<compile_context>
chip_gen: v6e
topology: v6e:2x2x1
jax: 0.10.0
libtpu: 0.0.40
codegen_flags: <defaults>
</compile_context>

<pallas_src>
import functools

import jax
import jax.numpy as jnp
from jax import lax
from jax.experimental import pallas as pl
from jax.experimental.pallas import tpu as pltpu


# ---------------------------------------------------------------------------
# small shared (non-Pallas) helpers — used identically by kernel & reference
# ---------------------------------------------------------------------------
def conv2d(x, w, padding):
    return lax.conv_general_dilated(
        x, w, window_strides=(1, 1),
        padding=((padding, padding), (padding, padding)),
        dimension_numbers=("NCHW", "OIHW", "NCHW"))


def depthwise_conv2d(x, w, padding):
    c = x.shape[1]
    return lax.conv_general_dilated(
        x, w, window_strides=(1, 1),
        padding=((padding, padding), (padding, padding)),
        dimension_numbers=("NCHW", "OIHW", "NCHW"),
        feature_group_count=c)


def maxpool2d(x, pool):
    b, c, h, w = x.shape
    ph, pw = pool
    return jnp.max(x.reshape(b, c, h // ph, ph, w // pw, pw), axis=(3, 5))


# ---------------------------------------------------------------------------
# Pallas kernels
# ---------------------------------------------------------------------------
def _sigmoid(z):
    # sigmoid via EUP exp + approx reciprocal (separate VLIW slots) plus one
    # Newton refinement step -> ~f32 accuracy without a VALU divide.
    d = 1.0 + jnp.exp(-z)
    r = pl.reciprocal(d, approx=True)
    return r * (2.0 - d * r)


def _channel_attention(x, w1_ref, w2_ref, inv_hw):
    """x: (C, HW) f32 -> (y = x*ca, channel-mean map, channel-max map)."""
    mu = jnp.sum(x, axis=-1, keepdims=True) * inv_hw              # (C, 1)
    h = jnp.maximum(
        jnp.dot(w1_ref[...], mu, preferred_element_type=jnp.float32), 0.0)
    ca = _sigmoid(jnp.dot(w2_ref[...], h, preferred_element_type=jnp.float32))
    y = x * ca                                                    # (C, HW)
    return y, jnp.mean(y, axis=0, keepdims=True), jnp.max(y, axis=0, keepdims=True)


def _bn_relu_cbam_channel_kernel(x_ref, s_ref, b_ref, w1_ref, w2_ref,
                                 y_ref, mean_ref, max_ref, *, inv_hw):
    """Fused inference BatchNorm + ReLU + CBAM channel attention (stage 1)."""
    x = x_ref[0].astype(jnp.float32)                              # (C, HW)
    x = jnp.maximum(x * s_ref[...] + b_ref[...], 0.0)
    y, m, mx = _channel_attention(x, w1_ref, w2_ref, inv_hw)
    y_ref[0] = y.astype(y_ref.dtype)
    mean_ref[0] = m
    max_ref[0] = mx


def _pw_cbam_channel_kernel(x_ref, wp_ref, w1_ref, w2_ref,
                            y_ref, mean_ref, max_ref, *, inv_hw):
    """Fused 1x1 pointwise conv + CBAM channel attention (stages 2-4)."""
    x = x_ref[0].astype(jnp.float32)                              # (Ci, HW)
    z = jnp.dot(wp_ref[...], x, preferred_element_type=jnp.float32)  # (Co, HW)
    y, m, mx = _channel_attention(z, w1_ref, w2_ref, inv_hw)
    y_ref[0] = y.astype(y_ref.dtype)
    mean_ref[0] = m
    max_ref[0] = mx


def _spatial_gate_kernel(y_ref, sa_ref, o_ref):
    """x * sigmoid(spatial-attention logits)."""
    y = y_ref[0].astype(jnp.float32)                              # (C, HW)
    sa = _sigmoid(sa_ref[0].astype(jnp.float32))                  # (1, HW)
    o_ref[0] = (y * sa).astype(o_ref.dtype)


def _spatial_gate_gap_kernel(y_ref, sa_ref, o_ref, *, inv_hw):
    """Stage-4 spatial gate fused with the global average pool."""
    y = y_ref[0].astype(jnp.float32)                              # (C, HW)
    sa = _sigmoid(sa_ref[0].astype(jnp.float32))                  # (1, HW)
    g = y * sa
    o_ref[0] = (jnp.sum(g, axis=-1, keepdims=True) * inv_hw).astype(o_ref.dtype)


_VMEM_LIMIT = 32 * 1024 * 1024  # safe on v5e/v6e (128 MiB) and v7x (64 MiB)


def _cp():
    return pltpu.CompilerParams(dimension_semantics=("parallel",),
                                vmem_limit_bytes=_VMEM_LIMIT)


# ---------------------------------------------------------------------------
# Pallas wrappers
# ---------------------------------------------------------------------------
def bn_relu_cbam_channel_pallas(x, scale, bias, att):
    """Stage 1: BN+ReLU + CBAM channel attention, fused.  Returns (y3, mean, max)."""
    b, c, h, w = x.shape
    hw = h * w
    x3 = x.reshape(b, c, hw)
    s2 = scale.reshape(c, 1).astype(jnp.float32)
    b2 = bias.reshape(c, 1).astype(jnp.float32)
    w1, w2 = att["w1"], att["w2"]
    cr = w1.shape[0]

    kernel = functools.partial(_bn_relu_cbam_channel_kernel, inv_hw=1.0 / hw)
    return pl.pallas_call(
        kernel,
        out_shape=(jax.ShapeDtypeStruct((b, c, hw), x.dtype),
                   jax.ShapeDtypeStruct((b, 1, hw), jnp.float32),
                   jax.ShapeDtypeStruct((b, 1, hw), jnp.float32)),
        grid_spec=pltpu.PrefetchScalarGridSpec(
            num_scalar_prefetch=0,
            grid=(b,),
            in_specs=[pl.BlockSpec((1, c, hw), lambda i: (i, 0, 0)),
                      pl.BlockSpec((c, 1), lambda i: (0, 0)),
                      pl.BlockSpec((c, 1), lambda i: (0, 0)),
                      pl.BlockSpec((cr, c), lambda i: (0, 0)),
                      pl.BlockSpec((c, cr), lambda i: (0, 0))],
            out_specs=[pl.BlockSpec((1, c, hw), lambda i: (i, 0, 0)),
                       pl.BlockSpec((1, 1, hw), lambda i: (i, 0, 0)),
                       pl.BlockSpec((1, 1, hw), lambda i: (i, 0, 0))],
        ),
        compiler_params=_cp(),
    )(x3, s2, b2, w1, w2)


def pw_cbam_channel_pallas(x, w_pw, att):
    """Stages 2-4: 1x1 pointwise conv + CBAM channel attention, fused."""
    b, ci, h, w = x.shape
    co = w_pw.shape[0]
    hw = h * w
    x3 = x.reshape(b, ci, hw)
    w1, w2 = att["w1"], att["w2"]
    cr = w1.shape[0]

    kernel = functools.partial(_pw_cbam_channel_kernel, inv_hw=1.0 / hw)
    return pl.pallas_call(
        kernel,
        out_shape=(jax.ShapeDtypeStruct((b, co, hw), x.dtype),
                   jax.ShapeDtypeStruct((b, 1, hw), jnp.float32),
                   jax.ShapeDtypeStruct((b, 1, hw), jnp.float32)),
        grid_spec=pltpu.PrefetchScalarGridSpec(
            num_scalar_prefetch=0,
            grid=(b,),
            in_specs=[pl.BlockSpec((1, ci, hw), lambda i: (i, 0, 0)),
                      pl.BlockSpec((co, ci), lambda i: (0, 0)),
                      pl.BlockSpec((cr, co), lambda i: (0, 0)),
                      pl.BlockSpec((co, cr), lambda i: (0, 0))],
            out_specs=[pl.BlockSpec((1, co, hw), lambda i: (i, 0, 0)),
                       pl.BlockSpec((1, 1, hw), lambda i: (i, 0, 0)),
                       pl.BlockSpec((1, 1, hw), lambda i: (i, 0, 0))],
        ),
        compiler_params=_cp(),
    )(x3, w_pw, w1, w2)


def spatial_gate_pallas(y3, sa3, h, w):
    """y * sigmoid(sa), returned as NCHW."""
    b, c, hw = y3.shape
    out3 = pl.pallas_call(
        _spatial_gate_kernel,
        out_shape=jax.ShapeDtypeStruct((b, c, hw), y3.dtype),
        grid_spec=pltpu.PrefetchScalarGridSpec(
            num_scalar_prefetch=0,
            grid=(b,),
            in_specs=[pl.BlockSpec((1, c, hw), lambda i: (i, 0, 0)),
                      pl.BlockSpec((1, 1, hw), lambda i: (i, 0, 0))],
            out_specs=pl.BlockSpec((1, c, hw), lambda i: (i, 0, 0)),
        ),
        compiler_params=_cp(),
    )(y3, sa3)
    return out3.reshape(b, c, h, w)


def spatial_gate_gap_pallas(y3, sa3):
    """Stage 4: mean_hw(y * sigmoid(sa)) -> (B, C)."""
    b, c, hw = y3.shape
    kernel = functools.partial(_spatial_gate_gap_kernel, inv_hw=1.0 / hw)
    out = pl.pallas_call(
        kernel,
        out_shape=jax.ShapeDtypeStruct((b, c, 1), jnp.float32),
        grid_spec=pltpu.PrefetchScalarGridSpec(
            num_scalar_prefetch=0,
            grid=(b,),
            in_specs=[pl.BlockSpec((1, c, hw), lambda i: (i, 0, 0)),
                      pl.BlockSpec((1, 1, hw), lambda i: (i, 0, 0))],
            out_specs=pl.BlockSpec((1, c, 1), lambda i: (i, 0, 0)),
        ),
        compiler_params=_cp(),
    )(y3, sa3)
    return out.reshape(b, c)


def _spatial_logits(mean_c, max_c, w_sp, b, h, w):
    # TODO(synk): 7x7 2->1 channel spatial-attention conv stays in XLA.
    mm = jnp.concatenate([mean_c, max_c], axis=1).reshape(b, 2, h, w)
    return conv2d(mm, w_sp, 3).reshape(b, 1, h * w)


# ---------------------------------------------------------------------------
# Full forward pass (Pallas) and pure-JAX reference
# ---------------------------------------------------------------------------
def forward_pallas(p, x, device_id):
    # ----- stage 1 -----
    x = conv2d(x, p["w_conv1"], 1)             # TODO(synk): 3x3 conv via XLA
    b, c, h, w = x.shape
    y3, mc, xc = bn_relu_cbam_channel_pallas(x, p["bn1_scale"], p["bn1_bias"], p["att1"])
    sa3 = _spatial_logits(mc, xc, p["att1"]["w_sp"], b, h, w)
    x = spatial_gate_pallas(y3, sa3, h, w)
    x = maxpool2d(x, (4, 4))                   # TODO(synk): maxpool via XLA

    # ----- stage 2 -----
    x = depthwise_conv2d(x, p["dw2"], 2)       # TODO(synk): depthwise 5x5 via XLA
    b, _, h, w = x.shape
    y3, mc, xc = pw_cbam_channel_pallas(x, p["pw2"], p["att2"])
    sa3 = _spatial_logits(mc, xc, p["att2"]["w_sp"], b, h, w)
    x = spatial_gate_pallas(y3, sa3, h, w)
    x = maxpool2d(x, (2, 4))
    # dropout(p=0.2): identity at inference

    # ----- stage 3 -----
    x = depthwise_conv2d(x, p["dw3"], 2)
    b, _, h, w = x.shape
    y3, mc, xc = pw_cbam_channel_pallas(x, p["pw3"], p["att3"])
    sa3 = _spatial_logits(mc, xc, p["att3"]["w_sp"], b, h, w)
    x = spatial_gate_pallas(y3, sa3, h, w)
    x = maxpool2d(x, (2, 4))

    # ----- stage 4 (spatial gate fused with global average pool) -----
    x = depthwise_conv2d(x, p["dw4"], 1)
    b, _, h, w = x.shape
    y3, mc, xc = pw_cbam_channel_pallas(x, p["pw4"], p["att4"])
    sa3 = _spatial_logits(mc, xc, p["att4"]["w_sp"], b, h, w)
    pooled = spatial_gate_gap_pallas(y3, sa3)                  # (B, C4)

    # ----- fc: GAP commuted in front of the 1x1 conv + folded BN affine -----
    # mean_hw(s*(W@x)+b) == s*(W@mean_hw(x))+b, and the device embedding is
    # constant over (H, W), so the concat happens on pooled features.
    dev = p["emb"][device_id]                  # TODO(synk): embedding gather via XLA
    feat = jnp.concatenate([pooled, dev], axis=1)              # (B, C4 + E)
    # TODO(synk): (B,224)@(224,10) is dispatch-dominated — left to XLA.
    logits = jnp.dot(feat, p["w_fc"].T, precision=lax.Precision.HIGHEST)
    return logits * p["bnfc_scale"][None, :] + p["bnfc_bias"][None, :]


def _bn_relu_ref(x, s, b):
    return jnp.maximum(x * s[None, :, None, None] + b[None, :, None, None], 0.0)


def _cbam_ref(x, att):
    mu = jnp.mean(x, axis=(2, 3))                               # (B, C)
    h = jnp.maximum(jnp.einsum("rc,bc->br", att["w1"], mu,
                               precision=lax.Precision.HIGHEST), 0.0)
    ca = jax.nn.sigmoid(jnp.einsum("cr,br->bc", att["w2"], h,
                                   precision=lax.Precision.HIGHEST))
    y = x * ca[:, :, None, None]
    mm = jnp.stack([jnp.mean(y, axis=1), jnp.max(y, axis=1)], axis=1)
    sa = jax.nn.sigmoid(conv2d(mm, att["w_sp"], 3))
    return y * sa


def _pointwise_ref(x, w, s=None, b=None):
    y = jnp.einsum("oc,bchw->bohw", w, x, precision=lax.Precision.HIGHEST)
    if s is not None:
        y = y * s[None, :, None, None] + b[None, :, None, None]
    return y


def forward_reference(p, x, device_id):
    x = _bn_relu_ref(conv2d(x, p["w_conv1"], 1), p["bn1_scale"], p["bn1_bias"])
    x = _cbam_ref(x, p["att1"])
    x = maxpool2d(x, (4, 4))
    x = _pointwise_ref(depthwise_conv2d(x, p["dw2"], 2), p["pw2"])
    x = _cbam_ref(x, p["att2"])
    x = maxpool2d(x, (2, 4))
    x = _pointwise_ref(depthwise_conv2d(x, p["dw3"], 2), p["pw3"])
    x = _cbam_ref(x, p["att3"])
    x = maxpool2d(x, (2, 4))
    x = _pointwise_ref(depthwise_conv2d(x, p["dw4"], 1), p["pw4"])
    x = _cbam_ref(x, p["att4"])
    b, c, h, w = x.shape
    dev = p["emb"][device_id]
    dev = jnp.broadcast_to(dev[:, :, None, None], (b, dev.shape[1], h, w))
    x = jnp.concatenate([x, dev], axis=1)
    x = _pointwise_ref(x, p["w_fc"], p["bnfc_scale"], p["bnfc_bias"])
    return jnp.mean(x, axis=(2, 3))


# ---------------------------------------------------------------------------
# deterministic parameter init (eval-mode BN folded to scale/bias)
# ---------------------------------------------------------------------------
def _init_params(key, filters=(64, 64, 96, 192), embed_dim=32, num_classes=10):
    ks = iter(jax.random.split(key, 32))

    def conv_w(shape):
        fan_in = shape[1] * shape[2] * shape[3]
        return jax.random.normal(next(ks), shape, jnp.float32) * jnp.sqrt(2.0 / fan_in)

    def lin_w(shape):  # (out, in)
        return jax.random.normal(next(ks), shape, jnp.float32) * jnp.sqrt(2.0 / shape[1])

    def cbam(c, r=4):
        return dict(w1=lin_w((c // r, c)), w2=lin_w((c, c // r)),
                    w_sp=conv_w((1, 2, 7, 7)))

    p = {}
    p["w_conv1"] = conv_w((filters[0], 1, 3, 3))
    p["bn1_scale"] = 1.0 + 0.1 * jax.random.normal(next(ks), (filters[0],), jnp.float32)
    p["bn1_bias"] = 0.1 * jax.random.normal(next(ks), (filters[0],), jnp.float32)
    p["att1"] = cbam(filters[0])
    p["dw2"] = conv_w((filters[0], 1, 5, 5)); p["pw2"] = lin_w((filters[1], filters[0]))
    p["att2"] = cbam(filters[1])
    p["dw3"] = conv_w((filters[1], 1, 5, 5)); p["pw3"] = lin_w((filters[2], filters[1]))
    p["att3"] = cbam(filters[2])
    p["dw4"] = conv_w((filters[2], 1, 3, 3)); p["pw4"] = lin_w((filters[3], filters[2]))
    p["att4"] = cbam(filters[3])
    p["emb"] = 0.1 * jax.random.normal(next(ks), (9, embed_dim), jnp.float32)
    p["w_fc"] = lin_w((num_classes, filters[3] + embed_dim))
    p["bnfc_scale"] = 1.0 + 0.1 * jax.random.normal(next(ks), (num_classes,), jnp.float32)
    p["bnfc_bias"] = 0.1 * jax.random.normal(next(ks), (num_classes,), jnp.float32)
    return p


if __name__ == "__main__":
    key = jax.random.PRNGKey(0)
    pkey, xkey = jax.random.split(key)
    params = _init_params(pkey)

    B, H, W = 2, 32, 128                       # (B, 1, H, W) input, like the module
    x = jax.random.normal(xkey, (B, 1, H, W), dtype=jnp.float32)
    device_id = jnp.array([3, 7], dtype=jnp.int32)

    out = jax.jit(forward_pallas)(params, x, device_id)
    out = jax.block_until_ready(out)

    ref = jax.jit(forward_reference)(params, x, device_id)
    ref = jax.block_until_ready(ref)

    assert out.shape == (B, 10)
    assert jnp.allclose(out, ref, atol=1e-3, rtol=1e-2), "mismatch vs reference"

    print("KERNEL_OK")
</pallas_src>

<mosaic_0001>
module attributes {stable_mosaic.version = 11 : i64} {
  func.func @_bn_relu_cbam_channel_kernel(%arg0: i32, %arg1: memref<1x64x4096xf32, #tpu.memory_space<vmem>>, %arg2: memref<64x1xf32, #tpu.memory_space<vmem>>, %arg3: memref<64x1xf32, #tpu.memory_space<vmem>>, %arg4: memref<16x64xf32, #tpu.memory_space<vmem>>, %arg5: memref<64x16xf32, #tpu.memory_space<vmem>>, %arg6: memref<1x64x4096xf32, #tpu.memory_space<vmem>>, %arg7: memref<1x1x4096xf32, #tpu.memory_space<vmem>>, %arg8: memref<1x1x4096xf32, #tpu.memory_space<vmem>>) attributes {dimension_semantics = [#tpu.dimension_semantics<parallel>], iteration_bounds = array<i64: 2>, scalar_prefetch = 0 : i64, scratch_operands = 0 : i64, tpu.core_type = #tpu.core_type<tc>, window_params = [{transform_indices = @transform_0, window_bounds = array<i64: 1, 64, 4096>}, {pipeline_mode = #tpu.pipeline_mode<synchronous>, transform_indices = @transform_1, window_bounds = array<i64: 64, 1>}, {pipeline_mode = #tpu.pipeline_mode<synchronous>, transform_indices = @transform_2, window_bounds = array<i64: 64, 1>}, {pipeline_mode = #tpu.pipeline_mode<synchronous>, transform_indices = @transform_3, window_bounds = array<i64: 16, 64>}, {pipeline_mode = #tpu.pipeline_mode<synchronous>, transform_indices = @transform_4, window_bounds = array<i64: 64, 16>}, {transform_indices = @transform_5, window_bounds = array<i64: 1, 64, 4096>}, {transform_indices = @transform_6, window_bounds = array<i64: 1, 1, 4096>}, {transform_indices = @transform_7, window_bounds = array<i64: 1, 1, 4096>}]} {
    %c0 = arith.constant 0 : index
    %c0_0 = arith.constant 0 : index
    %c0_1 = arith.constant 0 : index
    %0 = vector.load %arg1[%c0, %c0_0, %c0_1] : memref<1x64x4096xf32, #tpu.memory_space<vmem>>, vector<1x64x4096xf32>
    %1 = vector.shape_cast %0 : vector<1x64x4096xf32> to vector<64x4096xf32>
    %c0_2 = arith.constant 0 : index
    %c0_3 = arith.constant 0 : index
    %2 = vector.load %arg2[%c0_2, %c0_3] : memref<64x1xf32, #tpu.memory_space<vmem>>, vector<64x1xf32>
    %3 = vector.broadcast %2 : vector<64x1xf32> to vector<64x4096xf32>
    %4 = arith.mulf %1, %3 : vector<64x4096xf32>
    %c0_4 = arith.constant 0 : index
    %c0_5 = arith.constant 0 : index
    %5 = vector.load %arg3[%c0_4, %c0_5] : memref<64x1xf32, #tpu.memory_space<vmem>>, vector<64x1xf32>
    %6 = vector.broadcast %5 : vector<64x1xf32> to vector<64x4096xf32>
    %7 = arith.addf %4, %6 : vector<64x4096xf32>
    %cst = arith.constant 0.000000e+00 : f32
    %8 = vector.broadcast %cst : f32 to vector<64x4096xf32>
    %9 = arith.maximumf %7, %8 : vector<64x4096xf32>
    %cst_6 = arith.constant dense<0.000000e+00> : vector<64xf32>
    %10 = vector.multi_reduction <add>, %9, %cst_6 [1] : vector<64x4096xf32> to vector<64xf32>
    %11 = vector.shape_cast %10 : vector<64xf32> to vector<64x1xf32>
    %cst_7 = arith.constant 2.44140625E-4 : f32
    %12 = vector.broadcast %cst_7 : f32 to vector<64x1xf32>
    %13 = arith.mulf %11, %12 : vector<64x1xf32>
    %c0_8 = arith.constant 0 : index
    %c0_9 = arith.constant 0 : index
    %14 = vector.load %arg4[%c0_8, %c0_9] : memref<16x64xf32, #tpu.memory_space<vmem>>, vector<16x64xf32>
    %cst_10 = arith.constant dense<0.000000e+00> : vector<16x1xf32>
    %15 = tpu.matmul %14, %13, %cst_10 {dimension_numbers = #tpu.dot_dimension_numbers<[1], [0], [0], [1], [0, 0, 1, 1], [], []>} : vector<16x64xf32>, vector<64x1xf32>, vector<16x1xf32> -> vector<16x1xf32>
    %cst_11 = arith.constant 0.000000e+00 : f32
    %16 = vector.broadcast %cst_11 : f32 to vector<16x1xf32>
    %17 = arith.maximumf %15, %16 : vector<16x1xf32>
    %c0_12 = arith.constant 0 : index
    %c0_13 = arith.constant 0 : index
    %18 = vector.load %arg5[%c0_12, %c0_13] : memref<64x16xf32, #tpu.memory_space<vmem>>, vector<64x16xf32>
    %cst_14 = arith.constant dense<0.000000e+00> : vector<64x1xf32>
    %19 = tpu.matmul %18, %17, %cst_14 {dimension_numbers = #tpu.dot_dimension_numbers<[1], [0], [0], [1], [0, 0, 1, 1], [], []>} : vector<64x16xf32>, vector<16x1xf32>, vector<64x1xf32> -> vector<64x1xf32>
    %cst_15 = arith.constant 0.000000e+00 : f32
    %20 = vector.broadcast %cst_15 : f32 to vector<64x1xf32>
    %21 = arith.subf %20, %19 : vector<64x1xf32>
    %22 = math.exp %21 : vector<64x1xf32>
    %cst_16 = arith.constant 1.000000e+00 : f32
    %23 = vector.broadcast %cst_16 : f32 to vector<64x1xf32>
    %24 = arith.addf %23, %22 : vector<64x1xf32>
    %25 = tpu.reciprocal %24 {approx = true} : vector<64x1xf32> -> vector<64x1xf32>
    %26 = arith.mulf %24, %25 : vector<64x1xf32>
    %cst_17 = arith.constant 2.000000e+00 : f32
    %27 = vector.broadcast %cst_17 : f32 to vector<64x1xf32>
    %28 = arith.subf %27, %26 : vector<64x1xf32>
    %29 = arith.mulf %25, %28 : vector<64x1xf32>
    %30 = vector.broadcast %29 : vector<64x1xf32> to vector<64x4096xf32>
    %31 = arith.mulf %9, %30 : vector<64x4096xf32>
    %cst_18 = arith.constant dense<0.000000e+00> : vector<4096xf32>
    %32 = vector.multi_reduction <add>, %31, %cst_18 [0] : vector<64x4096xf32> to vector<4096xf32>
    %33 = vector.shape_cast %32 : vector<4096xf32> to vector<1x4096xf32>
    %cst_19 = arith.constant 6.400000e+01 : f32
    %34 = vector.broadcast %cst_19 : f32 to vector<1x4096xf32>
    %35 = arith.divf %33, %34 : vector<1x4096xf32>
    %cst_20 = arith.constant dense<0xFF800000> : vector<4096xf32>
    %36 = vector.multi_reduction <maximumf>, %31, %cst_20 [0] : vector<64x4096xf32> to vector<4096xf32>
    %37 = vector.shape_cast %36 : vector<4096xf32> to vector<1x4096xf32>
    %c0_21 = arith.constant 0 : index
    %c0_22 = arith.constant 0 : index
    %c0_23 = arith.constant 0 : index
    %38 = vector.load %arg6[%c0_21, %c0_22, %c0_23] : memref<1x64x4096xf32, #tpu.memory_space<vmem>>, vector<1x64x4096xf32>
    %39 = vector.shape_cast %38 : vector<1x64x4096xf32> to vector<64x4096xf32>
    %40 = vector.shape_cast %31 : vector<64x4096xf32> to vector<1x64x4096xf32>
    tpu.vector_store %arg6[%c0_21, %c0_22, %c0_23], %40 {strides = array<i32>} : memref<1x64x4096xf32, #tpu.memory_space<vmem>>, vector<1x64x4096xf32>,
    %c0_24 = arith.constant 0 : index
    %c0_25 = arith.constant 0 : index
    %c0_26 = arith.constant 0 : index
    %41 = vector.load %arg7[%c0_24, %c0_25, %c0_26] : memref<1x1x4096xf32, #tpu.memory_space<vmem>>, vector<1x1x4096xf32>
    %42 = vector.shape_cast %41 : vector<1x1x4096xf32> to vector<1x4096xf32>
    %43 = vector.shape_cast %35 : vector<1x4096xf32> to vector<1x1x4096xf32>
    tpu.vector_store %arg7[%c0_24, %c0_25, %c0_26], %43 {strides = array<i32>} : memref<1x1x4096xf32, #tpu.memory_space<vmem>>, vector<1x1x4096xf32>,
    %c0_27 = arith.constant 0 : index
    %c0_28 = arith.constant 0 : index
    %c0_29 = arith.constant 0 : index
    %44 = vector.load %arg8[%c0_27, %c0_28, %c0_29] : memref<1x1x4096xf32, #tpu.memory_space<vmem>>, vector<1x1x4096xf32>
    %45 = vector.shape_cast %44 : vector<1x1x4096xf32> to vector<1x4096xf32>
    %46 = vector.shape_cast %37 : vector<1x4096xf32> to vector<1x1x4096xf32>
    tpu.vector_store %arg8[%c0_27, %c0_28, %c0_29], %46 {strides = array<i32>} : memref<1x1x4096xf32, #tpu.memory_space<vmem>>, vector<1x1x4096xf32>,
    return
  }
  func.func @transform_0(%arg0: i32) -> (i32, i32, i32) {
    %c0_i32 = arith.constant 0 : i32
    %c0_i32_0 = arith.constant 0 : i32
    %c0_i32_1 = arith.constant 0 : i32
    return %arg0, %c0_i32, %c0_i32_0 : i32, i32, i32
  }
  func.func @transform_1(%arg0: i32) -> (i32, i32) {
    %c0_i32 = arith.constant 0 : i32
    %c0_i32_0 = arith.constant 0 : i32
    %c0_i32_1 = arith.constant 0 : i32
    return %c0_i32, %c0_i32_0 : i32, i32
  }
  func.func @transform_2(%arg0: i32) -> (i32, i32) {
    %c0_i32 = arith.constant 0 : i32
    %c0_i32_0 = arith.constant 0 : i32
    %c0_i32_1 = arith.constant 0 : i32
    return %c0_i32, %c0_i32_0 : i32, i32
  }
  func.func @transform_3(%arg0: i32) -> (i32, i32) {
    %c0_i32 = arith.constant 0 : i32
    %c0_i32_0 = arith.constant 0 : i32
    %c0_i32_1 = arith.constant 0 : i32
    return %c0_i32, %c0_i32_0 : i32, i32
  }
  func.func @transform_4(%arg0: i32) -> (i32, i32) {
    %c0_i32 = arith.constant 0 : i32
    %c0_i32_0 = arith.constant 0 : i32
    %c0_i32_1 = arith.constant 0 : i32
    return %c0_i32, %c0_i32_0 : i32, i32
  }
  func.func @transform_5(%arg0: i32) -> (i32, i32, i32) {
    %c0_i32 = arith.constant 0 : i32
    %c0_i32_0 = arith.constant 0 : i32
    %c0_i32_1 = arith.constant 0 : i32
    return %arg0, %c0_i32, %c0_i32_0 : i32, i32, i32
  }
  func.func @transform_6(%arg0: i32) -> (i32, i32, i32) {
    %c0_i32 = arith.constant 0 : i32
    %c0_i32_0 = arith.constant 0 : i32
    %c0_i32_1 = arith.constant 0 : i32
    return %arg0, %c0_i32, %c0_i32_0 : i32, i32, i32
  }
  func.func @transform_7(%arg0: i32) -> (i32, i32, i32) {
    %c0_i32 = arith.constant 0 : i32
    %c0_i32_0 = arith.constant 0 : i32
    %c0_i32_1 = arith.constant 0 : i32
    return %arg0, %c0_i32, %c0_i32_0 : i32, i32, i32
  }
}

module attributes {stable_mosaic.version = 11 : i64} {
  func.func @_spatial_gate_kernel(%arg0: i32, %arg1: memref<1x64x4096xf32, #tpu.memory_space<vmem>>, %arg2: memref<1x1x4096xf32, #tpu.memory_space<vmem>>, %arg3: memref<1x64x4096xf32, #tpu.memory_space<vmem>>) attributes {dimension_semantics = [#tpu.dimension_semantics<parallel>], iteration_bounds = array<i64: 2>, scalar_prefetch = 0 : i64, scratch_operands = 0 : i64, tpu.core_type = #tpu.core_type<tc>, window_params = [{transform_indices = @transform_0, window_bounds = array<i64: 1, 64, 4096>}, {transform_indices = @transform_1, window_bounds = array<i64: 1, 1, 4096>}, {transform_indices = @transform_2, window_bounds = array<i64: 1, 64, 4096>}]} {
    %c0 = arith.constant 0 : index
    %c0_0 = arith.constant 0 : index
    %c0_1 = arith.constant 0 : index
    %0 = vector.load %arg1[%c0, %c0_0, %c0_1] : memref<1x64x4096xf32, #tpu.memory_space<vmem>>, vector<1x64x4096xf32>
    %1 = vector.shape_cast %0 : vector<1x64x4096xf32> to vector<64x4096xf32>
    %c0_2 = arith.constant 0 : index
    %c0_3 = arith.constant 0 : index
    %c0_4 = arith.constant 0 : index
    %2 = vector.load %arg2[%c0_2, %c0_3, %c0_4] : memref<1x1x4096xf32, #tpu.memory_space<vmem>>, vector<1x1x4096xf32>
    %3 = vector.shape_cast %2 : vector<1x1x4096xf32> to vector<1x4096xf32>
    %cst = arith.constant 0.000000e+00 : f32
    %4 = vector.broadcast %cst : f32 to vector<1x4096xf32>
    %5 = arith.subf %4, %3 : vector<1x4096xf32>
    %6 = math.exp %5 : vector<1x4096xf32>
    %cst_5 = arith.constant 1.000000e+00 : f32
    %7 = vector.broadcast %cst_5 : f32 to vector<1x4096xf32>
    %8 = arith.addf %7, %6 : vector<1x4096xf32>
    %9 = tpu.reciprocal %8 {approx = true} : vector<1x4096xf32> -> vector<1x4096xf32>
    %10 = arith.mulf %8, %9 : vector<1x4096xf32>
    %cst_6 = arith.constant 2.000000e+00 : f32
    %11 = vector.broadcast %cst_6 : f32 to vector<1x4096xf32>
    %12 = arith.subf %11, %10 : vector<1x4096xf32>
    %13 = arith.mulf %9, %12 : vector<1x4096xf32>
    %14 = vector.broadcast %13 : vector<1x4096xf32> to vector<64x4096xf32>
    %15 = arith.mulf %1, %14 : vector<64x4096xf32>
    %c0_7 = arith.constant 0 : index
    %c0_8 = arith.constant 0 : index
    %c0_9 = arith.constant 0 : index
    %16 = vector.load %arg3[%c0_7, %c0_8, %c0_9] : memref<1x64x4096xf32, #tpu.memory_space<vmem>>, vector<1x64x4096xf32>
    %17 = vector.shape_cast %16 : vector<1x64x4096xf32> to vector<64x4096xf32>
    %18 = vector.shape_cast %15 : vector<64x4096xf32> to vector<1x64x4096xf32>
    tpu.vector_store %arg3[%c0_7, %c0_8, %c0_9], %18 {strides = array<i32>} : memref<1x64x4096xf32, #tpu.memory_space<vmem>>, vector<1x64x4096xf32>,
    return
  }
  func.func @transform_0(%arg0: i32) -> (i32, i32, i32) {
    %c0_i32 = arith.constant 0 : i32
    %c0_i32_0 = arith.constant 0 : i32
    %c0_i32_1 = arith.constant 0 : i32
    return %arg0, %c0_i32, %c0_i32_0 : i32, i32, i32
  }
  func.func @transform_1(%arg0: i32) -> (i32, i32, i32) {
    %c0_i32 = arith.constant 0 : i32
    %c0_i32_0 = arith.constant 0 : i32
    %c0_i32_1 = arith.constant 0 : i32
    return %arg0, %c0_i32, %c0_i32_0 : i32, i32, i32
  }
  func.func @transform_2(%arg0: i32) -> (i32, i32, i32) {
    %c0_i32 = arith.constant 0 : i32
    %c0_i32_0 = arith.constant 0 : i32
    %c0_i32_1 = arith.constant 0 : i32
    return %arg0, %c0_i32, %c0_i32_0 : i32, i32, i32
  }
}

module attributes {stable_mosaic.version = 11 : i64} {
  func.func @_pw_cbam_channel_kernel(%arg0: i32, %arg1: memref<1x64x256xf32, #tpu.memory_space<vmem>>, %arg2: memref<64x64xf32, #tpu.memory_space<vmem>>, %arg3: memref<16x64xf32, #tpu.memory_space<vmem>>, %arg4: memref<64x16xf32, #tpu.memory_space<vmem>>, %arg5: memref<1x64x256xf32, #tpu.memory_space<vmem>>, %arg6: memref<1x1x256xf32, #tpu.memory_space<vmem>>, %arg7: memref<1x1x256xf32, #tpu.memory_space<vmem>>) attributes {dimension_semantics = [#tpu.dimension_semantics<parallel>], iteration_bounds = array<i64: 2>, scalar_prefetch = 0 : i64, scratch_operands = 0 : i64, tpu.core_type = #tpu.core_type<tc>, window_params = [{transform_indices = @transform_0, window_bounds = array<i64: 1, 64, 256>}, {pipeline_mode = #tpu.pipeline_mode<synchronous>, transform_indices = @transform_1, window_bounds = array<i64: 64, 64>}, {pipeline_mode = #tpu.pipeline_mode<synchronous>, transform_indices = @transform_2, window_bounds = array<i64: 16, 64>}, {pipeline_mode = #tpu.pipeline_mode<synchronous>, transform_indices = @transform_3, window_bounds = array<i64: 64, 16>}, {transform_indices = @transform_4, window_bounds = array<i64: 1, 64, 256>}, {transform_indices = @transform_5, window_bounds = array<i64: 1, 1, 256>}, {transform_indices = @transform_6, window_bounds = array<i64: 1, 1, 256>}]} {
    %c0 = arith.constant 0 : index
    %c0_0 = arith.constant 0 : index
    %c0_1 = arith.constant 0 : index
    %0 = vector.load %arg1[%c0, %c0_0, %c0_1] : memref<1x64x256xf32, #tpu.memory_space<vmem>>, vector<1x64x256xf32>
    %1 = vector.shape_cast %0 : vector<1x64x256xf32> to vector<64x256xf32>
    %c0_2 = arith.constant 0 : index
    %c0_3 = arith.constant 0 : index
    %2 = vector.load %arg2[%c0_2, %c0_3] : memref<64x64xf32, #tpu.memory_space<vmem>>, vector<64x64xf32>
    %cst = arith.constant dense<0.000000e+00> : vector<64x256xf32>
    %3 = tpu.matmul %2, %1, %cst {dimension_numbers = #tpu.dot_dimension_numbers<[1], [0], [0], [1], [0, 0, 1, 1], [], []>} : vector<64x64xf32>, vector<64x256xf32>, vector<64x256xf32> -> vector<64x256xf32>
    %cst_4 = arith.constant dense<0.000000e+00> : vector<64xf32>
    %4 = vector.multi_reduction <add>, %3, %cst_4 [1] : vector<64x256xf32> to vector<64xf32>
    %5 = vector.shape_cast %4 : vector<64xf32> to vector<64x1xf32>
    %cst_5 = arith.constant 3.906250e-03 : f32
    %6 = vector.broadcast %cst_5 : f32 to vector<64x1xf32>
    %7 = arith.mulf %5, %6 : vector<64x1xf32>
    %c0_6 = arith.constant 0 : index
    %c0_7 = arith.constant 0 : index
    %8 = vector.load %arg3[%c0_6, %c0_7] : memref<16x64xf32, #tpu.memory_space<vmem>>, vector<16x64xf32>
    %cst_8 = arith.constant dense<0.000000e+00> : vector<16x1xf32>
    %9 = tpu.matmul %8, %7, %cst_8 {dimension_numbers = #tpu.dot_dimension_numbers<[1], [0], [0], [1], [0, 0, 1, 1], [], []>} : vector<16x64xf32>, vector<64x1xf32>, vector<16x1xf32> -> vector<16x1xf32>
    %cst_9 = arith.constant 0.000000e+00 : f32
    %10 = vector.broadcast %cst_9 : f32 to vector<16x1xf32>
    %11 = arith.maximumf %9, %10 : vector<16x1xf32>
    %c0_10 = arith.constant 0 : index
    %c0_11 = arith.constant 0 : index
    %12 = vector.load %arg4[%c0_10, %c0_11] : memref<64x16xf32, #tpu.memory_space<vmem>>, vector<64x16xf32>
    %cst_12 = arith.constant dense<0.000000e+00> : vector<64x1xf32>
    %13 = tpu.matmul %12, %11, %cst_12 {dimension_numbers = #tpu.dot_dimension_numbers<[1], [0], [0], [1], [0, 0, 1, 1], [], []>} : vector<64x16xf32>, vector<16x1xf32>, vector<64x1xf32> -> vector<64x1xf32>
    %cst_13 = arith.constant 0.000000e+00 : f32
    %14 = vector.broadcast %cst_13 : f32 to vector<64x1xf32>
    %15 = arith.subf %14, %13 : vector<64x1xf32>
    %16 = math.exp %15 : vector<64x1xf32>
    %cst_14 = arith.constant 1.000000e+00 : f32
    %17 = vector.broadcast %cst_14 : f32 to vector<64x1xf32>
    %18 = arith.addf %17, %16 : vector<64x1xf32>
    %19 = tpu.reciprocal %18 {approx = true} : vector<64x1xf32> -> vector<64x1xf32>
    %20 = arith.mulf %18, %19 : vector<64x1xf32>
    %cst_15 = arith.constant 2.000000e+00 : f32
    %21 = vector.broadcast %cst_15 : f32 to vector<64x1xf32>
    %22 = arith.subf %21, %20 : vector<64x1xf32>
    %23 = arith.mulf %19, %22 : vector<64x1xf32>
    %24 = vector.broadcast %23 : vector<64x1xf32> to vector<64x256xf32>
    %25 = arith.mulf %3, %24 : vector<64x256xf32>
    %cst_16 = arith.constant dense<0.000000e+00> : vector<256xf32>
    %26 = vector.multi_reduction <add>, %25, %cst_16 [0] : vector<64x256xf32> to vector<256xf32>
    %27 = vector.shape_cast %26 : vector<256xf32> to vector<1x256xf32>
    %cst_17 = arith.constant 6.400000e+01 : f32
    %28 = vector.broadcast %cst_17 : f32 to vector<1x256xf32>
    %29 = arith.divf %27, %28 : vector<1x256xf32>
    %cst_18 = arith.constant dense<0xFF800000> : vector<256xf32>
    %30 = vector.multi_reduction <maximumf>, %25, %cst_18 [0] : vector<64x256xf32> to vector<256xf32>
    %31 = vector.shape_cast %30 : vector<256xf32> to vector<1x256xf32>
    %c0_19 = arith.constant 0 : index
    %c0_20 = arith.constant 0 : index
    %c0_21 = arith.constant 0 : index
    %32 = vector.load %arg5[%c0_19, %c0_20, %c0_21] : memref<1x64x256xf32, #tpu.memory_space<vmem>>, vector<1x64x256xf32>
    %33 = vector.shape_cast %32 : vector<1x64x256xf32> to vector<64x256xf32>
    %34 = vector.shape_cast %25 : vector<64x256xf32> to vector<1x64x256xf32>
    tpu.vector_store %arg5[%c0_19, %c0_20, %c0_21], %34 {strides = array<i32>} : memref<1x64x256xf32, #tpu.memory_space<vmem>>, vector<1x64x256xf32>,
    %c0_22 = arith.constant 0 : index
    %c0_23 = arith.constant 0 : index
    %c0_24 = arith.constant 0 : index
    %35 = vector.load %arg6[%c0_22, %c0_23, %c0_24] : memref<1x1x256xf32, #tpu.memory_space<vmem>>, vector<1x1x256xf32>
    %36 = vector.shape_cast %35 : vector<1x1x256xf32> to vector<1x256xf32>
    %37 = vector.shape_cast %29 : vector<1x256xf32> to vector<1x1x256xf32>
    tpu.vector_store %arg6[%c0_22, %c0_23, %c0_24], %37 {strides = array<i32>} : memref<1x1x256xf32, #tpu.memory_space<vmem>>, vector<1x1x256xf32>,
    %c0_25 = arith.constant 0 : index
    %c0_26 = arith.constant 0 : index
    %c0_27 = arith.constant 0 : index
    %38 = vector.load %arg7[%c0_25, %c0_26, %c0_27] : memref<1x1x256xf32, #tpu.memory_space<vmem>>, vector<1x1x256xf32>
    %39 = vector.shape_cast %38 : vector<1x1x256xf32> to vector<1x256xf32>
    %40 = vector.shape_cast %31 : vector<1x256xf32> to vector<1x1x256xf32>
    tpu.vector_store %arg7[%c0_25, %c0_26, %c0_27], %40 {strides = array<i32>} : memref<1x1x256xf32, #tpu.memory_space<vmem>>, vector<1x1x256xf32>,
    return
  }
  func.func @transform_0(%arg0: i32) -> (i32, i32, i32) {
    %c0_i32 = arith.constant 0 : i32
    %c0_i32_0 = arith.constant 0 : i32
    %c0_i32_1 = arith.constant 0 : i32
    return %arg0, %c0_i32, %c0_i32_0 : i32, i32, i32
  }
  func.func @transform_1(%arg0: i32) -> (i32, i32) {
    %c0_i32 = arith.constant 0 : i32
    %c0_i32_0 = arith.constant 0 : i32
    %c0_i32_1 = arith.constant 0 : i32
    return %c0_i32, %c0_i32_0 : i32, i32
  }
  func.func @transform_2(%arg0: i32) -> (i32, i32) {
    %c0_i32 = arith.constant 0 : i32
    %c0_i32_0 = arith.constant 0 : i32
    %c0_i32_1 = arith.constant 0 : i32
    return %c0_i32, %c0_i32_0 : i32, i32
  }
  func.func @transform_3(%arg0: i32) -> (i32, i32) {
    %c0_i32 = arith.constant 0 : i32
    %c0_i32_0 = arith.constant 0 : i32
    %c0_i32_1 = arith.constant 0 : i32
    return %c0_i32, %c0_i32_0 : i32, i32
  }
  func.func @transform_4(%arg0: i32) -> (i32, i32, i32) {
    %c0_i32 = arith.constant 0 : i32
    %c0_i32_0 = arith.constant 0 : i32
    %c0_i32_1 = arith.constant 0 : i32
    return %arg0, %c0_i32, %c0_i32_0 : i32, i32, i32
  }
  func.func @transform_5(%arg0: i32) -> (i32, i32, i32) {
    %c0_i32 = arith.constant 0 : i32
    %c0_i32_0 = arith.constant 0 : i32
    %c0_i32_1 = arith.constant 0 : i32
    return %arg0, %c0_i32, %c0_i32_0 : i32, i32, i32
  }
  func.func @transform_6(%arg0: i32) -> (i32, i32, i32) {
    %c0_i32 = arith.constant 0 : i32
    %c0_i32_0 = arith.constant 0 : i32
    %c0_i32_1 = arith.constant 0 : i32
    return %arg0, %c0_i32, %c0_i32_0 : i32, i32, i32
  }
}

module attributes {stable_mosaic.version = 11 : i64} {
  func.func @_spatial_gate_kernel(%arg0: i32, %arg1: memref<1x64x256xf32, #tpu.memory_space<vmem>>, %arg2: memref<1x1x256xf32, #tpu.memory_space<vmem>>, %arg3: memref<1x64x256xf32, #tpu.memory_space<vmem>>) attributes {dimension_semantics = [#tpu.dimension_semantics<parallel>], iteration_bounds = array<i64: 2>, scalar_prefetch = 0 : i64, scratch_operands = 0 : i64, tpu.core_type = #tpu.core_type<tc>, window_params = [{transform_indices = @transform_0, window_bounds = array<i64: 1, 64, 256>}, {transform_indices = @transform_1, window_bounds = array<i64: 1, 1, 256>}, {transform_indices = @transform_2, window_bounds = array<i64: 1, 64, 256>}]} {
    %c0 = arith.constant 0 : index
    %c0_0 = arith.constant 0 : index
    %c0_1 = arith.constant 0 : index
    %0 = vector.load %arg1[%c0, %c0_0, %c0_1] : memref<1x64x256xf32, #tpu.memory_space<vmem>>, vector<1x64x256xf32>
    %1 = vector.shape_cast %0 : vector<1x64x256xf32> to vector<64x256xf32>
    %c0_2 = arith.constant 0 : index
    %c0_3 = arith.constant 0 : index
    %c0_4 = arith.constant 0 : index
    %2 = vector.load %arg2[%c0_2, %c0_3, %c0_4] : memref<1x1x256xf32, #tpu.memory_space<vmem>>, vector<1x1x256xf32>
    %3 = vector.shape_cast %2 : vector<1x1x256xf32> to vector<1x256xf32>
    %cst = arith.constant 0.000000e+00 : f32
    %4 = vector.broadcast %cst : f32 to vector<1x256xf32>
    %5 = arith.subf %4, %3 : vector<1x256xf32>
    %6 = math.exp %5 : vector<1x256xf32>
    %cst_5 = arith.constant 1.000000e+00 : f32
    %7 = vector.broadcast %cst_5 : f32 to vector<1x256xf32>
    %8 = arith.addf %7, %6 : vector<1x256xf32>
    %9 = tpu.reciprocal %8 {approx = true} : vector<1x256xf32> -> vector<1x256xf32>
    %10 = arith.mulf %8, %9 : vector<1x256xf32>
    %cst_6 = arith.constant 2.000000e+00 : f32
    %11 = vector.broadcast %cst_6 : f32 to vector<1x256xf32>
    %12 = arith.subf %11, %10 : vector<1x256xf32>
    %13 = arith.mulf %9, %12 : vector<1x256xf32>
    %14 = vector.broadcast %13 : vector<1x256xf32> to vector<64x256xf32>
    %15 = arith.mulf %1, %14 : vector<64x256xf32>
    %c0_7 = arith.constant 0 : index
    %c0_8 = arith.constant 0 : index
    %c0_9 = arith.constant 0 : index
    %16 = vector.load %arg3[%c0_7, %c0_8, %c0_9] : memref<1x64x256xf32, #tpu.memory_space<vmem>>, vector<1x64x256xf32>
    %17 = vector.shape_cast %16 : vector<1x64x256xf32> to vector<64x256xf32>
    %18 = vector.shape_cast %15 : vector<64x256xf32> to vector<1x64x256xf32>
    tpu.vector_store %arg3[%c0_7, %c0_8, %c0_9], %18 {strides = array<i32>} : memref<1x64x256xf32, #tpu.memory_space<vmem>>, vector<1x64x256xf32>,
    return
  }
  func.func @transform_0(%arg0: i32) -> (i32, i32, i32) {
    %c0_i32 = arith.constant 0 : i32
    %c0_i32_0 = arith.constant 0 : i32
    %c0_i32_1 = arith.constant 0 : i32
    return %arg0, %c0_i32, %c0_i32_0 : i32, i32, i32
  }
  func.func @transform_1(%arg0: i32) -> (i32, i32, i32) {
    %c0_i32 = arith.constant 0 : i32
    %c0_i32_0 = arith.constant 0 : i32
    %c0_i32_1 = arith.constant 0 : i32
    return %arg0, %c0_i32, %c0_i32_0 : i32, i32, i32
  }
  func.func @transform_2(%arg0: i32) -> (i32, i32, i32) {
    %c0_i32 = arith.constant 0 : i32
    %c0_i32_0 = arith.constant 0 : i32
    %c0_i32_1 = arith.constant 0 : i32
    return %arg0, %c0_i32, %c0_i32_0 : i32, i32, i32
  }
}

module attributes {stable_mosaic.version = 11 : i64} {
  func.func @_pw_cbam_channel_kernel(%arg0: i32, %arg1: memref<1x64x32xf32, #tpu.memory_space<vmem>>, %arg2: memref<96x64xf32, #tpu.memory_space<vmem>>, %arg3: memref<24x96xf32, #tpu.memory_space<vmem>>, %arg4: memref<96x24xf32, #tpu.memory_space<vmem>>, %arg5: memref<1x96x32xf32, #tpu.memory_space<vmem>>, %arg6: memref<1x1x32xf32, #tpu.memory_space<vmem>>, %arg7: memref<1x1x32xf32, #tpu.memory_space<vmem>>) attributes {dimension_semantics = [#tpu.dimension_semantics<parallel>], iteration_bounds = array<i64: 2>, scalar_prefetch = 0 : i64, scratch_operands = 0 : i64, tpu.core_type = #tpu.core_type<tc>, window_params = [{transform_indices = @transform_0, window_bounds = array<i64: 1, 64, 32>}, {pipeline_mode = #tpu.pipeline_mode<synchronous>, transform_indices = @transform_1, window_bounds = array<i64: 96, 64>}, {pipeline_mode = #tpu.pipeline_mode<synchronous>, transform_indices = @transform_2, window_bounds = array<i64: 24, 96>}, {pipeline_mode = #tpu.pipeline_mode<synchronous>, transform_indices = @transform_3, window_bounds = array<i64: 96, 24>}, {transform_indices = @transform_4, window_bounds = array<i64: 1, 96, 32>}, {transform_indices = @transform_5, window_bounds = array<i64: 1, 1, 32>}, {transform_indices = @transform_6, window_bounds = array<i64: 1, 1, 32>}]} {
    %c0 = arith.constant 0 : index
    %c0_0 = arith.constant 0 : index
    %c0_1 = arith.constant 0 : index
    %0 = vector.load %arg1[%c0, %c0_0, %c0_1] : memref<1x64x32xf32, #tpu.memory_space<vmem>>, vector<1x64x32xf32>
    %1 = vector.shape_cast %0 : vector<1x64x32xf32> to vector<64x32xf32>
    %c0_2 = arith.constant 0 : index
    %c0_3 = arith.constant 0 : index
    %2 = vector.load %arg2[%c0_2, %c0_3] : memref<96x64xf32, #tpu.memory_space<vmem>>, vector<96x64xf32>
    %cst = arith.constant dense<0.000000e+00> : vector<96x32xf32>
    %3 = tpu.matmul %2, %1, %cst {dimension_numbers = #tpu.dot_dimension_numbers<[1], [0], [0], [1], [0, 0, 1, 1], [], []>} : vector<96x64xf32>, vector<64x32xf32>, vector<96x32xf32> -> vector<96x32xf32>
    %cst_4 = arith.constant dense<0.000000e+00> : vector<96xf32>
    %4 = vector.multi_reduction <add>, %3, %cst_4 [1] : vector<96x32xf32> to vector<96xf32>
    %5 = vector.shape_cast %4 : vector<96xf32> to vector<96x1xf32>
    %cst_5 = arith.constant 3.125000e-02 : f32
    %6 = vector.broadcast %cst_5 : f32 to vector<96x1xf32>
    %7 = arith.mulf %5, %6 : vector<96x1xf32>
    %c0_6 = arith.constant 0 : index
    %c0_7 = arith.constant 0 : index
    %8 = vector.load %arg3[%c0_6, %c0_7] : memref<24x96xf32, #tpu.memory_space<vmem>>, vector<24x96xf32>
    %cst_8 = arith.constant dense<0.000000e+00> : vector<24x1xf32>
    %9 = tpu.matmul %8, %7, %cst_8 {dimension_numbers = #tpu.dot_dimension_numbers<[1], [0], [0], [1], [0, 0, 1, 1], [], []>} : vector<24x96xf32>, vector<96x1xf32>, vector<24x1xf32> -> vector<24x1xf32>
    %cst_9 = arith.constant 0.000000e+00 : f32
    %10 = vector.broadcast %cst_9 : f32 to vector<24x1xf32>
    %11 = arith.maximumf %9, %10 : vector<24x1xf32>
    %c0_10 = arith.constant 0 : index
    %c0_11 = arith.constant 0 : index
    %12 = vector.load %arg4[%c0_10, %c0_11] : memref<96x24xf32, #tpu.memory_space<vmem>>, vector<96x24xf32>
    %cst_12 = arith.constant dense<0.000000e+00> : vector<96x1xf32>
    %13 = tpu.matmul %12, %11, %cst_12 {dimension_numbers = #tpu.dot_dimension_numbers<[1], [0], [0], [1], [0, 0, 1, 1], [], []>} : vector<96x24xf32>, vector<24x1xf32>, vector<96x1xf32> -> vector<96x1xf32>
    %cst_13 = arith.constant 0.000000e+00 : f32
    %14 = vector.broadcast %cst_13 : f32 to vector<96x1xf32>
    %15 = arith.subf %14, %13 : vector<96x1xf32>
    %16 = math.exp %15 : vector<96x1xf32>
    %cst_14 = arith.constant 1.000000e+00 : f32
    %17 = vector.broadcast %cst_14 : f32 to vector<96x1xf32>
    %18 = arith.addf %17, %16 : vector<96x1xf32>
    %19 = tpu.reciprocal %18 {approx = true} : vector<96x1xf32> -> vector<96x1xf32>
    %20 = arith.mulf %18, %19 : vector<96x1xf32>
    %cst_15 = arith.constant 2.000000e+00 : f32
    %21 = vector.broadcast %cst_15 : f32 to vector<96x1xf32>
    %22 = arith.subf %21, %20 : vector<96x1xf32>
    %23 = arith.mulf %19, %22 : vector<96x1xf32>
    %24 = vector.broadcast %23 : vector<96x1xf32> to vector<96x32xf32>
    %25 = arith.mulf %3, %24 : vector<96x32xf32>
    %cst_16 = arith.constant dense<0.000000e+00> : vector<32xf32>
    %26 = vector.multi_reduction <add>, %25, %cst_16 [0] : vector<96x32xf32> to vector<32xf32>
    %27 = vector.shape_cast %26 : vector<32xf32> to vector<1x32xf32>
    %cst_17 = arith.constant 9.600000e+01 : f32
    %28 = vector.broadcast %cst_17 : f32 to vector<1x32xf32>
    %29 = arith.divf %27, %28 : vector<1x32xf32>
    %cst_18 = arith.constant dense<0xFF800000> : vector<32xf32>
    %30 = vector.multi_reduction <maximumf>, %25, %cst_18 [0] : vector<96x32xf32> to vector<32xf32>
    %31 = vector.shape_cast %30 : vector<32xf32> to vector<1x32xf32>
    %c0_19 = arith.constant 0 : index
    %c0_20 = arith.constant 0 : index
    %c0_21 = arith.constant 0 : index
    %32 = vector.load %arg5[%c0_19, %c0_20, %c0_21] : memref<1x96x32xf32, #tpu.memory_space<vmem>>, vector<1x96x32xf32>
    %33 = vector.shape_cast %32 : vector<1x96x32xf32> to vector<96x32xf32>
    %34 = vector.shape_cast %25 : vector<96x32xf32> to vector<1x96x32xf32>
    tpu.vector_store %arg5[%c0_19, %c0_20, %c0_21], %34 {strides = array<i32>} : memref<1x96x32xf32, #tpu.memory_space<vmem>>, vector<1x96x32xf32>,
    %c0_22 = arith.constant 0 : index
    %c0_23 = arith.constant 0 : index
    %c0_24 = arith.constant 0 : index
    %35 = vector.load %arg6[%c0_22, %c0_23, %c0_24] : memref<1x1x32xf32, #tpu.memory_space<vmem>>, vector<1x1x32xf32>
    %36 = vector.shape_cast %35 : vector<1x1x32xf32> to vector<1x32xf32>
    %37 = vector.shape_cast %29 : vector<1x32xf32> to vector<1x1x32xf32>
    tpu.vector_store %arg6[%c0_22, %c0_23, %c0_24], %37 {strides = array<i32>} : memref<1x1x32xf32, #tpu.memory_space<vmem>>, vector<1x1x32xf32>,
    %c0_25 = arith.constant 0 : index
    %c0_26 = arith.constant 0 : index
    %c0_27 = arith.constant 0 : index
    %38 = vector.load %arg7[%c0_25, %c0_26, %c0_27] : memref<1x1x32xf32, #tpu.memory_space<vmem>>, vector<1x1x32xf32>
    %39 = vector.shape_cast %38 : vector<1x1x32xf32> to vector<1x32xf32>
    %40 = vector.shape_cast %31 : vector<1x32xf32> to vector<1x1x32xf32>
    tpu.vector_store %arg7[%c0_25, %c0_26, %c0_27], %40 {strides = array<i32>} : memref<1x1x32xf32, #tpu.memory_space<vmem>>, vector<1x1x32xf32>,
    return
  }
  func.func @transform_0(%arg0: i32) -> (i32, i32, i32) {
    %c0_i32 = arith.constant 0 : i32
    %c0_i32_0 = arith.constant 0 : i32
    %c0_i32_1 = arith.constant 0 : i32
    return %arg0, %c0_i32, %c0_i32_0 : i32, i32, i32
  }
  func.func @transform_1(%arg0: i32) -> (i32, i32) {
    %c0_i32 = arith.constant 0 : i32
    %c0_i32_0 = arith.constant 0 : i32
    %c0_i32_1 = arith.constant 0 : i32
    return %c0_i32, %c0_i32_0 : i32, i32
  }
  func.func @transform_2(%arg0: i32) -> (i32, i32) {
    %c0_i32 = arith.constant 0 : i32
    %c0_i32_0 = arith.constant 0 : i32
    %c0_i32_1 = arith.constant 0 : i32
    return %c0_i32, %c0_i32_0 : i32, i32
  }
  func.func @transform_3(%arg0: i32) -> (i32, i32) {
    %c0_i32 = arith.constant 0 : i32
    %c0_i32_0 = arith.constant 0 : i32
    %c0_i32_1 = arith.constant 0 : i32
    return %c0_i32, %c0_i32_0 : i32, i32
  }
  func.func @transform_4(%arg0: i32) -> (i32, i32, i32) {
    %c0_i32 = arith.constant 0 : i32
    %c0_i32_0 = arith.constant 0 : i32
    %c0_i32_1 = arith.constant 0 : i32
    return %arg0, %c0_i32, %c0_i32_0 : i32, i32, i32
  }
  func.func @transform_5(%arg0: i32) -> (i32, i32, i32) {
    %c0_i32 = arith.constant 0 : i32
    %c0_i32_0 = arith.constant 0 : i32
    %c0_i32_1 = arith.constant 0 : i32
    return %arg0, %c0_i32, %c0_i32_0 : i32, i32, i32
  }
  func.func @transform_6(%arg0: i32) -> (i32, i32, i32) {
    %c0_i32 = arith.constant 0 : i32
    %c0_i32_0 = arith.constant 0 : i32
    %c0_i32_1 = arith.constant 0 : i32
    return %arg0, %c0_i32, %c0_i32_0 : i32, i32, i32
  }
}

module attributes {stable_mosaic.version = 11 : i64} {
  func.func @_spatial_gate_kernel(%arg0: i32, %arg1: memref<1x96x32xf32, #tpu.memory_space<vmem>>, %arg2: memref<1x1x32xf32, #tpu.memory_space<vmem>>, %arg3: memref<1x96x32xf32, #tpu.memory_space<vmem>>) attributes {dimension_semantics = [#tpu.dimension_semantics<parallel>], iteration_bounds = array<i64: 2>, scalar_prefetch = 0 : i64, scratch_operands = 0 : i64, tpu.core_type = #tpu.core_type<tc>, window_params = [{transform_indices = @transform_0, window_bounds = array<i64: 1, 96, 32>}, {transform_indices = @transform_1, window_bounds = array<i64: 1, 1, 32>}, {transform_indices = @transform_2, window_bounds = array<i64: 1, 96, 32>}]} {
    %c0 = arith.constant 0 : index
    %c0_0 = arith.constant 0 : index
    %c0_1 = arith.constant 0 : index
    %0 = vector.load %arg1[%c0, %c0_0, %c0_1] : memref<1x96x32xf32, #tpu.memory_space<vmem>>, vector<1x96x32xf32>
    %1 = vector.shape_cast %0 : vector<1x96x32xf32> to vector<96x32xf32>
    %c0_2 = arith.constant 0 : index
    %c0_3 = arith.constant 0 : index
    %c0_4 = arith.constant 0 : index
    %2 = vector.load %arg2[%c0_2, %c0_3, %c0_4] : memref<1x1x32xf32, #tpu.memory_space<vmem>>, vector<1x1x32xf32>
    %3 = vector.shape_cast %2 : vector<1x1x32xf32> to vector<1x32xf32>
    %cst = arith.constant 0.000000e+00 : f32
    %4 = vector.broadcast %cst : f32 to vector<1x32xf32>
    %5 = arith.subf %4, %3 : vector<1x32xf32>
    %6 = math.exp %5 : vector<1x32xf32>
    %cst_5 = arith.constant 1.000000e+00 : f32
    %7 = vector.broadcast %cst_5 : f32 to vector<1x32xf32>
    %8 = arith.addf %7, %6 : vector<1x32xf32>
    %9 = tpu.reciprocal %8 {approx = true} : vector<1x32xf32> -> vector<1x32xf32>
    %10 = arith.mulf %8, %9 : vector<1x32xf32>
    %cst_6 = arith.constant 2.000000e+00 : f32
    %11 = vector.broadcast %cst_6 : f32 to vector<1x32xf32>
    %12 = arith.subf %11, %10 : vector<1x32xf32>
    %13 = arith.mulf %9, %12 : vector<1x32xf32>
    %14 = vector.broadcast %13 : vector<1x32xf32> to vector<96x32xf32>
    %15 = arith.mulf %1, %14 : vector<96x32xf32>
    %c0_7 = arith.constant 0 : index
    %c0_8 = arith.constant 0 : index
    %c0_9 = arith.constant 0 : index
    %16 = vector.load %arg3[%c0_7, %c0_8, %c0_9] : memref<1x96x32xf32, #tpu.memory_space<vmem>>, vector<1x96x32xf32>
    %17 = vector.shape_cast %16 : vector<1x96x32xf32> to vector<96x32xf32>
    %18 = vector.shape_cast %15 : vector<96x32xf32> to vector<1x96x32xf32>
    tpu.vector_store %arg3[%c0_7, %c0_8, %c0_9], %18 {strides = array<i32>} : memref<1x96x32xf32, #tpu.memory_space<vmem>>, vector<1x96x32xf32>,
    return
  }
  func.func @transform_0(%arg0: i32) -> (i32, i32, i32) {
    %c0_i32 = arith.constant 0 : i32
    %c0_i32_0 = arith.constant 0 : i32
    %c0_i32_1 = arith.constant 0 : i32
    return %arg0, %c0_i32, %c0_i32_0 : i32, i32, i32
  }
  func.func @transform_1(%arg0: i32) -> (i32, i32, i32) {
    %c0_i32 = arith.constant 0 : i32
    %c0_i32_0 = arith.constant 0 : i32
    %c0_i32_1 = arith.constant 0 : i32
    return %arg0, %c0_i32, %c0_i32_0 : i32, i32, i32
  }
  func.func @transform_2(%arg0: i32) -> (i32, i32, i32) {
    %c0_i32 = arith.constant 0 : i32
    %c0_i32_0 = arith.constant 0 : i32
    %c0_i32_1 = arith.constant 0 : i32
    return %arg0, %c0_i32, %c0_i32_0 : i32, i32, i32
  }
}

module attributes {stable_mosaic.version = 11 : i64} {
  func.func @_pw_cbam_channel_kernel(%arg0: i32, %arg1: memref<1x96x4xf32, #tpu.memory_space<vmem>>, %arg2: memref<192x96xf32, #tpu.memory_space<vmem>>, %arg3: memref<48x192xf32, #tpu.memory_space<vmem>>, %arg4: memref<192x48xf32, #tpu.memory_space<vmem>>, %arg5: memref<1x192x4xf32, #tpu.memory_space<vmem>>, %arg6: memref<1x1x4xf32, #tpu.memory_space<vmem>>, %arg7: memref<1x1x4xf32, #tpu.memory_space<vmem>>) attributes {dimension_semantics = [#tpu.dimension_semantics<parallel>], iteration_bounds = array<i64: 2>, scalar_prefetch = 0 : i64, scratch_operands = 0 : i64, tpu.core_type = #tpu.core_type<tc>, window_params = [{transform_indices = @transform_0, window_bounds = array<i64: 1, 96, 4>}, {pipeline_mode = #tpu.pipeline_mode<synchronous>, transform_indices = @transform_1, window_bounds = array<i64: 192, 96>}, {pipeline_mode = #tpu.pipeline_mode<synchronous>, transform_indices = @transform_2, window_bounds = array<i64: 48, 192>}, {pipeline_mode = #tpu.pipeline_mode<synchronous>, transform_indices = @transform_3, window_bounds = array<i64: 192, 48>}, {transform_indices = @transform_4, window_bounds = array<i64: 1, 192, 4>}, {transform_indices = @transform_5, window_bounds = array<i64: 1, 1, 4>}, {transform_indices = @transform_6, window_bounds = array<i64: 1, 1, 4>}]} {
    %c0 = arith.constant 0 : index
    %c0_0 = arith.constant 0 : index
    %c0_1 = arith.constant 0 : index
    %0 = vector.load %arg1[%c0, %c0_0, %c0_1] : memref<1x96x4xf32, #tpu.memory_space<vmem>>, vector<1x96x4xf32>
    %1 = vector.shape_cast %0 : vector<1x96x4xf32> to vector<96x4xf32>
    %c0_2 = arith.constant 0 : index
    %c0_3 = arith.constant 0 : index
    %2 = vector.load %arg2[%c0_2, %c0_3] : memref<192x96xf32, #tpu.memory_space<vmem>>, vector<192x96xf32>
    %cst = arith.constant dense<0.000000e+00> : vector<192x4xf32>
    %3 = tpu.matmul %2, %1, %cst {dimension_numbers = #tpu.dot_dimension_numbers<[1], [0], [0], [1], [0, 0, 1, 1], [], []>} : vector<192x96xf32>, vector<96x4xf32>, vector<192x4xf32> -> vector<192x4xf32>
    %cst_4 = arith.constant dense<0.000000e+00> : vector<192xf32>
    %4 = vector.multi_reduction <add>, %3, %cst_4 [1] : vector<192x4xf32> to vector<192xf32>
    %5 = vector.shape_cast %4 : vector<192xf32> to vector<192x1xf32>
    %cst_5 = arith.constant 2.500000e-01 : f32
    %6 = vector.broadcast %cst_5 : f32 to vector<192x1xf32>
    %7 = arith.mulf %5, %6 : vector<192x1xf32>
    %c0_6 = arith.constant 0 : index
    %c0_7 = arith.constant 0 : index
    %8 = vector.load %arg3[%c0_6, %c0_7] : memref<48x192xf32, #tpu.memory_space<vmem>>, vector<48x192xf32>
    %cst_8 = arith.constant dense<0.000000e+00> : vector<48x1xf32>
    %9 = tpu.matmul %8, %7, %cst_8 {dimension_numbers = #tpu.dot_dimension_numbers<[1], [0], [0], [1], [0, 0, 1, 1], [], []>} : vector<48x192xf32>, vector<192x1xf32>, vector<48x1xf32> -> vector<48x1xf32>
    %cst_9 = arith.constant 0.000000e+00 : f32
    %10 = vector.broadcast %cst_9 : f32 to vector<48x1xf32>
    %11 = arith.maximumf %9, %10 : vector<48x1xf32>
    %c0_10 = arith.constant 0 : index
    %c0_11 = arith.constant 0 : index
    %12 = vector.load %arg4[%c0_10, %c0_11] : memref<192x48xf32, #tpu.memory_space<vmem>>, vector<192x48xf32>
    %cst_12 = arith.constant dense<0.000000e+00> : vector<192x1xf32>
    %13 = tpu.matmul %12, %11, %cst_12 {dimension_numbers = #tpu.dot_dimension_numbers<[1], [0], [0], [1], [0, 0, 1, 1], [], []>} : vector<192x48xf32>, vector<48x1xf32>, vector<192x1xf32> -> vector<192x1xf32>
    %cst_13 = arith.constant 0.000000e+00 : f32
    %14 = vector.broadcast %cst_13 : f32 to vector<192x1xf32>
    %15 = arith.subf %14, %13 : vector<192x1xf32>
    %16 = math.exp %15 : vector<192x1xf32>
    %cst_14 = arith.constant 1.000000e+00 : f32
    %17 = vector.broadcast %cst_14 : f32 to vector<192x1xf32>
    %18 = arith.addf %17, %16 : vector<192x1xf32>
    %19 = tpu.reciprocal %18 {approx = true} : vector<192x1xf32> -> vector<192x1xf32>
    %20 = arith.mulf %18, %19 : vector<192x1xf32>
    %cst_15 = arith.constant 2.000000e+00 : f32
    %21 = vector.broadcast %cst_15 : f32 to vector<192x1xf32>
    %22 = arith.subf %21, %20 : vector<192x1xf32>
    %23 = arith.mulf %19, %22 : vector<192x1xf32>
    %24 = vector.broadcast %23 : vector<192x1xf32> to vector<192x4xf32>
    %25 = arith.mulf %3, %24 : vector<192x4xf32>
    %cst_16 = arith.constant dense<0.000000e+00> : vector<4xf32>
    %26 = vector.multi_reduction <add>, %25, %cst_16 [0] : vector<192x4xf32> to vector<4xf32>
    %27 = vector.shape_cast %26 : vector<4xf32> to vector<1x4xf32>
    %cst_17 = arith.constant 1.920000e+02 : f32
    %28 = vector.broadcast %cst_17 : f32 to vector<1x4xf32>
    %29 = arith.divf %27, %28 : vector<1x4xf32>
    %cst_18 = arith.constant dense<0xFF800000> : vector<4xf32>
    %30 = vector.multi_reduction <maximumf>, %25, %cst_18 [0] : vector<192x4xf32> to vector<4xf32>
    %31 = vector.shape_cast %30 : vector<4xf32> to vector<1x4xf32>
    %c0_19 = arith.constant 0 : index
    %c0_20 = arith.constant 0 : index
    %c0_21 = arith.constant 0 : index
    %32 = vector.load %arg5[%c0_19, %c0_20, %c0_21] : memref<1x192x4xf32, #tpu.memory_space<vmem>>, vector<1x192x4xf32>
    %33 = vector.shape_cast %32 : vector<1x192x4xf32> to vector<192x4xf32>
    %34 = vector.shape_cast %25 : vector<192x4xf32> to vector<1x192x4xf32>
    tpu.vector_store %arg5[%c0_19, %c0_20, %c0_21], %34 {strides = array<i32>} : memref<1x192x4xf32, #tpu.memory_space<vmem>>, vector<1x192x4xf32>,
    %c0_22 = arith.constant 0 : index
    %c0_23 = arith.constant 0 : index
    %c0_24 = arith.constant 0 : index
    %35 = vector.load %arg6[%c0_22, %c0_23, %c0_24] : memref<1x1x4xf32, #tpu.memory_space<vmem>>, vector<1x1x4xf32>
    %36 = vector.shape_cast %35 : vector<1x1x4xf32> to vector<1x4xf32>
    %37 = vector.shape_cast %29 : vector<1x4xf32> to vector<1x1x4xf32>
    tpu.vector_store %arg6[%c0_22, %c0_23, %c0_24], %37 {strides = array<i32>} : memref<1x1x4xf32, #tpu.memory_space<vmem>>, vector<1x1x4xf32>,
    %c0_25 = arith.constant 0 : index
    %c0_26 = arith.constant 0 : index
    %c0_27 = arith.constant 0 : index
    %38 = vector.load %arg7[%c0_25, %c0_26, %c0_27] : memref<1x1x4xf32, #tpu.memory_space<vmem>>, vector<1x1x4xf32>
    %39 = vector.shape_cast %38 : vector<1x1x4xf32> to vector<1x4xf32>
    %40 = vector.shape_cast %31 : vector<1x4xf32> to vector<1x1x4xf32>
    tpu.vector_store %arg7[%c0_25, %c0_26, %c0_27], %40 {strides = array<i32>} : memref<1x1x4xf32, #tpu.memory_space<vmem>>, vector<1x1x4xf32>,
    return
  }
  func.func @transform_0(%arg0: i32) -> (i32, i32, i32) {
    %c0_i32 = arith.constant 0 : i32
    %c0_i32_0 = arith.constant 0 : i32
    %c0_i32_1 = arith.constant 0 : i32
    return %arg0, %c0_i32, %c0_i32_0 : i32, i32, i32
  }
  func.func @transform_1(%arg0: i32) -> (i32, i32) {
    %c0_i32 = arith.constant 0 : i32
    %c0_i32_0 = arith.constant 0 : i32
    %c0_i32_1 = arith.constant 0 : i32
    return %c0_i32, %c0_i32_0 : i32, i32
  }
  func.func @transform_2(%arg0: i32) -> (i32, i32) {
    %c0_i32 = arith.constant 0 : i32
    %c0_i32_0 = arith.constant 0 : i32
    %c0_i32_1 = arith.constant 0 : i32
    return %c0_i32, %c0_i32_0 : i32, i32
  }
  func.func @transform_3(%arg0: i32) -> (i32, i32) {
    %c0_i32 = arith.constant 0 : i32
    %c0_i32_0 = arith.constant 0 : i32
    %c0_i32_1 = arith.constant 0 : i32
    return %c0_i32, %c0_i32_0 : i32, i32
  }
  func.func @transform_4(%arg0: i32) -> (i32, i32, i32) {
    %c0_i32 = arith.constant 0 : i32
    %c0_i32_0 = arith.constant 0 : i32
    %c0_i32_1 = arith.constant 0 : i32
    return %arg0, %c0_i32, %c0_i32_0 : i32, i32, i32
  }
  func.func @transform_5(%arg0: i32) -> (i32, i32, i32) {
    %c0_i32 = arith.constant 0 : i32
    %c0_i32_0 = arith.constant 0 : i32
    %c0_i32_1 = arith.constant 0 : i32
    return %arg0, %c0_i32, %c0_i32_0 : i32, i32, i32
  }
  func.func @transform_6(%arg0: i32) -> (i32, i32, i32) {
    %c0_i32 = arith.constant 0 : i32
    %c0_i32_0 = arith.constant 0 : i32
    %c0_i32_1 = arith.constant 0 : i32
    return %arg0, %c0_i32, %c0_i32_0 : i32, i32, i32
  }
}

module attributes {stable_mosaic.version = 11 : i64} {
  func.func @_spatial_gate_gap_kernel(%arg0: i32, %arg1: memref<1x192x4xf32, #tpu.memory_space<vmem>>, %arg2: memref<1x1x4xf32, #tpu.memory_space<vmem>>, %arg3: memref<1x192x1xf32, #tpu.memory_space<vmem>>) attributes {dimension_semantics = [#tpu.dimension_semantics<parallel>], iteration_bounds = array<i64: 2>, scalar_prefetch = 0 : i64, scratch_operands = 0 : i64, tpu.core_type = #tpu.core_type<tc>, window_params = [{transform_indices = @transform_0, window_bounds = array<i64: 1, 192, 4>}, {transform_indices = @transform_1, window_bounds = array<i64: 1, 1, 4>}, {transform_indices = @transform_2, window_bounds = array<i64: 1, 192, 1>}]} {
    %c0 = arith.constant 0 : index
    %c0_0 = arith.constant 0 : index
    %c0_1 = arith.constant 0 : index
    %0 = vector.load %arg1[%c0, %c0_0, %c0_1] : memref<1x192x4xf32, #tpu.memory_space<vmem>>, vector<1x192x4xf32>
    %1 = vector.shape_cast %0 : vector<1x192x4xf32> to vector<192x4xf32>
    %c0_2 = arith.constant 0 : index
    %c0_3 = arith.constant 0 : index
    %c0_4 = arith.constant 0 : index
    %2 = vector.load %arg2[%c0_2, %c0_3, %c0_4] : memref<1x1x4xf32, #tpu.memory_space<vmem>>, vector<1x1x4xf32>
    %3 = vector.shape_cast %2 : vector<1x1x4xf32> to vector<1x4xf32>
    %cst = arith.constant 0.000000e+00 : f32
    %4 = vector.broadcast %cst : f32 to vector<1x4xf32>
    %5 = arith.subf %4, %3 : vector<1x4xf32>
    %6 = math.exp %5 : vector<1x4xf32>
    %cst_5 = arith.constant 1.000000e+00 : f32
    %7 = vector.broadcast %cst_5 : f32 to vector<1x4xf32>
    %8 = arith.addf %7, %6 : vector<1x4xf32>
    %9 = tpu.reciprocal %8 {approx = true} : vector<1x4xf32> -> vector<1x4xf32>
    %10 = arith.mulf %8, %9 : vector<1x4xf32>
    %cst_6 = arith.constant 2.000000e+00 : f32
    %11 = vector.broadcast %cst_6 : f32 to vector<1x4xf32>
    %12 = arith.subf %11, %10 : vector<1x4xf32>
    %13 = arith.mulf %9, %12 : vector<1x4xf32>
    %14 = vector.broadcast %13 : vector<1x4xf32> to vector<192x4xf32>
    %15 = arith.mulf %1, %14 : vector<192x4xf32>
    %cst_7 = arith.constant dense<0.000000e+00> : vector<192xf32>
    %16 = vector.multi_reduction <add>, %15, %cst_7 [1] : vector<192x4xf32> to vector<192xf32>
    %17 = vector.shape_cast %16 : vector<192xf32> to vector<192x1xf32>
    %cst_8 = arith.constant 2.500000e-01 : f32
    %18 = vector.broadcast %cst_8 : f32 to vector<192x1xf32>
    %19 = arith.mulf %17, %18 : vector<192x1xf32>
    %c0_9 = arith.constant 0 : index
    %c0_10 = arith.constant 0 : index
    %c0_11 = arith.constant 0 : index
    %20 = vector.load %arg3[%c0_9, %c0_10, %c0_11] : memref<1x192x1xf32, #tpu.memory_space<vmem>>, vector<1x192x1xf32>
    %21 = vector.shape_cast %20 : vector<1x192x1xf32> to vector<192x1xf32>
    %22 = vector.shape_cast %19 : vector<192x1xf32> to vector<1x192x1xf32>
    tpu.vector_store %arg3[%c0_9, %c0_10, %c0_11], %22 {strides = array<i32>} : memref<1x192x1xf32, #tpu.memory_space<vmem>>, vector<1x192x1xf32>,
    return
  }
  func.func @transform_0(%arg0: i32) -> (i32, i32, i32) {
    %c0_i32 = arith.constant 0 : i32
    %c0_i32_0 = arith.constant 0 : i32
    %c0_i32_1 = arith.constant 0 : i32
    return %arg0, %c0_i32, %c0_i32_0 : i32, i32, i32
  }
  func.func @transform_1(%arg0: i32) -> (i32, i32, i32) {
    %c0_i32 = arith.constant 0 : i32
    %c0_i32_0 = arith.constant 0 : i32
    %c0_i32_1 = arith.constant 0 : i32
    return %arg0, %c0_i32, %c0_i32_0 : i32, i32, i32
  }
  func.func @transform_2(%arg0: i32) -> (i32, i32, i32) {
    %c0_i32 = arith.constant 0 : i32
    %c0_i32_0 = arith.constant 0 : i32
    %c0_i32_1 = arith.constant 0 : i32
    return %arg0, %c0_i32, %c0_i32_0 : i32, i32, i32
  }
}

</mosaic_0001>

<llo_original>
// kernel: forward_pallas.8
$region0: #{forward_pallas.8}
  #allocation0 [shape = 'u32[]', space=smem, size = 0x4, offset = 0x4, fixed_abs, tag = 'smem constant byte address 0x4 - core index']
  #allocation1 [shape = 'u32[144,128]{1,0:T(1,128)}', space=vmem, size = 0x12000, scoped, tag = 'internal scratch']
  %s0 = inlined_call_operand.vmem [shape: f32[2,64,4096], index: 0, kind: input, shape index: {}]
  %s1 = inlined_call_operand.vmem [shape: f32[64,1], index: 1, kind: input, shape index: {}]
  %s2 = inlined_call_operand.vmem [shape: f32[64,1], index: 2, kind: input, shape index: {}]
  %s3 = inlined_call_operand.vmem [shape: f32[16,64], index: 3, kind: input, shape index: {}]
  %s4 = inlined_call_operand.vmem [shape: f32[64,16], index: 4, kind: input, shape index: {}]
  %s5 = inlined_call_operand.vmem [shape: f32[2,64,4096], index: 5, kind: output, shape index: {0}]
  %s6 = inlined_call_operand.vmem [shape: f32[2,1,4096], index: 6, kind: output, shape index: {1}]
  %s7 = inlined_call_operand.vmem [shape: f32[2,1,4096], index: 7, kind: output, shape index: {2}]
  %8 = xla_tuple %s5, %s6, %s7
  %s9 = sld [smem:[#allocation0]]
  $region69: #{forward_pallas.8} parent=0
    _
  %s11 = ssub.s32 1, %s9
  %s12 = scalar_select 0, %s11, %s9
  loop: start=0, step=1, limit=4
  $region2: #{forward_pallas.8} parent=0 // loop_pre_header
    _
  $region3: #{forward_pallas.8} parent=0 // loop_header
    %s14 = sphi 0, %s18
    %p15 = scmp.ge.s32.totalorder %s14, 4
    %s24 = sphi 0, %s26
    %s27 = sphi 0, %s24
    %s28 = sphi 0, %s27
    %s44 = sphi 0, %s28
    %s48 = sphi 0, %s48
    %s50 = sphi 0, %s48
    %s51 = sphi 0, %s50
    %s65 = sphi 0, %s51
    %s69 = sphi 0, %s69
    %s71 = sphi 0, %s69
    %s72 = sphi 0, %s71
    %s86 = sphi 0, %s72
    %s90 = sphi 0, %s90
    %s92 = sphi 0, %s90
    %s93 = sphi 0, %s92
    %s107 = sphi 0, %s93
    %s111 = sphi 0, %s111
    %s113 = sphi 0, %s111
    %s114 = sphi 0, %s113
    %s128 = sphi 0, %s114
    %s134 = sphi 0, %s136
    %s137 = sphi 0, %s134
    %s138 = sphi 0, %s137
    %s154 = sphi 0, %s138
    %s160 = sphi 0, %s162
    %s163 = sphi 0, %s160
    %s164 = sphi 0, %s163
    %s180 = sphi 0, %s164
    %s186 = sphi 0, %s188
    %s189 = sphi 0, %s186
    %s190 = sphi 0, %s189
    %s206 = sphi 0, %s190
  $region4: #{forward_pallas.8} parent=0 // loop_header_branch
    %17 = sbr.rel (%p15) target = $region8
  $region5: #{forward_pallas.8} parent=0 // loop_body
    %s19 = ssub.s32 %s14, 1
    %s20 = ssub.s32 %s14, 2
    %s21 = sadd.s32 %s14, 1
    %s22 = ssub.s32 %s14, %s21
    %p23 = scmp.eq.s32.totalorder %s22, 0
    %s25 = sadd.s32 %s24, 1
    %s26 = scalar_select %p23, %s24, %s25
    %p29 = pneg %p23
    %p30 = scmp.eq.s32.totalorder %s14, 1
    %p31 = por %p29, %p30
    %p32 = scmp.ne.s32.totalorder %s24, %s27
    %p33 = scmp.eq.s32.totalorder %s14, 0
    %p34 = por %p32, %p33
    %p35 = scmp.ne.s32.totalorder %s24, %s27
    %p36 = scmp.eq.s32.totalorder %s19, 1
    %p37 = por %p35, %p36
    %p38 = scmp.ne.s32.totalorder %s27, %s28
    %p39 = scmp.eq.s32.totalorder %s19, 0
    %p40 = por %p38, %p39
    %p41 = scmp.ne.s32.totalorder %s27, %s28
    %p42 = scmp.eq.s32.totalorder %s20, 1
    %p43 = por %p41, %p42
    %p45 = scmp.ne.s32.totalorder %s28, %s44
    %p46 = scmp.eq.s32.totalorder %s20, 0
    %p47 = por %p45, %p46
    %s49 = sadd.s32 %s48, 1
    %p52 = scmp.eq.s32.totalorder %s14, 1
    %p53 = scmp.ne.s32.totalorder %s48, %s50
    %p54 = scmp.eq.s32.totalorder %s14, 0
    %p55 = por %p53, %p54
    %p56 = scmp.ne.s32.totalorder %s48, %s50
    %p57 = scmp.eq.s32.totalorder %s19, 1
    %p58 = por %p56, %p57
    %p59 = scmp.ne.s32.totalorder %s50, %s51
    %p60 = scmp.eq.s32.totalorder %s19, 0
    %p61 = por %p59, %p60
    %p62 = scmp.ne.s32.totalorder %s50, %s51
    %p63 = scmp.eq.s32.totalorder %s20, 1
    %p64 = por %p62, %p63
    %p66 = scmp.ne.s32.totalorder %s51, %s65
    %p67 = scmp.eq.s32.totalorder %s20, 0
    %p68 = por %p66, %p67
    %s70 = sadd.s32 %s69, 1
    %p73 = scmp.eq.s32.totalorder %s14, 1
    %p74 = scmp.ne.s32.totalorder %s69, %s71
    %p75 = scmp.eq.s32.totalorder %s14, 0
    %p76 = por %p74, %p75
    %p77 = scmp.ne.s32.totalorder %s69, %s71
    %p78 = scmp.eq.s32.totalorder %s19, 1
    %p79 = por %p77, %p78
    %p80 = scmp.ne.s32.totalorder %s71, %s72
    %p81 = scmp.eq.s32.totalorder %s19, 0
    %p82 = por %p80, %p81
    %p83 = scmp.ne.s32.totalorder %s71, %s72
    %p84 = scmp.eq.s32.totalorder %s20, 1
    %p85 = por %p83, %p84
    %p87 = scmp.ne.s32.totalorder %s72, %s86
    %p88 = scmp.eq.s32.totalorder %s20, 0
    %p89 = por %p87, %p88
    %s91 = sadd.s32 %s90, 1
    %p94 = scmp.eq.s32.totalorder %s14, 1
    %p95 = scmp.ne.s32.totalorder %s90, %s92
    %p96 = scmp.eq.s32.totalorder %s14, 0
    %p97 = por %p95, %p96
    %p98 = scmp.ne.s32.totalorder %s90, %s92
    %p99 = scmp.eq.s32.totalorder %s19, 1
    %p100 = por %p98, %p99
    %p101 = scmp.ne.s32.totalorder %s92, %s93
    %p102 = scmp.eq.s32.totalorder %s19, 0
    %p103 = por %p101, %p102
    %p104 = scmp.ne.s32.totalorder %s92, %s93
    %p105 = scmp.eq.s32.totalorder %s20, 1
    %p106 = por %p104, %p105
    %p108 = scmp.ne.s32.totalorder %s93, %s107
    %p109 = scmp.eq.s32.totalorder %s20, 0
    %p110 = por %p108, %p109
    %s112 = sadd.s32 %s111, 1
    %p115 = scmp.eq.s32.totalorder %s14, 1
    %p116 = scmp.ne.s32.totalorder %s111, %s113
    %p117 = scmp.eq.s32.totalorder %s14, 0
    %p118 = por %p116, %p117
    %p119 = scmp.ne.s32.totalorder %s111, %s113
    %p120 = scmp.eq.s32.totalorder %s19, 1
    %p121 = por %p119, %p120
    %p122 = scmp.ne.s32.totalorder %s113, %s114
    %p123 = scmp.eq.s32.totalorder %s19, 0
    %p124 = por %p122, %p123
    %p125 = scmp.ne.s32.totalorder %s113, %s114
    %p126 = scmp.eq.s32.totalorder %s20, 1
    %p127 = por %p125, %p126
    %p129 = scmp.ne.s32.totalorder %s114, %s128
    %p130 = scmp.eq.s32.totalorder %s20, 0
    %p131 = por %p129, %p130
    %s132 = ssub.s32 %s14, %s21
    %p133 = scmp.eq.s32.totalorder %s132, 0
    %s135 = sadd.s32 %s134, 1
    %s136 = scalar_select %p133, %s134, %s135
    %p139 = pneg %p133
    %p140 = scmp.eq.s32.totalorder %s14, 1
    %p141 = por %p139, %p140
    %p142 = scmp.ne.s32.totalorder %s134, %s137
    %p143 = scmp.eq.s32.totalorder %s14, 0
    %p144 = por %p142, %p143
    %p145 = scmp.ne.s32.totalorder %s134, %s137
    %p146 = scmp.eq.s32.totalorder %s19, 1
    %p147 = por %p145, %p146
    %p148 = scmp.ne.s32.totalorder %s137, %s138
    %p149 = scmp.eq.s32.totalorder %s19, 0
    %p150 = por %p148, %p149
    %p151 = scmp.ne.s32.totalorder %s137, %s138
    %p152 = scmp.eq.s32.totalorder %s20, 1
    %p153 = por %p151, %p152
    %p155 = scmp.ne.s32.totalorder %s138, %s154
    %p156 = scmp.eq.s32.totalorder %s20, 0
    %p157 = por %p155, %p156
    %s158 = ssub.s32 %s14, %s21
    %p159 = scmp.eq.s32.totalorder %s158, 0
    %s161 = sadd.s32 %s160, 1
    %s162 = scalar_select %p159, %s160, %s161
    %p165 = pneg %p159
    %p166 = scmp.eq.s32.totalorder %s14, 1
    %p167 = por %p165, %p166
    %p168 = scmp.ne.s32.totalorder %s160, %s163
    %p169 = scmp.eq.s32.totalorder %s14, 0
    %p170 = por %p168, %p169
    %p171 = scmp.ne.s32.totalorder %s160, %s163
    %p172 = scmp.eq.s32.totalorder %s19, 1
    %p173 = por %p171, %p172
    %p174 = scmp.ne.s32.totalorder %s163, %s164
    %p175 = scmp.eq.s32.totalorder %s19, 0
    %p176 = por %p174, %p175
    %p177 = scmp.ne.s32.totalorder %s163, %s164
    %p178 = scmp.eq.s32.totalorder %s20, 1
    %p179 = por %p177, %p178
    %p181 = scmp.ne.s32.totalorder %s164, %s180
    %p182 = scmp.eq.s32.totalorder %s20, 0
    %p183 = por %p181, %p182
    %s184 = ssub.s32 %s14, %s21
    %p185 = scmp.eq.s32.totalorder %s184, 0
    %s187 = sadd.s32 %s186, 1
    %s188 = scalar_select %p185, %s186, %s187
    %p191 = pneg %p185
    %p192 = scmp.eq.s32.totalorder %s14, 1
    %p193 = por %p191, %p192
    %p194 = scmp.ne.s32.totalorder %s186, %s189
    %p195 = scmp.eq.s32.totalorder %s14, 0
    %p196 = por %p194, %p195
    %p197 = scmp.ne.s32.totalorder %s186, %s189
    %p198 = scmp.eq.s32.totalorder %s19, 1
    %p199 = por %p197, %p198
    %p200 = scmp.ne.s32.totalorder %s189, %s190
    %p201 = scmp.eq.s32.totalorder %s19, 0
    %p202 = por %p200, %p201
    %p203 = scmp.ne.s32.totalorder %s189, %s190
    %p204 = scmp.eq.s32.totalorder %s20, 1
    %p205 = por %p203, %p204
    %p207 = scmp.ne.s32.totalorder %s190, %s206
    %p208 = scmp.eq.s32.totalorder %s20, 0
    %p209 = por %p207, %p208
    %p210 = scmp.le.s32.totalorder 1, %s14
    %p211 = scmp.lt.s32.totalorder %s14, 3
    %p212 = pnand %p210, %p211
    %p213 = pneg %p212
    // Predicated region
    $region9: #{forward_pallas.8} parent=5 // pred_check
      _
    $region10: #{forward_pallas.8} parent=5 // pred_check_branch
      %215 = sbr.rel (%p212) target = $region12
    $region11: #{forward_pallas.8} parent=5 // pred_region
      %s216 = ssub.s32 %s14, 1
      // Predicated region
      $region13: #{forward_pallas.8} parent=11 // pred_check
        %p217 = pneg %p61
      $region14: #{forward_pallas.8} parent=11 // pred_check_branch
        %219 = sbr.rel (%p217) target = $region16
      $region15: #{forward_pallas.8} parent=11 // pred_region
        _
      $region16: #{forward_pallas.8} parent=11 // pred_fallthru
        _
      // Predicated region
      $region17: #{forward_pallas.8} parent=11 // pred_check
        %p220 = pneg %p82
      $region18: #{forward_pallas.8} parent=11 // pred_check_branch
        %222 = sbr.rel (%p220) target = $region20
      $region19: #{forward_pallas.8} parent=11 // pred_region
        _
      $region20: #{forward_pallas.8} parent=11 // pred_fallthru
        _
      // Predicated region
      $region21: #{forward_pallas.8} parent=11 // pred_check
        %p223 = pneg %p103
      $region22: #{forward_pallas.8} parent=11 // pred_check_branch
        %225 = sbr.rel (%p223) target = $region24
      $region23: #{forward_pallas.8} parent=11 // pred_region
        _
      $region24: #{forward_pallas.8} parent=11 // pred_fallthru
        _
      // Predicated region
      $region25: #{forward_pallas.8} parent=11 // pred_check
        %p226 = pneg %p124
      $region26: #{forward_pallas.8} parent=11 // pred_check_branch
        %228 = sbr.rel (%p226) target = $region28
      $region27: #{forward_pallas.8} parent=11 // pred_region
        _
      $region28: #{forward_pallas.8} parent=11 // pred_fallthru
        _
    $region12: #{forward_pallas.8} parent=5 // pred_fallthru
      _
    %p229 = scmp.lt.s32.totalorder %s14, 2
    // Predicated region
    $region29: #{forward_pallas.8} parent=5 // pred_check
      %p230 = pneg %p229
    $region30: #{forward_pallas.8} parent=5 // pred_check_branch
      %232 = sbr.rel (%p230) target = $region32
    $region31: #{forward_pallas.8} parent=5 // pred_region
      // Predicated region
      $region33: #{forward_pallas.8} parent=31 // pred_check
        %p233 = pneg %p34
      $region34: #{forward_pallas.8} parent=31 // pred_check_branch
        %235 = sbr.rel (%p233) target = $region36
      $region35: #{forward_pallas.8} parent=31 // pred_region
        %p236 = scmp.lt.s32.totalorder %s14, 1
        %s237 = scalar_select %p236, %s14, 1
        %s238 = smul.addr %s237, 256
        %s239 = smul.addr %s238, 8
        %s240 = scalar_lea.vmem %s0, %s239
      $region36: #{forward_pallas.8} parent=31 // pred_fallthru
        _
    $region32: #{forward_pallas.8} parent=5 // pred_fallthru
      _
    %p241 = scmp.le.s32.totalorder 1, %s14
    %p242 = scmp.lt.s32.totalorder %s14, 3
    %p243 = pnand %p241, %p242
    %p244 = pneg %p243
    // Predicated region
    $region37: #{forward_pallas.8} parent=5 // pred_check
      _
    $region38: #{forward_pallas.8} parent=5 // pred_check_branch
      %246 = sbr.rel (%p243) target = $region40
    $region39: #{forward_pallas.8} parent=5 // pred_region
      %s247 = ssub.s32 %s14, 1
      %p248 = scmp.lt.s32.totalorder %s19, 1
      %s249 = scalar_select %p248, %s19, 1
      %s250 = smul.addr %s249, 256
      %s251 = smul.addr %s250, 8
      %s252 = scalar_lea.vmem %s0, %s251
      %p253 = pneg %p40
      %p254 = pneg %p37
      %p255 = pneg %p61
      %p256 = pneg %p58
      %p257 = pneg %p82
      %p258 = pneg %p79
      %p259 = pneg %p103
      %p260 = pneg %p100
      %p261 = pneg %p124
      %p262 = pneg %p121
      %p263 = pneg %p150
      %p264 = pneg %p147
      %p265 = scmp.lt.s32.totalorder %s19, 1
      %s266 = scalar_select %p265, %s19, 1
      %s267 = smul.addr %s266, 256
      %s268 = smul.addr %s267, 8
      %s269 = scalar_lea.vmem %s5, %s268
      %p270 = pneg %p176
      %p271 = pneg %p173
      %p272 = scmp.lt.s32.totalorder %s19, 1
      %s273 = scalar_select %p272, %s19, 1
      %s274 = smul.addr %s273, 32
      %s275 = scalar_lea.vmem %s6, %s274
      %p276 = pneg %p202
      %p277 = pneg %p199
      %p278 = scmp.lt.s32.totalorder %s19, 1
      %s279 = scalar_select %p278, %s19, 1
      %s280 = smul.addr %s279, 32
      %s281 = scalar_lea.vmem %s7, %s280
      %p282 = scmp.lt.s32.totalorder %s19, 1
      %s283 = scalar_select %p282, %s19, 1
      %s284 = smul.addr %s283, 256
      %s285 = smul.addr %s284, 8
      %s286 = scalar_lea.vmem %s0, %s285
      %p287 = scmp.lt.s32.totalorder %s19, 1
      %s288 = scalar_select %p287, %s19, 1
      %s289 = smul.addr %s288, 256
      %s290 = smul.addr %s289, 8
      %s291 = scalar_lea.vmem %s5, %s290
      %p292 = scmp.lt.s32.totalorder %s19, 1
      %s293 = scalar_select %p292, %s19, 1
      %s294 = smul.addr %s293, 32
      %s295 = scalar_lea.vmem %s6, %s294
      %p296 = scmp.lt.s32.totalorder %s19, 1
      %s297 = scalar_select %p296, %s19, 1
      %s298 = smul.addr %s297, 32
      %s299 = scalar_lea.vmem %s7, %s298
      %v300 = vld [vmem:[%s286] sm:$0xff]
      %v301 = vld [vmem:[%s286 + $0x8] sm:$0xff]
      %v302 = vld [vmem:[%s286 + $0x10] sm:$0xff]
      %v303 = vld [vmem:[%s286 + $0x18] sm:$0xff]
      %v304 = vld [vmem:[%s286 + $0x20] sm:$0xff]
      %v305 = vld [vmem:[%s286 + $0x28] sm:$0xff]
      %v306 = vld [vmem:[%s286 + $0x30] sm:$0xff]
      %v307 = vld [vmem:[%s286 + $0x38] sm:$0xff]
      %v308 = vld [vmem:[%s286 + $0x40] sm:$0xff]
      %v309 = vld [vmem:[%s286 + $0x48] sm:$0xff]
      %v310 = vld [vmem:[%s286 + $0x50] sm:$0xff]
      %v311 = vld [vmem:[%s286 + $0x58] sm:$0xff]
      %v312 = vld [vmem:[%s286 + $0x60] sm:$0xff]
      %v313 = vld [vmem:[%s286 + $0x68] sm:$0xff]
      %v314 = vld [vmem:[%s286 + $0x70] sm:$0xff]
      %v315 = vld [vmem:[%s286 + $0x78] sm:$0xff]
      %v316 = vld [vmem:[%s286 + $0x80] sm:$0xff]
      %v317 = vld [vmem:[%s286 + $0x88] sm:$0xff]
      %v318 = vld [vmem:[%s286 + $0x90] sm:$0xff]
      %v319 = vld [vmem:[%s286 + $0x98] sm:$0xff]
      %v320 = vld [vmem:[%s286 + $0xa0] sm:$0xff]
      %v321 = vld [vmem:[%s286 + $0xa8] sm:$0xff]
      %v322 = vld [vmem:[%s286 + $0xb0] sm:$0xff]
      %v323 = vld [vmem:[%s286 + $0xb8] sm:$0xff]
      %v324 = vld [vmem:[%s286 + $0xc0] sm:$0xff]
      %v325 = vld [vmem:[%s286 + $0xc8] sm:$0xff]
      %v326 = vld [vmem:[%s286 + $0xd0] sm:$0xff]
      %v327 = vld [vmem:[%s286 + $0xd8] sm:$0xff]
      %v328 = vld [vmem:[%s286 + $0xe0] sm:$0xff]
      %v329 = vld [vmem:[%s286 + $0xe8] sm:$0xff]
      %v330 = vld [vmem:[%s286 + $0xf0] sm:$0xff]
      %v331 = vld [vmem:[%s286 + $0xf8] sm:$0xff]
      %v332 = vld [vmem:[%s286 + $0x100] sm:$0xff]
      %v333 = vld [vmem:[%s286 + $0x108] sm:$0xff]
      %v334 = vld [vmem:[%s286 + $0x110] sm:$0xff]
      %v335 = vld [vmem:[%s286 + $0x118] sm:$0xff]
      %v336 = vld [vmem:[%s286 + $0x120] sm:$0xff]
      %v337 = vld [vmem:[%s286 + $0x128] sm:$0xff]
      %v338 = vld [vmem:[%s286 + $0x130] sm:$0xff]
      %v339 = vld [vmem:[%s286 + $0x138] sm:$0xff]
      %v340 = vld [vmem:[%s286 + $0x140] sm:$0xff]
      %v341 = vld [vmem:[%s286 + $0x148] sm:$0xff]
      %v342 = vld [vmem:[%s286 + $0x150] sm:$0xff]
      %v343 = vld [vmem:[%s286 + $0x158] sm:$0xff]
      %v344 = vld [vmem:[%s286 + $0x160] sm:$0xff]
      %v345 = vld [vmem:[%s286 + $0x168] sm:$0xff]
      %v346 = vld [vmem:[%s286 + $0x170] sm:$0xff]
      %v347 = vld [vmem:[%s286 + $0x178] sm:$0xff]
      %v348 = vld [vmem:[%s286 + $0x180] sm:$0xff]
      %v349 = vld [vmem:[%s286 + $0x188] sm:$0xff]
      %v350 = vld [vmem:[%s286 + $0x190] sm:$0xff]
      %v351 = vld [vmem:[%s286 + $0x198] sm:$0xff]
      %v352 = vld [vmem:[%s286 + $0x1a0] sm:$0xff]
      %v353 = vld [vmem:[%s286 + $0x1a8] sm:$0xff]
      %v354 = vld [vmem:[%s286 + $0x1b0] sm:$0xff]
      %v355 = vld [vmem:[%s286 + $0x1b8] sm:$0xff]
      %v356 = vld [vmem:[%s286 + $0x1c0] sm:$0xff]
      %v357 = vld [vmem:[%s286 + $0x1c8] sm:$0xff]
      %v358 = vld [vmem:[%s286 + $0x1d0] sm:$0xff]
      %v359 = vld [vmem:[%s286 + $0x1d8] sm:$0xff]
      %v360 = vld [vmem:[%s286 + $0x1e0] sm:$0xff]
      %v361 = vld [vmem:[%s286 + $0x1e8] sm:$0xff]
      %v362 = vld [vmem:[%s286 + $0x1f0] sm:$0xff]
      %v363 = vld [vmem:[%s286 + $0x1f8] sm:$0xff]
      %v364 = vld [vmem:[%s286 + $0x200] sm:$0xff]
      %v365 = vld [vmem:[%s286 + $0x208] sm:$0xff]
      %v366 = vld [vmem:[%s286 + $0x210] sm:$0xff]
      %v367 = vld [vmem:[%s286 + $0x218] sm:$0xff]
      %v368 = vld [vmem:[%s286 + $0x220] sm:$0xff]
      %v369 = vld [vmem:[%s286 + $0x228] sm:$0xff]
      %v370 = vld [vmem:[%s286 + $0x230] sm:$0xff]
      %v371 = vld [vmem:[%s286 + $0x238] sm:$0xff]
      %v372 = vld [vmem:[%s286 + $0x240] sm:$0xff]
      %v373 = vld [vmem:[%s286 + $0x248] sm:$0xff]
      %v374 = vld [vmem:[%s286 + $0x250] sm:$0xff]
      %v375 = vld [vmem:[%s286 + $0x258] sm:$0xff]
      %v376 = vld [vmem:[%s286 + $0x260] sm:$0xff]
      %v377 = vld [vmem:[%s286 + $0x268] sm:$0xff]
      %v378 = vld [vmem:[%s286 + $0x270] sm:$0xff]
      %v379 = vld [vmem:[%s286 + $0x278] sm:$0xff]
      %v380 = vld [vmem:[%s286 + $0x280] sm:$0xff]
      %v381 = vld [vmem:[%s286 + $0x288] sm:$0xff]
      %v382 = vld [vmem:[%s286 + $0x290] sm:$0xff]
      %v383 = vld [vmem:[%s286 + $0x298] sm:$0xff]
      %v384 = vld [vmem:[%s286 + $0x2a0] sm:$0xff]
      %v385 = vld [vmem:[%s286 + $0x2a8] sm:$0xff]
      %v386 = vld [vmem:[%s286 + $0x2b0] sm:$0xff]
      %v387 = vld [vmem:[%s286 + $0x2b8] sm:$0xff]
      %v388 = vld [vmem:[%s286 + $0x2c0] sm:$0xff]
      %v389 = vld [vmem:[%s286 + $0x2c8] sm:$0xff]
      %v390 = vld [vmem:[%s286 + $0x2d0] sm:$0xff]
      %v391 = vld [vmem:[%s286 + $0x2d8] sm:$0xff]
      %v392 = vld [vmem:[%s286 + $0x2e0] sm:$0xff]
      %v393 = vld [vmem:[%s286 + $0x2e8] sm:$0xff]
      %v394 = vld [vmem:[%s286 + $0x2f0] sm:$0xff]
      %v395 = vld [vmem:[%s286 + $0x2f8] sm:$0xff]
      %v396 = vld [vmem:[%s286 + $0x300] sm:$0xff]
      %v397 = vld [vmem:[%s286 + $0x308] sm:$0xff]
      %v398 = vld [vmem:[%s286 + $0x310] sm:$0xff]
      %v399 = vld [vmem:[%s286 + $0x318] sm:$0xff]
      %v400 = vld [vmem:[%s286 + $0x320] sm:$0xff]
      %v401 = vld [vmem:[%s286 + $0x328] sm:$0xff]
      %v402 = vld [vmem:[%s286 + $0x330] sm:$0xff]
      %v403 = vld [vmem:[%s286 + $0x338] sm:$0xff]
      %v404 = vld [vmem:[%s286 + $0x340] sm:$0xff]
      %v405 = vld [vmem:[%s286 + $0x348] sm:$0xff]
      %v406 = vld [vmem:[%s286 + $0x350] sm:$0xff]
      %v407 = vld [vmem:[%s286 + $0x358] sm:$0xff]
      %v408 = vld [vmem:[%s286 + $0x360] sm:$0xff]
      %v409 = vld [vmem:[%s286 + $0x368] sm:$0xff]
      %v410 = vld [vmem:[%s286 + $0x370] sm:$0xff]
      %v411 = vld [vmem:[%s286 + $0x378] sm:$0xff]
      %v412 = vld [vmem:[%s286 + $0x380] sm:$0xff]
      %v413 = vld [vmem:[%s286 + $0x388] sm:$0xff]
      %v414 = vld [vmem:[%s286 + $0x390] sm:$0xff]
      %v415 = vld [vmem:[%s286 + $0x398] sm:$0xff]
      %v416 = vld [vmem:[%s286 + $0x3a0] sm:$0xff]
      %v417 = vld [vmem:[%s286 + $0x3a8] sm:$0xff]
      %v418 = vld [vmem:[%s286 + $0x3b0] sm:$0xff]
      %v419 = vld [vmem:[%s286 + $0x3b8] sm:$0xff]
      %v420 = vld [vmem:[%s286 + $0x3c0] sm:$0xff]
      %v421 = vld [vmem:[%s286 + $0x3c8] sm:$0xff]
      %v422 = vld [vmem:[%s286 + $0x3d0] sm:$0xff]
      %v423 = vld [vmem:[%s286 + $0x3d8] sm:$0xff]
      %v424 = vld [vmem:[%s286 + $0x3e0] sm:$0xff]
      %v425 = vld [vmem:[%s286 + $0x3e8] sm:$0xff]
      %v426 = vld [vmem:[%s286 + $0x3f0] sm:$0xff]
      %v427 = vld [vmem:[%s286 + $0x3f8] sm:$0xff]
      %v428 = vld [vmem:[%s286 + $0x400] sm:$0xff]
      %v429 = vld [vmem:[%s286 + $0x408] sm:$0xff]
      %v430 = vld [vmem:[%s286 + $0x410] sm:$0xff]
      %v431 = vld [vmem:[%s286 + $0x418] sm:$0xff]
      %v432 = vld [vmem:[%s286 + $0x420] sm:$0xff]
      %v433 = vld [vmem:[%s286 + $0x428] sm:$0xff]
      %v434 = vld [vmem:[%s286 + $0x430] sm:$0xff]
      %v435 = vld [vmem:[%s286 + $0x438] sm:$0xff]
      %v436 = vld [vmem:[%s286 + $0x440] sm:$0xff]
      %v437 = vld [vmem:[%s286 + $0x448] sm:$0xff]
      %v438 = vld [vmem:[%s286 + $0x450] sm:$0xff]
      %v439 = vld [vmem:[%s286 + $0x458] sm:$0xff]
      %v440 = vld [vmem:[%s286 + $0x460] sm:$0xff]
      %v441 = vld [vmem:[%s286 + $0x468] sm:$0xff]
      %v442 = vld [vmem:[%s286 + $0x470] sm:$0xff]
      %v443 = vld [vmem:[%s286 + $0x478] sm:$0xff]
      %v444 = vld [vmem:[%s286 + $0x480] sm:$0xff]
      %v445 = vld [vmem:[%s286 + $0x488] sm:$0xff]
      %v446 = vld [vmem:[%s286 + $0x490] sm:$0xff]
      %v447 = vld [vmem:[%s286 + $0x498] sm:$0xff]
      %v448 = vld [vmem:[%s286 + $0x4a0] sm:$0xff]
      %v449 = vld [vmem:[%s286 + $0x4a8] sm:$0xff]
      %v450 = vld [vmem:[%s286 + $0x4b0] sm:$0xff]
      %v451 = vld [vmem:[%s286 + $0x4b8] sm:$0xff]
      %v452 = vld [vmem:[%s286 + $0x4c0] sm:$0xff]
      %v453 = vld [vmem:[%s286 + $0x4c8] sm:$0xff]
      %v454 = vld [vmem:[%s286 + $0x4d0] sm:$0xff]
      %v455 = vld [vmem:[%s286 + $0x4d8] sm:$0xff]
      %v456 = vld [vmem:[%s286 + $0x4e0] sm:$0xff]
      %v457 = vld [vmem:[%s286 + $0x4e8] sm:$0xff]
      %v458 = vld [vmem:[%s286 + $0x4f0] sm:$0xff]
      %v459 = vld [vmem:[%s286 + $0x4f8] sm:$0xff]
      %v460 = vld [vmem:[%s286 + $0x500] sm:$0xff]
      %v461 = vld [vmem:[%s286 + $0x508] sm:$0xff]
      %v462 = vld [vmem:[%s286 + $0x510] sm:$0xff]
      %v463 = vld [vmem:[%s286 + $0x518] sm:$0xff]
      %v464 = vld [vmem:[%s286 + $0x520] sm:$0xff]
      %v465 = vld [vmem:[%s286 + $0x528] sm:$0xff]
      %v466 = vld [vmem:[%s286 + $0x530] sm:$0xff]
      %v467 = vld [vmem:[%s286 + $0x538] sm:$0xff]
      %v468 = vld [vmem:[%s286 + $0x540] sm:$0xff]
      %v469 = vld [vmem:[%s286 + $0x548] sm:$0xff]
      %v470 = vld [vmem:[%s286 + $0x550] sm:$0xff]
      %v471 = vld [vmem:[%s286 + $0x558] sm:$0xff]
      %v472 = vld [vmem:[%s286 + $0x560] sm:$0xff]
      %v473 = vld [vmem:[%s286 + $0x568] sm:$0xff]
      %v474 = vld [vmem:[%s286 + $0x570] sm:$0xff]
      %v475 = vld [vmem:[%s286 + $0x578] sm:$0xff]
      %v476 = vld [vmem:[%s286 + $0x580] sm:$0xff]
      %v477 = vld [vmem:[%s286 + $0x588] sm:$0xff]
      %v478 = vld [vmem:[%s286 + $0x590] sm:$0xff]
      %v479 = vld [vmem:[%s286 + $0x598] sm:$0xff]
      %v480 = vld [vmem:[%s286 + $0x5a0] sm:$0xff]
      %v481 = vld [vmem:[%s286 + $0x5a8] sm:$0xff]
      %v482 = vld [vmem:[%s286 + $0x5b0] sm:$0xff]
      %v483 = vld [vmem:[%s286 + $0x5b8] sm:$0xff]
      %v484 = vld [vmem:[%s286 + $0x5c0] sm:$0xff]
      %v485 = vld [vmem:[%s286 + $0x5c8] sm:$0xff]
      %v486 = vld [vmem:[%s286 + $0x5d0] sm:$0xff]
      %v487 = vld [vmem:[%s286 + $0x5d8] sm:$0xff]
      %v488 = vld [vmem:[%s286 + $0x5e0] sm:$0xff]
      %v489 = vld [vmem:[%s286 + $0x5e8] sm:$0xff]
      %v490 = vld [vmem:[%s286 + $0x5f0] sm:$0xff]
      %v491 = vld [vmem:[%s286 + $0x5f8] sm:$0xff]
      %v492 = vld [vmem:[%s286 + $0x600] sm:$0xff]
      %v493 = vld [vmem:[%s286 + $0x608] sm:$0xff]
      %v494 = vld [vmem:[%s286 + $0x610] sm:$0xff]
      %v495 = vld [vmem:[%s286 + $0x618] sm:$0xff]
      %v496 = vld [vmem:[%s286 + $0x620] sm:$0xff]
      %v497 = vld [vmem:[%s286 + $0x628] sm:$0xff]
      %v498 = vld [vmem:[%s286 + $0x630] sm:$0xff]
      %v499 = vld [vmem:[%s286 + $0x638] sm:$0xff]
      %v500 = vld [vmem:[%s286 + $0x640] sm:$0xff]
      %v501 = vld [vmem:[%s286 + $0x648] sm:$0xff]
      %v502 = vld [vmem:[%s286 + $0x650] sm:$0xff]
      %v503 = vld [vmem:[%s286 + $0x658] sm:$0xff]
      %v504 = vld [vmem:[%s286 + $0x660] sm:$0xff]
      %v505 = vld [vmem:[%s286 + $0x668] sm:$0xff]
      %v506 = vld [vmem:[%s286 + $0x670] sm:$0xff]
      %v507 = vld [vmem:[%s286 + $0x678] sm:$0xff]
      %v508 = vld [vmem:[%s286 + $0x680] sm:$0xff]
      %v509 = vld [vmem:[%s286 + $0x688] sm:$0xff]
      %v510 = vld [vmem:[%s286 + $0x690] sm:$0xff]
      %v511 = vld [vmem:[%s286 + $0x698] sm:$0xff]
      %v512 = vld [vmem:[%s286 + $0x6a0] sm:$0xff]
      %v513 = vld [vmem:[%s286 + $0x6a8] sm:$0xff]
      %v514 = vld [vmem:[%s286 + $0x6b0] sm:$0xff]
      %v515 = vld [vmem:[%s286 + $0x6b8] sm:$0xff]
      %v516 = vld [vmem:[%s286 + $0x6c0] sm:$0xff]
      %v517 = vld [vmem:[%s286 + $0x6c8] sm:$0xff]
      %v518 = vld [vmem:[%s286 + $0x6d0] sm:$0xff]
      %v519 = vld [vmem:[%s286 + $0x6d8] sm:$0xff]
      %v520 = vld [vmem:[%s286 + $0x6e0] sm:$0xff]
      %v521 = vld [vmem:[%s286 + $0x6e8] sm:$0xff]
      %v522 = vld [vmem:[%s286 + $0x6f0] sm:$0xff]
      %v523 = vld [vmem:[%s286 + $0x6f8] sm:$0xff]
      %v524 = vld [vmem:[%s286 + $0x700] sm:$0xff]
      %v525 = vld [vmem:[%s286 + $0x708] sm:$0xff]
      %v526 = vld [vmem:[%s286 + $0x710] sm:$0xff]
      %v527 = vld [vmem:[%s286 + $0x718] sm:$0xff]
      %v528 = vld [vmem:[%s286 + $0x720] sm:$0xff]
      %v529 = vld [vmem:[%s286 + $0x728] sm:$0xff]
      %v530 = vld [vmem:[%s286 + $0x730] sm:$0xff]
      %v531 = vld [vmem:[%s286 + $0x738] sm:$0xff]
      %v532 = vld [vmem:[%s286 + $0x740] sm:$0xff]
      %v533 = vld [vmem:[%s286 + $0x748] sm:$0xff]
      %v534 = vld [vmem:[%s286 + $0x750] sm:$0xff]
      %v535 = vld [vmem:[%s286 + $0x758] sm:$0xff]
      %v536 = vld [vmem:[%s286 + $0x760] sm:$0xff]
      %v537 = vld [vmem:[%s286 + $0x768] sm:$0xff]
      %v538 = vld [vmem:[%s286 + $0x770] sm:$0xff]
      %v539 = vld [vmem:[%s286 + $0x778] sm:$0xff]
      %v540 = vld [vmem:[%s286 + $0x780] sm:$0xff]
      %v541 = vld [vmem:[%s286 + $0x788] sm:$0xff]
      %v542 = vld [vmem:[%s286 + $0x790] sm:$0xff]
      %v543 = vld [vmem:[%s286 + $0x798] sm:$0xff]
      %v544 = vld [vmem:[%s286 + $0x7a0] sm:$0xff]
      %v545 = vld [vmem:[%s286 + $0x7a8] sm:$0xff]
      %v546 = vld [vmem:[%s286 + $0x7b0] sm:$0xff]
      %v547 = vld [vmem:[%s286 + $0x7b8] sm:$0xff]
      %v548 = vld [vmem:[%s286 + $0x7c0] sm:$0xff]
      %v549 = vld [vmem:[%s286 + $0x7c8] sm:$0xff]
      %v550 = vld [vmem:[%s286 + $0x7d0] sm:$0xff]
      %v551 = vld [vmem:[%s286 + $0x7d8] sm:$0xff]
      %v552 = vld [vmem:[%s286 + $0x7e0] sm:$0xff]
      %v553 = vld [vmem:[%s286 + $0x7e8] sm:$0xff]
      %v554 = vld [vmem:[%s286 + $0x7f0] sm:$0xff]
      %v555 = vld [vmem:[%s286 + $0x7f8] sm:$0xff]
      %v556 = vld [vmem:[%s1] sm:$0xff]
      %v557 = vld [vmem:[%s1 + $0x8] sm:$0xff]
      %v558 = vld [vmem:[%s1 + $0x10] sm:$0xff]
      %v559 = vld [vmem:[%s1 + $0x18] sm:$0xff]
      %v560 = vld [vmem:[%s1 + $0x20] sm:$0xff]
      %v561 = vld [vmem:[%s1 + $0x28] sm:$0xff]
      %v562 = vld [vmem:[%s1 + $0x30] sm:$0xff]
      %v563 = vld [vmem:[%s1 + $0x38] sm:$0xff]
      %565 = vset.pattern.permute.xlu0 0
      %566 = vperm.xlu0 %565, %v556
      %v567 = vpop.permute.xlu0 %566
      %570 = vset.pattern.permute.xlu0 0
      %571 = vperm.xlu0 %570, %v557
      %v572 = vpop.permute.xlu0 %571
      %575 = vset.pattern.permute.xlu0 0
      %576 = vperm.xlu0 %575, %v558
      %v577 = vpop.permute.xlu0 %576
      %580 = vset.pattern.permute.xlu0 0
      %581 = vperm.xlu0 %580, %v559
      %v582 = vpop.permute.xlu0 %581
      %585 = vset.pattern.permute.xlu0 0
      %586 = vperm.xlu0 %585, %v560
      %v587 = vpop.permute.xlu0 %586
      %590 = vset.pattern.permute.xlu0 0
      %591 = vperm.xlu0 %590, %v561
      %v592 = vpop.permute.xlu0 %591
      %595 = vset.pattern.permute.xlu0 0
      %596 = vperm.xlu0 %595, %v562
      %v597 = vpop.permute.xlu0 %596
      %600 = vset.pattern.permute.xlu0 0
      %601 = vperm.xlu0 %600, %v563
      %v602 = vpop.permute.xlu0 %601
      %v604 = vmul.f32 %v300, %v567
      %v605 = vmul.f32 %v301, %v567
      %v606 = vmul.f32 %v302, %v567
      %v607 = vmul.f32 %v303, %v567
      %v608 = vmul.f32 %v304, %v567
      %v609 = vmul.f32 %v305, %v567
      %v610 = vmul.f32 %v306, %v567
      %v611 = vmul.f32 %v307, %v567
      %v612 = vmul.f32 %v308, %v567
      %v613 = vmul.f32 %v309, %v567
      %v614 = vmul.f32 %v310, %v567
      %v615 = vmul.f32 %v311, %v567
      %v616 = vmul.f32 %v312, %v567
      %v617 = vmul.f32 %v313, %v567
      %v618 = vmul.f32 %v314, %v567
      %v619 = vmul.f32 %v315, %v567
      %v620 = vmul.f32 %v316, %v567
      %v621 = vmul.f32 %v317, %v567
      %v622 = vmul.f32 %v318, %v567
      %v623 = vmul.f32 %v319, %v567
      %v624 = vmul.f32 %v320, %v567
      %v625 = vmul.f32 %v321, %v567
      %v626 = vmul.f32 %v322, %v567
      %v627 = vmul.f32 %v323, %v567
      %v628 = vmul.f32 %v324, %v567
      %v629 = vmul.f32 %v325, %v567
      %v630 = vmul.f32 %v326, %v567
      %v631 = vmul.f32 %v327, %v567
      %v632 = vmul.f32 %v328, %v567
      %v633 = vmul.f32 %v329, %v567
      %v634 = vmul.f32 %v330, %v567
      %v635 = vmul.f32 %v331, %v567
      %v636 = vmul.f32 %v332, %v572
      %v637 = vmul.f32 %v333, %v572
      %v638 = vmul.f32 %v334, %v572
      %v639 = vmul.f32 %v335, %v572
      %v640 = vmul.f32 %v336, %v572
      %v641 = vmul.f32 %v337, %v572
      %v642 = vmul.f32 %v338, %v572
      %v643 = vmul.f32 %v339, %v572
      %v644 = vmul.f32 %v340, %v572
      %v645 = vmul.f32 %v341, %v572
      %v646 = vmul.f32 %v342, %v572
      %v647 = vmul.f32 %v343, %v572
      %v648 = vmul.f32 %v344, %v572
      %v649 = vmul.f32 %v345, %v572
      %v650 = vmul.f32 %v346, %v572
      %v651 = vmul.f32 %v347, %v572
      %v652 = vmul.f32 %v348, %v572
      %v653 = vmul.f32 %v349, %v572
      %v654 = vmul.f32 %v350, %v572
      %v655 = vmul.f32 %v351, %v572
      %v656 = vmul.f32 %v352, %v572
      %v657 = vmul.f32 %v353, %v572
      %v658 = vmul.f32 %v354, %v572
      %v659 = vmul.f32 %v355, %v572
      %v660 = vmul.f32 %v356, %v572
      %v661 = vmul.f32 %v357, %v572
      %v662 = vmul.f32 %v358, %v572
      %v663 = vmul.f32 %v359, %v572
      %v664 = vmul.f32 %v360, %v572
      %v665 = vmul.f32 %v361, %v572
      %v666 = vmul.f32 %v362, %v572
      %v667 = vmul.f32 %v363, %v572
      %v668 = vmul.f32 %v364, %v577
      %v669 = vmul.f32 %v365, %v577
      %v670 = vmul.f32 %v366, %v577
      %v671 = vmul.f32 %v367, %v577
      %v672 = vmul.f32 %v368, %v577
      %v673 = vmul.f32 %v369, %v577
      %v674 = vmul.f32 %v370, %v577
      %v675 = vmul.f32 %v371, %v577
      %v676 = vmul.f32 %v372, %v577
      %v677 = vmul.f32 %v373, %v577
      %v678 = vmul.f32 %v374, %v577
      %v679 = vmul.f32 %v375, %v577
      %v680 = vmul.f32 %v376, %v577
      %v681 = vmul.f32 %v377, %v577
      %v682 = vmul.f32 %v378, %v577
      %v683 = vmul.f32 %v379, %v577
      %v684 = vmul.f32 %v380, %v577
      %v685 = vmul.f32 %v381, %v577
      %v686 = vmul.f32 %v382, %v577
      %v687 = vmul.f32 %v383, %v577
      %v688 = vmul.f32 %v384, %v577
      %v689 = vmul.f32 %v385, %v577
      %v690 = vmul.f32 %v386, %v577
      %v691 = vmul.f32 %v387, %v577
      %v692 = vmul.f32 %v388, %v577
      %v693 = vmul.f32 %v389, %v577
      %v694 = vmul.f32 %v390, %v577
      %v695 = vmul.f32 %v391, %v577
      %v696 = vmul.f32 %v392, %v577
      %v697 = vmul.f32 %v393, %v577
      %v698 = vmul.f32 %v394, %v577
      %v699 = vmul.f32 %v395, %v577
      %v700 = vmul.f32 %v396, %v582
      %v701 = vmul.f32 %v397, %v582
      %v702 = vmul.f32 %v398, %v582
      %v703 = vmul.f32 %v399, %v582
      %v704 = vmul.f32 %v400, %v582
      %v705 = vmul.f32 %v401, %v582
      %v706 = vmul.f32 %v402, %v582
      %v707 = vmul.f32 %v403, %v582
      %v708 = vmul.f32 %v404, %v582
      %v709 = vmul.f32 %v405, %v582
      %v710 = vmul.f32 %v406, %v582
      %v711 = vmul.f32 %v407, %v582
      %v712 = vmul.f32 %v408, %v582
      %v713 = vmul.f32 %v409, %v582
      %v714 = vmul.f32 %v410, %v582
      %v715 = vmul.f32 %v411, %v582
      %v716 = vmul.f32 %v412, %v582
      %v717 = vmul.f32 %v413, %v582
      %v718 = vmul.f32 %v414, %v582
      %v719 = vmul.f32 %v415, %v582
      %v720 = vmul.f32 %v416, %v582
      %v721 = vmul.f32 %v417, %v582
      %v722 = vmul.f32 %v418, %v582
      %v723 = vmul.f32 %v419, %v582
      %v724 = vmul.f32 %v420, %v582
      %v725 = vmul.f32 %v421, %v582
      %v726 = vmul.f32 %v422, %v582
      %v727 = vmul.f32 %v423, %v582
      %v728 = vmul.f32 %v424, %v582
      %v729 = vmul.f32 %v425, %v582
      %v730 = vmul.f32 %v426, %v582
      %v731 = vmul.f32 %v427, %v582
      %v732 = vmul.f32 %v428, %v587
      %v733 = vmul.f32 %v429, %v587
      %v734 = vmul.f32 %v430, %v587
      %v735 = vmul.f32 %v431, %v587
      %v736 = vmul.f32 %v432, %v587
      %v737 = vmul.f32 %v433, %v587
      %v738 = vmul.f32 %v434, %v587
      %v739 = vmul.f32 %v435, %v587
      %v740 = vmul.f32 %v436, %v587
      %v741 = vmul.f32 %v437, %v587
      %v742 = vmul.f32 %v438, %v587
      %v743 = vmul.f32 %v439, %v587
      %v744 = vmul.f32 %v440, %v587
      %v745 = vmul.f32 %v441, %v587
      %v746 = vmul.f32 %v442, %v587
      %v747 = vmul.f32 %v443, %v587
      %v748 = vmul.f32 %v444, %v587
      %v749 = vmul.f32 %v445, %v587
      %v750 = vmul.f32 %v446, %v587
      %v751 = vmul.f32 %v447, %v587
      %v752 = vmul.f32 %v448, %v587
      %v753 = vmul.f32 %v449, %v587
      %v754 = vmul.f32 %v450, %v587
      %v755 = vmul.f32 %v451, %v587
      %v756 = vmul.f32 %v452, %v587
      %v757 = vmul.f32 %v453, %v587
      %v758 = vmul.f32 %v454, %v587
      %v759 = vmul.f32 %v455, %v587
      %v760 = vmul.f32 %v456, %v587
      %v761 = vmul.f32 %v457, %v587
      %v762 = vmul.f32 %v458, %v587
      %v763 = vmul.f32 %v459, %v587
      %v764 = vmul.f32 %v460, %v592
      %v765 = vmul.f32 %v461, %v592
      %v766 = vmul.f32 %v462, %v592
      %v767 = vmul.f32 %v463, %v592
      %v768 = vmul.f32 %v464, %v592
      %v769 = vmul.f32 %v465, %v592
      %v770 = vmul.f32 %v466, %v592
      %v771 = vmul.f32 %v467, %v592
      %v772 = vmul.f32 %v468, %v592
      %v773 = vmul.f32 %v469, %v592
      %v774 = vmul.f32 %v470, %v592
      %v775 = vmul.f32 %v471, %v592
      %v776 = vmul.f32 %v472, %v592
      %v777 = vmul.f32 %v473, %v592
      %v778 = vmul.f32 %v474, %v592
      %v779 = vmul.f32 %v475, %v592
      %v780 = vmul.f32 %v476, %v592
      %v781 = vmul.f32 %v477, %v592
      %v782 = vmul.f32 %v478, %v592
      %v783 = vmul.f32 %v479, %v592
      %v784 = vmul.f32 %v480, %v592
      %v785 = vmul.f32 %v481, %v592
      %v786 = vmul.f32 %v482, %v592
      %v787 = vmul.f32 %v483, %v592
      %v788 = vmul.f32 %v484, %v592
      %v789 = vmul.f32 %v485, %v592
      %v790 = vmul.f32 %v486, %v592
      %v791 = vmul.f32 %v487, %v592
      %v792 = vmul.f32 %v488, %v592
      %v793 = vmul.f32 %v489, %v592
      %v794 = vmul.f32 %v490, %v592
      %v795 = vmul.f32 %v491, %v592
      %v796 = vmul.f32 %v492, %v597
      %v797 = vmul.f32 %v493, %v597
      %v798 = vmul.f32 %v494, %v597
      %v799 = vmul.f32 %v495, %v597
      %v800 = vmul.f32 %v496, %v597
      %v801 = vmul.f32 %v497, %v597
      %v802 = vmul.f32 %v498, %v597
      %v803 = vmul.f32 %v499, %v597
      %v804 = vmul.f32 %v500, %v597
      %v805 = vmul.f32 %v501, %v597
      %v806 = vmul.f32 %v502, %v597
      %v807 = vmul.f32 %v503, %v597
      %v808 = vmul.f32 %v504, %v597
      %v809 = vmul.f32 %v505, %v597
      %v810 = vmul.f32 %v506, %v597
      %v811 = vmul.f32 %v507, %v597
      %v812 = vmul.f32 %v508, %v597
      %v813 = vmul.f32 %v509, %v597
      %v814 = vmul.f32 %v510, %v597
      %v815 = vmul.f32 %v511, %v597
      %v816 = vmul.f32 %v512, %v597
      %v817 = vmul.f32 %v513, %v597
      %v818 = vmul.f32 %v514, %v597
      %v819 = vmul.f32 %v515, %v597
      %v820 = vmul.f32 %v516, %v597
      %v821 = vmul.f32 %v517, %v597
      %v822 = vmul.f32 %v518, %v597
      %v823 = vmul.f32 %v519, %v597
      %v824 = vmul.f32 %v520, %v597
      %v825 = vmul.f32 %v521, %v597
      %v826 = vmul.f32 %v522, %v597
      %v827 = vmul.f32 %v523, %v597
      %v828 = vmul.f32 %v524, %v602
      %v829 = vmul.f32 %v525, %v602
      %v830 = vmul.f32 %v526, %v602
      %v831 = vmul.f32 %v527, %v602
      %v832 = vmul.f32 %v528, %v602
      %v833 = vmul.f32 %v529, %v602
      %v834 = vmul.f32 %v530, %v602
      %v835 = vmul.f32 %v531, %v602
      %v836 = vmul.f32 %v532, %v602
      %v837 = vmul.f32 %v533, %v602
      %v838 = vmul.f32 %v534, %v602
      %v839 = vmul.f32 %v535, %v602
      %v840 = vmul.f32 %v536, %v602
      %v841 = vmul.f32 %v537, %v602
      %v842 = vmul.f32 %v538, %v602
      %v843 = vmul.f32 %v539, %v602
      %v844 = vmul.f32 %v540, %v602
      %v845 = vmul.f32 %v541, %v602
      %v846 = vmul.f32 %v542, %v602
      %v847 = vmul.f32 %v543, %v602
      %v848 = vmul.f32 %v544, %v602
      %v849 = vmul.f32 %v545, %v602
      %v850 = vmul.f32 %v546, %v602
      %v851 = vmul.f32 %v547, %v602
      %v852 = vmul.f32 %v548, %v602
      %v853 = vmul.f32 %v549, %v602
      %v854 = vmul.f32 %v550, %v602
      %v855 = vmul.f32 %v551, %v602
      %v856 = vmul.f32 %v552, %v602
      %v857 = vmul.f32 %v553, %v602
      %v858 = vmul.f32 %v554, %v602
      %v859 = vmul.f32 %v555, %v602
      %v860 = vld [vmem:[%s2] sm:$0xff]
      %v861 = vld [vmem:[%s2 + $0x8] sm:$0xff]
      %v862 = vld [vmem:[%s2 + $0x10] sm:$0xff]
      %v863 = vld [vmem:[%s2 + $0x18] sm:$0xff]
      %v864 = vld [vmem:[%s2 + $0x20] sm:$0xff]
      %v865 = vld [vmem:[%s2 + $0x28] sm:$0xff]
      %v866 = vld [vmem:[%s2 + $0x30] sm:$0xff]
      %v867 = vld [vmem:[%s2 + $0x38] sm:$0xff]
      %869 = vset.pattern.permute.xlu0 0
      %870 = vperm.xlu0 %869, %v860
      %v871 = vpop.permute.xlu0 %870
      %874 = vset.pattern.permute.xlu0 0
      %875 = vperm.xlu0 %874, %v861
      %v876 = vpop.permute.xlu0 %875
      %879 = vset.pattern.permute.xlu0 0
      %880 = vperm.xlu0 %879, %v862
      %v881 = vpop.permute.xlu0 %880
      %884 = vset.pattern.permute.xlu0 0
      %885 = vperm.xlu0 %884, %v863
      %v886 = vpop.permute.xlu0 %885
      %889 = vset.pattern.permute.xlu0 0
      %890 = vperm.xlu0 %889, %v864
      %v891 = vpop.permute.xlu0 %890
      %894 = vset.pattern.permute.xlu0 0
      %895 = vperm.xlu0 %894, %v865
      %v896 = vpop.permute.xlu0 %895
      %899 = vset.pattern.permute.xlu0 0
      %900 = vperm.xlu0 %899, %v866
      %v901 = vpop.permute.xlu0 %900
      %904 = vset.pattern.permute.xlu0 0
      %905 = vperm.xlu0 %904, %v867
      %v906 = vpop.permute.xlu0 %905
      %v908 = vadd.f32 %v604, %v871
      %v909 = vadd.f32 %v605, %v871
      %v910 = vadd.f32 %v606, %v871
      %v911 = vadd.f32 %v607, %v871
      %v912 = vadd.f32 %v608, %v871
      %v913 = vadd.f32 %v609, %v871
      %v914 = vadd.f32 %v610, %v871
      %v915 = vadd.f32 %v611, %v871
      %v916 = vadd.f32 %v612, %v871
      %v917 = vadd.f32 %v613, %v871
      %v918 = vadd.f32 %v614, %v871
      %v919 = vadd.f32 %v615, %v871
      %v920 = vadd.f32 %v616, %v871
      %v921 = vadd.f32 %v617, %v871
      %v922 = vadd.f32 %v618, %v871
      %v923 = vadd.f32 %v619, %v871
      %v924 = vadd.f32 %v620, %v871
      %v925 = vadd.f32 %v621, %v871
      %v926 = vadd.f32 %v622, %v871
      %v927 = vadd.f32 %v623, %v871
      %v928 = vadd.f32 %v624, %v871
      %v929 = vadd.f32 %v625, %v871
      %v930 = vadd.f32 %v626, %v871
      %v931 = vadd.f32 %v627, %v871
      %v932 = vadd.f32 %v628, %v871
      %v933 = vadd.f32 %v629, %v871
      %v934 = vadd.f32 %v630, %v871
      %v935 = vadd.f32 %v631, %v871
      %v936 = vadd.f32 %v632, %v871
      %v937 = vadd.f32 %v633, %v871
      %v938 = vadd.f32 %v634, %v871
      %v939 = vadd.f32 %v635, %v871
      %v940 = vadd.f32 %v636, %v876
      %v941 = vadd.f32 %v637, %v876
      %v942 = vadd.f32 %v638, %v876
      %v943 = vadd.f32 %v639, %v876
      %v944 = vadd.f32 %v640, %v876
      %v945 = vadd.f32 %v641, %v876
      %v946 = vadd.f32 %v642, %v876
      %v947 = vadd.f32 %v643, %v876
      %v948 = vadd.f32 %v644, %v876
      %v949 = vadd.f32 %v645, %v876
      %v950 = vadd.f32 %v646, %v876
      %v951 = vadd.f32 %v647, %v876
      %v952 = vadd.f32 %v648, %v876
      %v953 = vadd.f32 %v649, %v876
      %v954 = vadd.f32 %v650, %v876
      %v955 = vadd.f32 %v651, %v876
      %v956 = vadd.f32 %v652, %v876
      %v957 = vadd.f32 %v653, %v876
      %v958 = vadd.f32 %v654, %v876
      %v959 = vadd.f32 %v655, %v876
      %v960 = vadd.f32 %v656, %v876
      %v961 = vadd.f32 %v657, %v876
      %v962 = vadd.f32 %v658, %v876
      %v963 = vadd.f32 %v659, %v876
      %v964 = vadd.f32 %v660, %v876
      %v965 = vadd.f32 %v661, %v876
      %v966 = vadd.f32 %v662, %v876
      %v967 = vadd.f32 %v663, %v876
      %v968 = vadd.f32 %v664, %v876
      %v969 = vadd.f32 %v665, %v876
      %v970 = vadd.f32 %v666, %v876
      %v971 = vadd.f32 %v667, %v876
      %v972 = vadd.f32 %v668, %v881
      %v973 = vadd.f32 %v669, %v881
      %v974 = vadd.f32 %v670, %v881
      %v975 = vadd.f32 %v671, %v881
      %v976 = vadd.f32 %v672, %v881
      %v977 = vadd.f32 %v673, %v881
      %v978 = vadd.f32 %v674, %v881
      %v979 = vadd.f32 %v675, %v881
      %v980 = vadd.f32 %v676, %v881
      %v981 = vadd.f32 %v677, %v881
      %v982 = vadd.f32 %v678, %v881
      %v983 = vadd.f32 %v679, %v881
      %v984 = vadd.f32 %v680, %v881
      %v985 = vadd.f32 %v681, %v881
      %v986 = vadd.f32 %v682, %v881
      %v987 = vadd.f32 %v683, %v881
      %v988 = vadd.f32 %v684, %v881
      %v989 = vadd.f32 %v685, %v881
      %v990 = vadd.f32 %v686, %v881
      %v991 = vadd.f32 %v687, %v881
      %v992 = vadd.f32 %v688, %v881
      %v993 = vadd.f32 %v689, %v881
      %v994 = vadd.f32 %v690, %v881
      %v995 = vadd.f32 %v691, %v881
      %v996 = vadd.f32 %v692, %v881
      %v997 = vadd.f32 %v693, %v881
      %v998 = vadd.f32 %v694, %v881
      %v999 = vadd.f32 %v695, %v881
      %v1000 = vadd.f32 %v696, %v881
      %v1001 = vadd.f32 %v697, %v881
      %v1002 = vadd.f32 %v698, %v881
      %v1003 = vadd.f32 %v699, %v881
      %v1004 = vadd.f32 %v700, %v886
      %v1005 = vadd.f32 %v701, %v886
      %v1006 = vadd.f32 %v702, %v886
      %v1007 = vadd.f32 %v703, %v886
      %v1008 = vadd.f32 %v704, %v886
      %v1009 = vadd.f32 %v705, %v886
      %v1010 = vadd.f32 %v706, %v886
      %v1011 = vadd.f32 %v707, %v886
      %v1012 = vadd.f32 %v708, %v886
      %v1013 = vadd.f32 %v709, %v886
      %v1014 = vadd.f32 %v710, %v886
      %v1015 = vadd.f32 %v711, %v886
      %v1016 = vadd.f32 %v712, %v886
      %v1017 = vadd.f32 %v713, %v886
      %v1018 = vadd.f32 %v714, %v886
      %v1019 = vadd.f32 %v715, %v886
      %v1020 = vadd.f32 %v716, %v886
      %v1021 = vadd.f32 %v717, %v886
      %v1022 = vadd.f32 %v718, %v886
      %v1023 = vadd.f32 %v719, %v886
      %v1024 = vadd.f32 %v720, %v886
      %v1025 = vadd.f32 %v721, %v886
      %v1026 = vadd.f32 %v722, %v886
      %v1027 = vadd.f32 %v723, %v886
      %v1028 = vadd.f32 %v724, %v886
      %v1029 = vadd.f32 %v725, %v886
      %v1030 = vadd.f32 %v726, %v886
      %v1031 = vadd.f32 %v727, %v886
      %v1032 = vadd.f32 %v728, %v886
      %v1033 = vadd.f32 %v729, %v886
      %v1034 = vadd.f32 %v730, %v886
      %v1035 = vadd.f32 %v731, %v886
      %v1036 = vadd.f32 %v732, %v891
      %v1037 = vadd.f32 %v733, %v891
      %v1038 = vadd.f32 %v734, %v891
      %v1039 = vadd.f32 %v735, %v891
      %v1040 = vadd.f32 %v736, %v891
      %v1041 = vadd.f32 %v737, %v891
      %v1042 = vadd.f32 %v738, %v891
      %v1043 = vadd.f32 %v739, %v891
      %v1044 = vadd.f32 %v740, %v891
      %v1045 = vadd.f32 %v741, %v891
      %v1046 = vadd.f32 %v742, %v891
      %v1047 = vadd.f32 %v743, %v891
      %v1048 = vadd.f32 %v744, %v891
      %v1049 = vadd.f32 %v745, %v891
      %v1050 = vadd.f32 %v746, %v891
      %v1051 = vadd.f32 %v747, %v891
      %v1052 = vadd.f32 %v748, %v891
      %v1053 = vadd.f32 %v749, %v891
      %v1054 = vadd.f32 %v750, %v891
      %v1055 = vadd.f32 %v751, %v891
      %v1056 = vadd.f32 %v752, %v891
      %v1057 = vadd.f32 %v753, %v891
      %v1058 = vadd.f32 %v754, %v891
      %v1059 = vadd.f32 %v755, %v891
      %v1060 = vadd.f32 %v756, %v891
      %v1061 = vadd.f32 %v757, %v891
      %v1062 = vadd.f32 %v758, %v891
      %v1063 = vadd.f32 %v759, %v891
      %v1064 = vadd.f32 %v760, %v891
      %v1065 = vadd.f32 %v761, %v891
      %v1066 = vadd.f32 %v762, %v891
      %v1067 = vadd.f32 %v763, %v891
      %v1068 = vadd.f32 %v764, %v896
      %v1069 = vadd.f32 %v765, %v896
      %v1070 = vadd.f32 %v766, %v896
      %v1071 = vadd.f32 %v767, %v896
      %v1072 = vadd.f32 %v768, %v896
      %v1073 = vadd.f32 %v769, %v896
      %v1074 = vadd.f32 %v770, %v896
      %v1075 = vadd.f32 %v771, %v896
      %v1076 = vadd.f32 %v772, %v896
      %v1077 = vadd.f32 %v773, %v896
      %v1078 = vadd.f32 %v774, %v896
      %v1079 = vadd.f32 %v775, %v896
      %v1080 = vadd.f32 %v776, %v896
      %v1081 = vadd.f32 %v777, %v896
      %v1082 = vadd.f32 %v778, %v896
      %v1083 = vadd.f32 %v779, %v896
      %v1084 = vadd.f32 %v780, %v896
      %v1085 = vadd.f32 %v781, %v896
      %v1086 = vadd.f32 %v782, %v896
      %v1087 = vadd.f32 %v783, %v896
      %v1088 = vadd.f32 %v784, %v896
      %v1089 = vadd.f32 %v785, %v896
      %v1090 = vadd.f32 %v786, %v896
      %v1091 = vadd.f32 %v787, %v896
      %v1092 = vadd.f32 %v788, %v896
      %v1093 = vadd.f32 %v789, %v896
      %v1094 = vadd.f32 %v790, %v896
      %v1095 = vadd.f32 %v791, %v896
      %v1096 = vadd.f32 %v792, %v896
      %v1097 = vadd.f32 %v793, %v896
      %v1098 = vadd.f32 %v794, %v896
      %v1099 = vadd.f32 %v795, %v896
      %v1100 = vadd.f32 %v796, %v901
      %v1101 = vadd.f32 %v797, %v901
      %v1102 = vadd.f32 %v798, %v901
      %v1103 = vadd.f32 %v799, %v901
      %v1104 = vadd.f32 %v800, %v901
      %v1105 = vadd.f32 %v801, %v901
      %v1106 = vadd.f32 %v802, %v901
      %v1107 = vadd.f32 %v803, %v901
      %v1108 = vadd.f32 %v804, %v901
      %v1109 = vadd.f32 %v805, %v901
      %v1110 = vadd.f32 %v806, %v901
      %v1111 = vadd.f32 %v807, %v901
      %v1112 = vadd.f32 %v808, %v901
      %v1113 = vadd.f32 %v809, %v901
      %v1114 = vadd.f32 %v810, %v901
      %v1115 = vadd.f32 %v811, %v901
      %v1116 = vadd.f32 %v812, %v901
      %v1117 = vadd.f32 %v813, %v901
      %v1118 = vadd.f32 %v814, %v901
      %v1119 = vadd.f32 %v815, %v901
      %v1120 = vadd.f32 %v816, %v901
      %v1121 = vadd.f32 %v817, %v901
      %v1122 = vadd.f32 %v818, %v901
      %v1123 = vadd.f32 %v819, %v901
      %v1124 = vadd.f32 %v820, %v901
      %v1125 = vadd.f32 %v821, %v901
      %v1126 = vadd.f32 %v822, %v901
      %v1127 = vadd.f32 %v823, %v901
      %v1128 = vadd.f32 %v824, %v901
      %v1129 = vadd.f32 %v825, %v901
      %v1130 = vadd.f32 %v826, %v901
      %v1131 = vadd.f32 %v827, %v901
      %v1132 = vadd.f32 %v828, %v906
      %v1133 = vadd.f32 %v829, %v906
      %v1134 = vadd.f32 %v830, %v906
      %v1135 = vadd.f32 %v831, %v906
      %v1136 = vadd.f32 %v832, %v906
      %v1137 = vadd.f32 %v833, %v906
      %v1138 = vadd.f32 %v834, %v906
      %v1139 = vadd.f32 %v835, %v906
      %v1140 = vadd.f32 %v836, %v906
      %v1141 = vadd.f32 %v837, %v906
      %v1142 = vadd.f32 %v838, %v906
      %v1143 = vadd.f32 %v839, %v906
      %v1144 = vadd.f32 %v840, %v906
      %v1145 = vadd.f32 %v841, %v906
      %v1146 = vadd.f32 %v842, %v906
      %v1147 = vadd.f32 %v843, %v906
      %v1148 = vadd.f32 %v844, %v906
      %v1149 = vadd.f32 %v845, %v906
      %v1150 = vadd.f32 %v846, %v906
      %v1151 = vadd.f32 %v847, %v906
      %v1152 = vadd.f32 %v848, %v906
      %v1153 = vadd.f32 %v849, %v906
      %v1154 = vadd.f32 %v850, %v906
      %v1155 = vadd.f32 %v851, %v906
      %v1156 = vadd.f32 %v852, %v906
      %v1157 = vadd.f32 %v853, %v906
      %v1158 = vadd.f32 %v854, %v906
      %v1159 = vadd.f32 %v855, %v906
      %v1160 = vadd.f32 %v856, %v906
      %v1161 = vadd.f32 %v857, %v906
      %v1162 = vadd.f32 %v858, %v906
      %v1163 = vadd.f32 %v859, %v906
      %v1164 = vmax.f32 %v908, 0.0
      %v1165 = vmax.f32 %v909, 0.0
      %v1166 = vmax.f32 %v910, 0.0
      %v1167 = vmax.f32 %v911, 0.0
      %v1168 = vmax.f32 %v912, 0.0
      %v1169 = vmax.f32 %v913, 0.0
      %v1170 = vmax.f32 %v914, 0.0
      %v1171 = vmax.f32 %v915, 0.0
      %v1172 = vmax.f32 %v916, 0.0
      %v1173 = vmax.f32 %v917, 0.0
      %v1174 = vmax.f32 %v918, 0.0
      %v1175 = vmax.f32 %v919, 0.0
      %v1176 = vmax.f32 %v920, 0.0
      %v1177 = vmax.f32 %v921, 0.0
      %v1178 = vmax.f32 %v922, 0.0
      %v1179 = vmax.f32 %v923, 0.0
      %v1180 = vmax.f32 %v924, 0.0
      %v1181 = vmax.f32 %v925, 0.0
      %v1182 = vmax.f32 %v926, 0.0
      %v1183 = vmax.f32 %v927, 0.0
      %v1184 = vmax.f32 %v928, 0.0
      %v1185 = vmax.f32 %v929, 0.0
      %v1186 = vmax.f32 %v930, 0.0
      %v1187 = vmax.f32 %v931, 0.0
      %v1188 = vmax.f32 %v932, 0.0
      %v1189 = vmax.f32 %v933, 0.0
      %v1190 = vmax.f32 %v934, 0.0
      %v1191 = vmax.f32 %v935, 0.0
      %v1192 = vmax.f32 %v936, 0.0
      %v1193 = vmax.f32 %v937, 0.0
      %v1194 = vmax.f32 %v938, 0.0
      %v1195 = vmax.f32 %v939, 0.0
      %v1196 = vmax.f32 %v940, 0.0
      %v1197 = vmax.f32 %v941, 0.0
      %v1198 = vmax.f32 %v942, 0.0
      %v1199 = vmax.f32 %v943, 0.0
      %v1200 = vmax.f32 %v944, 0.0
      %v1201 = vmax.f32 %v945, 0.0
      %v1202 = vmax.f32 %v946, 0.0
      %v1203 = vmax.f32 %v947, 0.0
      %v1204 = vmax.f32 %v948, 0.0
      %v1205 = vmax.f32 %v949, 0.0
      %v1206 = vmax.f32 %v950, 0.0
      %v1207 = vmax.f32 %v951, 0.0
      %v1208 = vmax.f32 %v952, 0.0
      %v1209 = vmax.f32 %v953, 0.0
      %v1210 = vmax.f32 %v954, 0.0
      %v1211 = vmax.f32 %v955, 0.0
      %v1212 = vmax.f32 %v956, 0.0
      %v1213 = vmax.f32 %v957, 0.0
      %v1214 = vmax.f32 %v958, 0.0
      %v1215 = vmax.f32 %v959, 0.0
      %v1216 = vmax.f32 %v960, 0.0
      %v1217 = vmax.f32 %v961, 0.0
      %v1218 = vmax.f32 %v962, 0.0
      %v1219 = vmax.f32 %v963, 0.0
      %v1220 = vmax.f32 %v964, 0.0
      %v1221 = vmax.f32 %v965, 0.0
      %v1222 = vmax.f32 %v966, 0.0
      %v1223 = vmax.f32 %v967, 0.0
      %v1224 = vmax.f32 %v968, 0.0
      %v1225 = vmax.f32 %v969, 0.0
      %v1226 = vmax.f32 %v970, 0.0
      %v1227 = vmax.f32 %v971, 0.0
      %v1228 = vmax.f32 %v972, 0.0
      %v1229 = vmax.f32 %v973, 0.0
      %v1230 = vmax.f32 %v974, 0.0
      %v1231 = vmax.f32 %v975, 0.0
      %v1232 = vmax.f32 %v976, 0.0
      %v1233 = vmax.f32 %v977, 0.0
      %v1234 = vmax.f32 %v978, 0.0
      %v1235 = vmax.f32 %v979, 0.0
      %v1236 = vmax.f32 %v980, 0.0
      %v1237 = vmax.f32 %v981, 0.0
      %v1238 = vmax.f32 %v982, 0.0
      %v1239 = vmax.f32 %v983, 0.0
      %v1240 = vmax.f32 %v984, 0.0
      %v1241 = vmax.f32 %v985, 0.0
      %v1242 = vmax.f32 %v986, 0.0
      %v1243 = vmax.f32 %v987, 0.0
      %v1244 = vmax.f32 %v988, 0.0
      %v1245 = vmax.f32 %v989, 0.0
      %v1246 = vmax.f32 %v990, 0.0
      %v1247 = vmax.f32 %v991, 0.0
      %v1248 = vmax.f32 %v992, 0.0
      %v1249 = vmax.f32 %v993, 0.0
      %v1250 = vmax.f32 %v994, 0.0
      %v1251 = vmax.f32 %v995, 0.0
      %v1252 = vmax.f32 %v996, 0.0
      %v1253 = vmax.f32 %v997, 0.0
      %v1254 = vmax.f32 %v998, 0.0
      %v1255 = vmax.f32 %v999, 0.0
      %v1256 = vmax.f32 %v1000, 0.0
      %v1257 = vmax.f32 %v1001, 0.0
      %v1258 = vmax.f32 %v1002, 0.0
      %v1259 = vmax.f32 %v1003, 0.0
      %v1260 = vmax.f32 %v1004, 0.0
      %v1261 = vmax.f32 %v1005, 0.0
      %v1262 = vmax.f32 %v1006, 0.0
      %v1263 = vmax.f32 %v1007, 0.0
      %v1264 = vmax.f32 %v1008, 0.0
      %v1265 = vmax.f32 %v1009, 0.0
      %v1266 = vmax.f32 %v1010, 0.0
      %v1267 = vmax.f32 %v1011, 0.0
      %v1268 = vmax.f32 %v1012, 0.0
      %v1269 = vmax.f32 %v1013, 0.0
      %v1270 = vmax.f32 %v1014, 0.0
      %v1271 = vmax.f32 %v1015, 0.0
      %v1272 = vmax.f32 %v1016, 0.0
      %v1273 = vmax.f32 %v1017, 0.0
      %v1274 = vmax.f32 %v1018, 0.0
      %v1275 = vmax.f32 %v1019, 0.0
      %v1276 = vmax.f32 %v1020, 0.0
      %v1277 = vmax.f32 %v1021, 0.0
      %v1278 = vmax.f32 %v1022, 0.0
      %v1279 = vmax.f32 %v1023, 0.0
      %v1280 = vmax.f32 %v1024, 0.0
      %v1281 = vmax.f32 %v1025, 0.0
      %v1282 = vmax.f32 %v1026, 0.0
      %v1283 = vmax.f32 %v1027, 0.0
      %v1284 = vmax.f32 %v1028, 0.0
      %v1285 = vmax.f32 %v1029, 0.0
      %v1286 = vmax.f32 %v1030, 0.0
      %v1287 = vmax.f32 %v1031, 0.0
      %v1288 = vmax.f32 %v1032, 0.0
      %v1289 = vmax.f32 %v1033, 0.0
      %v1290 = vmax.f32 %v1034, 0.0
      %v1291 = vmax.f32 %v1035, 0.0
      %v1292 = vmax.f32 %v1036, 0.0
      %v1293 = vmax.f32 %v1037, 0.0
      %v1294 = vmax.f32 %v1038, 0.0
      %v1295 = vmax.f32 %v1039, 0.0
      %v1296 = vmax.f32 %v1040, 0.0
      %v1297 = vmax.f32 %v1041, 0.0
      %v1298 = vmax.f32 %v1042, 0.0
      %v1299 = vmax.f32 %v1043, 0.0
      %v1300 = vmax.f32 %v1044, 0.0
      %v1301 = vmax.f32 %v1045, 0.0
      %v1302 = vmax.f32 %v1046, 0.0
      %v1303 = vmax.f32 %v1047, 0.0
      %v1304 = vmax.f32 %v1048, 0.0
      %v1305 = vmax.f32 %v1049, 0.0
      %v1306 = vmax.f32 %v1050, 0.0
      %v1307 = vmax.f32 %v1051, 0.0
      %v1308 = vmax.f32 %v1052, 0.0
      %v1309 = vmax.f32 %v1053, 0.0
      %v1310 = vmax.f32 %v1054, 0.0
      %v1311 = vmax.f32 %v1055, 0.0
      %v1312 = vmax.f32 %v1056, 0.0
      %v1313 = vmax.f32 %v1057, 0.0
      %v1314 = vmax.f32 %v1058, 0.0
      %v1315 = vmax.f32 %v1059, 0.0
      %v1316 = vmax.f32 %v1060, 0.0
      %v1317 = vmax.f32 %v1061, 0.0
      %v1318 = vmax.f32 %v1062, 0.0
      %v1319 = vmax.f32 %v1063, 0.0
      %v1320 = vmax.f32 %v1064, 0.0
      %v1321 = vmax.f32 %v1065, 0.0
      %v1322 = vmax.f32 %v1066, 0.0
      %v1323 = vmax.f32 %v1067, 0.0
      %v1324 = vmax.f32 %v1068, 0.0
      %v1325 = vmax.f32 %v1069, 0.0
      %v1326 = vmax.f32 %v1070, 0.0
      %v1327 = vmax.f32 %v1071, 0.0
      %v1328 = vmax.f32 %v1072, 0.0
      %v1329 = vmax.f32 %v1073, 0.0
      %v1330 = vmax.f32 %v1074, 0.0
      %v1331 = vmax.f32 %v1075, 0.0
      %v1332 = vmax.f32 %v1076, 0.0
      %v1333 = vmax.f32 %v1077, 0.0
      %v1334 = vmax.f32 %v1078, 0.0
      %v1335 = vmax.f32 %v1079, 0.0
      %v1336 = vmax.f32 %v1080, 0.0
      %v1337 = vmax.f32 %v1081, 0.0
      %v1338 = vmax.f32 %v1082, 0.0
      %v1339 = vmax.f32 %v1083, 0.0
      %v1340 = vmax.f32 %v1084, 0.0
      %v1341 = vmax.f32 %v1085, 0.0
      %v1342 = vmax.f32 %v1086, 0.0
      %v1343 = vmax.f32 %v1087, 0.0
      %v1344 = vmax.f32 %v1088, 0.0
      %v1345 = vmax.f32 %v1089, 0.0
      %v1346 = vmax.f32 %v1090, 0.0
      %v1347 = vmax.f32 %v1091, 0.0
      %v1348 = vmax.f32 %v1092, 0.0
      %v1349 = vmax.f32 %v1093, 0.0
      %v1350 = vmax.f32 %v1094, 0.0
      %v1351 = vmax.f32 %v1095, 0.0
      %v1352 = vmax.f32 %v1096, 0.0
      %v1353 = vmax.f32 %v1097, 0.0
      %v1354 = vmax.f32 %v1098, 0.0
      %v1355 = vmax.f32 %v1099, 0.0
      %v1356 = vmax.f32 %v1100, 0.0
      %v1357 = vmax.f32 %v1101, 0.0
      %v1358 = vmax.f32 %v1102, 0.0
      %v1359 = vmax.f32 %v1103, 0.0
      %v1360 = vmax.f32 %v1104, 0.0
      %v1361 = vmax.f32 %v1105, 0.0
      %v1362 = vmax.f32 %v1106, 0.0
      %v1363 = vmax.f32 %v1107, 0.0
      %v1364 = vmax.f32 %v1108, 0.0
      %v1365 = vmax.f32 %v1109, 0.0
      %v1366 = vmax.f32 %v1110, 0.0
      %v1367 = vmax.f32 %v1111, 0.0
      %v1368 = vmax.f32 %v1112, 0.0
      %v1369 = vmax.f32 %v1113, 0.0
      %v1370 = vmax.f32 %v1114, 0.0
      %v1371 = vmax.f32 %v1115, 0.0
      %v1372 = vmax.f32 %v1116, 0.0
      %v1373 = vmax.f32 %v1117, 0.0
      %v1374 = vmax.f32 %v1118, 0.0
      %v1375 = vmax.f32 %v1119, 0.0
      %v1376 = vmax.f32 %v1120, 0.0
      %v1377 = vmax.f32 %v1121, 0.0
      %v1378 = vmax.f32 %v1122, 0.0
      %v1379 = vmax.f32 %v1123, 0.0
      %v1380 = vmax.f32 %v1124, 0.0
      %v1381 = vmax.f32 %v1125, 0.0
      %v1382 = vmax.f32 %v1126, 0.0
      %v1383 = vmax.f32 %v1127, 0.0
      %v1384 = vmax.f32 %v1128, 0.0
      %v1385 = vmax.f32 %v1129, 0.0
      %v1386 = vmax.f32 %v1130, 0.0
      %v1387 = vmax.f32 %v1131, 0.0
      %v1388 = vmax.f32 %v1132, 0.0
      %v1389 = vmax.f32 %v1133, 0.0
      %v1390 = vmax.f32 %v1134, 0.0
      %v1391 = vmax.f32 %v1135, 0.0
      %v1392 = vmax.f32 %v1136, 0.0
      %v1393 = vmax.f32 %v1137, 0.0
      %v1394 = vmax.f32 %v1138, 0.0
      %v1395 = vmax.f32 %v1139, 0.0
      %v1396 = vmax.f32 %v1140, 0.0
      %v1397 = vmax.f32 %v1141, 0.0
      %v1398 = vmax.f32 %v1142, 0.0
      %v1399 = vmax.f32 %v1143, 0.0
      %v1400 = vmax.f32 %v1144, 0.0
      %v1401 = vmax.f32 %v1145, 0.0
      %v1402 = vmax.f32 %v1146, 0.0
      %v1403 = vmax.f32 %v1147, 0.0
      %v1404 = vmax.f32 %v1148, 0.0
      %v1405 = vmax.f32 %v1149, 0.0
      %v1406 = vmax.f32 %v1150, 0.0
      %v1407 = vmax.f32 %v1151, 0.0
      %v1408 = vmax.f32 %v1152, 0.0
      %v1409 = vmax.f32 %v1153, 0.0
      %v1410 = vmax.f32 %v1154, 0.0
      %v1411 = vmax.f32 %v1155, 0.0
      %v1412 = vmax.f32 %v1156, 0.0
      %v1413 = vmax.f32 %v1157, 0.0
      %v1414 = vmax.f32 %v1158, 0.0
      %v1415 = vmax.f32 %v1159, 0.0
      %v1416 = vmax.f32 %v1160, 0.0
      %v1417 = vmax.f32 %v1161, 0.0
      %v1418 = vmax.f32 %v1162, 0.0
      %v1419 = vmax.f32 %v1163, 0.0
      %v1420 = vadd.f32 %v1164, %v1165
      %v1421 = vadd.f32 %v1420, %v1166
      %v1422 = vadd.f32 %v1421, %v1167
      %v1423 = vadd.f32 %v1422, %v1168
      %v1424 = vadd.f32 %v1423, %v1169
      %v1425 = vadd.f32 %v1424, %v1170
      %v1426 = vadd.f32 %v1425, %v1171
      %v1427 = vadd.f32 %v1426, %v1172
      %v1428 = vadd.f32 %v1427, %v1173
      %v1429 = vadd.f32 %v1428, %v1174
      %v1430 = vadd.f32 %v1429, %v1175
      %v1431 = vadd.f32 %v1430, %v1176
      %v1432 = vadd.f32 %v1431, %v1177
      %v1433 = vadd.f32 %v1432, %v1178
      %v1434 = vadd.f32 %v1433, %v1179
      %v1435 = vadd.f32 %v1434, %v1180
      %v1436 = vadd.f32 %v1435, %v1181
      %v1437 = vadd.f32 %v1436, %v1182
      %v1438 = vadd.f32 %v1437, %v1183
      %v1439 = vadd.f32 %v1438, %v1184
      %v1440 = vadd.f32 %v1439, %v1185
      %v1441 = vadd.f32 %v1440, %v1186
      %v1442 = vadd.f32 %v1441, %v1187
      %v1443 = vadd.f32 %v1442, %v1188
      %v1444 = vadd.f32 %v1443, %v1189
      %v1445 = vadd.f32 %v1444, %v1190
      %v1446 = vadd.f32 %v1445, %v1191
      %v1447 = vadd.f32 %v1446, %v1192
      %v1448 = vadd.f32 %v1447, %v1193
      %v1449 = vadd.f32 %v1448, %v1194
      %v1450 = vadd.f32 %v1449, %v1195
      %1451 = vadd.xlane.f32.xlu0 %v1450
      %v1452 = vpop.xlane.xlu0 %1451
      %v1453 = vadd.f32 %v1196, %v1197
      %v1454 = vadd.f32 %v1453, %v1198
      %v1455 = vadd.f32 %v1454, %v1199
      %v1456 = vadd.f32 %v1455, %v1200
      %v1457 = vadd.f32 %v1456, %v1201
      %v1458 = vadd.f32 %v1457, %v1202
      %v1459 = vadd.f32 %v1458, %v1203
      %v1460 = vadd.f32 %v1459, %v1204
      %v1461 = vadd.f32 %v1460, %v1205
      %v1462 = vadd.f32 %v1461, %v1206
      %v1463 = vadd.f32 %v1462, %v1207
      %v1464 = vadd.f32 %v1463, %v1208
      %v1465 = vadd.f32 %v1464, %v1209
      %v1466 = vadd.f32 %v1465, %v1210
      %v1467 = vadd.f32 %v1466, %v1211
      %v1468 = vadd.f32 %v1467, %v1212
      %v1469 = vadd.f32 %v1468, %v1213
      %v1470 = vadd.f32 %v1469, %v1214
      %v1471 = vadd.f32 %v1470, %v1215
      %v1472 = vadd.f32 %v1471, %v1216
      %v1473 = vadd.f32 %v1472, %v1217
      %v1474 = vadd.f32 %v1473, %v1218
      %v1475 = vadd.f32 %v1474, %v1219
      %v1476 = vadd.f32 %v1475, %v1220
      %v1477 = vadd.f32 %v1476, %v1221
      %v1478 = vadd.f32 %v1477, %v1222
      %v1479 = vadd.f32 %v1478, %v1223
      %v1480 = vadd.f32 %v1479, %v1224
      %v1481 = vadd.f32 %v1480, %v1225
      %v1482 = vadd.f32 %v1481, %v1226
      %v1483 = vadd.f32 %v1482, %v1227
      %1484 = vadd.xlane.f32.xlu0 %v1483
      %v1485 = vpop.xlane.xlu0 %1484
      %v1486 = vadd.f32 %v1228, %v1229
      %v1487 = vadd.f32 %v1486, %v1230
      %v1488 = vadd.f32 %v1487, %v1231
      %v1489 = vadd.f32 %v1488, %v1232
      %v1490 = vadd.f32 %v1489, %v1233
      %v1491 = vadd.f32 %v1490, %v1234
      %v1492 = vadd.f32 %v1491, %v1235
      %v1493 = vadd.f32 %v1492, %v1236
      %v1494 = vadd.f32 %v1493, %v1237
      %v1495 = vadd.f32 %v1494, %v1238
      %v1496 = vadd.f32 %v1495, %v1239
      %v1497 = vadd.f32 %v1496, %v1240
      %v1498 = vadd.f32 %v1497, %v1241
      %v1499 = vadd.f32 %v1498, %v1242
      %v1500 = vadd.f32 %v1499, %v1243
      %v1501 = vadd.f32 %v1500, %v1244
      %v1502 = vadd.f32 %v1501, %v1245
      %v1503 = vadd.f32 %v1502, %v1246
      %v1504 = vadd.f32 %v1503, %v1247
      %v1505 = vadd.f32 %v1504, %v1248
      %v1506 = vadd.f32 %v1505, %v1249
      %v1507 = vadd.f32 %v1506, %v1250
      %v1508 = vadd.f32 %v1507, %v1251
      %v1509 = vadd.f32 %v1508, %v1252
      %v1510 = vadd.f32 %v1509, %v1253
      %v1511 = vadd.f32 %v1510, %v1254
      %v1512 = vadd.f32 %v1511, %v1255
      %v1513 = vadd.f32 %v1512, %v1256
      %v1514 = vadd.f32 %v1513, %v1257
      %v1515 = vadd.f32 %v1514, %v1258
      %v1516 = vadd.f32 %v1515, %v1259
      %1517 = vadd.xlane.f32.xlu0 %v1516
      %v1518 = vpop.xlane.xlu0 %1517
      %v1519 = vadd.f32 %v1260, %v1261
      %v1520 = vadd.f32 %v1519, %v1262
      %v1521 = vadd.f32 %v1520, %v1263
      %v1522 = vadd.f32 %v1521, %v1264
      %v1523 = vadd.f32 %v1522, %v1265
      %v1524 = vadd.f32 %v1523, %v1266
      %v1525 = vadd.f32 %v1524, %v1267
      %v1526 = vadd.f32 %v1525, %v1268
      %v1527 = vadd.f32 %v1526, %v1269
      %v1528 = vadd.f32 %v1527, %v1270
      %v1529 = vadd.f32 %v1528, %v1271
      %v1530 = vadd.f32 %v1529, %v1272
      %v1531 = vadd.f32 %v1530, %v1273
      %v1532 = vadd.f32 %v1531, %v1274
      %v1533 = vadd.f32 %v1532, %v1275
      %v1534 = vadd.f32 %v1533, %v1276
      %v1535 = vadd.f32 %v1534, %v1277
      %v1536 = vadd.f32 %v1535, %v1278
      %v1537 = vadd.f32 %v1536, %v1279
      %v1538 = vadd.f32 %v1537, %v1280
      %v1539 = vadd.f32 %v1538, %v1281
      %v1540 = vadd.f32 %v1539, %v1282
      %v1541 = vadd.f32 %v1540, %v1283
      %v1542 = vadd.f32 %v1541, %v1284
      %v1543 = vadd.f32 %v1542, %v1285
      %v1544 = vadd.f32 %v1543, %v1286
      %v1545 = vadd.f32 %v1544, %v1287
      %v1546 = vadd.f32 %v1545, %v1288
      %v1547 = vadd.f32 %v1546, %v1289
      %v1548 = vadd.f32 %v1547, %v1290
      %v1549 = vadd.f32 %v1548, %v1291
      %1550 = vadd.xlane.f32.xlu0 %v1549
      %v1551 = vpop.xlane.xlu0 %1550
      %v1552 = vadd.f32 %v1292, %v1293
      %v1553 = vadd.f32 %v1552, %v1294
      %v1554 = vadd.f32 %v1553, %v1295
      %v1555 = vadd.f32 %v1554, %v1296
      %v1556 = vadd.f32 %v1555, %v1297
      %v1557 = vadd.f32 %v1556, %v1298
      %v1558 = vadd.f32 %v1557, %v1299
      %v1559 = vadd.f32 %v1558, %v1300
      %v1560 = vadd.f32 %v1559, %v1301
      %v1561 = vadd.f32 %v1560, %v1302
      %v1562 = vadd.f32 %v1561, %v1303
      %v1563 = vadd.f32 %v1562, %v1304
      %v1564 = vadd.f32 %v1563, %v1305
      %v1565 = vadd.f32 %v1564, %v1306
      %v1566 = vadd.f32 %v1565, %v1307
      %v1567 = vadd.f32 %v1566, %v1308
      %v1568 = vadd.f32 %v1567, %v1309
      %v1569 = vadd.f32 %v1568, %v1310
      %v1570 = vadd.f32 %v1569, %v1311
      %v1571 = vadd.f32 %v1570, %v1312
      %v1572 = vadd.f32 %v1571, %v1313
      %v1573 = vadd.f32 %v1572, %v1314
      %v1574 = vadd.f32 %v1573, %v1315
      %v1575 = vadd.f32 %v1574, %v1316
      %v1576 = vadd.f32 %v1575, %v1317
      %v1577 = vadd.f32 %v1576, %v1318
      %v1578 = vadd.f32 %v1577, %v1319
      %v1579 = vadd.f32 %v1578, %v1320
      %v1580 = vadd.f32 %v1579, %v1321
      %v1581 = vadd.f32 %v1580, %v1322
      %v1582 = vadd.f32 %v1581, %v1323
      %1583 = vadd.xlane.f32.xlu0 %v1582
      %v1584 = vpop.xlane.xlu0 %1583
      %v1585 = vadd.f32 %v1324, %v1325
      %v1586 = vadd.f32 %v1585, %v1326
      %v1587 = vadd.f32 %v1586, %v1327
      %v1588 = vadd.f32 %v1587, %v1328
      %v1589 = vadd.f32 %v1588, %v1329
      %v1590 = vadd.f32 %v1589, %v1330
      %v1591 = vadd.f32 %v1590, %v1331
      %v1592 = vadd.f32 %v1591, %v1332
      %v1593 = vadd.f32 %v1592, %v1333
      %v1594 = vadd.f32 %v1593, %v1334
      %v1595 = vadd.f32 %v1594, %v1335
      %v1596 = vadd.f32 %v1595, %v1336
      %v1597 = vadd.f32 %v1596, %v1337
      %v1598 = vadd.f32 %v1597, %v1338
      %v1599 = vadd.f32 %v1598, %v1339
      %v1600 = vadd.f32 %v1599, %v1340
      %v1601 = vadd.f32 %v1600, %v1341
      %v1602 = vadd.f32 %v1601, %v1342
      %v1603 = vadd.f32 %v1602, %v1343
      %v1604 = vadd.f32 %v1603, %v1344
      %v1605 = vadd.f32 %v1604, %v1345
      %v1606 = vadd.f32 %v1605, %v1346
      %v1607 = vadd.f32 %v1606, %v1347
      %v1608 = vadd.f32 %v1607, %v1348
      %v1609 = vadd.f32 %v1608, %v1349
      %v1610 = vadd.f32 %v1609, %v1350
      %v1611 = vadd.f32 %v1610, %v1351
      %v1612 = vadd.f32 %v1611, %v1352
      %v1613 = vadd.f32 %v1612, %v1353
      %v1614 = vadd.f32 %v1613, %v1354
      %v1615 = vadd.f32 %v1614, %v1355
      %1616 = vadd.xlane.f32.xlu0 %v1615
      %v1617 = vpop.xlane.xlu0 %1616
      %v1618 = vadd.f32 %v1356, %v1357
      %v1619 = vadd.f32 %v1618, %v1358
      %v1620 = vadd.f32 %v1619, %v1359
      %v1621 = vadd.f32 %v1620, %v1360
      %v1622 = vadd.f32 %v1621, %v1361
      %v1623 = vadd.f32 %v1622, %v1362
      %v1624 = vadd.f32 %v1623, %v1363
      %v1625 = vadd.f32 %v1624, %v1364
      %v1626 = vadd.f32 %v1625, %v1365
      %v1627 = vadd.f32 %v1626, %v1366
      %v1628 = vadd.f32 %v1627, %v1367
      %v1629 = vadd.f32 %v1628, %v1368
      %v1630 = vadd.f32 %v1629, %v1369
      %v1631 = vadd.f32 %v1630, %v1370
      %v1632 = vadd.f32 %v1631, %v1371
      %v1633 = vadd.f32 %v1632, %v1372
      %v1634 = vadd.f32 %v1633, %v1373
      %v1635 = vadd.f32 %v1634, %v1374
      %v1636 = vadd.f32 %v1635, %v1375
      %v1637 = vadd.f32 %v1636, %v1376
      %v1638 = vadd.f32 %v1637, %v1377
      %v1639 = vadd.f32 %v1638, %v1378
      %v1640 = vadd.f32 %v1639, %v1379
      %v1641 = vadd.f32 %v1640, %v1380
      %v1642 = vadd.f32 %v1641, %v1381
      %v1643 = vadd.f32 %v1642, %v1382
      %v1644 = vadd.f32 %v1643, %v1383
      %v1645 = vadd.f32 %v1644, %v1384
      %v1646 = vadd.f32 %v1645, %v1385
      %v1647 = vadd.f32 %v1646, %v1386
      %v1648 = vadd.f32 %v1647, %v1387
      %1649 = vadd.xlane.f32.xlu0 %v1648
      %v1650 = vpop.xlane.xlu0 %1649
      %v1651 = vadd.f32 %v1388, %v1389
      %v1652 = vadd.f32 %v1651, %v1390
      %v1653 = vadd.f32 %v1652, %v1391
      %v1654 = vadd.f32 %v1653, %v1392
      %v1655 = vadd.f32 %v1654, %v1393
      %v1656 = vadd.f32 %v1655, %v1394
      %v1657 = vadd.f32 %v1656, %v1395
      %v1658 = vadd.f32 %v1657, %v1396
      %v1659 = vadd.f32 %v1658, %v1397
      %v1660 = vadd.f32 %v1659, %v1398
      %v1661 = vadd.f32 %v1660, %v1399
      %v1662 = vadd.f32 %v1661, %v1400
      %v1663 = vadd.f32 %v1662, %v1401
      %v1664 = vadd.f32 %v1663, %v1402
      %v1665 = vadd.f32 %v1664, %v1403
      %v1666 = vadd.f32 %v1665, %v1404
      %v1667 = vadd.f32 %v1666, %v1405
      %v1668 = vadd.f32 %v1667, %v1406
      %v1669 = vadd.f32 %v1668, %v1407
      %v1670 = vadd.f32 %v1669, %v1408
      %v1671 = vadd.f32 %v1670, %v1409
      %v1672 = vadd.f32 %v1671, %v1410
      %v1673 = vadd.f32 %v1672, %v1411
      %v1674 = vadd.f32 %v1673, %v1412
      %v1675 = vadd.f32 %v1674, %v1413
      %v1676 = vadd.f32 %v1675, %v1414
      %v1677 = vadd.f32 %v1676, %v1415
      %v1678 = vadd.f32 %v1677, %v1416
      %v1679 = vadd.f32 %v1678, %v1417
      %v1680 = vadd.f32 %v1679, %v1418
      %v1681 = vadd.f32 %v1680, %v1419
      %1682 = vadd.xlane.f32.xlu0 %v1681
      %v1683 = vpop.xlane.xlu0 %1682
      %v1684 = vmul.f32 %v1452, 0.00024414063
      %v1685 = vmul.f32 %v1485, 0.00024414063
      %v1686 = vmul.f32 %v1518, 0.00024414063
      %v1687 = vmul.f32 %v1551, 0.00024414063
      %v1688 = vmul.f32 %v1584, 0.00024414063
      %v1689 = vmul.f32 %v1617, 0.00024414063
      %v1690 = vmul.f32 %v1650, 0.00024414063
      %v1691 = vmul.f32 %v1683, 0.00024414063
      %v1692 = vld [vmem:[%s3] sm:$0xff]
      %v1693 = vld [vmem:[%s3 + $0x8] sm:$0xff]
      %vm1694 = vcmask 523264
      %v1696 = vsel %vm1694, %v1692, 0
      %v1699 = vsel %vm1694, %v1693, 0
      %1701 = vmatprep.subr.mxu0 0.0
      %1702 = vmatpush1.msra.mxu0 0.0
      %1703 = vmatprep.subr.mxu0 0.0
      %1704 = vmatpush1.msra.mxu0 0.0
      %1705 = vmatprep.subr.mxu0 0.0
      %1706 = vmatpush1.msra.mxu0 0.0
      %1707 = vmatprep.subr.mxu0 0.0
      %1708 = vmatpush1.msra.mxu0 0.0
      %1709 = vmatprep.subr.mxu0 0.0
      %1710 = vmatpush1.msra.mxu0 0.0
      %1711 = vmatprep.subr.mxu0 0.0
      %1712 = vmatpush1.msra.mxu0 0.0
      %1713 = vmatprep.subr.mxu0 0.0
      %1714 = vmatpush1.msra.mxu0 0.0
      %1715 = vmatprep.subr.mxu0 0.0
      %1716 = vmatpush1.msra.mxu0 0.0
      %1717 = vmatprep.subr.mxu0 0.0
      %1718 = vmatpush1.msra.mxu0 %v1691
      %1719 = vmatprep.subr.mxu0 0.0
      %1720 = vmatpush1.msra.mxu0 %v1690
      %1721 = vmatprep.subr.mxu0 0.0
      %1722 = vmatpush1.msra.mxu0 %v1689
      %1723 = vmatprep.subr.mxu0 0.0
      %1724 = vmatpush1.msra.mxu0 %v1688
      %1725 = vmatprep.subr.mxu0 0.0
      %1726 = vmatpush1.msra.mxu0 %v1687
      %1727 = vmatprep.subr.mxu0 0.0
      %1728 = vmatpush1.msra.mxu0 %v1686
      %1729 = vmatprep.subr.mxu0 0.0
      %1730 = vmatpush1.msra.mxu0 %v1685
      %1731 = vmatprep.subr.mxu0 0.0
      %1732 = vmatpush1.msra.mxu0 %v1684
      %1733 = vmatprep.subr.mxu0 0.0
      %1734 = vmatpush2.msra.mxu0 0.0
      %1735 = vmatprep.subr.mxu0 0.0
      %1736 = vmatpush2.msra.mxu0 0.0
      %1737 = vmatprep.subr.mxu0 0.0
      %1738 = vmatpush2.msra.mxu0 0.0
      %1739 = vmatprep.subr.mxu0 0.0
      %1740 = vmatpush2.msra.mxu0 0.0
      %1741 = vmatprep.subr.mxu0 0.0
      %1742 = vmatpush2.msra.mxu0 0.0
      %1743 = vmatprep.subr.mxu0 0.0
      %1744 = vmatpush2.msra.mxu0 0.0
      %1745 = vmatprep.subr.mxu0 0.0
      %1746 = vmatpush2.msra.mxu0 0.0
      %1747 = vmatprep.subr.mxu0 0.0
      %1748 = vmatpush2.msra.mxu0 0.0
      %1749 = vmatprep.subr.mxu0 0.0
      %1750 = vmatpush2.msra.mxu0 0.0
      %1751 = vmatprep.subr.mxu0 0.0
      %1752 = vmatpush2.msra.mxu0 0.0
      %1753 = vmatprep.subr.mxu0 0.0
      %1754 = vmatpush2.msra.mxu0 0.0
      %1755 = vmatprep.subr.mxu0 0.0
      %1756 = vmatpush2.msra.mxu0 0.0
      %1757 = vmatprep.subr.mxu0 0.0
      %1758 = vmatpush2.msra.mxu0 0.0
      %1759 = vmatprep.subr.mxu0 0.0
      %1760 = vmatpush2.msra.mxu0 0.0
      %1761 = vmatprep.subr.mxu0 0.0
      %1762 = vmatpush2.msra.mxu0 0.0
      %1763 = vmatprep.subr.mxu0 0.0
      %1764 = vmatpush2.msra.mxu0 0.0
      %1765 = vmatprep.mubr.f32.mxu0 0.0
      %1766 = vmatmul.mubr.f32.gmra.mxu0 %v1696
      %v1767 = vpop.f32.mrf.mxu0
      %v1768 = vadd.f32 0.0, %v1767
      %v1769 = vpop.f32.mrf.mxu0
      %1770 = vmatprep.mubr.f32.mxu0 0.0
      %1771 = vmatmul.mubr.f32.gmra.mxu0 %v1699
      %v1772 = vpop.f32.mrf.mxu0
      %v1773 = vadd.f32 0.0, %v1772
      %v1774 = vpop.f32.mrf.mxu0
      %1775 = vdwg.mxu0
      %v1776 = vmax.f32 %v1768, 0.0
      %v1777 = vmax.f32 %v1773, 0.0
      %v1778 = vld [vmem:[%s4] sm:$0xff]
      %v1779 = vld [vmem:[%s4 + $0x8] sm:$0xff]
      %v1780 = vld [vmem:[%s4 + $0x10] sm:$0xff]
      %v1781 = vld [vmem:[%s4 + $0x18] sm:$0xff]
      %v1782 = vld [vmem:[%s4 + $0x20] sm:$0xff]
      %v1783 = vld [vmem:[%s4 + $0x28] sm:$0xff]
      %v1784 = vld [vmem:[%s4 + $0x30] sm:$0xff]
      %v1785 = vld [vmem:[%s4 + $0x38] sm:$0xff]
      %vm1786 = vcmask 130048
      %v1788 = vsel %vm1786, %v1778, 0
      %v1791 = vsel %vm1786, %v1779, 0
      %v1794 = vsel %vm1786, %v1780, 0
      %v1797 = vsel %vm1786, %v1781, 0
      %v1800 = vsel %vm1786, %v1782, 0
      %v1803 = vsel %vm1786, %v1783, 0
      %v1806 = vsel %vm1786, %v1784, 0
      %v1809 = vsel %vm1786, %v1785, 0
      %1811 = vmatprep.subr.mxu0 0.0
      %1812 = vmatpush1.msra.mxu0 0.0
      %1813 = vmatprep.subr.mxu0 0.0
      %1814 = vmatpush1.msra.mxu0 0.0
      %1815 = vmatprep.subr.mxu0 0.0
      %1816 = vmatpush1.msra.mxu0 0.0
      %1817 = vmatprep.subr.mxu0 0.0
      %1818 = vmatpush1.msra.mxu0 0.0
      %1819 = vmatprep.subr.mxu0 0.0
      %1820 = vmatpush1.msra.mxu0 0.0
      %1821 = vmatprep.subr.mxu0 0.0
      %1822 = vmatpush1.msra.mxu0 0.0
      %1823 = vmatprep.subr.mxu0 0.0
      %1824 = vmatpush1.msra.mxu0 0.0
      %1825 = vmatprep.subr.mxu0 0.0
      %1826 = vmatpush1.msra.mxu0 0.0
      %1827 = vmatprep.subr.mxu0 0.0
      %1828 = vmatpush1.msra.mxu0 0.0
      %1829 = vmatprep.subr.mxu0 0.0
      %1830 = vmatpush1.msra.mxu0 0.0
      %1831 = vmatprep.subr.mxu0 0.0
      %1832 = vmatpush1.msra.mxu0 0.0
      %1833 = vmatprep.subr.mxu0 0.0
      %1834 = vmatpush1.msra.mxu0 0.0
      %1835 = vmatprep.subr.mxu0 0.0
      %1836 = vmatpush1.msra.mxu0 0.0
      %1837 = vmatprep.subr.mxu0 0.0
      %1838 = vmatpush1.msra.mxu0 0.0
      %1839 = vmatprep.subr.mxu0 0.0
      %1840 = vmatpush1.msra.mxu0 %v1777
      %1841 = vmatprep.subr.mxu0 0.0
      %1842 = vmatpush1.msra.mxu0 %v1776
      %1843 = vmatprep.subr.mxu0 0.0
      %1844 = vmatpush2.msra.mxu0 0.0
      %1845 = vmatprep.subr.mxu0 0.0
      %1846 = vmatpush2.msra.mxu0 0.0
      %1847 = vmatprep.subr.mxu0 0.0
      %1848 = vmatpush2.msra.mxu0 0.0
      %1849 = vmatprep.subr.mxu0 0.0
      %1850 = vmatpush2.msra.mxu0 0.0
      %1851 = vmatprep.subr.mxu0 0.0
      %1852 = vmatpush2.msra.mxu0 0.0
      %1853 = vmatprep.subr.mxu0 0.0
      %1854 = vmatpush2.msra.mxu0 0.0
      %1855 = vmatprep.subr.mxu0 0.0
      %1856 = vmatpush2.msra.mxu0 0.0
      %1857 = vmatprep.subr.mxu0 0.0
      %1858 = vmatpush2.msra.mxu0 0.0
      %1859 = vmatprep.subr.mxu0 0.0
      %1860 = vmatpush2.msra.mxu0 0.0
      %1861 = vmatprep.subr.mxu0 0.0
      %1862 = vmatpush2.msra.mxu0 0.0
      %1863 = vmatprep.subr.mxu0 0.0
      %1864 = vmatpush2.msra.mxu0 0.0
      %1865 = vmatprep.subr.mxu0 0.0
      %1866 = vmatpush2.msra.mxu0 0.0
      %1867 = vmatprep.subr.mxu0 0.0
      %1868 = vmatpush2.msra.mxu0 0.0
      %1869 = vmatprep.subr.mxu0 0.0
      %1870 = vmatpush2.msra.mxu0 0.0
      %1871 = vmatprep.subr.mxu0 0.0
      %1872 = vmatpush2.msra.mxu0 0.0
      %1873 = vmatprep.subr.mxu0 0.0
      %1874 = vmatpush2.msra.mxu0 0.0
      %1875 = vmatprep.mubr.f32.mxu0 0.0
      %1876 = vmatmul.mubr.f32.gmra.mxu0 %v1788
      %v1877 = vpop.f32.mrf.mxu0
      %v1878 = vadd.f32 0.0, %v1877
      %v1879 = vpop.f32.mrf.mxu0
      %1880 = vmatprep.mubr.f32.mxu0 0.0
      %1881 = vmatmul.mubr.f32.gmra.mxu0 %v1791
      %v1882 = vpop.f32.mrf.mxu0
      %v1883 = vadd.f32 0.0, %v1882
      %v1884 = vpop.f32.mrf.mxu0
      %1885 = vmatprep.mubr.f32.mxu0 0.0
      %1886 = vmatmul.mubr.f32.gmra.mxu0 %v1794
      %v1887 = vpop.f32.mrf.mxu0
      %v1888 = vadd.f32 0.0, %v1887
      %v1889 = vpop.f32.mrf.mxu0
      %1890 = vmatprep.mubr.f32.mxu0 0.0
      %1891 = vmatmul.mubr.f32.gmra.mxu0 %v1797
      %v1892 = vpop.f32.mrf.mxu0
      %v1893 = vadd.f32 0.0, %v1892
      %v1894 = vpop.f32.mrf.mxu0
      %1895 = vmatprep.mubr.f32.mxu0 0.0
      %1896 = vmatmul.mubr.f32.gmra.mxu0 %v1800
      %v1897 = vpop.f32.mrf.mxu0
      %v1898 = vadd.f32 0.0, %v1897
      %v1899 = vpop.f32.mrf.mxu0
      %1900 = vmatprep.mubr.f32.mxu0 0.0
      %1901 = vmatmul.mubr.f32.gmra.mxu0 %v1803
      %v1902 = vpop.f32.mrf.mxu0
      %v1903 = vadd.f32 0.0, %v1902
      %v1904 = vpop.f32.mrf.mxu0
      %1905 = vmatprep.mubr.f32.mxu0 0.0
      %1906 = vmatmul.mubr.f32.gmra.mxu0 %v1806
      %v1907 = vpop.f32.mrf.mxu0
      %v1908 = vadd.f32 0.0, %v1907
      %v1909 = vpop.f32.mrf.mxu0
      %1910 = vmatprep.mubr.f32.mxu0 0.0
      %1911 = vmatmul.mubr.f32.gmra.mxu0 %v1809
      %v1912 = vpop.f32.mrf.mxu0
      %v1913 = vadd.f32 0.0, %v1912
      %v1914 = vpop.f32.mrf.mxu0
      %1915 = vdwg.mxu0
      %v1916 = vsub.f32 0.0, %v1878
      %v1917 = vsub.f32 0.0, %v1883
      %v1918 = vsub.f32 0.0, %v1888
      %v1919 = vsub.f32 0.0, %v1893
      %v1920 = vsub.f32 0.0, %v1898
      %v1921 = vsub.f32 0.0, %v1903
      %v1922 = vsub.f32 0.0, %v1908
      %v1923 = vsub.f32 0.0, %v1913
      %v1924 = vmul.f32 %v1916, 1.442695
      %v1925 = vpow.pop %v1924
      %v1926 = vmul.f32 %v1917, 1.442695
      %v1927 = vpow.pop %v1926
      %v1928 = vmul.f32 %v1918, 1.442695
      %v1929 = vpow.pop %v1928
      %v1930 = vmul.f32 %v1919, 1.442695
      %v1931 = vpow.pop %v1930
      %v1932 = vmul.f32 %v1920, 1.442695
      %v1933 = vpow.pop %v1932
      %v1934 = vmul.f32 %v1921, 1.442695
      %v1935 = vpow.pop %v1934
      %v1936 = vmul.f32 %v1922, 1.442695
      %v1937 = vpow.pop %v1936
      %v1938 = vmul.f32 %v1923, 1.442695
      %v1939 = vpow.pop %v1938
      %v1940 = vadd.f32 %v1925, 1.0
      %v1941 = vadd.f32 %v1927, 1.0
      %v1942 = vadd.f32 %v1929, 1.0
      %v1943 = vadd.f32 %v1931, 1.0
      %v1944 = vadd.f32 %v1933, 1.0
      %v1945 = vadd.f32 %v1935, 1.0
      %v1946 = vadd.f32 %v1937, 1.0
      %v1947 = vadd.f32 %v1939, 1.0
      %v1948 = vrcp.pop %v1940
      %v1949 = vrcp.pop %v1941
      %v1950 = vrcp.pop %v1942
      %v1951 = vrcp.pop %v1943
      %v1952 = vrcp.pop %v1944
      %v1953 = vrcp.pop %v1945
      %v1954 = vrcp.pop %v1946
      %v1955 = vrcp.pop %v1947
      %v1956 = vmul.f32 %v1940, %v1948
      %v1957 = vmul.f32 %v1941, %v1949
      %v1958 = vmul.f32 %v1942, %v1950
      %v1959 = vmul.f32 %v1943, %v1951
      %v1960 = vmul.f32 %v1944, %v1952
      %v1961 = vmul.f32 %v1945, %v1953
      %v1962 = vmul.f32 %v1946, %v1954
      %v1963 = vmul.f32 %v1947, %v1955
      %v1964 = vsub.f32 2.0, %v1956
      %v1965 = vsub.f32 2.0, %v1957
      %v1966 = vsub.f32 2.0, %v1958
      %v1967 = vsub.f32 2.0, %v1959
      %v1968 = vsub.f32 2.0, %v1960
      %v1969 = vsub.f32 2.0, %v1961
      %v1970 = vsub.f32 2.0, %v1962
      %v1971 = vsub.f32 2.0, %v1963
      %v1972 = vmul.f32 %v1948, %v1964
      %v1973 = vmul.f32 %v1949, %v1965
      %v1974 = vmul.f32 %v1950, %v1966
      %v1975 = vmul.f32 %v1951, %v1967
      %v1976 = vmul.f32 %v1952, %v1968
      %v1977 = vmul.f32 %v1953, %v1969
      %v1978 = vmul.f32 %v1954, %v1970
      %v1979 = vmul.f32 %v1955, %v1971
      %1981 = vset.pattern.permute.xlu0 0
      %1982 = vperm.xlu0 %1981, %v1972
      %v1983 = vpop.permute.xlu0 %1982
      %1986 = vset.pattern.permute.xlu0 0
      %1987 = vperm.xlu0 %1986, %v1973
      %v1988 = vpop.permute.xlu0 %1987
      %1991 = vset.pattern.permute.xlu0 0
      %1992 = vperm.xlu0 %1991, %v1974
      %v1993 = vpop.permute.xlu0 %1992
      %1996 = vset.pattern.permute.xlu0 0
      %1997 = vperm.xlu0 %1996, %v1975
      %v1998 = vpop.permute.xlu0 %1997
      %2001 = vset.pattern.permute.xlu0 0
      %2002 = vperm.xlu0 %2001, %v1976
      %v2003 = vpop.permute.xlu0 %2002
      %2006 = vset.pattern.permute.xlu0 0
      %2007 = vperm.xlu0 %2006, %v1977
      %v2008 = vpop.permute.xlu0 %2007
      %2011 = vset.pattern.permute.xlu0 0
      %2012 = vperm.xlu0 %2011, %v1978
      %v2013 = vpop.permute.xlu0 %2012
      %2016 = vset.pattern.permute.xlu0 0
      %2017 = vperm.xlu0 %2016, %v1979
      %v2018 = vpop.permute.xlu0 %2017
      %v2020 = vmul.f32 %v1164, %v1983
      %v2021 = vmul.f32 %v1165, %v1983
      %v2022 = vmul.f32 %v1166, %v1983
      %v2023 = vmul.f32 %v1167, %v1983
      %v2024 = vmul.f32 %v1168, %v1983
      %v2025 = vmul.f32 %v1169, %v1983
      %v2026 = vmul.f32 %v1170, %v1983
      %v2027 = vmul.f32 %v1171, %v1983
      %v2028 = vmul.f32 %v1172, %v1983
      %v2029 = vmul.f32 %v1173, %v1983
      %v2030 = vmul.f32 %v1174, %v1983
      %v2031 = vmul.f32 %v1175, %v1983
      %v2032 = vmul.f32 %v1176, %v1983
      %v2033 = vmul.f32 %v1177, %v1983
      %v2034 = vmul.f32 %v1178, %v1983
      %v2035 = vmul.f32 %v1179, %v1983
      %v2036 = vmul.f32 %v1180, %v1983
      %v2037 = vmul.f32 %v1181, %v1983
      %v2038 = vmul.f32 %v1182, %v1983
      %v2039 = vmul.f32 %v1183, %v1983
      %v2040 = vmul.f32 %v1184, %v1983
      %v2041 = vmul.f32 %v1185, %v1983
      %v2042 = vmul.f32 %v1186, %v1983
      %v2043 = vmul.f32 %v1187, %v1983
      %v2044 = vmul.f32 %v1188, %v1983
      %v2045 = vmul.f32 %v1189, %v1983
      %v2046 = vmul.f32 %v1190, %v1983
      %v2047 = vmul.f32 %v1191, %v1983
      %v2048 = vmul.f32 %v1192, %v1983
      %v2049 = vmul.f32 %v1193, %v1983
      %v2050 = vmul.f32 %v1194, %v1983
      %v2051 = vmul.f32 %v1195, %v1983
      %v2052 = vmul.f32 %v1196, %v1988
      %v2053 = vmul.f32 %v1197, %v1988
      %v2054 = vmul.f32 %v1198, %v1988
      %v2055 = vmul.f32 %v1199, %v1988
      %v2056 = vmul.f32 %v1200, %v1988
      %v2057 = vmul.f32 %v1201, %v1988
      %v2058 = vmul.f32 %v1202, %v1988
      %v2059 = vmul.f32 %v1203, %v1988
      %v2060 = vmul.f32 %v1204, %v1988
      %v2061 = vmul.f32 %v1205, %v1988
      %v2062 = vmul.f32 %v1206, %v1988
      %v2063 = vmul.f32 %v1207, %v1988
      %v2064 = vmul.f32 %v1208, %v1988
      %v2065 = vmul.f32 %v1209, %v1988
      %v2066 = vmul.f32 %v1210, %v1988
      %v2067 = vmul.f32 %v1211, %v1988
      %v2068 = vmul.f32 %v1212, %v1988
      %v2069 = vmul.f32 %v1213, %v1988
      %v2070 = vmul.f32 %v1214, %v1988
      %v2071 = vmul.f32 %v1215, %v1988
      %v2072 = vmul.f32 %v1216, %v1988
      %v2073 = vmul.f32 %v1217, %v1988
      %v2074 = vmul.f32 %v1218, %v1988
      %v2075 = vmul.f32 %v1219, %v1988
      %v2076 = vmul.f32 %v1220, %v1988
      %v2077 = vmul.f32 %v1221, %v1988
      %v2078 = vmul.f32 %v1222, %v1988
      %v2079 = vmul.f32 %v1223, %v1988
      %v2080 = vmul.f32 %v1224, %v1988
      %v2081 = vmul.f32 %v1225, %v1988
      %v2082 = vmul.f32 %v1226, %v1988
      %v2083 = vmul.f32 %v1227, %v1988
      %v2084 = vmul.f32 %v1228, %v1993
      %v2085 = vmul.f32 %v1229, %v1993
      %v2086 = vmul.f32 %v1230, %v1993
      %v2087 = vmul.f32 %v1231, %v1993
      %v2088 = vmul.f32 %v1232, %v1993
      %v2089 = vmul.f32 %v1233, %v1993
      %v2090 = vmul.f32 %v1234, %v1993
      %v2091 = vmul.f32 %v1235, %v1993
      %v2092 = vmul.f32 %v1236, %v1993
      %v2093 = vmul.f32 %v1237, %v1993
      %v2094 = vmul.f32 %v1238, %v1993
      %v2095 = vmul.f32 %v1239, %v1993
      %v2096 = vmul.f32 %v1240, %v1993
      %v2097 = vmul.f32 %v1241, %v1993
      %v2098 = vmul.f32 %v1242, %v1993
      %v2099 = vmul.f32 %v1243, %v1993
      %v2100 = vmul.f32 %v1244, %v1993
      %v2101 = vmul.f32 %v1245, %v1993
      %v2102 = vmul.f32 %v1246, %v1993
      %v2103 = vmul.f32 %v1247, %v1993
      %v2104 = vmul.f32 %v1248, %v1993
      %v2105 = vmul.f32 %v1249, %v1993
      %v2106 = vmul.f32 %v1250, %v1993
      %v2107 = vmul.f32 %v1251, %v1993
      %v2108 = vmul.f32 %v1252, %v1993
      %v2109 = vmul.f32 %v1253, %v1993
      %v2110 = vmul.f32 %v1254, %v1993
      %v2111 = vmul.f32 %v1255, %v1993
      %v2112 = vmul.f32 %v1256, %v1993
      %v2113 = vmul.f32 %v1257, %v1993
      %v2114 = vmul.f32 %v1258, %v1993
      %v2115 = vmul.f32 %v1259, %v1993
      %v2116 = vmul.f32 %v1260, %v1998
      %v2117 = vmul.f32 %v1261, %v1998
      %v2118 = vmul.f32 %v1262, %v1998
      %v2119 = vmul.f32 %v1263, %v1998
      %v2120 = vmul.f32 %v1264, %v1998
      %v2121 = vmul.f32 %v1265, %v1998
      %v2122 = vmul.f32 %v1266, %v1998
      %v2123 = vmul.f32 %v1267, %v1998
      %v2124 = vmul.f32 %v1268, %v1998
      %v2125 = vmul.f32 %v1269, %v1998
      %v2126 = vmul.f32 %v1270, %v1998
      %v2127 = vmul.f32 %v1271, %v1998
      %v2128 = vmul.f32 %v1272, %v1998
      %v2129 = vmul.f32 %v1273, %v1998
      %v2130 = vmul.f32 %v1274, %v1998
      %v2131 = vmul.f32 %v1275, %v1998
      %v2132 = vmul.f32 %v1276, %v1998
      %v2133 = vmul.f32 %v1277, %v1998
      %v2134 = vmul.f32 %v1278, %v1998
      %v2135 = vmul.f32 %v1279, %v1998
      %v2136 = vmul.f32 %v1280, %v1998
      %v2137 = vmul.f32 %v1281, %v1998
      %v2138 = vmul.f32 %v1282, %v1998
      %v2139 = vmul.f32 %v1283, %v1998
      %v2140 = vmul.f32 %v1284, %v1998
      %v2141 = vmul.f32 %v1285, %v1998
      %v2142 = vmul.f32 %v1286, %v1998
      %v2143 = vmul.f32 %v1287, %v1998
      %v2144 = vmul.f32 %v1288, %v1998
      %v2145 = vmul.f32 %v1289, %v1998
      %v2146 = vmul.f32 %v1290, %v1998
      %v2147 = vmul.f32 %v1291, %v1998
      %v2148 = vmul.f32 %v1292, %v2003
      %v2149 = vmul.f32 %v1293, %v2003
      %v2150 = vmul.f32 %v1294, %v2003
      %v2151 = vmul.f32 %v1295, %v2003
      %v2152 = vmul.f32 %v1296, %v2003
      %v2153 = vmul.f32 %v1297, %v2003
      %v2154 = vmul.f32 %v1298, %v2003
      %v2155 = vmul.f32 %v1299, %v2003
      %v2156 = vmul.f32 %v1300, %v2003
      %v2157 = vmul.f32 %v1301, %v2003
      %v2158 = vmul.f32 %v1302, %v2003
      %v2159 = vmul.f32 %v1303, %v2003
      %v2160 = vmul.f32 %v1304, %v2003
      %v2161 = vmul.f32 %v1305, %v2003
      %v2162 = vmul.f32 %v1306, %v2003
      %v2163 = vmul.f32 %v1307, %v2003
      %v2164 = vmul.f32 %v1308, %v2003
      %v2165 = vmul.f32 %v1309, %v2003
      %v2166 = vmul.f32 %v1310, %v2003
      %v2167 = vmul.f32 %v1311, %v2003
      %v2168 = vmul.f32 %v1312, %v2003
      %v2169 = vmul.f32 %v1313, %v2003
      %v2170 = vmul.f32 %v1314, %v2003
      %v2171 = vmul.f32 %v1315, %v2003
      %v2172 = vmul.f32 %v1316, %v2003
      %v2173 = vmul.f32 %v1317, %v2003
      %v2174 = vmul.f32 %v1318, %v2003
      %v2175 = vmul.f32 %v1319, %v2003
      %v2176 = vmul.f32 %v1320, %v2003
      %v2177 = vmul.f32 %v1321, %v2003
      %v2178 = vmul.f32 %v1322, %v2003
      %v2179 = vmul.f32 %v1323, %v2003
      %v2180 = vmul.f32 %v1324, %v2008
      %v2181 = vmul.f32 %v1325, %v2008
      %v2182 = vmul.f32 %v1326, %v2008
      %v2183 = vmul.f32 %v1327, %v2008
      %v2184 = vmul.f32 %v1328, %v2008
      %v2185 = vmul.f32 %v1329, %v2008
      %v2186 = vmul.f32 %v1330, %v2008
      %v2187 = vmul.f32 %v1331, %v2008
      %v2188 = vmul.f32 %v1332, %v2008
      %v2189 = vmul.f32 %v1333, %v2008
      %v2190 = vmul.f32 %v1334, %v2008
      %v2191 = vmul.f32 %v1335, %v2008
      %v2192 = vmul.f32 %v1336, %v2008
      %v2193 = vmul.f32 %v1337, %v2008
      %v2194 = vmul.f32 %v1338, %v2008
      %v2195 = vmul.f32 %v1339, %v2008
      %v2196 = vmul.f32 %v1340, %v2008
      %v2197 = vmul.f32 %v1341, %v2008
      %v2198 = vmul.f32 %v1342, %v2008
      %v2199 = vmul.f32 %v1343, %v2008
      %v2200 = vmul.f32 %v1344, %v2008
      %v2201 = vmul.f32 %v1345, %v2008
      %v2202 = vmul.f32 %v1346, %v2008
      %v2203 = vmul.f32 %v1347, %v2008
      %v2204 = vmul.f32 %v1348, %v2008
      %v2205 = vmul.f32 %v1349, %v2008
      %v2206 = vmul.f32 %v1350, %v2008
      %v2207 = vmul.f32 %v1351, %v2008
      %v2208 = vmul.f32 %v1352, %v2008
      %v2209 = vmul.f32 %v1353, %v2008
      %v2210 = vmul.f32 %v1354, %v2008
      %v2211 = vmul.f32 %v1355, %v2008
      %v2212 = vmul.f32 %v1356, %v2013
      %v2213 = vmul.f32 %v1357, %v2013
      %v2214 = vmul.f32 %v1358, %v2013
      %v2215 = vmul.f32 %v1359, %v2013
      %v2216 = vmul.f32 %v1360, %v2013
      %v2217 = vmul.f32 %v1361, %v2013
      %v2218 = vmul.f32 %v1362, %v2013
      %v2219 = vmul.f32 %v1363, %v2013
      %v2220 = vmul.f32 %v1364, %v2013
      %v2221 = vmul.f32 %v1365, %v2013
      %v2222 = vmul.f32 %v1366, %v2013
      %v2223 = vmul.f32 %v1367, %v2013
      %v2224 = vmul.f32 %v1368, %v2013
      %v2225 = vmul.f32 %v1369, %v2013
      %v2226 = vmul.f32 %v1370, %v2013
      %v2227 = vmul.f32 %v1371, %v2013
      %v2228 = vmul.f32 %v1372, %v2013
      %v2229 = vmul.f32 %v1373, %v2013
      %v2230 = vmul.f32 %v1374, %v2013
      %v2231 = vmul.f32 %v1375, %v2013
      %v2232 = vmul.f32 %v1376, %v2013
      %v2233 = vmul.f32 %v1377, %v2013
      %v2234 = vmul.f32 %v1378, %v2013
      %v2235 = vmul.f32 %v1379, %v2013
      %v2236 = vmul.f32 %v1380, %v2013
      %v2237 = vmul.f32 %v1381, %v2013
      %v2238 = vmul.f32 %v1382, %v2013
      %v2239 = vmul.f32 %v1383, %v2013
      %v2240 = vmul.f32 %v1384, %v2013
      %v2241 = vmul.f32 %v1385, %v2013
      %v2242 = vmul.f32 %v1386, %v2013
      %v2243 = vmul.f32 %v1387, %v2013
      %v2244 = vmul.f32 %v1388, %v2018
      %v2245 = vmul.f32 %v1389, %v2018
      %v2246 = vmul.f32 %v1390, %v2018
      %v2247 = vmul.f32 %v1391, %v2018
      %v2248 = vmul.f32 %v1392, %v2018
      %v2249 = vmul.f32 %v1393, %v2018
      %v2250 = vmul.f32 %v1394, %v2018
      %v2251 = vmul.f32 %v1395, %v2018
      %v2252 = vmul.f32 %v1396, %v2018
      %v2253 = vmul.f32 %v1397, %v2018
      %v2254 = vmul.f32 %v1398, %v2018
      %v2255 = vmul.f32 %v1399, %v2018
      %v2256 = vmul.f32 %v1400, %v2018
      %v2257 = vmul.f32 %v1401, %v2018
      %v2258 = vmul.f32 %v1402, %v2018
      %v2259 = vmul.f32 %v1403, %v2018
      %v2260 = vmul.f32 %v1404, %v2018
      %v2261 = vmul.f32 %v1405, %v2018
      %v2262 = vmul.f32 %v1406, %v2018
      %v2263 = vmul.f32 %v1407, %v2018
      %v2264 = vmul.f32 %v1408, %v2018
      %v2265 = vmul.f32 %v1409, %v2018
      %v2266 = vmul.f32 %v1410, %v2018
      %v2267 = vmul.f32 %v1411, %v2018
      %v2268 = vmul.f32 %v1412, %v2018
      %v2269 = vmul.f32 %v1413, %v2018
      %v2270 = vmul.f32 %v1414, %v2018
      %v2271 = vmul.f32 %v1415, %v2018
      %v2272 = vmul.f32 %v1416, %v2018
      %v2273 = vmul.f32 %v1417, %v2018
      %v2274 = vmul.f32 %v1418, %v2018
      %v2275 = vmul.f32 %v1419, %v2018
      %v2276 = vadd.f32 %v2020, %v2052
      %v2277 = vadd.f32 %v2276, %v2084
      %v2278 = vadd.f32 %v2277, %v2116
      %v2279 = vadd.f32 %v2278, %v2148
      %v2280 = vadd.f32 %v2279, %v2180
      %v2281 = vadd.f32 %v2280, %v2212
      %v2282 = vadd.f32 %v2281, %v2244
      %v2283 = vrot.slane %v2282, 4
      %v2284 = vadd.f32 %v2282, %v2283
      %v2285 = vrot.slane %v2284, 2
      %v2286 = vadd.f32 %v2284, %v2285
      %v2287 = vrot.slane %v2286, 1
      %v2288 = vadd.f32 %v2286, %v2287
      %v2289 = vadd.f32 %v2021, %v2053
      %v2290 = vadd.f32 %v2289, %v2085
      %v2291 = vadd.f32 %v2290, %v2117
      %v2292 = vadd.f32 %v2291, %v2149
      %v2293 = vadd.f32 %v2292, %v2181
      %v2294 = vadd.f32 %v2293, %v2213
      %v2295 = vadd.f32 %v2294, %v2245
      %v2296 = vrot.slane %v2295, 4
      %v2297 = vadd.f32 %v2295, %v2296
      %v2298 = vrot.slane %v2297, 2
      %v2299 = vadd.f32 %v2297, %v2298
      %v2300 = vrot.slane %v2299, 1
      %v2301 = vadd.f32 %v2299, %v2300
      %v2302 = vadd.f32 %v2022, %v2054
      %v2303 = vadd.f32 %v2302, %v2086
      %v2304 = vadd.f32 %v2303, %v2118
      %v2305 = vadd.f32 %v2304, %v2150
      %v2306 = vadd.f32 %v2305, %v2182
      %v2307 = vadd.f32 %v2306, %v2214
      %v2308 = vadd.f32 %v2307, %v2246
      %v2309 = vrot.slane %v2308, 4
      %v2310 = vadd.f32 %v2308, %v2309
      %v2311 = vrot.slane %v2310, 2
      %v2312 = vadd.f32 %v2310, %v2311
      %v2313 = vrot.slane %v2312, 1
      %v2314 = vadd.f32 %v2312, %v2313
      %v2315 = vadd.f32 %v2023, %v2055
      %v2316 = vadd.f32 %v2315, %v2087
      %v2317 = vadd.f32 %v2316, %v2119
      %v2318 = vadd.f32 %v2317, %v2151
      %v2319 = vadd.f32 %v2318, %v2183
      %v2320 = vadd.f32 %v2319, %v2215
      %v2321 = vadd.f32 %v2320, %v2247
      %v2322 = vrot.slane %v2321, 4
      %v2323 = vadd.f32 %v2321, %v2322
      %v2324 = vrot.slane %v2323, 2
      %v2325 = vadd.f32 %v2323, %v2324
      %v2326 = vrot.slane %v2325, 1
      %v2327 = vadd.f32 %v2325, %v2326
      %v2328 = vadd.f32 %v2024, %v2056
      %v2329 = vadd.f32 %v2328, %v2088
      %v2330 = vadd.f32 %v2329, %v2120
      %v2331 = vadd.f32 %v2330, %v2152
      %v2332 = vadd.f32 %v2331, %v2184
      %v2333 = vadd.f32 %v2332, %v2216
      %v2334 = vadd.f32 %v2333, %v2248
      %v2335 = vrot.slane %v2334, 4
      %v2336 = vadd.f32 %v2334, %v2335
      %v2337 = vrot.slane %v2336, 2
      %v2338 = vadd.f32 %v2336, %v2337
      %v2339 = vrot.slane %v2338, 1
      %v2340 = vadd.f32 %v2338, %v2339
      %v2341 = vadd.f32 %v2025, %v2057
      %v2342 = vadd.f32 %v2341, %v2089
      %v2343 = vadd.f32 %v2342, %v2121
      %v2344 = vadd.f32 %v2343, %v2153
      %v2345 = vadd.f32 %v2344, %v2185
      %v2346 = vadd.f32 %v2345, %v2217
      %v2347 = vadd.f32 %v2346, %v2249
      %v2348 = vrot.slane %v2347, 4
      %v2349 = vadd.f32 %v2347, %v2348
      %v2350 = vrot.slane %v2349, 2
      %v2351 = vadd.f32 %v2349, %v2350
      %v2352 = vrot.slane %v2351, 1
      %v2353 = vadd.f32 %v2351, %v2352
      %v2354 = vadd.f32 %v2026, %v2058
      %v2355 = vadd.f32 %v2354, %v2090
      %v2356 = vadd.f32 %v2355, %v2122
      %v2357 = vadd.f32 %v2356, %v2154
      %v2358 = vadd.f32 %v2357, %v2186
      %v2359 = vadd.f32 %v2358, %v2218
      %v2360 = vadd.f32 %v2359, %v2250
      %v2361 = vrot.slane %v2360, 4
      %v2362 = vadd.f32 %v2360, %v2361
      %v2363 = vrot.slane %v2362, 2
      %v2364 = vadd.f32 %v2362, %v2363
      %v2365 = vrot.slane %v2364, 1
      %v2366 = vadd.f32 %v2364, %v2365
      %v2367 = vadd.f32 %v2027, %v2059
      %v2368 = vadd.f32 %v2367, %v2091
      %v2369 = vadd.f32 %v2368, %v2123
      %v2370 = vadd.f32 %v2369, %v2155
      %v2371 = vadd.f32 %v2370, %v2187
      %v2372 = vadd.f32 %v2371, %v2219
      %v2373 = vadd.f32 %v2372, %v2251
      %v2374 = vrot.slane %v2373, 4
      %v2375 = vadd.f32 %v2373, %v2374
      %v2376 = vrot.slane %v2375, 2
      %v2377 = vadd.f32 %v2375, %v2376
      %v2378 = vrot.slane %v2377, 1
      %v2379 = vadd.f32 %v2377, %v2378
      %v2380 = vadd.f32 %v2028, %v2060
      %v2381 = vadd.f32 %v2380, %v2092
      %v2382 = vadd.f32 %v2381, %v2124
      %v2383 = vadd.f32 %v2382, %v2156
      %v2384 = vadd.f32 %v2383, %v2188
      %v2385 = vadd.f32 %v2384, %v2220
      %v2386 = vadd.f32 %v2385, %v2252
      %v2387 = vrot.slane %v2386, 4
      %v2388 = vadd.f32 %v2386, %v2387
      %v2389 = vrot.slane %v2388, 2
      %v2390 = vadd.f32 %v2388, %v2389
      %v2391 = vrot.slane %v2390, 1
      %v2392 = vadd.f32 %v2390, %v2391
      %v2393 = vadd.f32 %v2029, %v2061
      %v2394 = vadd.f32 %v2393, %v2093
      %v2395 = vadd.f32 %v2394, %v2125
      %v2396 = vadd.f32 %v2395, %v2157
      %v2397 = vadd.f32 %v2396, %v2189
      %v2398 = vadd.f32 %v2397, %v2221
      %v2399 = vadd.f32 %v2398, %v2253
      %v2400 = vrot.slane %v2399, 4
      %v2401 = vadd.f32 %v2399, %v2400
      %v2402 = vrot.slane %v2401, 2
      %v2403 = vadd.f32 %v2401, %v2402
      %v2404 = vrot.slane %v2403, 1
      %v2405 = vadd.f32 %v2403, %v2404
      %v2406 = vadd.f32 %v2030, %v2062
      %v2407 = vadd.f32 %v2406, %v2094
      %v2408 = vadd.f32 %v2407, %v2126
      %v2409 = vadd.f32 %v2408, %v2158
      %v2410 = vadd.f32 %v2409, %v2190
      %v2411 = vadd.f32 %v2410, %v2222
      %v2412 = vadd.f32 %v2411, %v2254
      %v2413 = vrot.slane %v2412, 4
      %v2414 = vadd.f32 %v2412, %v2413
      %v2415 = vrot.slane %v2414, 2
      %v2416 = vadd.f32 %v2414, %v2415
      %v2417 = vrot.slane %v2416, 1
      %v2418 = vadd.f32 %v2416, %v2417
      %v2419 = vadd.f32 %v2031, %v2063
      %v2420 = vadd.f32 %v2419, %v2095
      %v2421 = vadd.f32 %v2420, %v2127
      %v2422 = vadd.f32 %v2421, %v2159
      %v2423 = vadd.f32 %v2422, %v2191
      %v2424 = vadd.f32 %v2423, %v2223
      %v2425 = vadd.f32 %v2424, %v2255
      %v2426 = vrot.slane %v2425, 4
      %v2427 = vadd.f32 %v2425, %v2426
      %v2428 = vrot.slane %v2427, 2
      %v2429 = vadd.f32 %v2427, %v2428
      %v2430 = vrot.slane %v2429, 1
      %v2431 = vadd.f32 %v2429, %v2430
      %v2432 = vadd.f32 %v2032, %v2064
      %v2433 = vadd.f32 %v2432, %v2096
      %v2434 = vadd.f32 %v2433, %v2128
      %v2435 = vadd.f32 %v2434, %v2160
      %v2436 = vadd.f32 %v2435, %v2192
      %v2437 = vadd.f32 %v2436, %v2224
      %v2438 = vadd.f32 %v2437, %v2256
      %v2439 = vrot.slane %v2438, 4
      %v2440 = vadd.f32 %v2438, %v2439
      %v2441 = vrot.slane %v2440, 2
      %v2442 = vadd.f32 %v2440, %v2441
      %v2443 = vrot.slane %v2442, 1
      %v2444 = vadd.f32 %v2442, %v2443
      %v2445 = vadd.f32 %v2033, %v2065
      %v2446 = vadd.f32 %v2445, %v2097
      %v2447 = vadd.f32 %v2446, %v2129
      %v2448 = vadd.f32 %v2447, %v2161
      %v2449 = vadd.f32 %v2448, %v2193
      %v2450 = vadd.f32 %v2449, %v2225
      %v2451 = vadd.f32 %v2450, %v2257
      %v2452 = vrot.slane %v2451, 4
      %v2453 = vadd.f32 %v2451, %v2452
      %v2454 = vrot.slane %v2453, 2
      %v2455 = vadd.f32 %v2453, %v2454
      %v2456 = vrot.slane %v2455, 1
      %v2457 = vadd.f32 %v2455, %v2456
      %v2458 = vadd.f32 %v2034, %v2066
      %v2459 = vadd.f32 %v2458, %v2098
      %v2460 = vadd.f32 %v2459, %v2130
      %v2461 = vadd.f32 %v2460, %v2162
      %v2462 = vadd.f32 %v2461, %v2194
      %v2463 = vadd.f32 %v2462, %v2226
      %v2464 = vadd.f32 %v2463, %v2258
      %v2465 = vrot.slane %v2464, 4
      %v2466 = vadd.f32 %v2464, %v2465
      %v2467 = vrot.slane %v2466, 2
      %v2468 = vadd.f32 %v2466, %v2467
      %v2469 = vrot.slane %v2468, 1
      %v2470 = vadd.f32 %v2468, %v2469
      %v2471 = vadd.f32 %v2035, %v2067
      %v2472 = vadd.f32 %v2471, %v2099
      %v2473 = vadd.f32 %v2472, %v2131
      %v2474 = vadd.f32 %v2473, %v2163
      %v2475 = vadd.f32 %v2474, %v2195
      %v2476 = vadd.f32 %v2475, %v2227
      %v2477 = vadd.f32 %v2476, %v2259
      %v2478 = vrot.slane %v2477, 4
      %v2479 = vadd.f32 %v2477, %v2478
      %v2480 = vrot.slane %v2479, 2
      %v2481 = vadd.f32 %v2479, %v2480
      %v2482 = vrot.slane %v2481, 1
      %v2483 = vadd.f32 %v2481, %v2482
      %v2484 = vadd.f32 %v2036, %v2068
      %v2485 = vadd.f32 %v2484, %v2100
      %v2486 = vadd.f32 %v2485, %v2132
      %v2487 = vadd.f32 %v2486, %v2164
      %v2488 = vadd.f32 %v2487, %v2196
      %v2489 = vadd.f32 %v2488, %v2228
      %v2490 = vadd.f32 %v2489, %v2260
      %v2491 = vrot.slane %v2490, 4
      %v2492 = vadd.f32 %v2490, %v2491
      %v2493 = vrot.slane %v2492, 2
      %v2494 = vadd.f32 %v2492, %v2493
      %v2495 = vrot.slane %v2494, 1
      %v2496 = vadd.f32 %v2494, %v2495
      %v2497 = vadd.f32 %v2037, %v2069
      %v2498 = vadd.f32 %v2497, %v2101
      %v2499 = vadd.f32 %v2498, %v2133
      %v2500 = vadd.f32 %v2499, %v2165
      %v2501 = vadd.f32 %v2500, %v2197
      %v2502 = vadd.f32 %v2501, %v2229
      %v2503 = vadd.f32 %v2502, %v2261
      %v2504 = vrot.slane %v2503, 4
      %v2505 = vadd.f32 %v2503, %v2504
      %v2506 = vrot.slane %v2505, 2
      %v2507 = vadd.f32 %v2505, %v2506
      %v2508 = vrot.slane %v2507, 1
      %v2509 = vadd.f32 %v2507, %v2508
      %v2510 = vadd.f32 %v2038, %v2070
      %v2511 = vadd.f32 %v2510, %v2102
      %v2512 = vadd.f32 %v2511, %v2134
      %v2513 = vadd.f32 %v2512, %v2166
      %v2514 = vadd.f32 %v2513, %v2198
      %v2515 = vadd.f32 %v2514, %v2230
      %v2516 = vadd.f32 %v2515, %v2262
      %v2517 = vrot.slane %v2516, 4
      %v2518 = vadd.f32 %v2516, %v2517
      %v2519 = vrot.slane %v2518, 2
      %v2520 = vadd.f32 %v2518, %v2519
      %v2521 = vrot.slane %v2520, 1
      %v2522 = vadd.f32 %v2520, %v2521
      %v2523 = vadd.f32 %v2039, %v2071
      %v2524 = vadd.f32 %v2523, %v2103
      %v2525 = vadd.f32 %v2524, %v2135
      %v2526 = vadd.f32 %v2525, %v2167
      %v2527 = vadd.f32 %v2526, %v2199
      %v2528 = vadd.f32 %v2527, %v2231
      %v2529 = vadd.f32 %v2528, %v2263
      %v2530 = vrot.slane %v2529, 4
      %v2531 = vadd.f32 %v2529, %v2530
      %v2532 = vrot.slane %v2531, 2
      %v2533 = vadd.f32 %v2531, %v2532
      %v2534 = vrot.slane %v2533, 1
      %v2535 = vadd.f32 %v2533, %v2534
      %v2536 = vadd.f32 %v2040, %v2072
      %v2537 = vadd.f32 %v2536, %v2104
      %v2538 = vadd.f32 %v2537, %v2136
      %v2539 = vadd.f32 %v2538, %v2168
      %v2540 = vadd.f32 %v2539, %v2200
      %v2541 = vadd.f32 %v2540, %v2232
      %v2542 = vadd.f32 %v2541, %v2264
      %v2543 = vrot.slane %v2542, 4
      %v2544 = vadd.f32 %v2542, %v2543
      %v2545 = vrot.slane %v2544, 2
      %v2546 = vadd.f32 %v2544, %v2545
      %v2547 = vrot.slane %v2546, 1
      %v2548 = vadd.f32 %v2546, %v2547
      %v2549 = vadd.f32 %v2041, %v2073
      %v2550 = vadd.f32 %v2549, %v2105
      %v2551 = vadd.f32 %v2550, %v2137
      %v2552 = vadd.f32 %v2551, %v2169
      %v2553 = vadd.f32 %v2552, %v2201
      %v2554 = vadd.f32 %v2553, %v2233
      %v2555 = vadd.f32 %v2554, %v2265
      %v2556 = vrot.slane %v2555, 4
      %v2557 = vadd.f32 %v2555, %v2556
      %v2558 = vrot.slane %v2557, 2
      %v2559 = vadd.f32 %v2557, %v2558
      %v2560 = vrot.slane %v2559, 1
      %v2561 = vadd.f32 %v2559, %v2560
      %v2562 = vadd.f32 %v2042, %v2074
      %v2563 = vadd.f32 %v2562, %v2106
      %v2564 = vadd.f32 %v2563, %v2138
      %v2565 = vadd.f32 %v2564, %v2170
      %v2566 = vadd.f32 %v2565, %v2202
      %v2567 = vadd.f32 %v2566, %v2234
      %v2568 = vadd.f32 %v2567, %v2266
      %v2569 = vrot.slane %v2568, 4
      %v2570 = vadd.f32 %v2568, %v2569
      %v2571 = vrot.slane %v2570, 2
      %v2572 = vadd.f32 %v2570, %v2571
      %v2573 = vrot.slane %v2572, 1
      %v2574 = vadd.f32 %v2572, %v2573
      %v2575 = vadd.f32 %v2043, %v2075
      %v2576 = vadd.f32 %v2575, %v2107
      %v2577 = vadd.f32 %v2576, %v2139
      %v2578 = vadd.f32 %v2577, %v2171
      %v2579 = vadd.f32 %v2578, %v2203
      %v2580 = vadd.f32 %v2579, %v2235
      %v2581 = vadd.f32 %v2580, %v2267
      %v2582 = vrot.slane %v2581, 4
      %v2583 = vadd.f32 %v2581, %v2582
      %v2584 = vrot.slane %v2583, 2
      %v2585 = vadd.f32 %v2583, %v2584
      %v2586 = vrot.slane %v2585, 1
      %v2587 = vadd.f32 %v2585, %v2586
      %v2588 = vadd.f32 %v2044, %v2076
      %v2589 = vadd.f32 %v2588, %v2108
      %v2590 = vadd.f32 %v2589, %v2140
      %v2591 = vadd.f32 %v2590, %v2172
      %v2592 = vadd.f32 %v2591, %v2204
      %v2593 = vadd.f32 %v2592, %v2236
      %v2594 = vadd.f32 %v2593, %v2268
      %v2595 = vrot.slane %v2594, 4
      %v2596 = vadd.f32 %v2594, %v2595
      %v2597 = vrot.slane %v2596, 2
      %v2598 = vadd.f32 %v2596, %v2597
      %v2599 = vrot.slane %v2598, 1
      %v2600 = vadd.f32 %v2598, %v2599
      %v2601 = vadd.f32 %v2045, %v2077
      %v2602 = vadd.f32 %v2601, %v2109
      %v2603 = vadd.f32 %v2602, %v2141
      %v2604 = vadd.f32 %v2603, %v2173
      %v2605 = vadd.f32 %v2604, %v2205
      %v2606 = vadd.f32 %v2605, %v2237
      %v2607 = vadd.f32 %v2606, %v2269
      %v2608 = vrot.slane %v2607, 4
      %v2609 = vadd.f32 %v2607, %v2608
      %v2610 = vrot.slane %v2609, 2
      %v2611 = vadd.f32 %v2609, %v2610
      %v2612 = vrot.slane %v2611, 1
      %v2613 = vadd.f32 %v2611, %v2612
      %v2614 = vadd.f32 %v2046, %v2078
      %v2615 = vadd.f32 %v2614, %v2110
      %v2616 = vadd.f32 %v2615, %v2142
      %v2617 = vadd.f32 %v2616, %v2174
      %v2618 = vadd.f32 %v2617, %v2206
      %v2619 = vadd.f32 %v2618, %v2238
      %v2620 = vadd.f32 %v2619, %v2270
      %v2621 = vrot.slane %v2620, 4
      %v2622 = vadd.f32 %v2620, %v2621
      %v2623 = vrot.slane %v2622, 2
      %v2624 = vadd.f32 %v2622, %v2623
      %v2625 = vrot.slane %v2624, 1
      %v2626 = vadd.f32 %v2624, %v2625
      %v2627 = vadd.f32 %v2047, %v2079
      %v2628 = vadd.f32 %v2627, %v2111
      %v2629 = vadd.f32 %v2628, %v2143
      %v2630 = vadd.f32 %v2629, %v2175
      %v2631 = vadd.f32 %v2630, %v2207
      %v2632 = vadd.f32 %v2631, %v2239
      %v2633 = vadd.f32 %v2632, %v2271
      %v2634 = vrot.slane %v2633, 4
      %v2635 = vadd.f32 %v2633, %v2634
      %v2636 = vrot.slane %v2635, 2
      %v2637 = vadd.f32 %v2635, %v2636
      %v2638 = vrot.slane %v2637, 1
      %v2639 = vadd.f32 %v2637, %v2638
      %v2640 = vadd.f32 %v2048, %v2080
      %v2641 = vadd.f32 %v2640, %v2112
      %v2642 = vadd.f32 %v2641, %v2144
      %v2643 = vadd.f32 %v2642, %v2176
      %v2644 = vadd.f32 %v2643, %v2208
      %v2645 = vadd.f32 %v2644, %v2240
      %v2646 = vadd.f32 %v2645, %v2272
      %v2647 = vrot.slane %v2646, 4
      %v2648 = vadd.f32 %v2646, %v2647
      %v2649 = vrot.slane %v2648, 2
      %v2650 = vadd.f32 %v2648, %v2649
      %v2651 = vrot.slane %v2650, 1
      %v2652 = vadd.f32 %v2650, %v2651
      %v2653 = vadd.f32 %v2049, %v2081
      %v2654 = vadd.f32 %v2653, %v2113
      %v2655 = vadd.f32 %v2654, %v2145
      %v2656 = vadd.f32 %v2655, %v2177
      %v2657 = vadd.f32 %v2656, %v2209
      %v2658 = vadd.f32 %v2657, %v2241
      %v2659 = vadd.f32 %v2658, %v2273
      %v2660 = vrot.slane %v2659, 4
      %v2661 = vadd.f32 %v2659, %v2660
      %v2662 = vrot.slane %v2661, 2
      %v2663 = vadd.f32 %v2661, %v2662
      %v2664 = vrot.slane %v2663, 1
      %v2665 = vadd.f32 %v2663, %v2664
      %v2666 = vadd.f32 %v2050, %v2082
      %v2667 = vadd.f32 %v2666, %v2114
      %v2668 = vadd.f32 %v2667, %v2146
      %v2669 = vadd.f32 %v2668, %v2178
      %v2670 = vadd.f32 %v2669, %v2210
      %v2671 = vadd.f32 %v2670, %v2242
      %v2672 = vadd.f32 %v2671, %v2274
      %v2673 = vrot.slane %v2672, 4
      %v2674 = vadd.f32 %v2672, %v2673
      %v2675 = vrot.slane %v2674, 2
      %v2676 = vadd.f32 %v2674, %v2675
      %v2677 = vrot.slane %v2676, 1
      %v2678 = vadd.f32 %v2676, %v2677
      %v2679 = vadd.f32 %v2051, %v2083
      %v2680 = vadd.f32 %v2679, %v2115
      %v2681 = vadd.f32 %v2680, %v2147
      %v2682 = vadd.f32 %v2681, %v2179
      %v2683 = vadd.f32 %v2682, %v2211
      %v2684 = vadd.f32 %v2683, %v2243
      %v2685 = vadd.f32 %v2684, %v2275
      %v2686 = vrot.slane %v2685, 4
      %v2687 = vadd.f32 %v2685, %v2686
      %v2688 = vrot.slane %v2687, 2
      %v2689 = vadd.f32 %v2687, %v2688
      %v2690 = vrot.slane %v2689, 1
      %v2691 = vadd.f32 %v2689, %v2690
      %v2692 = vrcp.pop 64.0
      %v2693 = vmul.f32 %v2288, %v2692
      %v2694 = vmul.f32 %v2301, %v2692
      %v2695 = vmul.f32 %v2314, %v2692
      %v2696 = vmul.f32 %v2327, %v2692
      %v2697 = vmul.f32 %v2340, %v2692
      %v2698 = vmul.f32 %v2353, %v2692
      %v2699 = vmul.f32 %v2366, %v2692
      %v2700 = vmul.f32 %v2379, %v2692
      %v2701 = vmul.f32 %v2392, %v2692
      %v2702 = vmul.f32 %v2405, %v2692
      %v2703 = vmul.f32 %v2418, %v2692
      %v2704 = vmul.f32 %v2431, %v2692
      %v2705 = vmul.f32 %v2444, %v2692
      %v2706 = vmul.f32 %v2457, %v2692
      %v2707 = vmul.f32 %v2470, %v2692
      %v2708 = vmul.f32 %v2483, %v2692
      %v2709 = vmul.f32 %v2496, %v2692
      %v2710 = vmul.f32 %v2509, %v2692
      %v2711 = vmul.f32 %v2522, %v2692
      %v2712 = vmul.f32 %v2535, %v2692
      %v2713 = vmul.f32 %v2548, %v2692
      %v2714 = vmul.f32 %v2561, %v2692
      %v2715 = vmul.f32 %v2574, %v2692
      %v2716 = vmul.f32 %v2587, %v2692
      %v2717 = vmul.f32 %v2600, %v2692
      %v2718 = vmul.f32 %v2613, %v2692
      %v2719 = vmul.f32 %v2626, %v2692
      %v2720 = vmul.f32 %v2639, %v2692
      %v2721 = vmul.f32 %v2652, %v2692
      %v2722 = vmul.f32 %v2665, %v2692
      %v2723 = vmul.f32 %v2678, %v2692
      %v2724 = vmul.f32 %v2691, %v2692
      %v2725 = vmax.f32 %v2020, %v2052
      %v2726 = vmax.f32 %v2725, %v2084
      %v2727 = vmax.f32 %v2726, %v2116
      %v2728 = vmax.f32 %v2727, %v2148
      %v2729 = vmax.f32 %v2728, %v2180
      %v2730 = vmax.f32 %v2729, %v2212
      %v2731 = vmax.f32 %v2730, %v2244
      %v2732 = vrot.slane %v2731, 4
      %v2733 = vmax.f32 %v2731, %v2732
      %v2734 = vrot.slane %v2733, 2
      %v2735 = vmax.f32 %v2733, %v2734
      %v2736 = vrot.slane %v2735, 1
      %v2737 = vmax.f32 %v2735, %v2736
      %v2738 = vmax.f32 %v2021, %v2053
      %v2739 = vmax.f32 %v2738, %v2085
      %v2740 = vmax.f32 %v2739, %v2117
      %v2741 = vmax.f32 %v2740, %v2149
      %v2742 = vmax.f32 %v2741, %v2181
      %v2743 = vmax.f32 %v2742, %v2213
      %v2744 = vmax.f32 %v2743, %v2245
      %v2745 = vrot.slane %v2744, 4
      %v2746 = vmax.f32 %v2744, %v2745
      %v2747 = vrot.slane %v2746, 2
      %v2748 = vmax.f32 %v2746, %v2747
      %v2749 = vrot.slane %v2748, 1
      %v2750 = vmax.f32 %v2748, %v2749
      %v2751 = vmax.f32 %v2022, %v2054
      %v2752 = vmax.f32 %v2751, %v2086
      %v2753 = vmax.f32 %v2752, %v2118
      %v2754 = vmax.f32 %v2753, %v2150
      %v2755 = vmax.f32 %v2754, %v2182
      %v2756 = vmax.f32 %v2755, %v2214
      %v2757 = vmax.f32 %v2756, %v2246
      %v2758 = vrot.slane %v2757, 4
      %v2759 = vmax.f32 %v2757, %v2758
      %v2760 = vrot.slane %v2759, 2
      %v2761 = vmax.f32 %v2759, %v2760
      %v2762 = vrot.slane %v2761, 1
      %v2763 = vmax.f32 %v2761, %v2762
      %v2764 = vmax.f32 %v2023, %v2055
      %v2765 = vmax.f32 %v2764, %v2087
      %v2766 = vmax.f32 %v2765, %v2119
      %v2767 = vmax.f32 %v2766, %v2151
      %v2768 = vmax.f32 %v2767, %v2183
      %v2769 = vmax.f32 %v2768, %v2215
      %v2770 = vmax.f32 %v2769, %v2247
      %v2771 = vrot.slane %v2770, 4
      %v2772 = vmax.f32 %v2770, %v2771
      %v2773 = vrot.slane %v2772, 2
      %v2774 = vmax.f32 %v2772, %v2773
      %v2775 = vrot.slane %v2774, 1
      %v2776 = vmax.f32 %v2774, %v2775
      %v2777 = vmax.f32 %v2024, %v2056
      %v2778 = vmax.f32 %v2777, %v2088
      %v2779 = vmax.f32 %v2778, %v2120
      %v2780 = vmax.f32 %v2779, %v2152
      %v2781 = vmax.f32 %v2780, %v2184
      %v2782 = vmax.f32 %v2781, %v2216
      %v2783 = vmax.f32 %v2782, %v2248
      %v2784 = vrot.slane %v2783, 4
      %v2785 = vmax.f32 %v2783, %v2784
      %v2786 = vrot.slane %v2785, 2
      %v2787 = vmax.f32 %v2785, %v2786
      %v2788 = vrot.slane %v2787, 1
      %v2789 = vmax.f32 %v2787, %v2788
      %v2790 = vmax.f32 %v2025, %v2057
      %v2791 = vmax.f32 %v2790, %v2089
      %v2792 = vmax.f32 %v2791, %v2121
      %v2793 = vmax.f32 %v2792, %v2153
      %v2794 = vmax.f32 %v2793, %v2185
      %v2795 = vmax.f32 %v2794, %v2217
      %v2796 = vmax.f32 %v2795, %v2249
      %v2797 = vrot.slane %v2796, 4
      %v2798 = vmax.f32 %v2796, %v2797
      %v2799 = vrot.slane %v2798, 2
      %v2800 = vmax.f32 %v2798, %v2799
      %v2801 = vrot.slane %v2800, 1
      %v2802 = vmax.f32 %v2800, %v2801
      %v2803 = vmax.f32 %v2026, %v2058
      %v2804 = vmax.f32 %v2803, %v2090
      %v2805 = vmax.f32 %v2804, %v2122
      %v2806 = vmax.f32 %v2805, %v2154
      %v2807 = vmax.f32 %v2806, %v2186
      %v2808 = vmax.f32 %v2807, %v2218
      %v2809 = vmax.f32 %v2808, %v2250
      %v2810 = vrot.slane %v2809, 4
      %v2811 = vmax.f32 %v2809, %v2810
      %v2812 = vrot.slane %v2811, 2
      %v2813 = vmax.f32 %v2811, %v2812
      %v2814 = vrot.slane %v2813, 1
      %v2815 = vmax.f32 %v2813, %v2814
      %v2816 = vmax.f32 %v2027, %v2059
      %v2817 = vmax.f32 %v2816, %v2091
      %v2818 = vmax.f32 %v2817, %v2123
      %v2819 = vmax.f32 %v2818, %v2155
      %v2820 = vmax.f32 %v2819, %v2187
      %v2821 = vmax.f32 %v2820, %v2219
      %v2822 = vmax.f32 %v2821, %v2251
      %v2823 = vrot.slane %v2822, 4
      %v2824 = vmax.f32 %v2822, %v2823
      %v2825 = vrot.slane %v2824, 2
      %v2826 = vmax.f32 %v2824, %v2825
      %v2827 = vrot.slane %v2826, 1
      %v2828 = vmax.f32 %v2826, %v2827
      %v2829 = vmax.f32 %v2028, %v2060
      %v2830 = vmax.f32 %v2829, %v2092
      %v2831 = vmax.f32 %v2830, %v2124
      %v2832 = vmax.f32 %v2831, %v2156
      %v2833 = vmax.f32 %v2832, %v2188
      %v2834 = vmax.f32 %v2833, %v2220
      %v2835 = vmax.f32 %v2834, %v2252
      %v2836 = vrot.slane %v2835, 4
      %v2837 = vmax.f32 %v2835, %v2836
      %v2838 = vrot.slane %v2837, 2
      %v2839 = vmax.f32 %v2837, %v2838
      %v2840 = vrot.slane %v2839, 1
      %v2841 = vmax.f32 %v2839, %v2840
      %v2842 = vmax.f32 %v2029, %v2061
      %v2843 = vmax.f32 %v2842, %v2093
      %v2844 = vmax.f32 %v2843, %v2125
      %v2845 = vmax.f32 %v2844, %v2157
      %v2846 = vmax.f32 %v2845, %v2189
      %v2847 = vmax.f32 %v2846, %v2221
      %v2848 = vmax.f32 %v2847, %v2253
      %v2849 = vrot.slane %v2848, 4
      %v2850 = vmax.f32 %v2848, %v2849
      %v2851 = vrot.slane %v2850, 2
      %v2852 = vmax.f32 %v2850, %v2851
      %v2853 = vrot.slane %v2852, 1
      %v2854 = vmax.f32 %v2852, %v2853
      %v2855 = vmax.f32 %v2030, %v2062
      %v2856 = vmax.f32 %v2855, %v2094
      %v2857 = vmax.f32 %v2856, %v2126
      %v2858 = vmax.f32 %v2857, %v2158
      %v2859 = vmax.f32 %v2858, %v2190
      %v2860 = vmax.f32 %v2859, %v2222
      %v2861 = vmax.f32 %v2860, %v2254
      %v2862 = vrot.slane %v2861, 4
      %v2863 = vmax.f32 %v2861, %v2862
      %v2864 = vrot.slane %v2863, 2
      %v2865 = vmax.f32 %v2863, %v2864
      %v2866 = vrot.slane %v2865, 1
      %v2867 = vmax.f32 %v2865, %v2866
      %v2868 = vmax.f32 %v2031, %v2063
      %v2869 = vmax.f32 %v2868, %v2095
      %v2870 = vmax.f32 %v2869, %v2127
      %v2871 = vmax.f32 %v2870, %v2159
      %v2872 = vmax.f32 %v2871, %v2191
      %v2873 = vmax.f32 %v2872, %v2223
      %v2874 = vmax.f32 %v2873, %v2255
      %v2875 = vrot.slane %v2874, 4
      %v2876 = vmax.f32 %v2874, %v2875
      %v2877 = vrot.slane %v2876, 2
      %v2878 = vmax.f32 %v2876, %v2877
      %v2879 = vrot.slane %v2878, 1
      %v2880 = vmax.f32 %v2878, %v2879
      %v2881 = vmax.f32 %v2032, %v2064
      %v2882 = vmax.f32 %v2881, %v2096
      %v2883 = vmax.f32 %v2882, %v2128
      %v2884 = vmax.f32 %v2883, %v2160
      %v2885 = vmax.f32 %v2884, %v2192
      %v2886 = vmax.f32 %v2885, %v2224
      %v2887 = vmax.f32 %v2886, %v2256
      %v2888 = vrot.slane %v2887, 4
      %v2889 = vmax.f32 %v2887, %v2888
      %v2890 = vrot.slane %v2889, 2
      %v2891 = vmax.f32 %v2889, %v2890
      %v2892 = vrot.slane %v2891, 1
      %v2893 = vmax.f32 %v2891, %v2892
      %v2894 = vmax.f32 %v2033, %v2065
      %v2895 = vmax.f32 %v2894, %v2097
      %v2896 = vmax.f32 %v2895, %v2129
      %v2897 = vmax.f32 %v2896, %v2161
      %v2898 = vmax.f32 %v2897, %v2193
      %v2899 = vmax.f32 %v2898, %v2225
      %v2900 = vmax.f32 %v2899, %v2257
      %v2901 = vrot.slane %v2900, 4
      %v2902 = vmax.f32 %v2900, %v2901
      %v2903 = vrot.slane %v2902, 2
      %v2904 = vmax.f32 %v2902, %v2903
      %v2905 = vrot.slane %v2904, 1
      %v2906 = vmax.f32 %v2904, %v2905
      %v2907 = vmax.f32 %v2034, %v2066
      %v2908 = vmax.f32 %v2907, %v2098
      %v2909 = vmax.f32 %v2908, %v2130
      %v2910 = vmax.f32 %v2909, %v2162
      %v2911 = vmax.f32 %v2910, %v2194
      %v2912 = vmax.f32 %v2911, %v2226
      %v2913 = vmax.f32 %v2912, %v2258
      %v2914 = vrot.slane %v2913, 4
      %v2915 = vmax.f32 %v2913, %v2914
      %v2916 = vrot.slane %v2915, 2
      %v2917 = vmax.f32 %v2915, %v2916
      %v2918 = vrot.slane %v2917, 1
      %v2919 = vmax.f32 %v2917, %v2918
      %v2920 = vmax.f32 %v2035, %v2067
      %v2921 = vmax.f32 %v2920, %v2099
      %v2922 = vmax.f32 %v2921, %v2131
      %v2923 = vmax.f32 %v2922, %v2163
      %v2924 = vmax.f32 %v2923, %v2195
      %v2925 = vmax.f32 %v2924, %v2227
      %v2926 = vmax.f32 %v2925, %v2259
      %v2927 = vrot.slane %v2926, 4
      %v2928 = vmax.f32 %v2926, %v2927
      %v2929 = vrot.slane %v2928, 2
      %v2930 = vmax.f32 %v2928, %v2929
      %v2931 = vrot.slane %v2930, 1
      %v2932 = vmax.f32 %v2930, %v2931
      %v2933 = vmax.f32 %v2036, %v2068
      %v2934 = vmax.f32 %v2933, %v2100
      %v2935 = vmax.f32 %v2934, %v2132
      %v2936 = vmax.f32 %v2935, %v2164
      %v2937 = vmax.f32 %v2936, %v2196
      %v2938 = vmax.f32 %v2937, %v2228
      %v2939 = vmax.f32 %v2938, %v2260
      %v2940 = vrot.slane %v2939, 4
      %v2941 = vmax.f32 %v2939, %v2940
      %v2942 = vrot.slane %v2941, 2
      %v2943 = vmax.f32 %v2941, %v2942
      %v2944 = vrot.slane %v2943, 1
      %v2945 = vmax.f32 %v2943, %v2944
      %v2946 = vmax.f32 %v2037, %v2069
      %v2947 = vmax.f32 %v2946, %v2101
      %v2948 = vmax.f32 %v2947, %v2133
      %v2949 = vmax.f32 %v2948, %v2165
      %v2950 = vmax.f32 %v2949, %v2197
      %v2951 = vmax.f32 %v2950, %v2229
      %v2952 = vmax.f32 %v2951, %v2261
      %v2953 = vrot.slane %v2952, 4
      %v2954 = vmax.f32 %v2952, %v2953
      %v2955 = vrot.slane %v2954, 2
      %v2956 = vmax.f32 %v2954, %v2955
      %v2957 = vrot.slane %v2956, 1
      %v2958 = vmax.f32 %v2956, %v2957
      %v2959 = vmax.f32 %v2038, %v2070
      %v2960 = vmax.f32 %v2959, %v2102
      %v2961 = vmax.f32 %v2960, %v2134
      %v2962 = vmax.f32 %v2961, %v2166
      %v2963 = vmax.f32 %v2962, %v2198
      %v2964 = vmax.f32 %v2963, %v2230
      %v2965 = vmax.f32 %v2964, %v2262
      %v2966 = vrot.slane %v2965, 4
      %v2967 = vmax.f32 %v2965, %v2966
      %v2968 = vrot.slane %v2967, 2
      %v2969 = vmax.f32 %v2967, %v2968
      %v2970 = vrot.slane %v2969, 1
      %v2971 = vmax.f32 %v2969, %v2970
      %v2972 = vmax.f32 %v2039, %v2071
      %v2973 = vmax.f32 %v2972, %v2103
      %v2974 = vmax.f32 %v2973, %v2135
      %v2975 = vmax.f32 %v2974, %v2167
      %v2976 = vmax.f32 %v2975, %v2199
      %v2977 = vmax.f32 %v2976, %v2231
      %v2978 = vmax.f32 %v2977, %v2263
      %v2979 = vrot.slane %v2978, 4
      %v2980 = vmax.f32 %v2978, %v2979
      %v2981 = vrot.slane %v2980, 2
      %v2982 = vmax.f32 %v2980, %v2981
      %v2983 = vrot.slane %v2982, 1
      %v2984 = vmax.f32 %v2982, %v2983
      %v2985 = vmax.f32 %v2040, %v2072
      %v2986 = vmax.f32 %v2985, %v2104
      %v2987 = vmax.f32 %v2986, %v2136
      %v2988 = vmax.f32 %v2987, %v2168
      %v2989 = vmax.f32 %v2988, %v2200
      %v2990 = vmax.f32 %v2989, %v2232
      %v2991 = vmax.f32 %v2990, %v2264
      %v2992 = vrot.slane %v2991, 4
      %v2993 = vmax.f32 %v2991, %v2992
      %v2994 = vrot.slane %v2993, 2
      %v2995 = vmax.f32 %v2993, %v2994
      %v2996 = vrot.slane %v2995, 1
      %v2997 = vmax.f32 %v2995, %v2996
      %v2998 = vmax.f32 %v2041, %v2073
      %v2999 = vmax.f32 %v2998, %v2105
      %v3000 = vmax.f32 %v2999, %v2137
      %v3001 = vmax.f32 %v3000, %v2169
      %v3002 = vmax.f32 %v3001, %v2201
      %v3003 = vmax.f32 %v3002, %v2233
      %v3004 = vmax.f32 %v3003, %v2265
      %v3005 = vrot.slane %v3004, 4
      %v3006 = vmax.f32 %v3004, %v3005
      %v3007 = vrot.slane %v3006, 2
      %v3008 = vmax.f32 %v3006, %v3007
      %v3009 = vrot.slane %v3008, 1
      %v3010 = vmax.f32 %v3008, %v3009
      %v3011 = vmax.f32 %v2042, %v2074
      %v3012 = vmax.f32 %v3011, %v2106
      %v3013 = vmax.f32 %v3012, %v2138
      %v3014 = vmax.f32 %v3013, %v2170
      %v3015 = vmax.f32 %v3014, %v2202
      %v3016 = vmax.f32 %v3015, %v2234
      %v3017 = vmax.f32 %v3016, %v2266
      %v3018 = vrot.slane %v3017, 4
      %v3019 = vmax.f32 %v3017, %v3018
      %v3020 = vrot.slane %v3019, 2
      %v3021 = vmax.f32 %v3019, %v3020
      %v3022 = vrot.slane %v3021, 1
      %v3023 = vmax.f32 %v3021, %v3022
      %v3024 = vmax.f32 %v2043, %v2075
      %v3025 = vmax.f32 %v3024, %v2107
      %v3026 = vmax.f32 %v3025, %v2139
      %v3027 = vmax.f32 %v3026, %v2171
      %v3028 = vmax.f32 %v3027, %v2203
      %v3029 = vmax.f32 %v3028, %v2235
      %v3030 = vmax.f32 %v3029, %v2267
      %v3031 = vrot.slane %v3030, 4
      %v3032 = vmax.f32 %v3030, %v3031
      %v3033 = vrot.slane %v3032, 2
      %v3034 = vmax.f32 %v3032, %v3033
      %v3035 = vrot.slane %v3034, 1
      %v3036 = vmax.f32 %v3034, %v3035
      %v3037 = vmax.f32 %v2044, %v2076
      %v3038 = vmax.f32 %v3037, %v2108
      %v3039 = vmax.f32 %v3038, %v2140
      %v3040 = vmax.f32 %v3039, %v2172
      %v3041 = vmax.f32 %v3040, %v2204
      %v3042 = vmax.f32 %v3041, %v2236
      %v3043 = vmax.f32 %v3042, %v2268
      %v3044 = vrot.slane %v3043, 4
      %v3045 = vmax.f32 %v3043, %v3044
      %v3046 = vrot.slane %v3045, 2
      %v3047 = vmax.f32 %v3045, %v3046
      %v3048 = vrot.slane %v3047, 1
      %v3049 = vmax.f32 %v3047, %v3048
      %v3050 = vmax.f32 %v2045, %v2077
      %v3051 = vmax.f32 %v3050, %v2109
      %v3052 = vmax.f32 %v3051, %v2141
      %v3053 = vmax.f32 %v3052, %v2173
      %v3054 = vmax.f32 %v3053, %v2205
      %v3055 = vmax.f32 %v3054, %v2237
      %v3056 = vmax.f32 %v3055, %v2269
      %v3057 = vrot.slane %v3056, 4
      %v3058 = vmax.f32 %v3056, %v3057
      %v3059 = vrot.slane %v3058, 2
      %v3060 = vmax.f32 %v3058, %v3059
      %v3061 = vrot.slane %v3060, 1
      %v3062 = vmax.f32 %v3060, %v3061
      %v3063 = vmax.f32 %v2046, %v2078
      %v3064 = vmax.f32 %v3063, %v2110
      %v3065 = vmax.f32 %v3064, %v2142
      %v3066 = vmax.f32 %v3065, %v2174
      %v3067 = vmax.f32 %v3066, %v2206
      %v3068 = vmax.f32 %v3067, %v2238
      %v3069 = vmax.f32 %v3068, %v2270
      %v3070 = vrot.slane %v3069, 4
      %v3071 = vmax.f32 %v3069, %v3070
      %v3072 = vrot.slane %v3071, 2
      %v3073 = vmax.f32 %v3071, %v3072
      %v3074 = vrot.slane %v3073, 1
      %v3075 = vmax.f32 %v3073, %v3074
      %v3076 = vmax.f32 %v2047, %v2079
      %v3077 = vmax.f32 %v3076, %v2111
      %v3078 = vmax.f32 %v3077, %v2143
      %v3079 = vmax.f32 %v3078, %v2175
      %v3080 = vmax.f32 %v3079, %v2207
      %v3081 = vmax.f32 %v3080, %v2239
      %v3082 = vmax.f32 %v3081, %v2271
      %v3083 = vrot.slane %v3082, 4
      %v3084 = vmax.f32 %v3082, %v3083
      %v3085 = vrot.slane %v3084, 2
      %v3086 = vmax.f32 %v3084, %v3085
      %v3087 = vrot.slane %v3086, 1
      %v3088 = vmax.f32 %v3086, %v3087
      %v3089 = vmax.f32 %v2048, %v2080
      %v3090 = vmax.f32 %v3089, %v2112
      %v3091 = vmax.f32 %v3090, %v2144
      %v3092 = vmax.f32 %v3091, %v2176
      %v3093 = vmax.f32 %v3092, %v2208
      %v3094 = vmax.f32 %v3093, %v2240
      %v3095 = vmax.f32 %v3094, %v2272
      %v3096 = vrot.slane %v3095, 4
      %v3097 = vmax.f32 %v3095, %v3096
      %v3098 = vrot.slane %v3097, 2
      %v3099 = vmax.f32 %v3097, %v3098
      %v3100 = vrot.slane %v3099, 1
      %v3101 = vmax.f32 %v3099, %v3100
      %v3102 = vmax.f32 %v2049, %v2081
      %v3103 = vmax.f32 %v3102, %v2113
      %v3104 = vmax.f32 %v3103, %v2145
      %v3105 = vmax.f32 %v3104, %v2177
      %v3106 = vmax.f32 %v3105, %v2209
      %v3107 = vmax.f32 %v3106, %v2241
      %v3108 = vmax.f32 %v3107, %v2273
      %v3109 = vrot.slane %v3108, 4
      %v3110 = vmax.f32 %v3108, %v3109
      %v3111 = vrot.slane %v3110, 2
      %v3112 = vmax.f32 %v3110, %v3111
      %v3113 = vrot.slane %v3112, 1
      %v3114 = vmax.f32 %v3112, %v3113
      %v3115 = vmax.f32 %v2050, %v2082
      %v3116 = vmax.f32 %v3115, %v2114
      %v3117 = vmax.f32 %v3116, %v2146
      %v3118 = vmax.f32 %v3117, %v2178
      %v3119 = vmax.f32 %v3118, %v2210
      %v3120 = vmax.f32 %v3119, %v2242
      %v3121 = vmax.f32 %v3120, %v2274
      %v3122 = vrot.slane %v3121, 4
      %v3123 = vmax.f32 %v3121, %v3122
      %v3124 = vrot.slane %v3123, 2
      %v3125 = vmax.f32 %v3123, %v3124
      %v3126 = vrot.slane %v3125, 1
      %v3127 = vmax.f32 %v3125, %v3126
      %v3128 = vmax.f32 %v2051, %v2083
      %v3129 = vmax.f32 %v3128, %v2115
      %v3130 = vmax.f32 %v3129, %v2147
      %v3131 = vmax.f32 %v3130, %v2179
      %v3132 = vmax.f32 %v3131, %v2211
      %v3133 = vmax.f32 %v3132, %v2243
      %v3134 = vmax.f32 %v3133, %v2275
      %v3135 = vrot.slane %v3134, 4
      %v3136 = vmax.f32 %v3134, %v3135
      %v3137 = vrot.slane %v3136, 2
      %v3138 = vmax.f32 %v3136, %v3137
      %v3139 = vrot.slane %v3138, 1
      %v3140 = vmax.f32 %v3138, %v3139
      %3141 = vst [vmem:[%s291] sm:$0xff] %v2020
      %3142 = vst [vmem:[%s291 + $0x8] sm:$0xff] %v2021
      %3143 = vst [vmem:[%s291 + $0x10] sm:$0xff] %v2022
      %3144 = vst [vmem:[%s291 + $0x18] sm:$0xff] %v2023
      %3145 = vst [vmem:[%s291 + $0x20] sm:$0xff] %v2024
      %3146 = vst [vmem:[%s291 + $0x28] sm:$0xff] %v2025
      %3147 = vst [vmem:[%s291 + $0x30] sm:$0xff] %v2026
      %3148 = vst [vmem:[%s291 + $0x38] sm:$0xff] %v2027
      %3149 = vst [vmem:[%s291 + $0x40] sm:$0xff] %v2028
      %3150 = vst [vmem:[%s291 + $0x48] sm:$0xff] %v2029
      %3151 = vst [vmem:[%s291 + $0x50] sm:$0xff] %v2030
      %3152 = vst [vmem:[%s291 + $0x58] sm:$0xff] %v2031
      %3153 = vst [vmem:[%s291 + $0x60] sm:$0xff] %v2032
      %3154 = vst [vmem:[%s291 + $0x68] sm:$0xff] %v2033
      %3155 = vst [vmem:[%s291 + $0x70] sm:$0xff] %v2034
      %3156 = vst [vmem:[%s291 + $0x78] sm:$0xff] %v2035
      %3157 = vst [vmem:[%s291 + $0x80] sm:$0xff] %v2036
      %3158 = vst [vmem:[%s291 + $0x88] sm:$0xff] %v2037
      %3159 = vst [vmem:[%s291 + $0x90] sm:$0xff] %v2038
      %3160 = vst [vmem:[%s291 + $0x98] sm:$0xff] %v2039
      %3161 = vst [vmem:[%s291 + $0xa0] sm:$0xff] %v2040
      %3162 = vst [vmem:[%s291 + $0xa8] sm:$0xff] %v2041
      %3163 = vst [vmem:[%s291 + $0xb0] sm:$0xff] %v2042
      %3164 = vst [vmem:[%s291 + $0xb8] sm:$0xff] %v2043
      %3165 = vst [vmem:[%s291 + $0xc0] sm:$0xff] %v2044
      %3166 = vst [vmem:[%s291 + $0xc8] sm:$0xff] %v2045
      %3167 = vst [vmem:[%s291 + $0xd0] sm:$0xff] %v2046
      %3168 = vst [vmem:[%s291 + $0xd8] sm:$0xff] %v2047
      %3169 = vst [vmem:[%s291 + $0xe0] sm:$0xff] %v2048
      %3170 = vst [vmem:[%s291 + $0xe8] sm:$0xff] %v2049
      %3171 = vst [vmem:[%s291 + $0xf0] sm:$0xff] %v2050
      %3172 = vst [vmem:[%s291 + $0xf8] sm:$0xff] %v2051
      %3173 = vst [vmem:[%s291 + $0x100] sm:$0xff] %v2052
      %3174 = vst [vmem:[%s291 + $0x108] sm:$0xff] %v2053
      %3175 = vst [vmem:[%s291 + $0x110] sm:$0xff] %v2054
      %3176 = vst [vmem:[%s291 + $0x118] sm:$0xff] %v2055
      %3177 = vst [vmem:[%s291 + $0x120] sm:$0xff] %v2056
      %3178 = vst [vmem:[%s291 + $0x128] sm:$0xff] %v2057
      %3179 = vst [vmem:[%s291 + $0x130] sm:$0xff] %v2058
      %3180 = vst [vmem:[%s291 + $0x138] sm:$0xff] %v2059
      %3181 = vst [vmem:[%s291 + $0x140] sm:$0xff] %v2060
      %3182 = vst [vmem:[%s291 + $0x148] sm:$0xff] %v2061
      %3183 = vst [vmem:[%s291 + $0x150] sm:$0xff] %v2062
      %3184 = vst [vmem:[%s291 + $0x158] sm:$0xff] %v2063
      %3185 = vst [vmem:[%s291 + $0x160] sm:$0xff] %v2064
      %3186 = vst [vmem:[%s291 + $0x168] sm:$0xff] %v2065
      %3187 = vst [vmem:[%s291 + $0x170] sm:$0xff] %v2066
      %3188 = vst [vmem:[%s291 + $0x178] sm:$0xff] %v2067
      %3189 = vst [vmem:[%s291 + $0x180] sm:$0xff] %v2068
      %3190 = vst [vmem:[%s291 + $0x188] sm:$0xff] %v2069
      %3191 = vst [vmem:[%s291 + $0x190] sm:$0xff] %v2070
      %3192 = vst [vmem:[%s291 + $0x198] sm:$0xff] %v2071
      %3193 = vst [vmem:[%s291 + $0x1a0] sm:$0xff] %v2072
      %3194 = vst [vmem:[%s291 + $0x1a8] sm:$0xff] %v2073
      %3195 = vst [vmem:[%s291 + $0x1b0] sm:$0xff] %v2074
      %3196 = vst [vmem:[%s291 + $0x1b8] sm:$0xff] %v2075
      %3197 = vst [vmem:[%s291 + $0x1c0] sm:$0xff] %v2076
      %3198 = vst [vmem:[%s291 + $0x1c8] sm:$0xff] %v2077
      %3199 = vst [vmem:[%s291 + $0x1d0] sm:$0xff] %v2078
      %3200 = vst [vmem:[%s291 + $0x1d8] sm:$0xff] %v2079
      %3201 = vst [vmem:[%s291 + $0x1e0] sm:$0xff] %v2080
      %3202 = vst [vmem:[%s291 + $0x1e8] sm:$0xff] %v2081
      %3203 = vst [vmem:[%s291 + $0x1f0] sm:$0xff] %v2082
      %3204 = vst [vmem:[%s291 + $0x1f8] sm:$0xff] %v2083
      %3205 = vst [vmem:[%s291 + $0x200] sm:$0xff] %v2084
      %3206 = vst [vmem:[%s291 + $0x208] sm:$0xff] %v2085
      %3207 = vst [vmem:[%s291 + $0x210] sm:$0xff] %v2086
      %3208 = vst [vmem:[%s291 + $0x218] sm:$0xff] %v2087
      %3209 = vst [vmem:[%s291 + $0x220] sm:$0xff] %v2088
      %3210 = vst [vmem:[%s291 + $0x228] sm:$0xff] %v2089
      %3211 = vst [vmem:[%s291 + $0x230] sm:$0xff] %v2090
      %3212 = vst [vmem:[%s291 + $0x238] sm:$0xff] %v2091
      %3213 = vst [vmem:[%s291 + $0x240] sm:$0xff] %v2092
      %3214 = vst [vmem:[%s291 + $0x248] sm:$0xff] %v2093
      %3215 = vst [vmem:[%s291 + $0x250] sm:$0xff] %v2094
      %3216 = vst [vmem:[%s291 + $0x258] sm:$0xff] %v2095
      %3217 = vst [vmem:[%s291 + $0x260] sm:$0xff] %v2096
      %3218 = vst [vmem:[%s291 + $0x268] sm:$0xff] %v2097
      %3219 = vst [vmem:[%s291 + $0x270] sm:$0xff] %v2098
      %3220 = vst [vmem:[%s291 + $0x278] sm:$0xff] %v2099
      %3221 = vst [vmem:[%s291 + $0x280] sm:$0xff] %v2100
      %3222 = vst [vmem:[%s291 + $0x288] sm:$0xff] %v2101
      %3223 = vst [vmem:[%s291 + $0x290] sm:$0xff] %v2102
      %3224 = vst [vmem:[%s291 + $0x298] sm:$0xff] %v2103
      %3225 = vst [vmem:[%s291 + $0x2a0] sm:$0xff] %v2104
      %3226 = vst [vmem:[%s291 + $0x2a8] sm:$0xff] %v2105
      %3227 = vst [vmem:[%s291 + $0x2b0] sm:$0xff] %v2106
      %3228 = vst [vmem:[%s291 + $0x2b8] sm:$0xff] %v2107
      %3229 = vst [vmem:[%s291 + $0x2c0] sm:$0xff] %v2108
      %3230 = vst [vmem:[%s291 + $0x2c8] sm:$0xff] %v2109
      %3231 = vst [vmem:[%s291 + $0x2d0] sm:$0xff] %v2110
      %3232 = vst [vmem:[%s291 + $0x2d8] sm:$0xff] %v2111
      %3233 = vst [vmem:[%s291 + $0x2e0] sm:$0xff] %v2112
      %3234 = vst [vmem:[%s291 + $0x2e8] sm:$0xff] %v2113
      %3235 = vst [vmem:[%s291 + $0x2f0] sm:$0xff] %v2114
      %3236 = vst [vmem:[%s291 + $0x2f8] sm:$0xff] %v2115
      %3237 = vst [vmem:[%s291 + $0x300] sm:$0xff] %v2116
      %3238 = vst [vmem:[%s291 + $0x308] sm:$0xff] %v2117
      %3239 = vst [vmem:[%s291 + $0x310] sm:$0xff] %v2118
      %3240 = vst [vmem:[%s291 + $0x318] sm:$0xff] %v2119
      %3241 = vst [vmem:[%s291 + $0x320] sm:$0xff] %v2120
      %3242 = vst [vmem:[%s291 + $0x328] sm:$0xff] %v2121
      %3243 = vst [vmem:[%s291 + $0x330] sm:$0xff] %v2122
      %3244 = vst [vmem:[%s291 + $0x338] sm:$0xff] %v2123
      %3245 = vst [vmem:[%s291 + $0x340] sm:$0xff] %v2124
      %3246 = vst [vmem:[%s291 + $0x348] sm:$0xff] %v2125
      %3247 = vst [vmem:[%s291 + $0x350] sm:$0xff] %v2126
      %3248 = vst [vmem:[%s291 + $0x358] sm:$0xff] %v2127
      %3249 = vst [vmem:[%s291 + $0x360] sm:$0xff] %v2128
      %3250 = vst [vmem:[%s291 + $0x368] sm:$0xff] %v2129
      %3251 = vst [vmem:[%s291 + $0x370] sm:$0xff] %v2130
      %3252 = vst [vmem:[%s291 + $0x378] sm:$0xff] %v2131
      %3253 = vst [vmem:[%s291 + $0x380] sm:$0xff] %v2132
      %3254 = vst [vmem:[%s291 + $0x388] sm:$0xff] %v2133
      %3255 = vst [vmem:[%s291 + $0x390] sm:$0xff] %v2134
      %3256 = vst [vmem:[%s291 + $0x398] sm:$0xff] %v2135
      %3257 = vst [vmem:[%s291 + $0x3a0] sm:$0xff] %v2136
      %3258 = vst [vmem:[%s291 + $0x3a8] sm:$0xff] %v2137
      %3259 = vst [vmem:[%s291 + $0x3b0] sm:$0xff] %v2138
      %3260 = vst [vmem:[%s291 + $0x3b8] sm:$0xff] %v2139
      %3261 = vst [vmem:[%s291 + $0x3c0] sm:$0xff] %v2140
      %3262 = vst [vmem:[%s291 + $0x3c8] sm:$0xff] %v2141
      %3263 = vst [vmem:[%s291 + $0x3d0] sm:$0xff] %v2142
      %3264 = vst [vmem:[%s291 + $0x3d8] sm:$0xff] %v2143
      %3265 = vst [vmem:[%s291 + $0x3e0] sm:$0xff] %v2144
      %3266 = vst [vmem:[%s291 + $0x3e8] sm:$0xff] %v2145
      %3267 = vst [vmem:[%s291 + $0x3f0] sm:$0xff] %v2146
      %3268 = vst [vmem:[%s291 + $0x3f8] sm:$0xff] %v2147
      %3269 = vst [vmem:[%s291 + $0x400] sm:$0xff] %v2148
      %3270 = vst [vmem:[%s291 + $0x408] sm:$0xff] %v2149
      %3271 = vst [vmem:[%s291 + $0x410] sm:$0xff] %v2150
      %3272 = vst [vmem:[%s291 + $0x418] sm:$0xff] %v2151
      %3273 = vst [vmem:[%s291 + $0x420] sm:$0xff] %v2152
      %3274 = vst [vmem:[%s291 + $0x428] sm:$0xff] %v2153
      %3275 = vst [vmem:[%s291 + $0x430] sm:$0xff] %v2154
      %3276 = vst [vmem:[%s291 + $0x438] sm:$0xff] %v2155
      %3277 = vst [vmem:[%s291 + $0x440] sm:$0xff] %v2156
      %3278 = vst [vmem:[%s291 + $0x448] sm:$0xff] %v2157
      %3279 = vst [vmem:[%s291 + $0x450] sm:$0xff] %v2158
      %3280 = vst [vmem:[%s291 + $0x458] sm:$0xff] %v2159
      %3281 = vst [vmem:[%s291 + $0x460] sm:$0xff] %v2160
      %3282 = vst [vmem:[%s291 + $0x468] sm:$0xff] %v2161
      %3283 = vst [vmem:[%s291 + $0x470] sm:$0xff] %v2162
      %3284 = vst [vmem:[%s291 + $0x478] sm:$0xff] %v2163
      %3285 = vst [vmem:[%s291 + $0x480] sm:$0xff] %v2164
      %3286 = vst [vmem:[%s291 + $0x488] sm:$0xff] %v2165
      %3287 = vst [vmem:[%s291 + $0x490] sm:$0xff] %v2166
      %3288 = vst [vmem:[%s291 + $0x498] sm:$0xff] %v2167
      %3289 = vst [vmem:[%s291 + $0x4a0] sm:$0xff] %v2168
      %3290 = vst [vmem:[%s291 + $0x4a8] sm:$0xff] %v2169
      %3291 = vst [vmem:[%s291 + $0x4b0] sm:$0xff] %v2170
      %3292 = vst [vmem:[%s291 + $0x4b8] sm:$0xff] %v2171
      %3293 = vst [vmem:[%s291 + $0x4c0] sm:$0xff] %v2172
      %3294 = vst [vmem:[%s291 + $0x4c8] sm:$0xff] %v2173
      %3295 = vst [vmem:[%s291 + $0x4d0] sm:$0xff] %v2174
      %3296 = vst [vmem:[%s291 + $0x4d8] sm:$0xff] %v2175
      %3297 = vst [vmem:[%s291 + $0x4e0] sm:$0xff] %v2176
      %3298 = vst [vmem:[%s291 + $0x4e8] sm:$0xff] %v2177
      %3299 = vst [vmem:[%s291 + $0x4f0] sm:$0xff] %v2178
      %3300 = vst [vmem:[%s291 + $0x4f8] sm:$0xff] %v2179
      %3301 = vst [vmem:[%s291 + $0x500] sm:$0xff] %v2180
      %3302 = vst [vmem:[%s291 + $0x508] sm:$0xff] %v2181
      %3303 = vst [vmem:[%s291 + $0x510] sm:$0xff] %v2182
      %3304 = vst [vmem:[%s291 + $0x518] sm:$0xff] %v2183
      %3305 = vst [vmem:[%s291 + $0x520] sm:$0xff] %v2184
      %3306 = vst [vmem:[%s291 + $0x528] sm:$0xff] %v2185
      %3307 = vst [vmem:[%s291 + $0x530] sm:$0xff] %v2186
      %3308 = vst [vmem:[%s291 + $0x538] sm:$0xff] %v2187
      %3309 = vst [vmem:[%s291 + $0x540] sm:$0xff] %v2188
      %3310 = vst [vmem:[%s291 + $0x548] sm:$0xff] %v2189
      %3311 = vst [vmem:[%s291 + $0x550] sm:$0xff] %v2190
      %3312 = vst [vmem:[%s291 + $0x558] sm:$0xff] %v2191
      %3313 = vst [vmem:[%s291 + $0x560] sm:$0xff] %v2192
      %3314 = vst [vmem:[%s291 + $0x568] sm:$0xff] %v2193
      %3315 = vst [vmem:[%s291 + $0x570] sm:$0xff] %v2194
      %3316 = vst [vmem:[%s291 + $0x578] sm:$0xff] %v2195
      %3317 = vst [vmem:[%s291 + $0x580] sm:$0xff] %v2196
      %3318 = vst [vmem:[%s291 + $0x588] sm:$0xff] %v2197
      %3319 = vst [vmem:[%s291 + $0x590] sm:$0xff] %v2198
      %3320 = vst [vmem:[%s291 + $0x598] sm:$0xff] %v2199
      %3321 = vst [vmem:[%s291 + $0x5a0] sm:$0xff] %v2200
      %3322 = vst [vmem:[%s291 + $0x5a8] sm:$0xff] %v2201
      %3323 = vst [vmem:[%s291 + $0x5b0] sm:$0xff] %v2202
      %3324 = vst [vmem:[%s291 + $0x5b8] sm:$0xff] %v2203
      %3325 = vst [vmem:[%s291 + $0x5c0] sm:$0xff] %v2204
      %3326 = vst [vmem:[%s291 + $0x5c8] sm:$0xff] %v2205
      %3327 = vst [vmem:[%s291 + $0x5d0] sm:$0xff] %v2206
      %3328 = vst [vmem:[%s291 + $0x5d8] sm:$0xff] %v2207
      %3329 = vst [vmem:[%s291 + $0x5e0] sm:$0xff] %v2208
      %3330 = vst [vmem:[%s291 + $0x5e8] sm:$0xff] %v2209
      %3331 = vst [vmem:[%s291 + $0x5f0] sm:$0xff] %v2210
      %3332 = vst [vmem:[%s291 + $0x5f8] sm:$0xff] %v2211
      %3333 = vst [vmem:[%s291 + $0x600] sm:$0xff] %v2212
      %3334 = vst [vmem:[%s291 + $0x608] sm:$0xff] %v2213
      %3335 = vst [vmem:[%s291 + $0x610] sm:$0xff] %v2214
      %3336 = vst [vmem:[%s291 + $0x618] sm:$0xff] %v2215
      %3337 = vst [vmem:[%s291 + $0x620] sm:$0xff] %v2216
      %3338 = vst [vmem:[%s291 + $0x628] sm:$0xff] %v2217
      %3339 = vst [vmem:[%s291 + $0x630] sm:$0xff] %v2218
      %3340 = vst [vmem:[%s291 + $0x638] sm:$0xff] %v2219
      %3341 = vst [vmem:[%s291 + $0x640] sm:$0xff] %v2220
      %3342 = vst [vmem:[%s291 + $0x648] sm:$0xff] %v2221
      %3343 = vst [vmem:[%s291 + $0x650] sm:$0xff] %v2222
      %3344 = vst [vmem:[%s291 + $0x658] sm:$0xff] %v2223
      %3345 = vst [vmem:[%s291 + $0x660] sm:$0xff] %v2224
      %3346 = vst [vmem:[%s291 + $0x668] sm:$0xff] %v2225
      %3347 = vst [vmem:[%s291 + $0x670] sm:$0xff] %v2226
      %3348 = vst [vmem:[%s291 + $0x678] sm:$0xff] %v2227
      %3349 = vst [vmem:[%s291 + $0x680] sm:$0xff] %v2228
      %3350 = vst [vmem:[%s291 + $0x688] sm:$0xff] %v2229
      %3351 = vst [vmem:[%s291 + $0x690] sm:$0xff] %v2230
      %3352 = vst [vmem:[%s291 + $0x698] sm:$0xff] %v2231
      %3353 = vst [vmem:[%s291 + $0x6a0] sm:$0xff] %v2232
      %3354 = vst [vmem:[%s291 + $0x6a8] sm:$0xff] %v2233
      %3355 = vst [vmem:[%s291 + $0x6b0] sm:$0xff] %v2234
      %3356 = vst [vmem:[%s291 + $0x6b8] sm:$0xff] %v2235
      %3357 = vst [vmem:[%s291 + $0x6c0] sm:$0xff] %v2236
      %3358 = vst [vmem:[%s291 + $0x6c8] sm:$0xff] %v2237
      %3359 = vst [vmem:[%s291 + $0x6d0] sm:$0xff] %v2238
      %3360 = vst [vmem:[%s291 + $0x6d8] sm:$0xff] %v2239
      %3361 = vst [vmem:[%s291 + $0x6e0] sm:$0xff] %v2240
      %3362 = vst [vmem:[%s291 + $0x6e8] sm:$0xff] %v2241
      %3363 = vst [vmem:[%s291 + $0x6f0] sm:$0xff] %v2242
      %3364 = vst [vmem:[%s291 + $0x6f8] sm:$0xff] %v2243
      %3365 = vst [vmem:[%s291 + $0x700] sm:$0xff] %v2244
      %3366 = vst [vmem:[%s291 + $0x708] sm:$0xff] %v2245
      %3367 = vst [vmem:[%s291 + $0x710] sm:$0xff] %v2246
      %3368 = vst [vmem:[%s291 + $0x718] sm:$0xff] %v2247
      %3369 = vst [vmem:[%s291 + $0x720] sm:$0xff] %v2248
      %3370 = vst [vmem:[%s291 + $0x728] sm:$0xff] %v2249
      %3371 = vst [vmem:[%s291 + $0x730] sm:$0xff] %v2250
      %3372 = vst [vmem:[%s291 + $0x738] sm:$0xff] %v2251
      %3373 = vst [vmem:[%s291 + $0x740] sm:$0xff] %v2252
      %3374 = vst [vmem:[%s291 + $0x748] sm:$0xff] %v2253
      %3375 = vst [vmem:[%s291 + $0x750] sm:$0xff] %v2254
      %3376 = vst [vmem:[%s291 + $0x758] sm:$0xff] %v2255
      %3377 = vst [vmem:[%s291 + $0x760] sm:$0xff] %v2256
      %3378 = vst [vmem:[%s291 + $0x768] sm:$0xff] %v2257
      %3379 = vst [vmem:[%s291 + $0x770] sm:$0xff] %v2258
      %3380 = vst [vmem:[%s291 + $0x778] sm:$0xff] %v2259
      %3381 = vst [vmem:[%s291 + $0x780] sm:$0xff] %v2260
      %3382 = vst [vmem:[%s291 + $0x788] sm:$0xff] %v2261
      %3383 = vst [vmem:[%s291 + $0x790] sm:$0xff] %v2262
      %3384 = vst [vmem:[%s291 + $0x798] sm:$0xff] %v2263
      %3385 = vst [vmem:[%s291 + $0x7a0] sm:$0xff] %v2264
      %3386 = vst [vmem:[%s291 + $0x7a8] sm:$0xff] %v2265
      %3387 = vst [vmem:[%s291 + $0x7b0] sm:$0xff] %v2266
      %3388 = vst [vmem:[%s291 + $0x7b8] sm:$0xff] %v2267
      %3389 = vst [vmem:[%s291 + $0x7c0] sm:$0xff] %v2268
      %3390 = vst [vmem:[%s291 + $0x7c8] sm:$0xff] %v2269
      %3391 = vst [vmem:[%s291 + $0x7d0] sm:$0xff] %v2270
      %3392 = vst [vmem:[%s291 + $0x7d8] sm:$0xff] %v2271
      %3393 = vst [vmem:[%s291 + $0x7e0] sm:$0xff] %v2272
      %3394 = vst [vmem:[%s291 + $0x7e8] sm:$0xff] %v2273
      %3395 = vst [vmem:[%s291 + $0x7f0] sm:$0xff] %v2274
      %3396 = vst [vmem:[%s291 + $0x7f8] sm:$0xff] %v2275
      %v3429 = vcombine.low %v2693, %v2694
      %v3430 = vcombine.low %v2695, %v2696
      %v3431 = vcombine.low %v2697, %v2698
      %v3432 = vcombine.low %v2699, %v2700
      %v3434 = vunpack.c.l.s4 1966171168
      %v3435 = vunpack.c.0.s8 %v3434
      %v3436 = vlaneseq
      %v3437 = vshrl.u32 %v3436, 7
      %v3438 = vsub.s32 %v3435, %v3437
      %v3439 = vrot.slane %v3429, %v3438
      %v3441 = vunpack.c.l.s4 1966171168
      %v3442 = vunpack.c.0.s8 %v3441
      %v3443 = vlaneseq
      %v3444 = vshrl.u32 %v3443, 7
      %v3445 = vsub.s32 %v3442, %v3444
      %v3446 = vrot.slane %v3430, %v3445
      %v3448 = vunpack.c.l.s4 1966171168
      %v3449 = vunpack.c.0.s8 %v3448
      %v3450 = vlaneseq
      %v3451 = vshrl.u32 %v3450, 7
      %v3452 = vsub.s32 %v3449, %v3451
      %v3453 = vrot.slane %v3431, %v3452
      %v3455 = vunpack.c.l.s4 1966171168
      %v3456 = vunpack.c.0.s8 %v3455
      %v3457 = vlaneseq
      %v3458 = vshrl.u32 %v3457, 7
      %v3459 = vsub.s32 %v3456, %v3458
      %v3460 = vrot.slane %v3432, %v3459
      %v3461 = vcombine.low %v3439, %v3446
      %v3462 = vcombine.low %v3453, %v3460
      %v3464 = vunpack.c.l.s4 1966171168
      %v3465 = vunpack.c.0.s8 %v3464
      %v3466 = vlaneseq
      %v3467 = vshrl.u32 %v3466, 7
      %v3468 = vsub.s32 %v3465, %v3467
      %v3469 = vrot.slane %v3461, %v3468
      %v3471 = vunpack.c.l.s4 1966171168
      %v3472 = vunpack.c.0.s8 %v3471
      %v3473 = vlaneseq
      %v3474 = vshrl.u32 %v3473, 7
      %v3475 = vsub.s32 %v3472, %v3474
      %v3476 = vrot.slane %v3462, %v3475
      %v3477 = vcombine.low %v3469, %v3476
      %v3478 = vcombine.low %v2701, %v2702
      %v3479 = vcombine.low %v2703, %v2704
      %v3480 = vcombine.low %v2705, %v2706
      %v3481 = vcombine.low %v2707, %v2708
      %v3483 = vunpack.c.l.s4 1966171168
      %v3484 = vunpack.c.0.s8 %v3483
      %v3485 = vlaneseq
      %v3486 = vshrl.u32 %v3485, 7
      %v3487 = vsub.s32 %v3484, %v3486
      %v3488 = vrot.slane %v3478, %v3487
      %v3490 = vunpack.c.l.s4 1966171168
      %v3491 = vunpack.c.0.s8 %v3490
      %v3492 = vlaneseq
      %v3493 = vshrl.u32 %v3492, 7
      %v3494 = vsub.s32 %v3491, %v3493
      %v3495 = vrot.slane %v3479, %v3494
      %v3497 = vunpack.c.l.s4 1966171168
      %v3498 = vunpack.c.0.s8 %v3497
      %v3499 = vlaneseq
      %v3500 = vshrl.u32 %v3499, 7
      %v3501 = vsub.s32 %v3498, %v3500
      %v3502 = vrot.slane %v3480, %v3501
      %v3504 = vunpack.c.l.s4 1966171168
      %v3505 = vunpack.c.0.s8 %v3504
      %v3506 = vlaneseq
      %v3507 = vshrl.u32 %v3506, 7
      %v3508 = vsub.s32 %v3505, %v3507
      %v3509 = vrot.slane %v3481, %v3508
      %v3510 = vcombine.low %v3488, %v3495
      %v3511 = vcombine.low %v3502, %v3509
      %v3513 = vunpack.c.l.s4 1966171168
      %v3514 = vunpack.c.0.s8 %v3513
      %v3515 = vlaneseq
      %v3516 = vshrl.u32 %v3515, 7
      %v3517 = vsub.s32 %v3514, %v3516
      %v3518 = vrot.slane %v3510, %v3517
      %v3520 = vunpack.c.l.s4 1966171168
      %v3521 = vunpack.c.0.s8 %v3520
      %v3522 = vlaneseq
      %v3523 = vshrl.u32 %v3522, 7
      %v3524 = vsub.s32 %v3521, %v3523
      %v3525 = vrot.slane %v3511, %v3524
      %v3526 = vcombine.low %v3518, %v3525
      %v3527 = vcombine.low %v2709, %v2710
      %v3528 = vcombine.low %v2711, %v2712
      %v3529 = vcombine.low %v2713, %v2714
      %v3530 = vcombine.low %v2715, %v2716
      %v3532 = vunpack.c.l.s4 1966171168
      %v3533 = vunpack.c.0.s8 %v3532
      %v3534 = vlaneseq
      %v3535 = vshrl.u32 %v3534, 7
      %v3536 = vsub.s32 %v3533, %v3535
      %v3537 = vrot.slane %v3527, %v3536
      %v3539 = vunpack.c.l.s4 1966171168
      %v3540 = vunpack.c.0.s8 %v3539
      %v3541 = vlaneseq
      %v3542 = vshrl.u32 %v3541, 7
      %v3543 = vsub.s32 %v3540, %v3542
      %v3544 = vrot.slane %v3528, %v3543
      %v3546 = vunpack.c.l.s4 1966171168
      %v3547 = vunpack.c.0.s8 %v3546
      %v3548 = vlaneseq
      %v3549 = vshrl.u32 %v3548, 7
      %v3550 = vsub.s32 %v3547, %v3549
      %v3551 = vrot.slane %v3529, %v3550
      %v3553 = vunpack.c.l.s4 1966171168
      %v3554 = vunpack.c.0.s8 %v3553
      %v3555 = vlaneseq
      %v3556 = vshrl.u32 %v3555, 7
      %v3557 = vsub.s32 %v3554, %v3556
      %v3558 = vrot.slane %v3530, %v3557
      %v3559 = vcombine.low %v3537, %v3544
      %v3560 = vcombine.low %v3551, %v3558
      %v3562 = vunpack.c.l.s4 1966171168
      %v3563 = vunpack.c.0.s8 %v3562
      %v3564 = vlaneseq
      %v3565 = vshrl.u32 %v3564, 7
      %v3566 = vsub.s32 %v3563, %v3565
      %v3567 = vrot.slane %v3559, %v3566
      %v3569 = vunpack.c.l.s4 1966171168
      %v3570 = vunpack.c.0.s8 %v3569
      %v3571 = vlaneseq
      %v3572 = vshrl.u32 %v3571, 7
      %v3573 = vsub.s32 %v3570, %v3572
      %v3574 = vrot.slane %v3560, %v3573
      %v3575 = vcombine.low %v3567, %v3574
      %v3576 = vcombine.low %v2717, %v2718
      %v3577 = vcombine.low %v2719, %v2720
      %v3578 = vcombine.low %v2721, %v2722
      %v3579 = vcombine.low %v2723, %v2724
      %v3581 = vunpack.c.l.s4 1966171168
      %v3582 = vunpack.c.0.s8 %v3581
      %v3583 = vlaneseq
      %v3584 = vshrl.u32 %v3583, 7
      %v3585 = vsub.s32 %v3582, %v3584
      %v3586 = vrot.slane %v3576, %v3585
      %v3588 = vunpack.c.l.s4 1966171168
      %v3589 = vunpack.c.0.s8 %v3588
      %v3590 = vlaneseq
      %v3591 = vshrl.u32 %v3590, 7
      %v3592 = vsub.s32 %v3589, %v3591
      %v3593 = vrot.slane %v3577, %v3592
      %v3595 = vunpack.c.l.s4 1966171168
      %v3596 = vunpack.c.0.s8 %v3595
      %v3597 = vlaneseq
      %v3598 = vshrl.u32 %v3597, 7
      %v3599 = vsub.s32 %v3596, %v3598
      %v3600 = vrot.slane %v3578, %v3599
      %v3602 = vunpack.c.l.s4 1966171168
      %v3603 = vunpack.c.0.s8 %v3602
      %v3604 = vlaneseq
      %v3605 = vshrl.u32 %v3604, 7
      %v3606 = vsub.s32 %v3603, %v3605
      %v3607 = vrot.slane %v3579, %v3606
      %v3608 = vcombine.low %v3586, %v3593
      %v3609 = vcombine.low %v3600, %v3607
      %v3611 = vunpack.c.l.s4 1966171168
      %v3612 = vunpack.c.0.s8 %v3611
      %v3613 = vlaneseq
      %v3614 = vshrl.u32 %v3613, 7
      %v3615 = vsub.s32 %v3612, %v3614
      %v3616 = vrot.slane %v3608, %v3615
      %v3618 = vunpack.c.l.s4 1966171168
      %v3619 = vunpack.c.0.s8 %v3618
      %v3620 = vlaneseq
      %v3621 = vshrl.u32 %v3620, 7
      %v3622 = vsub.s32 %v3619, %v3621
      %v3623 = vrot.slane %v3609, %v3622
      %v3624 = vcombine.low %v3616, %v3623
      %3629 = vst [vmem:[%s295] sm:$0xff] %v3477
      %3630 = vst [vmem:[%s295 + $0x8] sm:$0xff] %v3526
      %3631 = vst [vmem:[%s295 + $0x10] sm:$0xff] %v3575
      %3632 = vst [vmem:[%s295 + $0x18] sm:$0xff] %v3624
      %v3665 = vcombine.low %v2737, %v2750
      %v3666 = vcombine.low %v2763, %v2776
      %v3667 = vcombine.low %v2789, %v2802
      %v3668 = vcombine.low %v2815, %v2828
      %v3670 = vunpack.c.l.s4 1966171168
      %v3671 = vunpack.c.0.s8 %v3670
      %v3672 = vlaneseq
      %v3673 = vshrl.u32 %v3672, 7
      %v3674 = vsub.s32 %v3671, %v3673
      %v3675 = vrot.slane %v3665, %v3674
      %v3677 = vunpack.c.l.s4 1966171168
      %v3678 = vunpack.c.0.s8 %v3677
      %v3679 = vlaneseq
      %v3680 = vshrl.u32 %v3679, 7
      %v3681 = vsub.s32 %v3678, %v3680
      %v3682 = vrot.slane %v3666, %v3681
      %v3684 = vunpack.c.l.s4 1966171168
      %v3685 = vunpack.c.0.s8 %v3684
      %v3686 = vlaneseq
      %v3687 = vshrl.u32 %v3686, 7
      %v3688 = vsub.s32 %v3685, %v3687
      %v3689 = vrot.slane %v3667, %v3688
      %v3691 = vunpack.c.l.s4 1966171168
      %v3692 = vunpack.c.0.s8 %v3691
      %v3693 = vlaneseq
      %v3694 = vshrl.u32 %v3693, 7
      %v3695 = vsub.s32 %v3692, %v3694
      %v3696 = vrot.slane %v3668, %v3695
      %v3697 = vcombine.low %v3675, %v3682
      %v3698 = vcombine.low %v3689, %v3696
      %v3700 = vunpack.c.l.s4 1966171168
      %v3701 = vunpack.c.0.s8 %v3700
      %v3702 = vlaneseq
      %v3703 = vshrl.u32 %v3702, 7
      %v3704 = vsub.s32 %v3701, %v3703
      %v3705 = vrot.slane %v3697, %v3704
      %v3707 = vunpack.c.l.s4 1966171168
      %v3708 = vunpack.c.0.s8 %v3707
      %v3709 = vlaneseq
      %v3710 = vshrl.u32 %v3709, 7
      %v3711 = vsub.s32 %v3708, %v3710
      %v3712 = vrot.slane %v3698, %v3711
      %v3713 = vcombine.low %v3705, %v3712
      %v3714 = vcombine.low %v2841, %v2854
      %v3715 = vcombine.low %v2867, %v2880
      %v3716 = vcombine.low %v2893, %v2906
      %v3717 = vcombine.low %v2919, %v2932
      %v3719 = vunpack.c.l.s4 1966171168
      %v3720 = vunpack.c.0.s8 %v3719
      %v3721 = vlaneseq
      %v3722 = vshrl.u32 %v3721, 7
      %v3723 = vsub.s32 %v3720, %v3722
      %v3724 = vrot.slane %v3714, %v3723
      %v3726 = vunpack.c.l.s4 1966171168
      %v3727 = vunpack.c.0.s8 %v3726
      %v3728 = vlaneseq
      %v3729 = vshrl.u32 %v3728, 7
      %v3730 = vsub.s32 %v3727, %v3729
      %v3731 = vrot.slane %v3715, %v3730
      %v3733 = vunpack.c.l.s4 1966171168
      %v3734 = vunpack.c.0.s8 %v3733
      %v3735 = vlaneseq
      %v3736 = vshrl.u32 %v3735, 7
      %v3737 = vsub.s32 %v3734, %v3736
      %v3738 = vrot.slane %v3716, %v3737
      %v3740 = vunpack.c.l.s4 1966171168
      %v3741 = vunpack.c.0.s8 %v3740
      %v3742 = vlaneseq
      %v3743 = vshrl.u32 %v3742, 7
      %v3744 = vsub.s32 %v3741, %v3743
      %v3745 = vrot.slane %v3717, %v3744
      %v3746 = vcombine.low %v3724, %v3731
      %v3747 = vcombine.low %v3738, %v3745
      %v3749 = vunpack.c.l.s4 1966171168
      %v3750 = vunpack.c.0.s8 %v3749
      %v3751 = vlaneseq
      %v3752 = vshrl.u32 %v3751, 7
      %v3753 = vsub.s32 %v3750, %v3752
      %v3754 = vrot.slane %v3746, %v3753
      %v3756 = vunpack.c.l.s4 1966171168
      %v3757 = vunpack.c.0.s8 %v3756
      %v3758 = vlaneseq
      %v3759 = vshrl.u32 %v3758, 7
      %v3760 = vsub.s32 %v3757, %v3759
      %v3761 = vrot.slane %v3747, %v3760
      %v3762 = vcombine.low %v3754, %v3761
      %v3763 = vcombine.low %v2945, %v2958
      %v3764 = vcombine.low %v2971, %v2984
      %v3765 = vcombine.low %v2997, %v3010
      %v3766 = vcombine.low %v3023, %v3036
      %v3768 = vunpack.c.l.s4 1966171168
      %v3769 = vunpack.c.0.s8 %v3768
      %v3770 = vlaneseq
      %v3771 = vshrl.u32 %v3770, 7
      %v3772 = vsub.s32 %v3769, %v3771
      %v3773 = vrot.slane %v3763, %v3772
      %v3775 = vunpack.c.l.s4 1966171168
      %v3776 = vunpack.c.0.s8 %v3775
      %v3777 = vlaneseq
      %v3778 = vshrl.u32 %v3777, 7
      %v3779 = vsub.s32 %v3776, %v3778
      %v3780 = vrot.slane %v3764, %v3779
      %v3782 = vunpack.c.l.s4 1966171168
      %v3783 = vunpack.c.0.s8 %v3782
      %v3784 = vlaneseq
      %v3785 = vshrl.u32 %v3784, 7
      %v3786 = vsub.s32 %v3783, %v3785
      %v3787 = vrot.slane %v3765, %v3786
      %v3789 = vunpack.c.l.s4 1966171168
      %v3790 = vunpack.c.0.s8 %v3789
      %v3791 = vlaneseq
      %v3792 = vshrl.u32 %v3791, 7
      %v3793 = vsub.s32 %v3790, %v3792
      %v3794 = vrot.slane %v3766, %v3793
      %v3795 = vcombine.low %v3773, %v3780
      %v3796 = vcombine.low %v3787, %v3794
      %v3798 = vunpack.c.l.s4 1966171168
      %v3799 = vunpack.c.0.s8 %v3798
      %v3800 = vlaneseq
      %v3801 = vshrl.u32 %v3800, 7
      %v3802 = vsub.s32 %v3799, %v3801
      %v3803 = vrot.slane %v3795, %v3802
      %v3805 = vunpack.c.l.s4 1966171168
      %v3806 = vunpack.c.0.s8 %v3805
      %v3807 = vlaneseq
      %v3808 = vshrl.u32 %v3807, 7
      %v3809 = vsub.s32 %v3806, %v3808
      %v3810 = vrot.slane %v3796, %v3809
      %v3811 = vcombine.low %v3803, %v3810
      %v3812 = vcombine.low %v3049, %v3062
      %v3813 = vcombine.low %v3075, %v3088
      %v3814 = vcombine.low %v3101, %v3114
      %v3815 = vcombine.low %v3127, %v3140
      %v3817 = vunpack.c.l.s4 1966171168
      %v3818 = vunpack.c.0.s8 %v3817
      %v3819 = vlaneseq
      %v3820 = vshrl.u32 %v3819, 7
      %v3821 = vsub.s32 %v3818, %v3820
      %v3822 = vrot.slane %v3812, %v3821
      %v3824 = vunpack.c.l.s4 1966171168
      %v3825 = vunpack.c.0.s8 %v3824
      %v3826 = vlaneseq
      %v3827 = vshrl.u32 %v3826, 7
      %v3828 = vsub.s32 %v3825, %v3827
      %v3829 = vrot.slane %v3813, %v3828
      %v3831 = vunpack.c.l.s4 1966171168
      %v3832 = vunpack.c.0.s8 %v3831
      %v3833 = vlaneseq
      %v3834 = vshrl.u32 %v3833, 7
      %v3835 = vsub.s32 %v3832, %v3834
      %v3836 = vrot.slane %v3814, %v3835
      %v3838 = vunpack.c.l.s4 1966171168
      %v3839 = vunpack.c.0.s8 %v3838
      %v3840 = vlaneseq
      %v3841 = vshrl.u32 %v3840, 7
      %v3842 = vsub.s32 %v3839, %v3841
      %v3843 = vrot.slane %v3815, %v3842
      %v3844 = vcombine.low %v3822, %v3829
      %v3845 = vcombine.low %v3836, %v3843
      %v3847 = vunpack.c.l.s4 1966171168
      %v3848 = vunpack.c.0.s8 %v3847
      %v3849 = vlaneseq
      %v3850 = vshrl.u32 %v3849, 7
      %v3851 = vsub.s32 %v3848, %v3850
      %v3852 = vrot.slane %v3844, %v3851
      %v3854 = vunpack.c.l.s4 1966171168
      %v3855 = vunpack.c.0.s8 %v3854
      %v3856 = vlaneseq
      %v3857 = vshrl.u32 %v3856, 7
      %v3858 = vsub.s32 %v3855, %v3857
      %v3859 = vrot.slane %v3845, %v3858
      %v3860 = vcombine.low %v3852, %v3859
      %3865 = vst [vmem:[%s299] sm:$0xff] %v3713
      %3866 = vst [vmem:[%s299 + $0x8] sm:$0xff] %v3762
      %3867 = vst [vmem:[%s299 + $0x10] sm:$0xff] %v3811
      %3868 = vst [vmem:[%s299 + $0x18] sm:$0xff] %v3860
      %p3869 = scmp.lt.s32.totalorder %s19, 1
      %s3870 = scalar_select %p3869, %s19, 1
      %s3871 = smul.addr %s3870, 256
      %s3872 = smul.addr %s3871, 8
      %s3873 = scalar_lea.vmem %s5, %s3872
      %p3874 = scmp.lt.s32.totalorder %s19, 1
      %s3875 = scalar_select %p3874, %s19, 1
      %s3876 = smul.addr %s3875, 32
      %s3877 = scalar_lea.vmem %s6, %s3876
      %p3878 = scmp.lt.s32.totalorder %s19, 1
      %s3879 = scalar_select %p3878, %s19, 1
      %s3880 = smul.addr %s3879, 32
      %s3881 = scalar_lea.vmem %s7, %s3880
      // Predicated region
      $region41: #{forward_pallas.8} parent=39 // pred_check
        %p3882 = pneg %p147
      $region42: #{forward_pallas.8} parent=39 // pred_check_branch
        %3884 = sbr.rel (%p3882) target = $region44
      $region43: #{forward_pallas.8} parent=39 // pred_region
        _
      $region44: #{forward_pallas.8} parent=39 // pred_fallthru
        _
      // Predicated region
      $region45: #{forward_pallas.8} parent=39 // pred_check
        %p3885 = pneg %p173
      $region46: #{forward_pallas.8} parent=39 // pred_check_branch
        %3887 = sbr.rel (%p3885) target = $region48
      $region47: #{forward_pallas.8} parent=39 // pred_region
        _
      $region48: #{forward_pallas.8} parent=39 // pred_fallthru
        _
      // Predicated region
      $region49: #{forward_pallas.8} parent=39 // pred_check
        %p3888 = pneg %p199
      $region50: #{forward_pallas.8} parent=39 // pred_check_branch
        %3890 = sbr.rel (%p3888) target = $region52
      $region51: #{forward_pallas.8} parent=39 // pred_region
        _
      $region52: #{forward_pallas.8} parent=39 // pred_fallthru
        _
    $region40: #{forward_pallas.8} parent=5 // pred_fallthru
      _
    %p3891 = scmp.le.s32.totalorder 2, %s14
    // Predicated region
    $region53: #{forward_pallas.8} parent=5 // pred_check
      %p3892 = pneg %p3891
    $region54: #{forward_pallas.8} parent=5 // pred_check_branch
      %3894 = sbr.rel (%p3892) target = $region56
    $region55: #{forward_pallas.8} parent=5 // pred_region
      %s3895 = ssub.s32 %s14, 2
      // Predicated region
      $region57: #{forward_pallas.8} parent=55 // pred_check
        %p3896 = pneg %p153
      $region58: #{forward_pallas.8} parent=55 // pred_check_branch
        %3898 = sbr.rel (%p3896) target = $region60
      $region59: #{forward_pallas.8} parent=55 // pred_region
        %p3899 = scmp.lt.s32.totalorder %s20, 1
        %s3900 = scalar_select %p3899, %s20, 1
        %s3901 = smul.addr %s3900, 256
        %s3902 = smul.addr %s3901, 8
        %s3903 = scalar_lea.vmem %s5, %s3902
      $region60: #{forward_pallas.8} parent=55 // pred_fallthru
        _
      // Predicated region
      $region61: #{forward_pallas.8} parent=55 // pred_check
        %p3904 = pneg %p179
      $region62: #{forward_pallas.8} parent=55 // pred_check_branch
        %3906 = sbr.rel (%p3904) target = $region64
      $region63: #{forward_pallas.8} parent=55 // pred_region
        %p3907 = scmp.lt.s32.totalorder %s20, 1
        %s3908 = scalar_select %p3907, %s20, 1
        %s3909 = smul.addr %s3908, 32
        %s3910 = scalar_lea.vmem %s6, %s3909
      $region64: #{forward_pallas.8} parent=55 // pred_fallthru
        _
      // Predicated region
      $region65: #{forward_pallas.8} parent=55 // pred_check
        %p3911 = pneg %p205
      $region66: #{forward_pallas.8} parent=55 // pred_check_branch
        %3913 = sbr.rel (%p3911) target = $region68
      $region67: #{forward_pallas.8} parent=55 // pred_region
        %p3914 = scmp.lt.s32.totalorder %s20, 1
        %s3915 = scalar_select %p3914, %s20, 1
        %s3916 = smul.addr %s3915, 32
        %s3917 = scalar_lea.vmem %s7, %s3916
      $region68: #{forward_pallas.8} parent=55 // pred_fallthru
        _
    $region56: #{forward_pallas.8} parent=5 // pred_fallthru
      _
  $region6: #{forward_pallas.8} parent=0 // loop_footer
    %s18 = sadd.s32 1, %s14
  $region7: #{forward_pallas.8} parent=0 // loop_footer_branch
    %13 = sbr.rel target = $region3
  $region8: #{forward_pallas.8} parent=0 // loop_exit
    _

// kernel: forward_pallas.9
$region0: #{forward_pallas.9}
  #allocation0 [shape = 'u32[]', space=smem, size = 0x4, offset = 0x4, fixed_abs, tag = 'smem constant byte address 0x4 - core index']
  #allocation1 [shape = 'u32[144,128]{1,0:T(1,128)}', space=vmem, size = 0x12000, scoped, tag = 'internal scratch']
  %s0 = inlined_call_operand.vmem [shape: f32[2,64,4096], index: 0, kind: input, shape index: {}]
  %s1 = inlined_call_operand.vmem [shape: f32[2,1,4096], index: 1, kind: input, shape index: {}]
  %s2 = inlined_call_operand.vmem [shape: f32[2,64,4096], index: 2, kind: output, shape index: {}]
  %s3 = sld [smem:[#allocation0]]
  $region41: #{forward_pallas.9} parent=0
    _
  %s5 = ssub.s32 1, %s3
  %s6 = scalar_select 0, %s5, %s3
  loop: start=0, step=1, limit=4
  $region2: #{forward_pallas.9} parent=0 // loop_pre_header
    _
  $region3: #{forward_pallas.9} parent=0 // loop_header
    %s8 = sphi 0, %s12
    %p9 = scmp.ge.s32.totalorder %s8, 4
    %s18 = sphi 0, %s20
    %s21 = sphi 0, %s18
    %s22 = sphi 0, %s21
    %s38 = sphi 0, %s22
    %s44 = sphi 0, %s46
    %s47 = sphi 0, %s44
    %s48 = sphi 0, %s47
    %s64 = sphi 0, %s48
    %s70 = sphi 0, %s72
    %s73 = sphi 0, %s70
    %s74 = sphi 0, %s73
    %s90 = sphi 0, %s74
  $region4: #{forward_pallas.9} parent=0 // loop_header_branch
    %11 = sbr.rel (%p9) target = $region8
  $region5: #{forward_pallas.9} parent=0 // loop_body
    %s13 = ssub.s32 %s8, 1
    %s14 = ssub.s32 %s8, 2
    %s15 = sadd.s32 %s8, 1
    %s16 = ssub.s32 %s8, %s15
    %p17 = scmp.eq.s32.totalorder %s16, 0
    %s19 = sadd.s32 %s18, 1
    %s20 = scalar_select %p17, %s18, %s19
    %p23 = pneg %p17
    %p24 = scmp.eq.s32.totalorder %s8, 1
    %p25 = por %p23, %p24
    %p26 = scmp.ne.s32.totalorder %s18, %s21
    %p27 = scmp.eq.s32.totalorder %s8, 0
    %p28 = por %p26, %p27
    %p29 = scmp.ne.s32.totalorder %s18, %s21
    %p30 = scmp.eq.s32.totalorder %s13, 1
    %p31 = por %p29, %p30
    %p32 = scmp.ne.s32.totalorder %s21, %s22
    %p33 = scmp.eq.s32.totalorder %s13, 0
    %p34 = por %p32, %p33
    %p35 = scmp.ne.s32.totalorder %s21, %s22
    %p36 = scmp.eq.s32.totalorder %s14, 1
    %p37 = por %p35, %p36
    %p39 = scmp.ne.s32.totalorder %s22, %s38
    %p40 = scmp.eq.s32.totalorder %s14, 0
    %p41 = por %p39, %p40
    %s42 = ssub.s32 %s8, %s15
    %p43 = scmp.eq.s32.totalorder %s42, 0
    %s45 = sadd.s32 %s44, 1
    %s46 = scalar_select %p43, %s44, %s45
    %p49 = pneg %p43
    %p50 = scmp.eq.s32.totalorder %s8, 1
    %p51 = por %p49, %p50
    %p52 = scmp.ne.s32.totalorder %s44, %s47
    %p53 = scmp.eq.s32.totalorder %s8, 0
    %p54 = por %p52, %p53
    %p55 = scmp.ne.s32.totalorder %s44, %s47
    %p56 = scmp.eq.s32.totalorder %s13, 1
    %p57 = por %p55, %p56
    %p58 = scmp.ne.s32.totalorder %s47, %s48
    %p59 = scmp.eq.s32.totalorder %s13, 0
    %p60 = por %p58, %p59
    %p61 = scmp.ne.s32.totalorder %s47, %s48
    %p62 = scmp.eq.s32.totalorder %s14, 1
    %p63 = por %p61, %p62
    %p65 = scmp.ne.s32.totalorder %s48, %s64
    %p66 = scmp.eq.s32.totalorder %s14, 0
    %p67 = por %p65, %p66
    %s68 = ssub.s32 %s8, %s15
    %p69 = scmp.eq.s32.totalorder %s68, 0
    %s71 = sadd.s32 %s70, 1
    %s72 = scalar_select %p69, %s70, %s71
    %p75 = pneg %p69
    %p76 = scmp.eq.s32.totalorder %s8, 1
    %p77 = por %p75, %p76
    %p78 = scmp.ne.s32.totalorder %s70, %s73
    %p79 = scmp.eq.s32.totalorder %s8, 0
    %p80 = por %p78, %p79
    %p81 = scmp.ne.s32.totalorder %s70, %s73
    %p82 = scmp.eq.s32.totalorder %s13, 1
    %p83 = por %p81, %p82
    %p84 = scmp.ne.s32.totalorder %s73, %s74
    %p85 = scmp.eq.s32.totalorder %s13, 0
    %p86 = por %p84, %p85
    %p87 = scmp.ne.s32.totalorder %s73, %s74
    %p88 = scmp.eq.s32.totalorder %s14, 1
    %p89 = por %p87, %p88
    %p91 = scmp.ne.s32.totalorder %s74, %s90
    %p92 = scmp.eq.s32.totalorder %s14, 0
    %p93 = por %p91, %p92
    %p94 = scmp.le.s32.totalorder 1, %s8
    %p95 = scmp.lt.s32.totalorder %s8, 3
    %p96 = pnand %p94, %p95
    %p97 = pneg %p96
    // Predicated region
    $region9: #{forward_pallas.9} parent=5 // pred_check
      _
    $region10: #{forward_pallas.9} parent=5 // pred_check_branch
      %99 = sbr.rel (%p96) target = $region12
    $region11: #{forward_pallas.9} parent=5 // pred_region
      %s100 = ssub.s32 %s8, 1
    $region12: #{forward_pallas.9} parent=5 // pred_fallthru
      _
    %p101 = scmp.lt.s32.totalorder %s8, 2
    // Predicated region
    $region13: #{forward_pallas.9} parent=5 // pred_check
      %p102 = pneg %p101
    $region14: #{forward_pallas.9} parent=5 // pred_check_branch
      %104 = sbr.rel (%p102) target = $region16
    $region15: #{forward_pallas.9} parent=5 // pred_region
      // Predicated region
      $region17: #{forward_pallas.9} parent=15 // pred_check
        %p105 = pneg %p28
      $region18: #{forward_pallas.9} parent=15 // pred_check_branch
        %107 = sbr.rel (%p105) target = $region20
      $region19: #{forward_pallas.9} parent=15 // pred_region
        %p108 = scmp.lt.s32.totalorder %s8, 1
        %s109 = scalar_select %p108, %s8, 1
        %s110 = smul.addr %s109, 256
        %s111 = smul.addr %s110, 8
        %s112 = scalar_lea.vmem %s0, %s111
      $region20: #{forward_pallas.9} parent=15 // pred_fallthru
        _
      // Predicated region
      $region21: #{forward_pallas.9} parent=15 // pred_check
        %p113 = pneg %p54
      $region22: #{forward_pallas.9} parent=15 // pred_check_branch
        %115 = sbr.rel (%p113) target = $region24
      $region23: #{forward_pallas.9} parent=15 // pred_region
        %p116 = scmp.lt.s32.totalorder %s8, 1
        %s117 = scalar_select %p116, %s8, 1
        %s118 = smul.addr %s117, 32
        %s119 = scalar_lea.vmem %s1, %s118
      $region24: #{forward_pallas.9} parent=15 // pred_fallthru
        _
    $region16: #{forward_pallas.9} parent=5 // pred_fallthru
      _
    %p120 = scmp.le.s32.totalorder 1, %s8
    %p121 = scmp.lt.s32.totalorder %s8, 3
    %p122 = pnand %p120, %p121
    %p123 = pneg %p122
    // Predicated region
    $region25: #{forward_pallas.9} parent=5 // pred_check
      _
    $region26: #{forward_pallas.9} parent=5 // pred_check_branch
      %125 = sbr.rel (%p122) target = $region28
    $region27: #{forward_pallas.9} parent=5 // pred_region
      %s126 = ssub.s32 %s8, 1
      %p127 = scmp.lt.s32.totalorder %s13, 1
      %s128 = scalar_select %p127, %s13, 1
      %s129 = smul.addr %s128, 256
      %s130 = smul.addr %s129, 8
      %s131 = scalar_lea.vmem %s0, %s130
      %p132 = pneg %p34
      %p133 = pneg %p31
      %p134 = scmp.lt.s32.totalorder %s13, 1
      %s135 = scalar_select %p134, %s13, 1
      %s136 = smul.addr %s135, 32
      %s137 = scalar_lea.vmem %s1, %s136
      %p138 = pneg %p60
      %p139 = pneg %p57
      %p140 = pneg %p86
      %p141 = pneg %p83
      %p142 = scmp.lt.s32.totalorder %s13, 1
      %s143 = scalar_select %p142, %s13, 1
      %s144 = smul.addr %s143, 256
      %s145 = smul.addr %s144, 8
      %s146 = scalar_lea.vmem %s2, %s145
      %p147 = scmp.lt.s32.totalorder %s13, 1
      %s148 = scalar_select %p147, %s13, 1
      %s149 = smul.addr %s148, 256
      %s150 = smul.addr %s149, 8
      %s151 = scalar_lea.vmem %s0, %s150
      %p152 = scmp.lt.s32.totalorder %s13, 1
      %s153 = scalar_select %p152, %s13, 1
      %s154 = smul.addr %s153, 32
      %s155 = scalar_lea.vmem %s1, %s154
      %p156 = scmp.lt.s32.totalorder %s13, 1
      %s157 = scalar_select %p156, %s13, 1
      %s158 = smul.addr %s157, 256
      %s159 = smul.addr %s158, 8
      %s160 = scalar_lea.vmem %s2, %s159
      %v161 = vld [vmem:[%s151] sm:$0xff]
      %v162 = vld [vmem:[%s151 + $0x8] sm:$0xff]
      %v163 = vld [vmem:[%s151 + $0x10] sm:$0xff]
      %v164 = vld [vmem:[%s151 + $0x18] sm:$0xff]
      %v165 = vld [vmem:[%s151 + $0x20] sm:$0xff]
      %v166 = vld [vmem:[%s151 + $0x28] sm:$0xff]
      %v167 = vld [vmem:[%s151 + $0x30] sm:$0xff]
      %v168 = vld [vmem:[%s151 + $0x38] sm:$0xff]
      %v169 = vld [vmem:[%s151 + $0x40] sm:$0xff]
      %v170 = vld [vmem:[%s151 + $0x48] sm:$0xff]
      %v171 = vld [vmem:[%s151 + $0x50] sm:$0xff]
      %v172 = vld [vmem:[%s151 + $0x58] sm:$0xff]
      %v173 = vld [vmem:[%s151 + $0x60] sm:$0xff]
      %v174 = vld [vmem:[%s151 + $0x68] sm:$0xff]
      %v175 = vld [vmem:[%s151 + $0x70] sm:$0xff]
      %v176 = vld [vmem:[%s151 + $0x78] sm:$0xff]
      %v177 = vld [vmem:[%s151 + $0x80] sm:$0xff]
      %v178 = vld [vmem:[%s151 + $0x88] sm:$0xff]
      %v179 = vld [vmem:[%s151 + $0x90] sm:$0xff]
      %v180 = vld [vmem:[%s151 + $0x98] sm:$0xff]
      %v181 = vld [vmem:[%s151 + $0xa0] sm:$0xff]
      %v182 = vld [vmem:[%s151 + $0xa8] sm:$0xff]
      %v183 = vld [vmem:[%s151 + $0xb0] sm:$0xff]
      %v184 = vld [vmem:[%s151 + $0xb8] sm:$0xff]
      %v185 = vld [vmem:[%s151 + $0xc0] sm:$0xff]
      %v186 = vld [vmem:[%s151 + $0xc8] sm:$0xff]
      %v187 = vld [vmem:[%s151 + $0xd0] sm:$0xff]
      %v188 = vld [vmem:[%s151 + $0xd8] sm:$0xff]
      %v189 = vld [vmem:[%s151 + $0xe0] sm:$0xff]
      %v190 = vld [vmem:[%s151 + $0xe8] sm:$0xff]
      %v191 = vld [vmem:[%s151 + $0xf0] sm:$0xff]
      %v192 = vld [vmem:[%s151 + $0xf8] sm:$0xff]
      %v193 = vld [vmem:[%s151 + $0x100] sm:$0xff]
      %v194 = vld [vmem:[%s151 + $0x108] sm:$0xff]
      %v195 = vld [vmem:[%s151 + $0x110] sm:$0xff]
      %v196 = vld [vmem:[%s151 + $0x118] sm:$0xff]
      %v197 = vld [vmem:[%s151 + $0x120] sm:$0xff]
      %v198 = vld [vmem:[%s151 + $0x128] sm:$0xff]
      %v199 = vld [vmem:[%s151 + $0x130] sm:$0xff]
      %v200 = vld [vmem:[%s151 + $0x138] sm:$0xff]
      %v201 = vld [vmem:[%s151 + $0x140] sm:$0xff]
      %v202 = vld [vmem:[%s151 + $0x148] sm:$0xff]
      %v203 = vld [vmem:[%s151 + $0x150] sm:$0xff]
      %v204 = vld [vmem:[%s151 + $0x158] sm:$0xff]
      %v205 = vld [vmem:[%s151 + $0x160] sm:$0xff]
      %v206 = vld [vmem:[%s151 + $0x168] sm:$0xff]
      %v207 = vld [vmem:[%s151 + $0x170] sm:$0xff]
      %v208 = vld [vmem:[%s151 + $0x178] sm:$0xff]
      %v209 = vld [vmem:[%s151 + $0x180] sm:$0xff]
      %v210 = vld [vmem:[%s151 + $0x188] sm:$0xff]
      %v211 = vld [vmem:[%s151 + $0x190] sm:$0xff]
      %v212 = vld [vmem:[%s151 + $0x198] sm:$0xff]
      %v213 = vld [vmem:[%s151 + $0x1a0] sm:$0xff]
      %v214 = vld [vmem:[%s151 + $0x1a8] sm:$0xff]
      %v215 = vld [vmem:[%s151 + $0x1b0] sm:$0xff]
      %v216 = vld [vmem:[%s151 + $0x1b8] sm:$0xff]
      %v217 = vld [vmem:[%s151 + $0x1c0] sm:$0xff]
      %v218 = vld [vmem:[%s151 + $0x1c8] sm:$0xff]
      %v219 = vld [vmem:[%s151 + $0x1d0] sm:$0xff]
      %v220 = vld [vmem:[%s151 + $0x1d8] sm:$0xff]
      %v221 = vld [vmem:[%s151 + $0x1e0] sm:$0xff]
      %v222 = vld [vmem:[%s151 + $0x1e8] sm:$0xff]
      %v223 = vld [vmem:[%s151 + $0x1f0] sm:$0xff]
      %v224 = vld [vmem:[%s151 + $0x1f8] sm:$0xff]
      %v225 = vld [vmem:[%s151 + $0x200] sm:$0xff]
      %v226 = vld [vmem:[%s151 + $0x208] sm:$0xff]
      %v227 = vld [vmem:[%s151 + $0x210] sm:$0xff]
      %v228 = vld [vmem:[%s151 + $0x218] sm:$0xff]
      %v229 = vld [vmem:[%s151 + $0x220] sm:$0xff]
      %v230 = vld [vmem:[%s151 + $0x228] sm:$0xff]
      %v231 = vld [vmem:[%s151 + $0x230] sm:$0xff]
      %v232 = vld [vmem:[%s151 + $0x238] sm:$0xff]
      %v233 = vld [vmem:[%s151 + $0x240] sm:$0xff]
      %v234 = vld [vmem:[%s151 + $0x248] sm:$0xff]
      %v235 = vld [vmem:[%s151 + $0x250] sm:$0xff]
      %v236 = vld [vmem:[%s151 + $0x258] sm:$0xff]
      %v237 = vld [vmem:[%s151 + $0x260] sm:$0xff]
      %v238 = vld [vmem:[%s151 + $0x268] sm:$0xff]
      %v239 = vld [vmem:[%s151 + $0x270] sm:$0xff]
      %v240 = vld [vmem:[%s151 + $0x278] sm:$0xff]
      %v241 = vld [vmem:[%s151 + $0x280] sm:$0xff]
      %v242 = vld [vmem:[%s151 + $0x288] sm:$0xff]
      %v243 = vld [vmem:[%s151 + $0x290] sm:$0xff]
      %v244 = vld [vmem:[%s151 + $0x298] sm:$0xff]
      %v245 = vld [vmem:[%s151 + $0x2a0] sm:$0xff]
      %v246 = vld [vmem:[%s151 + $0x2a8] sm:$0xff]
      %v247 = vld [vmem:[%s151 + $0x2b0] sm:$0xff]
      %v248 = vld [vmem:[%s151 + $0x2b8] sm:$0xff]
      %v249 = vld [vmem:[%s151 + $0x2c0] sm:$0xff]
      %v250 = vld [vmem:[%s151 + $0x2c8] sm:$0xff]
      %v251 = vld [vmem:[%s151 + $0x2d0] sm:$0xff]
      %v252 = vld [vmem:[%s151 + $0x2d8] sm:$0xff]
      %v253 = vld [vmem:[%s151 + $0x2e0] sm:$0xff]
      %v254 = vld [vmem:[%s151 + $0x2e8] sm:$0xff]
      %v255 = vld [vmem:[%s151 + $0x2f0] sm:$0xff]
      %v256 = vld [vmem:[%s151 + $0x2f8] sm:$0xff]
      %v257 = vld [vmem:[%s151 + $0x300] sm:$0xff]
      %v258 = vld [vmem:[%s151 + $0x308] sm:$0xff]
      %v259 = vld [vmem:[%s151 + $0x310] sm:$0xff]
      %v260 = vld [vmem:[%s151 + $0x318] sm:$0xff]
      %v261 = vld [vmem:[%s151 + $0x320] sm:$0xff]
      %v262 = vld [vmem:[%s151 + $0x328] sm:$0xff]
      %v263 = vld [vmem:[%s151 + $0x330] sm:$0xff]
      %v264 = vld [vmem:[%s151 + $0x338] sm:$0xff]
      %v265 = vld [vmem:[%s151 + $0x340] sm:$0xff]
      %v266 = vld [vmem:[%s151 + $0x348] sm:$0xff]
      %v267 = vld [vmem:[%s151 + $0x350] sm:$0xff]
      %v268 = vld [vmem:[%s151 + $0x358] sm:$0xff]
      %v269 = vld [vmem:[%s151 + $0x360] sm:$0xff]
      %v270 = vld [vmem:[%s151 + $0x368] sm:$0xff]
      %v271 = vld [vmem:[%s151 + $0x370] sm:$0xff]
      %v272 = vld [vmem:[%s151 + $0x378] sm:$0xff]
      %v273 = vld [vmem:[%s151 + $0x380] sm:$0xff]
      %v274 = vld [vmem:[%s151 + $0x388] sm:$0xff]
      %v275 = vld [vmem:[%s151 + $0x390] sm:$0xff]
      %v276 = vld [vmem:[%s151 + $0x398] sm:$0xff]
      %v277 = vld [vmem:[%s151 + $0x3a0] sm:$0xff]
      %v278 = vld [vmem:[%s151 + $0x3a8] sm:$0xff]
      %v279 = vld [vmem:[%s151 + $0x3b0] sm:$0xff]
      %v280 = vld [vmem:[%s151 + $0x3b8] sm:$0xff]
      %v281 = vld [vmem:[%s151 + $0x3c0] sm:$0xff]
      %v282 = vld [vmem:[%s151 + $0x3c8] sm:$0xff]
      %v283 = vld [vmem:[%s151 + $0x3d0] sm:$0xff]
      %v284 = vld [vmem:[%s151 + $0x3d8] sm:$0xff]
      %v285 = vld [vmem:[%s151 + $0x3e0] sm:$0xff]
      %v286 = vld [vmem:[%s151 + $0x3e8] sm:$0xff]
      %v287 = vld [vmem:[%s151 + $0x3f0] sm:$0xff]
      %v288 = vld [vmem:[%s151 + $0x3f8] sm:$0xff]
      %v289 = vld [vmem:[%s151 + $0x400] sm:$0xff]
      %v290 = vld [vmem:[%s151 + $0x408] sm:$0xff]
      %v291 = vld [vmem:[%s151 + $0x410] sm:$0xff]
      %v292 = vld [vmem:[%s151 + $0x418] sm:$0xff]
      %v293 = vld [vmem:[%s151 + $0x420] sm:$0xff]
      %v294 = vld [vmem:[%s151 + $0x428] sm:$0xff]
      %v295 = vld [vmem:[%s151 + $0x430] sm:$0xff]
      %v296 = vld [vmem:[%s151 + $0x438] sm:$0xff]
      %v297 = vld [vmem:[%s151 + $0x440] sm:$0xff]
      %v298 = vld [vmem:[%s151 + $0x448] sm:$0xff]
      %v299 = vld [vmem:[%s151 + $0x450] sm:$0xff]
      %v300 = vld [vmem:[%s151 + $0x458] sm:$0xff]
      %v301 = vld [vmem:[%s151 + $0x460] sm:$0xff]
      %v302 = vld [vmem:[%s151 + $0x468] sm:$0xff]
      %v303 = vld [vmem:[%s151 + $0x470] sm:$0xff]
      %v304 = vld [vmem:[%s151 + $0x478] sm:$0xff]
      %v305 = vld [vmem:[%s151 + $0x480] sm:$0xff]
      %v306 = vld [vmem:[%s151 + $0x488] sm:$0xff]
      %v307 = vld [vmem:[%s151 + $0x490] sm:$0xff]
      %v308 = vld [vmem:[%s151 + $0x498] sm:$0xff]
      %v309 = vld [vmem:[%s151 + $0x4a0] sm:$0xff]
      %v310 = vld [vmem:[%s151 + $0x4a8] sm:$0xff]
      %v311 = vld [vmem:[%s151 + $0x4b0] sm:$0xff]
      %v312 = vld [vmem:[%s151 + $0x4b8] sm:$0xff]
      %v313 = vld [vmem:[%s151 + $0x4c0] sm:$0xff]
      %v314 = vld [vmem:[%s151 + $0x4c8] sm:$0xff]
      %v315 = vld [vmem:[%s151 + $0x4d0] sm:$0xff]
      %v316 = vld [vmem:[%s151 + $0x4d8] sm:$0xff]
      %v317 = vld [vmem:[%s151 + $0x4e0] sm:$0xff]
      %v318 = vld [vmem:[%s151 + $0x4e8] sm:$0xff]
      %v319 = vld [vmem:[%s151 + $0x4f0] sm:$0xff]
      %v320 = vld [vmem:[%s151 + $0x4f8] sm:$0xff]
      %v321 = vld [vmem:[%s151 + $0x500] sm:$0xff]
      %v322 = vld [vmem:[%s151 + $0x508] sm:$0xff]
      %v323 = vld [vmem:[%s151 + $0x510] sm:$0xff]
      %v324 = vld [vmem:[%s151 + $0x518] sm:$0xff]
      %v325 = vld [vmem:[%s151 + $0x520] sm:$0xff]
      %v326 = vld [vmem:[%s151 + $0x528] sm:$0xff]
      %v327 = vld [vmem:[%s151 + $0x530] sm:$0xff]
      %v328 = vld [vmem:[%s151 + $0x538] sm:$0xff]
      %v329 = vld [vmem:[%s151 + $0x540] sm:$0xff]
      %v330 = vld [vmem:[%s151 + $0x548] sm:$0xff]
      %v331 = vld [vmem:[%s151 + $0x550] sm:$0xff]
      %v332 = vld [vmem:[%s151 + $0x558] sm:$0xff]
      %v333 = vld [vmem:[%s151 + $0x560] sm:$0xff]
      %v334 = vld [vmem:[%s151 + $0x568] sm:$0xff]
      %v335 = vld [vmem:[%s151 + $0x570] sm:$0xff]
      %v336 = vld [vmem:[%s151 + $0x578] sm:$0xff]
      %v337 = vld [vmem:[%s151 + $0x580] sm:$0xff]
      %v338 = vld [vmem:[%s151 + $0x588] sm:$0xff]
      %v339 = vld [vmem:[%s151 + $0x590] sm:$0xff]
      %v340 = vld [vmem:[%s151 + $0x598] sm:$0xff]
      %v341 = vld [vmem:[%s151 + $0x5a0] sm:$0xff]
      %v342 = vld [vmem:[%s151 + $0x5a8] sm:$0xff]
      %v343 = vld [vmem:[%s151 + $0x5b0] sm:$0xff]
      %v344 = vld [vmem:[%s151 + $0x5b8] sm:$0xff]
      %v345 = vld [vmem:[%s151 + $0x5c0] sm:$0xff]
      %v346 = vld [vmem:[%s151 + $0x5c8] sm:$0xff]
      %v347 = vld [vmem:[%s151 + $0x5d0] sm:$0xff]
      %v348 = vld [vmem:[%s151 + $0x5d8] sm:$0xff]
      %v349 = vld [vmem:[%s151 + $0x5e0] sm:$0xff]
      %v350 = vld [vmem:[%s151 + $0x5e8] sm:$0xff]
      %v351 = vld [vmem:[%s151 + $0x5f0] sm:$0xff]
      %v352 = vld [vmem:[%s151 + $0x5f8] sm:$0xff]
      %v353 = vld [vmem:[%s151 + $0x600] sm:$0xff]
      %v354 = vld [vmem:[%s151 + $0x608] sm:$0xff]
      %v355 = vld [vmem:[%s151 + $0x610] sm:$0xff]
      %v356 = vld [vmem:[%s151 + $0x618] sm:$0xff]
      %v357 = vld [vmem:[%s151 + $0x620] sm:$0xff]
      %v358 = vld [vmem:[%s151 + $0x628] sm:$0xff]
      %v359 = vld [vmem:[%s151 + $0x630] sm:$0xff]
      %v360 = vld [vmem:[%s151 + $0x638] sm:$0xff]
      %v361 = vld [vmem:[%s151 + $0x640] sm:$0xff]
      %v362 = vld [vmem:[%s151 + $0x648] sm:$0xff]
      %v363 = vld [vmem:[%s151 + $0x650] sm:$0xff]
      %v364 = vld [vmem:[%s151 + $0x658] sm:$0xff]
      %v365 = vld [vmem:[%s151 + $0x660] sm:$0xff]
      %v366 = vld [vmem:[%s151 + $0x668] sm:$0xff]
      %v367 = vld [vmem:[%s151 + $0x670] sm:$0xff]
      %v368 = vld [vmem:[%s151 + $0x678] sm:$0xff]
      %v369 = vld [vmem:[%s151 + $0x680] sm:$0xff]
      %v370 = vld [vmem:[%s151 + $0x688] sm:$0xff]
      %v371 = vld [vmem:[%s151 + $0x690] sm:$0xff]
      %v372 = vld [vmem:[%s151 + $0x698] sm:$0xff]
      %v373 = vld [vmem:[%s151 + $0x6a0] sm:$0xff]
      %v374 = vld [vmem:[%s151 + $0x6a8] sm:$0xff]
      %v375 = vld [vmem:[%s151 + $0x6b0] sm:$0xff]
      %v376 = vld [vmem:[%s151 + $0x6b8] sm:$0xff]
      %v377 = vld [vmem:[%s151 + $0x6c0] sm:$0xff]
      %v378 = vld [vmem:[%s151 + $0x6c8] sm:$0xff]
      %v379 = vld [vmem:[%s151 + $0x6d0] sm:$0xff]
      %v380 = vld [vmem:[%s151 + $0x6d8] sm:$0xff]
      %v381 = vld [vmem:[%s151 + $0x6e0] sm:$0xff]
      %v382 = vld [vmem:[%s151 + $0x6e8] sm:$0xff]
      %v383 = vld [vmem:[%s151 + $0x6f0] sm:$0xff]
      %v384 = vld [vmem:[%s151 + $0x6f8] sm:$0xff]
      %v385 = vld [vmem:[%s151 + $0x700] sm:$0xff]
      %v386 = vld [vmem:[%s151 + $0x708] sm:$0xff]
      %v387 = vld [vmem:[%s151 + $0x710] sm:$0xff]
      %v388 = vld [vmem:[%s151 + $0x718] sm:$0xff]
      %v389 = vld [vmem:[%s151 + $0x720] sm:$0xff]
      %v390 = vld [vmem:[%s151 + $0x728] sm:$0xff]
      %v391 = vld [vmem:[%s151 + $0x730] sm:$0xff]
      %v392 = vld [vmem:[%s151 + $0x738] sm:$0xff]
      %v393 = vld [vmem:[%s151 + $0x740] sm:$0xff]
      %v394 = vld [vmem:[%s151 + $0x748] sm:$0xff]
      %v395 = vld [vmem:[%s151 + $0x750] sm:$0xff]
      %v396 = vld [vmem:[%s151 + $0x758] sm:$0xff]
      %v397 = vld [vmem:[%s151 + $0x760] sm:$0xff]
      %v398 = vld [vmem:[%s151 + $0x768] sm:$0xff]
      %v399 = vld [vmem:[%s151 + $0x770] sm:$0xff]
      %v400 = vld [vmem:[%s151 + $0x778] sm:$0xff]
      %v401 = vld [vmem:[%s151 + $0x780] sm:$0xff]
      %v402 = vld [vmem:[%s151 + $0x788] sm:$0xff]
      %v403 = vld [vmem:[%s151 + $0x790] sm:$0xff]
      %v404 = vld [vmem:[%s151 + $0x798] sm:$0xff]
      %v405 = vld [vmem:[%s151 + $0x7a0] sm:$0xff]
      %v406 = vld [vmem:[%s151 + $0x7a8] sm:$0xff]
      %v407 = vld [vmem:[%s151 + $0x7b0] sm:$0xff]
      %v408 = vld [vmem:[%s151 + $0x7b8] sm:$0xff]
      %v409 = vld [vmem:[%s151 + $0x7c0] sm:$0xff]
      %v410 = vld [vmem:[%s151 + $0x7c8] sm:$0xff]
      %v411 = vld [vmem:[%s151 + $0x7d0] sm:$0xff]
      %v412 = vld [vmem:[%s151 + $0x7d8] sm:$0xff]
      %v413 = vld [vmem:[%s151 + $0x7e0] sm:$0xff]
      %v414 = vld [vmem:[%s151 + $0x7e8] sm:$0xff]
      %v415 = vld [vmem:[%s151 + $0x7f0] sm:$0xff]
      %v416 = vld [vmem:[%s151 + $0x7f8] sm:$0xff]
      %v417 = vld [vmem:[%s155] sm:$0xff]
      %v418 = vld [vmem:[%s155 + $0x8] sm:$0xff]
      %v419 = vld [vmem:[%s155 + $0x10] sm:$0xff]
      %v420 = vld [vmem:[%s155 + $0x18] sm:$0xff]
      %v421 = vsub.f32 0.0, %v417
      %v422 = vsub.f32 0.0, %v418
      %v423 = vsub.f32 0.0, %v419
      %v424 = vsub.f32 0.0, %v420
      %v425 = vmul.f32 %v421, 1.442695
      %v426 = vpow.pop %v425
      %v427 = vmul.f32 %v422, 1.442695
      %v428 = vpow.pop %v427
      %v429 = vmul.f32 %v423, 1.442695
      %v430 = vpow.pop %v429
      %v431 = vmul.f32 %v424, 1.442695
      %v432 = vpow.pop %v431
      %v433 = vadd.f32 %v426, 1.0
      %v434 = vadd.f32 %v428, 1.0
      %v435 = vadd.f32 %v430, 1.0
      %v436 = vadd.f32 %v432, 1.0
      %v437 = vrcp.pop %v433
      %v438 = vrcp.pop %v434
      %v439 = vrcp.pop %v435
      %v440 = vrcp.pop %v436
      %v441 = vmul.f32 %v433, %v437
      %v442 = vmul.f32 %v434, %v438
      %v443 = vmul.f32 %v435, %v439
      %v444 = vmul.f32 %v436, %v440
      %v445 = vsub.f32 2.0, %v441
      %v446 = vsub.f32 2.0, %v442
      %v447 = vsub.f32 2.0, %v443
      %v448 = vsub.f32 2.0, %v444
      %v449 = vmul.f32 %v437, %v445
      %v450 = vmul.f32 %v438, %v446
      %v451 = vmul.f32 %v439, %v447
      %v452 = vmul.f32 %v440, %v448
      %v457 = vlaneseq
      %v458 = vshrl.u32 %v457, 7
      %v459 = vsub.s32 0, %v458
      %v460 = vrot.slane %v449, %v459
      %v461 = vlaneseq
      %v462 = vshrl.u32 %v461, 7
      %v463 = vsub.s32 1, %v462
      %v464 = vrot.slane %v449, %v463
      %v465 = vlaneseq
      %v466 = vshrl.u32 %v465, 7
      %v467 = vsub.s32 2, %v466
      %v468 = vrot.slane %v449, %v467
      %v469 = vlaneseq
      %v470 = vshrl.u32 %v469, 7
      %v471 = vsub.s32 3, %v470
      %v472 = vrot.slane %v449, %v471
      %v473 = vlaneseq
      %v474 = vshrl.u32 %v473, 7
      %v475 = vsub.s32 4, %v474
      %v476 = vrot.slane %v449, %v475
      %v477 = vlaneseq
      %v478 = vshrl.u32 %v477, 7
      %v479 = vsub.s32 5, %v478
      %v480 = vrot.slane %v449, %v479
      %v481 = vlaneseq
      %v482 = vshrl.u32 %v481, 7
      %v483 = vsub.s32 6, %v482
      %v484 = vrot.slane %v449, %v483
      %v485 = vlaneseq
      %v486 = vshrl.u32 %v485, 7
      %v487 = vsub.s32 7, %v486
      %v488 = vrot.slane %v449, %v487
      %v489 = vlaneseq
      %v490 = vshrl.u32 %v489, 7
      %v491 = vsub.s32 0, %v490
      %v492 = vrot.slane %v450, %v491
      %v493 = vlaneseq
      %v494 = vshrl.u32 %v493, 7
      %v495 = vsub.s32 1, %v494
      %v496 = vrot.slane %v450, %v495
      %v497 = vlaneseq
      %v498 = vshrl.u32 %v497, 7
      %v499 = vsub.s32 2, %v498
      %v500 = vrot.slane %v450, %v499
      %v501 = vlaneseq
      %v502 = vshrl.u32 %v501, 7
      %v503 = vsub.s32 3, %v502
      %v504 = vrot.slane %v450, %v503
      %v505 = vlaneseq
      %v506 = vshrl.u32 %v505, 7
      %v507 = vsub.s32 4, %v506
      %v508 = vrot.slane %v450, %v507
      %v509 = vlaneseq
      %v510 = vshrl.u32 %v509, 7
      %v511 = vsub.s32 5, %v510
      %v512 = vrot.slane %v450, %v511
      %v513 = vlaneseq
      %v514 = vshrl.u32 %v513, 7
      %v515 = vsub.s32 6, %v514
      %v516 = vrot.slane %v450, %v515
      %v517 = vlaneseq
      %v518 = vshrl.u32 %v517, 7
      %v519 = vsub.s32 7, %v518
      %v520 = vrot.slane %v450, %v519
      %v521 = vlaneseq
      %v522 = vshrl.u32 %v521, 7
      %v523 = vsub.s32 0, %v522
      %v524 = vrot.slane %v451, %v523
      %v525 = vlaneseq
      %v526 = vshrl.u32 %v525, 7
      %v527 = vsub.s32 1, %v526
      %v528 = vrot.slane %v451, %v527
      %v529 = vlaneseq
      %v530 = vshrl.u32 %v529, 7
      %v531 = vsub.s32 2, %v530
      %v532 = vrot.slane %v451, %v531
      %v533 = vlaneseq
      %v534 = vshrl.u32 %v533, 7
      %v535 = vsub.s32 3, %v534
      %v536 = vrot.slane %v451, %v535
      %v537 = vlaneseq
      %v538 = vshrl.u32 %v537, 7
      %v539 = vsub.s32 4, %v538
      %v540 = vrot.slane %v451, %v539
      %v541 = vlaneseq
      %v542 = vshrl.u32 %v541, 7
      %v543 = vsub.s32 5, %v542
      %v544 = vrot.slane %v451, %v543
      %v545 = vlaneseq
      %v546 = vshrl.u32 %v545, 7
      %v547 = vsub.s32 6, %v546
      %v548 = vrot.slane %v451, %v547
      %v549 = vlaneseq
      %v550 = vshrl.u32 %v549, 7
      %v551 = vsub.s32 7, %v550
      %v552 = vrot.slane %v451, %v551
      %v553 = vlaneseq
      %v554 = vshrl.u32 %v553, 7
      %v555 = vsub.s32 0, %v554
      %v556 = vrot.slane %v452, %v555
      %v557 = vlaneseq
      %v558 = vshrl.u32 %v557, 7
      %v559 = vsub.s32 1, %v558
      %v560 = vrot.slane %v452, %v559
      %v561 = vlaneseq
      %v562 = vshrl.u32 %v561, 7
      %v563 = vsub.s32 2, %v562
      %v564 = vrot.slane %v452, %v563
      %v565 = vlaneseq
      %v566 = vshrl.u32 %v565, 7
      %v567 = vsub.s32 3, %v566
      %v568 = vrot.slane %v452, %v567
      %v569 = vlaneseq
      %v570 = vshrl.u32 %v569, 7
      %v571 = vsub.s32 4, %v570
      %v572 = vrot.slane %v452, %v571
      %v573 = vlaneseq
      %v574 = vshrl.u32 %v573, 7
      %v575 = vsub.s32 5, %v574
      %v576 = vrot.slane %v452, %v575
      %v577 = vlaneseq
      %v578 = vshrl.u32 %v577, 7
      %v579 = vsub.s32 6, %v578
      %v580 = vrot.slane %v452, %v579
      %v581 = vlaneseq
      %v582 = vshrl.u32 %v581, 7
      %v583 = vsub.s32 7, %v582
      %v584 = vrot.slane %v452, %v583
      %v617 = vmul.f32 %v161, %v460
      %v618 = vmul.f32 %v162, %v464
      %v619 = vmul.f32 %v163, %v468
      %v620 = vmul.f32 %v164, %v472
      %v621 = vmul.f32 %v165, %v476
      %v622 = vmul.f32 %v166, %v480
      %v623 = vmul.f32 %v167, %v484
      %v624 = vmul.f32 %v168, %v488
      %v625 = vmul.f32 %v169, %v492
      %v626 = vmul.f32 %v170, %v496
      %v627 = vmul.f32 %v171, %v500
      %v628 = vmul.f32 %v172, %v504
      %v629 = vmul.f32 %v173, %v508
      %v630 = vmul.f32 %v174, %v512
      %v631 = vmul.f32 %v175, %v516
      %v632 = vmul.f32 %v176, %v520
      %v633 = vmul.f32 %v177, %v524
      %v634 = vmul.f32 %v178, %v528
      %v635 = vmul.f32 %v179, %v532
      %v636 = vmul.f32 %v180, %v536
      %v637 = vmul.f32 %v181, %v540
      %v638 = vmul.f32 %v182, %v544
      %v639 = vmul.f32 %v183, %v548
      %v640 = vmul.f32 %v184, %v552
      %v641 = vmul.f32 %v185, %v556
      %v642 = vmul.f32 %v186, %v560
      %v643 = vmul.f32 %v187, %v564
      %v644 = vmul.f32 %v188, %v568
      %v645 = vmul.f32 %v189, %v572
      %v646 = vmul.f32 %v190, %v576
      %v647 = vmul.f32 %v191, %v580
      %v648 = vmul.f32 %v192, %v584
      %v649 = vmul.f32 %v193, %v460
      %v650 = vmul.f32 %v194, %v464
      %v651 = vmul.f32 %v195, %v468
      %v652 = vmul.f32 %v196, %v472
      %v653 = vmul.f32 %v197, %v476
      %v654 = vmul.f32 %v198, %v480
      %v655 = vmul.f32 %v199, %v484
      %v656 = vmul.f32 %v200, %v488
      %v657 = vmul.f32 %v201, %v492
      %v658 = vmul.f32 %v202, %v496
      %v659 = vmul.f32 %v203, %v500
      %v660 = vmul.f32 %v204, %v504
      %v661 = vmul.f32 %v205, %v508
      %v662 = vmul.f32 %v206, %v512
      %v663 = vmul.f32 %v207, %v516
      %v664 = vmul.f32 %v208, %v520
      %v665 = vmul.f32 %v209, %v524
      %v666 = vmul.f32 %v210, %v528
      %v667 = vmul.f32 %v211, %v532
      %v668 = vmul.f32 %v212, %v536
      %v669 = vmul.f32 %v213, %v540
      %v670 = vmul.f32 %v214, %v544
      %v671 = vmul.f32 %v215, %v548
      %v672 = vmul.f32 %v216, %v552
      %v673 = vmul.f32 %v217, %v556
      %v674 = vmul.f32 %v218, %v560
      %v675 = vmul.f32 %v219, %v564
      %v676 = vmul.f32 %v220, %v568
      %v677 = vmul.f32 %v221, %v572
      %v678 = vmul.f32 %v222, %v576
      %v679 = vmul.f32 %v223, %v580
      %v680 = vmul.f32 %v224, %v584
      %v681 = vmul.f32 %v225, %v460
      %v682 = vmul.f32 %v226, %v464
      %v683 = vmul.f32 %v227, %v468
      %v684 = vmul.f32 %v228, %v472
      %v685 = vmul.f32 %v229, %v476
      %v686 = vmul.f32 %v230, %v480
      %v687 = vmul.f32 %v231, %v484
      %v688 = vmul.f32 %v232, %v488
      %v689 = vmul.f32 %v233, %v492
      %v690 = vmul.f32 %v234, %v496
      %v691 = vmul.f32 %v235, %v500
      %v692 = vmul.f32 %v236, %v504
      %v693 = vmul.f32 %v237, %v508
      %v694 = vmul.f32 %v238, %v512
      %v695 = vmul.f32 %v239, %v516
      %v696 = vmul.f32 %v240, %v520
      %v697 = vmul.f32 %v241, %v524
      %v698 = vmul.f32 %v242, %v528
      %v699 = vmul.f32 %v243, %v532
      %v700 = vmul.f32 %v244, %v536
      %v701 = vmul.f32 %v245, %v540
      %v702 = vmul.f32 %v246, %v544
      %v703 = vmul.f32 %v247, %v548
      %v704 = vmul.f32 %v248, %v552
      %v705 = vmul.f32 %v249, %v556
      %v706 = vmul.f32 %v250, %v560
      %v707 = vmul.f32 %v251, %v564
      %v708 = vmul.f32 %v252, %v568
      %v709 = vmul.f32 %v253, %v572
      %v710 = vmul.f32 %v254, %v576
      %v711 = vmul.f32 %v255, %v580
      %v712 = vmul.f32 %v256, %v584
      %v713 = vmul.f32 %v257, %v460
      %v714 = vmul.f32 %v258, %v464
      %v715 = vmul.f32 %v259, %v468
      %v716 = vmul.f32 %v260, %v472
      %v717 = vmul.f32 %v261, %v476
      %v718 = vmul.f32 %v262, %v480
      %v719 = vmul.f32 %v263, %v484
      %v720 = vmul.f32 %v264, %v488
      %v721 = vmul.f32 %v265, %v492
      %v722 = vmul.f32 %v266, %v496
      %v723 = vmul.f32 %v267, %v500
      %v724 = vmul.f32 %v268, %v504
      %v725 = vmul.f32 %v269, %v508
      %v726 = vmul.f32 %v270, %v512
      %v727 = vmul.f32 %v271, %v516
      %v728 = vmul.f32 %v272, %v520
      %v729 = vmul.f32 %v273, %v524
      %v730 = vmul.f32 %v274, %v528
      %v731 = vmul.f32 %v275, %v532
      %v732 = vmul.f32 %v276, %v536
      %v733 = vmul.f32 %v277, %v540
      %v734 = vmul.f32 %v278, %v544
      %v735 = vmul.f32 %v279, %v548
      %v736 = vmul.f32 %v280, %v552
      %v737 = vmul.f32 %v281, %v556
      %v738 = vmul.f32 %v282, %v560
      %v739 = vmul.f32 %v283, %v564
      %v740 = vmul.f32 %v284, %v568
      %v741 = vmul.f32 %v285, %v572
      %v742 = vmul.f32 %v286, %v576
      %v743 = vmul.f32 %v287, %v580
      %v744 = vmul.f32 %v288, %v584
      %v745 = vmul.f32 %v289, %v460
      %v746 = vmul.f32 %v290, %v464
      %v747 = vmul.f32 %v291, %v468
      %v748 = vmul.f32 %v292, %v472
      %v749 = vmul.f32 %v293, %v476
      %v750 = vmul.f32 %v294, %v480
      %v751 = vmul.f32 %v295, %v484
      %v752 = vmul.f32 %v296, %v488
      %v753 = vmul.f32 %v297, %v492
      %v754 = vmul.f32 %v298, %v496
      %v755 = vmul.f32 %v299, %v500
      %v756 = vmul.f32 %v300, %v504
      %v757 = vmul.f32 %v301, %v508
      %v758 = vmul.f32 %v302, %v512
      %v759 = vmul.f32 %v303, %v516
      %v760 = vmul.f32 %v304, %v520
      %v761 = vmul.f32 %v305, %v524
      %v762 = vmul.f32 %v306, %v528
      %v763 = vmul.f32 %v307, %v532
      %v764 = vmul.f32 %v308, %v536
      %v765 = vmul.f32 %v309, %v540
      %v766 = vmul.f32 %v310, %v544
      %v767 = vmul.f32 %v311, %v548
      %v768 = vmul.f32 %v312, %v552
      %v769 = vmul.f32 %v313, %v556
      %v770 = vmul.f32 %v314, %v560
      %v771 = vmul.f32 %v315, %v564
      %v772 = vmul.f32 %v316, %v568
      %v773 = vmul.f32 %v317, %v572
      %v774 = vmul.f32 %v318, %v576
      %v775 = vmul.f32 %v319, %v580
      %v776 = vmul.f32 %v320, %v584
      %v777 = vmul.f32 %v321, %v460
      %v778 = vmul.f32 %v322, %v464
      %v779 = vmul.f32 %v323, %v468
      %v780 = vmul.f32 %v324, %v472
      %v781 = vmul.f32 %v325, %v476
      %v782 = vmul.f32 %v326, %v480
      %v783 = vmul.f32 %v327, %v484
      %v784 = vmul.f32 %v328, %v488
      %v785 = vmul.f32 %v329, %v492
      %v786 = vmul.f32 %v330, %v496
      %v787 = vmul.f32 %v331, %v500
      %v788 = vmul.f32 %v332, %v504
      %v789 = vmul.f32 %v333, %v508
      %v790 = vmul.f32 %v334, %v512
      %v791 = vmul.f32 %v335, %v516
      %v792 = vmul.f32 %v336, %v520
      %v793 = vmul.f32 %v337, %v524
      %v794 = vmul.f32 %v338, %v528
      %v795 = vmul.f32 %v339, %v532
      %v796 = vmul.f32 %v340, %v536
      %v797 = vmul.f32 %v341, %v540
      %v798 = vmul.f32 %v342, %v544
      %v799 = vmul.f32 %v343, %v548
      %v800 = vmul.f32 %v344, %v552
      %v801 = vmul.f32 %v345, %v556
      %v802 = vmul.f32 %v346, %v560
      %v803 = vmul.f32 %v347, %v564
      %v804 = vmul.f32 %v348, %v568
      %v805 = vmul.f32 %v349, %v572
      %v806 = vmul.f32 %v350, %v576
      %v807 = vmul.f32 %v351, %v580
      %v808 = vmul.f32 %v352, %v584
      %v809 = vmul.f32 %v353, %v460
      %v810 = vmul.f32 %v354, %v464
      %v811 = vmul.f32 %v355, %v468
      %v812 = vmul.f32 %v356, %v472
      %v813 = vmul.f32 %v357, %v476
      %v814 = vmul.f32 %v358, %v480
      %v815 = vmul.f32 %v359, %v484
      %v816 = vmul.f32 %v360, %v488
      %v817 = vmul.f32 %v361, %v492
      %v818 = vmul.f32 %v362, %v496
      %v819 = vmul.f32 %v363, %v500
      %v820 = vmul.f32 %v364, %v504
      %v821 = vmul.f32 %v365, %v508
      %v822 = vmul.f32 %v366, %v512
      %v823 = vmul.f32 %v367, %v516
      %v824 = vmul.f32 %v368, %v520
      %v825 = vmul.f32 %v369, %v524
      %v826 = vmul.f32 %v370, %v528
      %v827 = vmul.f32 %v371, %v532
      %v828 = vmul.f32 %v372, %v536
      %v829 = vmul.f32 %v373, %v540
      %v830 = vmul.f32 %v374, %v544
      %v831 = vmul.f32 %v375, %v548
      %v832 = vmul.f32 %v376, %v552
      %v833 = vmul.f32 %v377, %v556
      %v834 = vmul.f32 %v378, %v560
      %v835 = vmul.f32 %v379, %v564
      %v836 = vmul.f32 %v380, %v568
      %v837 = vmul.f32 %v381, %v572
      %v838 = vmul.f32 %v382, %v576
      %v839 = vmul.f32 %v383, %v580
      %v840 = vmul.f32 %v384, %v584
      %v841 = vmul.f32 %v385, %v460
      %v842 = vmul.f32 %v386, %v464
      %v843 = vmul.f32 %v387, %v468
      %v844 = vmul.f32 %v388, %v472
      %v845 = vmul.f32 %v389, %v476
      %v846 = vmul.f32 %v390, %v480
      %v847 = vmul.f32 %v391, %v484
      %v848 = vmul.f32 %v392, %v488
      %v849 = vmul.f32 %v393, %v492
      %v850 = vmul.f32 %v394, %v496
      %v851 = vmul.f32 %v395, %v500
      %v852 = vmul.f32 %v396, %v504
      %v853 = vmul.f32 %v397, %v508
      %v854 = vmul.f32 %v398, %v512
      %v855 = vmul.f32 %v399, %v516
      %v856 = vmul.f32 %v400, %v520
      %v857 = vmul.f32 %v401, %v524
      %v858 = vmul.f32 %v402, %v528
      %v859 = vmul.f32 %v403, %v532
      %v860 = vmul.f32 %v404, %v536
      %v861 = vmul.f32 %v405, %v540
      %v862 = vmul.f32 %v406, %v544
      %v863 = vmul.f32 %v407, %v548
      %v864 = vmul.f32 %v408, %v552
      %v865 = vmul.f32 %v409, %v556
      %v866 = vmul.f32 %v410, %v560
      %v867 = vmul.f32 %v411, %v564
      %v868 = vmul.f32 %v412, %v568
      %v869 = vmul.f32 %v413, %v572
      %v870 = vmul.f32 %v414, %v576
      %v871 = vmul.f32 %v415, %v580
      %v872 = vmul.f32 %v416, %v584
      %873 = vst [vmem:[%s160] sm:$0xff] %v617
      %874 = vst [vmem:[%s160 + $0x8] sm:$0xff] %v618
      %875 = vst [vmem:[%s160 + $0x10] sm:$0xff] %v619
      %876 = vst [vmem:[%s160 + $0x18] sm:$0xff] %v620
      %877 = vst [vmem:[%s160 + $0x20] sm:$0xff] %v621
      %878 = vst [vmem:[%s160 + $0x28] sm:$0xff] %v622
      %879 = vst [vmem:[%s160 + $0x30] sm:$0xff] %v623
      %880 = vst [vmem:[%s160 + $0x38] sm:$0xff] %v624
      %881 = vst [vmem:[%s160 + $0x40] sm:$0xff] %v625
      %882 = vst [vmem:[%s160 + $0x48] sm:$0xff] %v626
      %883 = vst [vmem:[%s160 + $0x50] sm:$0xff] %v627
      %884 = vst [vmem:[%s160 + $0x58] sm:$0xff] %v628
      %885 = vst [vmem:[%s160 + $0x60] sm:$0xff] %v629
      %886 = vst [vmem:[%s160 + $0x68] sm:$0xff] %v630
      %887 = vst [vmem:[%s160 + $0x70] sm:$0xff] %v631
      %888 = vst [vmem:[%s160 + $0x78] sm:$0xff] %v632
      %889 = vst [vmem:[%s160 + $0x80] sm:$0xff] %v633
      %890 = vst [vmem:[%s160 + $0x88] sm:$0xff] %v634
      %891 = vst [vmem:[%s160 + $0x90] sm:$0xff] %v635
      %892 = vst [vmem:[%s160 + $0x98] sm:$0xff] %v636
      %893 = vst [vmem:[%s160 + $0xa0] sm:$0xff] %v637
      %894 = vst [vmem:[%s160 + $0xa8] sm:$0xff] %v638
      %895 = vst [vmem:[%s160 + $0xb0] sm:$0xff] %v639
      %896 = vst [vmem:[%s160 + $0xb8] sm:$0xff] %v640
      %897 = vst [vmem:[%s160 + $0xc0] sm:$0xff] %v641
      %898 = vst [vmem:[%s160 + $0xc8] sm:$0xff] %v642
      %899 = vst [vmem:[%s160 + $0xd0] sm:$0xff] %v643
      %900 = vst [vmem:[%s160 + $0xd8] sm:$0xff] %v644
      %901 = vst [vmem:[%s160 + $0xe0] sm:$0xff] %v645
      %902 = vst [vmem:[%s160 + $0xe8] sm:$0xff] %v646
      %903 = vst [vmem:[%s160 + $0xf0] sm:$0xff] %v647
      %904 = vst [vmem:[%s160 + $0xf8] sm:$0xff] %v648
      %905 = vst [vmem:[%s160 + $0x100] sm:$0xff] %v649
      %906 = vst [vmem:[%s160 + $0x108] sm:$0xff] %v650
      %907 = vst [vmem:[%s160 + $0x110] sm:$0xff] %v651
      %908 = vst [vmem:[%s160 + $0x118] sm:$0xff] %v652
      %909 = vst [vmem:[%s160 + $0x120] sm:$0xff] %v653
      %910 = vst [vmem:[%s160 + $0x128] sm:$0xff] %v654
      %911 = vst [vmem:[%s160 + $0x130] sm:$0xff] %v655
      %912 = vst [vmem:[%s160 + $0x138] sm:$0xff] %v656
      %913 = vst [vmem:[%s160 + $0x140] sm:$0xff] %v657
      %914 = vst [vmem:[%s160 + $0x148] sm:$0xff] %v658
      %915 = vst [vmem:[%s160 + $0x150] sm:$0xff] %v659
      %916 = vst [vmem:[%s160 + $0x158] sm:$0xff] %v660
      %917 = vst [vmem:[%s160 + $0x160] sm:$0xff] %v661
      %918 = vst [vmem:[%s160 + $0x168] sm:$0xff] %v662
      %919 = vst [vmem:[%s160 + $0x170] sm:$0xff] %v663
      %920 = vst [vmem:[%s160 + $0x178] sm:$0xff] %v664
      %921 = vst [vmem:[%s160 + $0x180] sm:$0xff] %v665
      %922 = vst [vmem:[%s160 + $0x188] sm:$0xff] %v666
      %923 = vst [vmem:[%s160 + $0x190] sm:$0xff] %v667
      %924 = vst [vmem:[%s160 + $0x198] sm:$0xff] %v668
      %925 = vst [vmem:[%s160 + $0x1a0] sm:$0xff] %v669
      %926 = vst [vmem:[%s160 + $0x1a8] sm:$0xff] %v670
      %927 = vst [vmem:[%s160 + $0x1b0] sm:$0xff] %v671
      %928 = vst [vmem:[%s160 + $0x1b8] sm:$0xff] %v672
      %929 = vst [vmem:[%s160 + $0x1c0] sm:$0xff] %v673
      %930 = vst [vmem:[%s160 + $0x1c8] sm:$0xff] %v674
      %931 = vst [vmem:[%s160 + $0x1d0] sm:$0xff] %v675
      %932 = vst [vmem:[%s160 + $0x1d8] sm:$0xff] %v676
      %933 = vst [vmem:[%s160 + $0x1e0] sm:$0xff] %v677
      %934 = vst [vmem:[%s160 + $0x1e8] sm:$0xff] %v678
      %935 = vst [vmem:[%s160 + $0x1f0] sm:$0xff] %v679
      %936 = vst [vmem:[%s160 + $0x1f8] sm:$0xff] %v680
      %937 = vst [vmem:[%s160 + $0x200] sm:$0xff] %v681
      %938 = vst [vmem:[%s160 + $0x208] sm:$0xff] %v682
      %939 = vst [vmem:[%s160 + $0x210] sm:$0xff] %v683
      %940 = vst [vmem:[%s160 + $0x218] sm:$0xff] %v684
      %941 = vst [vmem:[%s160 + $0x220] sm:$0xff] %v685
      %942 = vst [vmem:[%s160 + $0x228] sm:$0xff] %v686
      %943 = vst [vmem:[%s160 + $0x230] sm:$0xff] %v687
      %944 = vst [vmem:[%s160 + $0x238] sm:$0xff] %v688
      %945 = vst [vmem:[%s160 + $0x240] sm:$0xff] %v689
      %946 = vst [vmem:[%s160 + $0x248] sm:$0xff] %v690
      %947 = vst [vmem:[%s160 + $0x250] sm:$0xff] %v691
      %948 = vst [vmem:[%s160 + $0x258] sm:$0xff] %v692
      %949 = vst [vmem:[%s160 + $0x260] sm:$0xff] %v693
      %950 = vst [vmem:[%s160 + $0x268] sm:$0xff] %v694
      %951 = vst [vmem:[%s160 + $0x270] sm:$0xff] %v695
      %952 = vst [vmem:[%s160 + $0x278] sm:$0xff] %v696
      %953 = vst [vmem:[%s160 + $0x280] sm:$0xff] %v697
      %954 = vst [vmem:[%s160 + $0x288] sm:$0xff] %v698
      %955 = vst [vmem:[%s160 + $0x290] sm:$0xff] %v699
      %956 = vst [vmem:[%s160 + $0x298] sm:$0xff] %v700
      %957 = vst [vmem:[%s160 + $0x2a0] sm:$0xff] %v701
      %958 = vst [vmem:[%s160 + $0x2a8] sm:$0xff] %v702
      %959 = vst [vmem:[%s160 + $0x2b0] sm:$0xff] %v703
      %960 = vst [vmem:[%s160 + $0x2b8] sm:$0xff] %v704
      %961 = vst [vmem:[%s160 + $0x2c0] sm:$0xff] %v705
      %962 = vst [vmem:[%s160 + $0x2c8] sm:$0xff] %v706
      %963 = vst [vmem:[%s160 + $0x2d0] sm:$0xff] %v707
      %964 = vst [vmem:[%s160 + $0x2d8] sm:$0xff] %v708
      %965 = vst [vmem:[%s160 + $0x2e0] sm:$0xff] %v709
      %966 = vst [vmem:[%s160 + $0x2e8] sm:$0xff] %v710
      %967 = vst [vmem:[%s160 + $0x2f0] sm:$0xff] %v711
      %968 = vst [vmem:[%s160 + $0x2f8] sm:$0xff] %v712
      %969 = vst [vmem:[%s160 + $0x300] sm:$0xff] %v713
      %970 = vst [vmem:[%s160 + $0x308] sm:$0xff] %v714
      %971 = vst [vmem:[%s160 + $0x310] sm:$0xff] %v715
      %972 = vst [vmem:[%s160 + $0x318] sm:$0xff] %v716
      %973 = vst [vmem:[%s160 + $0x320] sm:$0xff] %v717
      %974 = vst [vmem:[%s160 + $0x328] sm:$0xff] %v718
      %975 = vst [vmem:[%s160 + $0x330] sm:$0xff] %v719
      %976 = vst [vmem:[%s160 + $0x338] sm:$0xff] %v720
      %977 = vst [vmem:[%s160 + $0x340] sm:$0xff] %v721
      %978 = vst [vmem:[%s160 + $0x348] sm:$0xff] %v722
      %979 = vst [vmem:[%s160 + $0x350] sm:$0xff] %v723
      %980 = vst [vmem:[%s160 + $0x358] sm:$0xff] %v724
      %981 = vst [vmem:[%s160 + $0x360] sm:$0xff] %v725
      %982 = vst [vmem:[%s160 + $0x368] sm:$0xff] %v726
      %983 = vst [vmem:[%s160 + $0x370] sm:$0xff] %v727
      %984 = vst [vmem:[%s160 + $0x378] sm:$0xff] %v728
      %985 = vst [vmem:[%s160 + $0x380] sm:$0xff] %v729
      %986 = vst [vmem:[%s160 + $0x388] sm:$0xff] %v730
      %987 = vst [vmem:[%s160 + $0x390] sm:$0xff] %v731
      %988 = vst [vmem:[%s160 + $0x398] sm:$0xff] %v732
      %989 = vst [vmem:[%s160 + $0x3a0] sm:$0xff] %v733
      %990 = vst [vmem:[%s160 + $0x3a8] sm:$0xff] %v734
      %991 = vst [vmem:[%s160 + $0x3b0] sm:$0xff] %v735
      %992 = vst [vmem:[%s160 + $0x3b8] sm:$0xff] %v736
      %993 = vst [vmem:[%s160 + $0x3c0] sm:$0xff] %v737
      %994 = vst [vmem:[%s160 + $0x3c8] sm:$0xff] %v738
      %995 = vst [vmem:[%s160 + $0x3d0] sm:$0xff] %v739
      %996 = vst [vmem:[%s160 + $0x3d8] sm:$0xff] %v740
      %997 = vst [vmem:[%s160 + $0x3e0] sm:$0xff] %v741
      %998 = vst [vmem:[%s160 + $0x3e8] sm:$0xff] %v742
      %999 = vst [vmem:[%s160 + $0x3f0] sm:$0xff] %v743
      %1000 = vst [vmem:[%s160 + $0x3f8] sm:$0xff] %v744
      %1001 = vst [vmem:[%s160 + $0x400] sm:$0xff] %v745
      %1002 = vst [vmem:[%s160 + $0x408] sm:$0xff] %v746
      %1003 = vst [vmem:[%s160 + $0x410] sm:$0xff] %v747
      %1004 = vst [vmem:[%s160 + $0x418] sm:$0xff] %v748
      %1005 = vst [vmem:[%s160 + $0x420] sm:$0xff] %v749
      %1006 = vst [vmem:[%s160 + $0x428] sm:$0xff] %v750
      %1007 = vst [vmem:[%s160 + $0x430] sm:$0xff] %v751
      %1008 = vst [vmem:[%s160 + $0x438] sm:$0xff] %v752
      %1009 = vst [vmem:[%s160 + $0x440] sm:$0xff] %v753
      %1010 = vst [vmem:[%s160 + $0x448] sm:$0xff] %v754
      %1011 = vst [vmem:[%s160 + $0x450] sm:$0xff] %v755
      %1012 = vst [vmem:[%s160 + $0x458] sm:$0xff] %v756
      %1013 = vst [vmem:[%s160 + $0x460] sm:$0xff] %v757
      %1014 = vst [vmem:[%s160 + $0x468] sm:$0xff] %v758
      %1015 = vst [vmem:[%s160 + $0x470] sm:$0xff] %v759
      %1016 = vst [vmem:[%s160 + $0x478] sm:$0xff] %v760
      %1017 = vst [vmem:[%s160 + $0x480] sm:$0xff] %v761
      %1018 = vst [vmem:[%s160 + $0x488] sm:$0xff] %v762
      %1019 = vst [vmem:[%s160 + $0x490] sm:$0xff] %v763
      %1020 = vst [vmem:[%s160 + $0x498] sm:$0xff] %v764
      %1021 = vst [vmem:[%s160 + $0x4a0] sm:$0xff] %v765
      %1022 = vst [vmem:[%s160 + $0x4a8] sm:$0xff] %v766
      %1023 = vst [vmem:[%s160 + $0x4b0] sm:$0xff] %v767
      %1024 = vst [vmem:[%s160 + $0x4b8] sm:$0xff] %v768
      %1025 = vst [vmem:[%s160 + $0x4c0] sm:$0xff] %v769
      %1026 = vst [vmem:[%s160 + $0x4c8] sm:$0xff] %v770
      %1027 = vst [vmem:[%s160 + $0x4d0] sm:$0xff] %v771
      %1028 = vst [vmem:[%s160 + $0x4d8] sm:$0xff] %v772
      %1029 = vst [vmem:[%s160 + $0x4e0] sm:$0xff] %v773
      %1030 = vst [vmem:[%s160 + $0x4e8] sm:$0xff] %v774
      %1031 = vst [vmem:[%s160 + $0x4f0] sm:$0xff] %v775
      %1032 = vst [vmem:[%s160 + $0x4f8] sm:$0xff] %v776
      %1033 = vst [vmem:[%s160 + $0x500] sm:$0xff] %v777
      %1034 = vst [vmem:[%s160 + $0x508] sm:$0xff] %v778
      %1035 = vst [vmem:[%s160 + $0x510] sm:$0xff] %v779
      %1036 = vst [vmem:[%s160 + $0x518] sm:$0xff] %v780
      %1037 = vst [vmem:[%s160 + $0x520] sm:$0xff] %v781
      %1038 = vst [vmem:[%s160 + $0x528] sm:$0xff] %v782
      %1039 = vst [vmem:[%s160 + $0x530] sm:$0xff] %v783
      %1040 = vst [vmem:[%s160 + $0x538] sm:$0xff] %v784
      %1041 = vst [vmem:[%s160 + $0x540] sm:$0xff] %v785
      %1042 = vst [vmem:[%s160 + $0x548] sm:$0xff] %v786
      %1043 = vst [vmem:[%s160 + $0x550] sm:$0xff] %v787
      %1044 = vst [vmem:[%s160 + $0x558] sm:$0xff] %v788
      %1045 = vst [vmem:[%s160 + $0x560] sm:$0xff] %v789
      %1046 = vst [vmem:[%s160 + $0x568] sm:$0xff] %v790
      %1047 = vst [vmem:[%s160 + $0x570] sm:$0xff] %v791
      %1048 = vst [vmem:[%s160 + $0x578] sm:$0xff] %v792
      %1049 = vst [vmem:[%s160 + $0x580] sm:$0xff] %v793
      %1050 = vst [vmem:[%s160 + $0x588] sm:$0xff] %v794
      %1051 = vst [vmem:[%s160 + $0x590] sm:$0xff] %v795
      %1052 = vst [vmem:[%s160 + $0x598] sm:$0xff] %v796
      %1053 = vst [vmem:[%s160 + $0x5a0] sm:$0xff] %v797
      %1054 = vst [vmem:[%s160 + $0x5a8] sm:$0xff] %v798
      %1055 = vst [vmem:[%s160 + $0x5b0] sm:$0xff] %v799
      %1056 = vst [vmem:[%s160 + $0x5b8] sm:$0xff] %v800
      %1057 = vst [vmem:[%s160 + $0x5c0] sm:$0xff] %v801
      %1058 = vst [vmem:[%s160 + $0x5c8] sm:$0xff] %v802
      %1059 = vst [vmem:[%s160 + $0x5d0] sm:$0xff] %v803
      %1060 = vst [vmem:[%s160 + $0x5d8] sm:$0xff] %v804
      %1061 = vst [vmem:[%s160 + $0x5e0] sm:$0xff] %v805
      %1062 = vst [vmem:[%s160 + $0x5e8] sm:$0xff] %v806
      %1063 = vst [vmem:[%s160 + $0x5f0] sm:$0xff] %v807
      %1064 = vst [vmem:[%s160 + $0x5f8] sm:$0xff] %v808
      %1065 = vst [vmem:[%s160 + $0x600] sm:$0xff] %v809
      %1066 = vst [vmem:[%s160 + $0x608] sm:$0xff] %v810
      %1067 = vst [vmem:[%s160 + $0x610] sm:$0xff] %v811
      %1068 = vst [vmem:[%s160 + $0x618] sm:$0xff] %v812
      %1069 = vst [vmem:[%s160 + $0x620] sm:$0xff] %v813
      %1070 = vst [vmem:[%s160 + $0x628] sm:$0xff] %v814
      %1071 = vst [vmem:[%s160 + $0x630] sm:$0xff] %v815
      %1072 = vst [vmem:[%s160 + $0x638] sm:$0xff] %v816
      %1073 = vst [vmem:[%s160 + $0x640] sm:$0xff] %v817
      %1074 = vst [vmem:[%s160 + $0x648] sm:$0xff] %v818
      %1075 = vst [vmem:[%s160 + $0x650] sm:$0xff] %v819
      %1076 = vst [vmem:[%s160 + $0x658] sm:$0xff] %v820
      %1077 = vst [vmem:[%s160 + $0x660] sm:$0xff] %v821
      %1078 = vst [vmem:[%s160 + $0x668] sm:$0xff] %v822
      %1079 = vst [vmem:[%s160 + $0x670] sm:$0xff] %v823
      %1080 = vst [vmem:[%s160 + $0x678] sm:$0xff] %v824
      %1081 = vst [vmem:[%s160 + $0x680] sm:$0xff] %v825
      %1082 = vst [vmem:[%s160 + $0x688] sm:$0xff] %v826
      %1083 = vst [vmem:[%s160 + $0x690] sm:$0xff] %v827
      %1084 = vst [vmem:[%s160 + $0x698] sm:$0xff] %v828
      %1085 = vst [vmem:[%s160 + $0x6a0] sm:$0xff] %v829
      %1086 = vst [vmem:[%s160 + $0x6a8] sm:$0xff] %v830
      %1087 = vst [vmem:[%s160 + $0x6b0] sm:$0xff] %v831
      %1088 = vst [vmem:[%s160 + $0x6b8] sm:$0xff] %v832
      %1089 = vst [vmem:[%s160 + $0x6c0] sm:$0xff] %v833
      %1090 = vst [vmem:[%s160 + $0x6c8] sm:$0xff] %v834
      %1091 = vst [vmem:[%s160 + $0x6d0] sm:$0xff] %v835
      %1092 = vst [vmem:[%s160 + $0x6d8] sm:$0xff] %v836
      %1093 = vst [vmem:[%s160 + $0x6e0] sm:$0xff] %v837
      %1094 = vst [vmem:[%s160 + $0x6e8] sm:$0xff] %v838
      %1095 = vst [vmem:[%s160 + $0x6f0] sm:$0xff] %v839
      %1096 = vst [vmem:[%s160 + $0x6f8] sm:$0xff] %v840
      %1097 = vst [vmem:[%s160 + $0x700] sm:$0xff] %v841
      %1098 = vst [vmem:[%s160 + $0x708] sm:$0xff] %v842
      %1099 = vst [vmem:[%s160 + $0x710] sm:$0xff] %v843
      %1100 = vst [vmem:[%s160 + $0x718] sm:$0xff] %v844
      %1101 = vst [vmem:[%s160 + $0x720] sm:$0xff] %v845
      %1102 = vst [vmem:[%s160 + $0x728] sm:$0xff] %v846
      %1103 = vst [vmem:[%s160 + $0x730] sm:$0xff] %v847
      %1104 = vst [vmem:[%s160 + $0x738] sm:$0xff] %v848
      %1105 = vst [vmem:[%s160 + $0x740] sm:$0xff] %v849
      %1106 = vst [vmem:[%s160 + $0x748] sm:$0xff] %v850
      %1107 = vst [vmem:[%s160 + $0x750] sm:$0xff] %v851
      %1108 = vst [vmem:[%s160 + $0x758] sm:$0xff] %v852
      %1109 = vst [vmem:[%s160 + $0x760] sm:$0xff] %v853
      %1110 = vst [vmem:[%s160 + $0x768] sm:$0xff] %v854
      %1111 = vst [vmem:[%s160 + $0x770] sm:$0xff] %v855
      %1112 = vst [vmem:[%s160 + $0x778] sm:$0xff] %v856
      %1113 = vst [vmem:[%s160 + $0x780] sm:$0xff] %v857
      %1114 = vst [vmem:[%s160 + $0x788] sm:$0xff] %v858
      %1115 = vst [vmem:[%s160 + $0x790] sm:$0xff] %v859
      %1116 = vst [vmem:[%s160 + $0x798] sm:$0xff] %v860
      %1117 = vst [vmem:[%s160 + $0x7a0] sm:$0xff] %v861
      %1118 = vst [vmem:[%s160 + $0x7a8] sm:$0xff] %v862
      %1119 = vst [vmem:[%s160 + $0x7b0] sm:$0xff] %v863
      %1120 = vst [vmem:[%s160 + $0x7b8] sm:$0xff] %v864
      %1121 = vst [vmem:[%s160 + $0x7c0] sm:$0xff] %v865
      %1122 = vst [vmem:[%s160 + $0x7c8] sm:$0xff] %v866
      %1123 = vst [vmem:[%s160 + $0x7d0] sm:$0xff] %v867
      %1124 = vst [vmem:[%s160 + $0x7d8] sm:$0xff] %v868
      %1125 = vst [vmem:[%s160 + $0x7e0] sm:$0xff] %v869
      %1126 = vst [vmem:[%s160 + $0x7e8] sm:$0xff] %v870
      %1127 = vst [vmem:[%s160 + $0x7f0] sm:$0xff] %v871
      %1128 = vst [vmem:[%s160 + $0x7f8] sm:$0xff] %v872
      %p1129 = scmp.lt.s32.totalorder %s13, 1
      %s1130 = scalar_select %p1129, %s13, 1
      %s1131 = smul.addr %s1130, 256
      %s1132 = smul.addr %s1131, 8
      %s1133 = scalar_lea.vmem %s2, %s1132
      // Predicated region
      $region29: #{forward_pallas.9} parent=27 // pred_check
        %p1134 = pneg %p83
      $region30: #{forward_pallas.9} parent=27 // pred_check_branch
        %1136 = sbr.rel (%p1134) target = $region32
      $region31: #{forward_pallas.9} parent=27 // pred_region
        _
      $region32: #{forward_pallas.9} parent=27 // pred_fallthru
        _
    $region28: #{forward_pallas.9} parent=5 // pred_fallthru
      _
    %p1137 = scmp.le.s32.totalorder 2, %s8
    // Predicated region
    $region33: #{forward_pallas.9} parent=5 // pred_check
      %p1138 = pneg %p1137
    $region34: #{forward_pallas.9} parent=5 // pred_check_branch
      %1140 = sbr.rel (%p1138) target = $region36
    $region35: #{forward_pallas.9} parent=5 // pred_region
      %s1141 = ssub.s32 %s8, 2
      // Predicated region
      $region37: #{forward_pallas.9} parent=35 // pred_check
        %p1142 = pneg %p89
      $region38: #{forward_pallas.9} parent=35 // pred_check_branch
        %1144 = sbr.rel (%p1142) target = $region40
      $region39: #{forward_pallas.9} parent=35 // pred_region
        %p1145 = scmp.lt.s32.totalorder %s14, 1
        %s1146 = scalar_select %p1145, %s14, 1
        %s1147 = smul.addr %s1146, 256
        %s1148 = smul.addr %s1147, 8
        %s1149 = scalar_lea.vmem %s2, %s1148
      $region40: #{forward_pallas.9} parent=35 // pred_fallthru
        _
    $region36: #{forward_pallas.9} parent=5 // pred_fallthru
      _
  $region6: #{forward_pallas.9} parent=0 // loop_footer
    %s12 = sadd.s32 1, %s8
  $region7: #{forward_pallas.9} parent=0 // loop_footer_branch
    %7 = sbr.rel target = $region3
  $region8: #{forward_pallas.9} parent=0 // loop_exit
    _

// kernel: forward_pallas.10
$region0: #{forward_pallas.10}
  #allocation0 [shape = 'u32[]', space=smem, size = 0x4, offset = 0x4, fixed_abs, tag = 'smem constant byte address 0x4 - core index']
  #allocation1 [shape = 'u32[144,128]{1,0:T(1,128)}', space=vmem, size = 0x12000, scoped, tag = 'internal scratch']
  %s0 = inlined_call_operand.vmem [shape: f32[2,64,256], index: 0, kind: input, shape index: {}]
  %s1 = inlined_call_operand.vmem [shape: f32[64,64], index: 1, kind: input, shape index: {}]
  %s2 = inlined_call_operand.vmem [shape: f32[16,64], index: 2, kind: input, shape index: {}]
  %s3 = inlined_call_operand.vmem [shape: f32[64,16], index: 3, kind: input, shape index: {}]
  %s4 = inlined_call_operand.vmem [shape: f32[2,64,256], index: 4, kind: output, shape index: {0}]
  %s5 = inlined_call_operand.vmem [shape: f32[2,1,256], index: 5, kind: output, shape index: {1}]
  %s6 = inlined_call_operand.vmem [shape: f32[2,1,256], index: 6, kind: output, shape index: {2}]
  %7 = xla_tuple %s4, %s5, %s6
  %s8 = sld [smem:[#allocation0]]
  $region65: #{forward_pallas.10} parent=0
    _
  %s10 = ssub.s32 1, %s8
  %s11 = scalar_select 0, %s10, %s8
  loop: start=0, step=1, limit=4
  $region2: #{forward_pallas.10} parent=0 // loop_pre_header
    _
  $region3: #{forward_pallas.10} parent=0 // loop_header
    %s13 = sphi 0, %s17
    %p14 = scmp.ge.s32.totalorder %s13, 4
    %s23 = sphi 0, %s25
    %s26 = sphi 0, %s23
    %s27 = sphi 0, %s26
    %s43 = sphi 0, %s27
    %s47 = sphi 0, %s47
    %s49 = sphi 0, %s47
    %s50 = sphi 0, %s49
    %s64 = sphi 0, %s50
    %s68 = sphi 0, %s68
    %s70 = sphi 0, %s68
    %s71 = sphi 0, %s70
    %s85 = sphi 0, %s71
    %s89 = sphi 0, %s89
    %s91 = sphi 0, %s89
    %s92 = sphi 0, %s91
    %s106 = sphi 0, %s92
    %s112 = sphi 0, %s114
    %s115 = sphi 0, %s112
    %s116 = sphi 0, %s115
    %s132 = sphi 0, %s116
    %s138 = sphi 0, %s140
    %s141 = sphi 0, %s138
    %s142 = sphi 0, %s141
    %s158 = sphi 0, %s142
    %s164 = sphi 0, %s166
    %s167 = sphi 0, %s164
    %s168 = sphi 0, %s167
    %s184 = sphi 0, %s168
  $region4: #{forward_pallas.10} parent=0 // loop_header_branch
    %16 = sbr.rel (%p14) target = $region8
  $region5: #{forward_pallas.10} parent=0 // loop_body
    %s18 = ssub.s32 %s13, 1
    %s19 = ssub.s32 %s13, 2
    %s20 = sadd.s32 %s13, 1
    %s21 = ssub.s32 %s13, %s20
    %p22 = scmp.eq.s32.totalorder %s21, 0
    %s24 = sadd.s32 %s23, 1
    %s25 = scalar_select %p22, %s23, %s24
    %p28 = pneg %p22
    %p29 = scmp.eq.s32.totalorder %s13, 1
    %p30 = por %p28, %p29
    %p31 = scmp.ne.s32.totalorder %s23, %s26
    %p32 = scmp.eq.s32.totalorder %s13, 0
    %p33 = por %p31, %p32
    %p34 = scmp.ne.s32.totalorder %s23, %s26
    %p35 = scmp.eq.s32.totalorder %s18, 1
    %p36 = por %p34, %p35
    %p37 = scmp.ne.s32.totalorder %s26, %s27
    %p38 = scmp.eq.s32.totalorder %s18, 0
    %p39 = por %p37, %p38
    %p40 = scmp.ne.s32.totalorder %s26, %s27
    %p41 = scmp.eq.s32.totalorder %s19, 1
    %p42 = por %p40, %p41
    %p44 = scmp.ne.s32.totalorder %s27, %s43
    %p45 = scmp.eq.s32.totalorder %s19, 0
    %p46 = por %p44, %p45
    %s48 = sadd.s32 %s47, 1
    %p51 = scmp.eq.s32.totalorder %s13, 1
    %p52 = scmp.ne.s32.totalorder %s47, %s49
    %p53 = scmp.eq.s32.totalorder %s13, 0
    %p54 = por %p52, %p53
    %p55 = scmp.ne.s32.totalorder %s47, %s49
    %p56 = scmp.eq.s32.totalorder %s18, 1
    %p57 = por %p55, %p56
    %p58 = scmp.ne.s32.totalorder %s49, %s50
    %p59 = scmp.eq.s32.totalorder %s18, 0
    %p60 = por %p58, %p59
    %p61 = scmp.ne.s32.totalorder %s49, %s50
    %p62 = scmp.eq.s32.totalorder %s19, 1
    %p63 = por %p61, %p62
    %p65 = scmp.ne.s32.totalorder %s50, %s64
    %p66 = scmp.eq.s32.totalorder %s19, 0
    %p67 = por %p65, %p66
    %s69 = sadd.s32 %s68, 1
    %p72 = scmp.eq.s32.totalorder %s13, 1
    %p73 = scmp.ne.s32.totalorder %s68, %s70
    %p74 = scmp.eq.s32.totalorder %s13, 0
    %p75 = por %p73, %p74
    %p76 = scmp.ne.s32.totalorder %s68, %s70
    %p77 = scmp.eq.s32.totalorder %s18, 1
    %p78 = por %p76, %p77
    %p79 = scmp.ne.s32.totalorder %s70, %s71
    %p80 = scmp.eq.s32.totalorder %s18, 0
    %p81 = por %p79, %p80
    %p82 = scmp.ne.s32.totalorder %s70, %s71
    %p83 = scmp.eq.s32.totalorder %s19, 1
    %p84 = por %p82, %p83
    %p86 = scmp.ne.s32.totalorder %s71, %s85
    %p87 = scmp.eq.s32.totalorder %s19, 0
    %p88 = por %p86, %p87
    %s90 = sadd.s32 %s89, 1
    %p93 = scmp.eq.s32.totalorder %s13, 1
    %p94 = scmp.ne.s32.totalorder %s89, %s91
    %p95 = scmp.eq.s32.totalorder %s13, 0
    %p96 = por %p94, %p95
    %p97 = scmp.ne.s32.totalorder %s89, %s91
    %p98 = scmp.eq.s32.totalorder %s18, 1
    %p99 = por %p97, %p98
    %p100 = scmp.ne.s32.totalorder %s91, %s92
    %p101 = scmp.eq.s32.totalorder %s18, 0
    %p102 = por %p100, %p101
    %p103 = scmp.ne.s32.totalorder %s91, %s92
    %p104 = scmp.eq.s32.totalorder %s19, 1
    %p105 = por %p103, %p104
    %p107 = scmp.ne.s32.totalorder %s92, %s106
    %p108 = scmp.eq.s32.totalorder %s19, 0
    %p109 = por %p107, %p108
    %s110 = ssub.s32 %s13, %s20
    %p111 = scmp.eq.s32.totalorder %s110, 0
    %s113 = sadd.s32 %s112, 1
    %s114 = scalar_select %p111, %s112, %s113
    %p117 = pneg %p111
    %p118 = scmp.eq.s32.totalorder %s13, 1
    %p119 = por %p117, %p118
    %p120 = scmp.ne.s32.totalorder %s112, %s115
    %p121 = scmp.eq.s32.totalorder %s13, 0
    %p122 = por %p120, %p121
    %p123 = scmp.ne.s32.totalorder %s112, %s115
    %p124 = scmp.eq.s32.totalorder %s18, 1
    %p125 = por %p123, %p124
    %p126 = scmp.ne.s32.totalorder %s115, %s116
    %p127 = scmp.eq.s32.totalorder %s18, 0
    %p128 = por %p126, %p127
    %p129 = scmp.ne.s32.totalorder %s115, %s116
    %p130 = scmp.eq.s32.totalorder %s19, 1
    %p131 = por %p129, %p130
    %p133 = scmp.ne.s32.totalorder %s116, %s132
    %p134 = scmp.eq.s32.totalorder %s19, 0
    %p135 = por %p133, %p134
    %s136 = ssub.s32 %s13, %s20
    %p137 = scmp.eq.s32.totalorder %s136, 0
    %s139 = sadd.s32 %s138, 1
    %s140 = scalar_select %p137, %s138, %s139
    %p143 = pneg %p137
    %p144 = scmp.eq.s32.totalorder %s13, 1
    %p145 = por %p143, %p144
    %p146 = scmp.ne.s32.totalorder %s138, %s141
    %p147 = scmp.eq.s32.totalorder %s13, 0
    %p148 = por %p146, %p147
    %p149 = scmp.ne.s32.totalorder %s138, %s141
    %p150 = scmp.eq.s32.totalorder %s18, 1
    %p151 = por %p149, %p150
    %p152 = scmp.ne.s32.totalorder %s141, %s142
    %p153 = scmp.eq.s32.totalorder %s18, 0
    %p154 = por %p152, %p153
    %p155 = scmp.ne.s32.totalorder %s141, %s142
    %p156 = scmp.eq.s32.totalorder %s19, 1
    %p157 = por %p155, %p156
    %p159 = scmp.ne.s32.totalorder %s142, %s158
    %p160 = scmp.eq.s32.totalorder %s19, 0
    %p161 = por %p159, %p160
    %s162 = ssub.s32 %s13, %s20
    %p163 = scmp.eq.s32.totalorder %s162, 0
    %s165 = sadd.s32 %s164, 1
    %s166 = scalar_select %p163, %s164, %s165
    %p169 = pneg %p163
    %p170 = scmp.eq.s32.totalorder %s13, 1
    %p171 = por %p169, %p170
    %p172 = scmp.ne.s32.totalorder %s164, %s167
    %p173 = scmp.eq.s32.totalorder %s13, 0
    %p174 = por %p172, %p173
    %p175 = scmp.ne.s32.totalorder %s164, %s167
    %p176 = scmp.eq.s32.totalorder %s18, 1
    %p177 = por %p175, %p176
    %p178 = scmp.ne.s32.totalorder %s167, %s168
    %p179 = scmp.eq.s32.totalorder %s18, 0
    %p180 = por %p178, %p179
    %p181 = scmp.ne.s32.totalorder %s167, %s168
    %p182 = scmp.eq.s32.totalorder %s19, 1
    %p183 = por %p181, %p182
    %p185 = scmp.ne.s32.totalorder %s168, %s184
    %p186 = scmp.eq.s32.totalorder %s19, 0
    %p187 = por %p185, %p186
    %p188 = scmp.le.s32.totalorder 1, %s13
    %p189 = scmp.lt.s32.totalorder %s13, 3
    %p190 = pnand %p188, %p189
    %p191 = pneg %p190
    // Predicated region
    $region9: #{forward_pallas.10} parent=5 // pred_check
      _
    $region10: #{forward_pallas.10} parent=5 // pred_check_branch
      %193 = sbr.rel (%p190) target = $region12
    $region11: #{forward_pallas.10} parent=5 // pred_region
      %s194 = ssub.s32 %s13, 1
      // Predicated region
      $region13: #{forward_pallas.10} parent=11 // pred_check
        %p195 = pneg %p60
      $region14: #{forward_pallas.10} parent=11 // pred_check_branch
        %197 = sbr.rel (%p195) target = $region16
      $region15: #{forward_pallas.10} parent=11 // pred_region
        _
      $region16: #{forward_pallas.10} parent=11 // pred_fallthru
        _
      // Predicated region
      $region17: #{forward_pallas.10} parent=11 // pred_check
        %p198 = pneg %p81
      $region18: #{forward_pallas.10} parent=11 // pred_check_branch
        %200 = sbr.rel (%p198) target = $region20
      $region19: #{forward_pallas.10} parent=11 // pred_region
        _
      $region20: #{forward_pallas.10} parent=11 // pred_fallthru
        _
      // Predicated region
      $region21: #{forward_pallas.10} parent=11 // pred_check
        %p201 = pneg %p102
      $region22: #{forward_pallas.10} parent=11 // pred_check_branch
        %203 = sbr.rel (%p201) target = $region24
      $region23: #{forward_pallas.10} parent=11 // pred_region
        _
      $region24: #{forward_pallas.10} parent=11 // pred_fallthru
        _
    $region12: #{forward_pallas.10} parent=5 // pred_fallthru
      _
    %p204 = scmp.lt.s32.totalorder %s13, 2
    // Predicated region
    $region25: #{forward_pallas.10} parent=5 // pred_check
      %p205 = pneg %p204
    $region26: #{forward_pallas.10} parent=5 // pred_check_branch
      %207 = sbr.rel (%p205) target = $region28
    $region27: #{forward_pallas.10} parent=5 // pred_region
      // Predicated region
      $region29: #{forward_pallas.10} parent=27 // pred_check
        %p208 = pneg %p33
      $region30: #{forward_pallas.10} parent=27 // pred_check_branch
        %210 = sbr.rel (%p208) target = $region32
      $region31: #{forward_pallas.10} parent=27 // pred_region
        %p211 = scmp.lt.s32.totalorder %s13, 1
        %s212 = scalar_select %p211, %s13, 1
        %s213 = smul.addr %s212, 16
        %s214 = smul.addr %s213, 8
        %s215 = scalar_lea.vmem %s0, %s214
      $region32: #{forward_pallas.10} parent=27 // pred_fallthru
        _
    $region28: #{forward_pallas.10} parent=5 // pred_fallthru
      _
    %p216 = scmp.le.s32.totalorder 1, %s13
    %p217 = scmp.lt.s32.totalorder %s13, 3
    %p218 = pnand %p216, %p217
    %p219 = pneg %p218
    // Predicated region
    $region33: #{forward_pallas.10} parent=5 // pred_check
      _
    $region34: #{forward_pallas.10} parent=5 // pred_check_branch
      %221 = sbr.rel (%p218) target = $region36
    $region35: #{forward_pallas.10} parent=5 // pred_region
      %s222 = ssub.s32 %s13, 1
      %p223 = scmp.lt.s32.totalorder %s18, 1
      %s224 = scalar_select %p223, %s18, 1
      %s225 = smul.addr %s224, 16
      %s226 = smul.addr %s225, 8
      %s227 = scalar_lea.vmem %s0, %s226
      %p228 = pneg %p39
      %p229 = pneg %p36
      %p230 = pneg %p60
      %p231 = pneg %p57
      %p232 = pneg %p81
      %p233 = pneg %p78
      %p234 = pneg %p102
      %p235 = pneg %p99
      %p236 = pneg %p128
      %p237 = pneg %p125
      %p238 = scmp.lt.s32.totalorder %s18, 1
      %s239 = scalar_select %p238, %s18, 1
      %s240 = smul.addr %s239, 16
      %s241 = smul.addr %s240, 8
      %s242 = scalar_lea.vmem %s4, %s241
      %p243 = pneg %p154
      %p244 = pneg %p151
      %p245 = scmp.lt.s32.totalorder %s18, 1
      %s246 = scalar_select %p245, %s18, 1
      %s247 = smul.addr %s246, 2
      %s248 = scalar_lea.vmem %s5, %s247
      %p249 = pneg %p180
      %p250 = pneg %p177
      %p251 = scmp.lt.s32.totalorder %s18, 1
      %s252 = scalar_select %p251, %s18, 1
      %s253 = smul.addr %s252, 2
      %s254 = scalar_lea.vmem %s6, %s253
      %p255 = scmp.lt.s32.totalorder %s18, 1
      %s256 = scalar_select %p255, %s18, 1
      %s257 = smul.addr %s256, 16
      %s258 = smul.addr %s257, 8
      %s259 = scalar_lea.vmem %s0, %s258
      %p260 = scmp.lt.s32.totalorder %s18, 1
      %s261 = scalar_select %p260, %s18, 1
      %s262 = smul.addr %s261, 16
      %s263 = smul.addr %s262, 8
      %s264 = scalar_lea.vmem %s4, %s263
      %p265 = scmp.lt.s32.totalorder %s18, 1
      %s266 = scalar_select %p265, %s18, 1
      %s267 = smul.addr %s266, 2
      %s268 = scalar_lea.vmem %s5, %s267
      %p269 = scmp.lt.s32.totalorder %s18, 1
      %s270 = scalar_select %p269, %s18, 1
      %s271 = smul.addr %s270, 2
      %s272 = scalar_lea.vmem %s6, %s271
      %v273 = vld [vmem:[%s259] sm:$0xff]
      %v274 = vld [vmem:[%s259 + $0x8] sm:$0xff]
      %v275 = vld [vmem:[%s259 + $0x10] sm:$0xff]
      %v276 = vld [vmem:[%s259 + $0x18] sm:$0xff]
      %v277 = vld [vmem:[%s259 + $0x20] sm:$0xff]
      %v278 = vld [vmem:[%s259 + $0x28] sm:$0xff]
      %v279 = vld [vmem:[%s259 + $0x30] sm:$0xff]
      %v280 = vld [vmem:[%s259 + $0x38] sm:$0xff]
      %v281 = vld [vmem:[%s259 + $0x40] sm:$0xff]
      %v282 = vld [vmem:[%s259 + $0x48] sm:$0xff]
      %v283 = vld [vmem:[%s259 + $0x50] sm:$0xff]
      %v284 = vld [vmem:[%s259 + $0x58] sm:$0xff]
      %v285 = vld [vmem:[%s259 + $0x60] sm:$0xff]
      %v286 = vld [vmem:[%s259 + $0x68] sm:$0xff]
      %v287 = vld [vmem:[%s259 + $0x70] sm:$0xff]
      %v288 = vld [vmem:[%s259 + $0x78] sm:$0xff]
      %v289 = vld [vmem:[%s1] sm:$0xff]
      %v290 = vld [vmem:[%s1 + $0x8] sm:$0xff]
      %v291 = vld [vmem:[%s1 + $0x10] sm:$0xff]
      %v292 = vld [vmem:[%s1 + $0x18] sm:$0xff]
      %v293 = vld [vmem:[%s1 + $0x20] sm:$0xff]
      %v294 = vld [vmem:[%s1 + $0x28] sm:$0xff]
      %v295 = vld [vmem:[%s1 + $0x30] sm:$0xff]
      %v296 = vld [vmem:[%s1 + $0x38] sm:$0xff]
      %vm297 = vcmask 523264
      %v299 = vsel %vm297, %v289, 0
      %v302 = vsel %vm297, %v290, 0
      %v305 = vsel %vm297, %v291, 0
      %v308 = vsel %vm297, %v292, 0
      %v311 = vsel %vm297, %v293, 0
      %v314 = vsel %vm297, %v294, 0
      %v317 = vsel %vm297, %v295, 0
      %v320 = vsel %vm297, %v296, 0
      %322 = vmatprep.subr.mxu0 0.0
      %323 = vmatpush1.msra.mxu0 0.0
      %324 = vmatprep.subr.mxu0 0.0
      %325 = vmatpush1.msra.mxu0 0.0
      %326 = vmatprep.subr.mxu0 0.0
      %327 = vmatpush1.msra.mxu0 0.0
      %328 = vmatprep.subr.mxu0 0.0
      %329 = vmatpush1.msra.mxu0 0.0
      %330 = vmatprep.subr.mxu0 0.0
      %331 = vmatpush1.msra.mxu0 0.0
      %332 = vmatprep.subr.mxu0 0.0
      %333 = vmatpush1.msra.mxu0 0.0
      %334 = vmatprep.subr.mxu0 0.0
      %335 = vmatpush1.msra.mxu0 0.0
      %336 = vmatprep.subr.mxu0 0.0
      %337 = vmatpush1.msra.mxu0 0.0
      %338 = vmatprep.subr.mxu0 %v288
      %339 = vmatpush1.msra.mxu0 %v287
      %340 = vmatprep.subr.mxu0 %v286
      %341 = vmatpush1.msra.mxu0 %v285
      %342 = vmatprep.subr.mxu0 %v284
      %343 = vmatpush1.msra.mxu0 %v283
      %344 = vmatprep.subr.mxu0 %v282
      %345 = vmatpush1.msra.mxu0 %v281
      %346 = vmatprep.subr.mxu0 %v280
      %347 = vmatpush1.msra.mxu0 %v279
      %348 = vmatprep.subr.mxu0 %v278
      %349 = vmatpush1.msra.mxu0 %v277
      %350 = vmatprep.subr.mxu0 %v276
      %351 = vmatpush1.msra.mxu0 %v275
      %352 = vmatprep.subr.mxu0 %v274
      %353 = vmatpush1.msra.mxu0 %v273
      %354 = vmatprep.subr.mxu0 0.0
      %355 = vmatpush2.msra.mxu0 0.0
      %356 = vmatprep.subr.mxu0 0.0
      %357 = vmatpush2.msra.mxu0 0.0
      %358 = vmatprep.subr.mxu0 0.0
      %359 = vmatpush2.msra.mxu0 0.0
      %360 = vmatprep.subr.mxu0 0.0
      %361 = vmatpush2.msra.mxu0 0.0
      %362 = vmatprep.subr.mxu0 0.0
      %363 = vmatpush2.msra.mxu0 0.0
      %364 = vmatprep.subr.mxu0 0.0
      %365 = vmatpush2.msra.mxu0 0.0
      %366 = vmatprep.subr.mxu0 0.0
      %367 = vmatpush2.msra.mxu0 0.0
      %368 = vmatprep.subr.mxu0 0.0
      %369 = vmatpush2.msra.mxu0 0.0
      %370 = vmatprep.subr.mxu0 0.0
      %371 = vmatpush2.msra.mxu0 0.0
      %372 = vmatprep.subr.mxu0 0.0
      %373 = vmatpush2.msra.mxu0 0.0
      %374 = vmatprep.subr.mxu0 0.0
      %375 = vmatpush2.msra.mxu0 0.0
      %376 = vmatprep.subr.mxu0 0.0
      %377 = vmatpush2.msra.mxu0 0.0
      %378 = vmatprep.subr.mxu0 0.0
      %379 = vmatpush2.msra.mxu0 0.0
      %380 = vmatprep.subr.mxu0 0.0
      %381 = vmatpush2.msra.mxu0 0.0
      %382 = vmatprep.subr.mxu0 0.0
      %383 = vmatpush2.msra.mxu0 0.0
      %384 = vmatprep.subr.mxu0 0.0
      %385 = vmatpush2.msra.mxu0 0.0
      %386 = vmatprep.mubr.f32.mxu0 0.0
      %387 = vmatmul.mubr.f32.gmra.mxu0 %v299
      %v388 = vpop.f32.mrf.mxu0
      %v389 = vadd.f32 0.0, %v388
      %v390 = vpop.f32.mrf.mxu0
      %v391 = vadd.f32 0.0, %v390
      %392 = vmatprep.mubr.f32.mxu0 0.0
      %393 = vmatmul.mubr.f32.gmra.mxu0 %v302
      %v394 = vpop.f32.mrf.mxu0
      %v395 = vadd.f32 0.0, %v394
      %v396 = vpop.f32.mrf.mxu0
      %v397 = vadd.f32 0.0, %v396
      %398 = vmatprep.mubr.f32.mxu0 0.0
      %399 = vmatmul.mubr.f32.gmra.mxu0 %v305
      %v400 = vpop.f32.mrf.mxu0
      %v401 = vadd.f32 0.0, %v400
      %v402 = vpop.f32.mrf.mxu0
      %v403 = vadd.f32 0.0, %v402
      %404 = vmatprep.mubr.f32.mxu0 0.0
      %405 = vmatmul.mubr.f32.gmra.mxu0 %v308
      %v406 = vpop.f32.mrf.mxu0
      %v407 = vadd.f32 0.0, %v406
      %v408 = vpop.f32.mrf.mxu0
      %v409 = vadd.f32 0.0, %v408
      %410 = vmatprep.mubr.f32.mxu0 0.0
      %411 = vmatmul.mubr.f32.gmra.mxu0 %v311
      %v412 = vpop.f32.mrf.mxu0
      %v413 = vadd.f32 0.0, %v412
      %v414 = vpop.f32.mrf.mxu0
      %v415 = vadd.f32 0.0, %v414
      %416 = vmatprep.mubr.f32.mxu0 0.0
      %417 = vmatmul.mubr.f32.gmra.mxu0 %v314
      %v418 = vpop.f32.mrf.mxu0
      %v419 = vadd.f32 0.0, %v418
      %v420 = vpop.f32.mrf.mxu0
      %v421 = vadd.f32 0.0, %v420
      %422 = vmatprep.mubr.f32.mxu0 0.0
      %423 = vmatmul.mubr.f32.gmra.mxu0 %v317
      %v424 = vpop.f32.mrf.mxu0
      %v425 = vadd.f32 0.0, %v424
      %v426 = vpop.f32.mrf.mxu0
      %v427 = vadd.f32 0.0, %v426
      %428 = vmatprep.mubr.f32.mxu0 0.0
      %429 = vmatmul.mubr.f32.gmra.mxu0 %v320
      %v430 = vpop.f32.mrf.mxu0
      %v431 = vadd.f32 0.0, %v430
      %v432 = vpop.f32.mrf.mxu0
      %v433 = vadd.f32 0.0, %v432
      %434 = vdwg.mxu0
      %v435 = vadd.f32 %v389, %v391
      %436 = vadd.xlane.f32.xlu0 %v435
      %v437 = vpop.xlane.xlu0 %436
      %v438 = vadd.f32 %v395, %v397
      %439 = vadd.xlane.f32.xlu0 %v438
      %v440 = vpop.xlane.xlu0 %439
      %v441 = vadd.f32 %v401, %v403
      %442 = vadd.xlane.f32.xlu0 %v441
      %v443 = vpop.xlane.xlu0 %442
      %v444 = vadd.f32 %v407, %v409
      %445 = vadd.xlane.f32.xlu0 %v444
      %v446 = vpop.xlane.xlu0 %445
      %v447 = vadd.f32 %v413, %v415
      %448 = vadd.xlane.f32.xlu0 %v447
      %v449 = vpop.xlane.xlu0 %448
      %v450 = vadd.f32 %v419, %v421
      %451 = vadd.xlane.f32.xlu0 %v450
      %v452 = vpop.xlane.xlu0 %451
      %v453 = vadd.f32 %v425, %v427
      %454 = vadd.xlane.f32.xlu0 %v453
      %v455 = vpop.xlane.xlu0 %454
      %v456 = vadd.f32 %v431, %v433
      %457 = vadd.xlane.f32.xlu0 %v456
      %v458 = vpop.xlane.xlu0 %457
      %v459 = vmul.f32 %v437, 0.00390625
      %v460 = vmul.f32 %v440, 0.00390625
      %v461 = vmul.f32 %v443, 0.00390625
      %v462 = vmul.f32 %v446, 0.00390625
      %v463 = vmul.f32 %v449, 0.00390625
      %v464 = vmul.f32 %v452, 0.00390625
      %v465 = vmul.f32 %v455, 0.00390625
      %v466 = vmul.f32 %v458, 0.00390625
      %v467 = vld [vmem:[%s2] sm:$0xff]
      %v468 = vld [vmem:[%s2 + $0x8] sm:$0xff]
      %v470 = vsel %vm297, %v467, 0
      %v473 = vsel %vm297, %v468, 0
      %475 = vmatprep.subr.mxu0 0.0
      %476 = vmatpush1.msra.mxu0 0.0
      %477 = vmatprep.subr.mxu0 0.0
      %478 = vmatpush1.msra.mxu0 0.0
      %479 = vmatprep.subr.mxu0 0.0
      %480 = vmatpush1.msra.mxu0 0.0
      %481 = vmatprep.subr.mxu0 0.0
      %482 = vmatpush1.msra.mxu0 0.0
      %483 = vmatprep.subr.mxu0 0.0
      %484 = vmatpush1.msra.mxu0 0.0
      %485 = vmatprep.subr.mxu0 0.0
      %486 = vmatpush1.msra.mxu0 0.0
      %487 = vmatprep.subr.mxu0 0.0
      %488 = vmatpush1.msra.mxu0 0.0
      %489 = vmatprep.subr.mxu0 0.0
      %490 = vmatpush1.msra.mxu0 0.0
      %491 = vmatprep.subr.mxu0 0.0
      %492 = vmatpush1.msra.mxu0 %v466
      %493 = vmatprep.subr.mxu0 0.0
      %494 = vmatpush1.msra.mxu0 %v465
      %495 = vmatprep.subr.mxu0 0.0
      %496 = vmatpush1.msra.mxu0 %v464
      %497 = vmatprep.subr.mxu0 0.0
      %498 = vmatpush1.msra.mxu0 %v463
      %499 = vmatprep.subr.mxu0 0.0
      %500 = vmatpush1.msra.mxu0 %v462
      %501 = vmatprep.subr.mxu0 0.0
      %502 = vmatpush1.msra.mxu0 %v461
      %503 = vmatprep.subr.mxu0 0.0
      %504 = vmatpush1.msra.mxu0 %v460
      %505 = vmatprep.subr.mxu0 0.0
      %506 = vmatpush1.msra.mxu0 %v459
      %507 = vmatprep.subr.mxu0 0.0
      %508 = vmatpush2.msra.mxu0 0.0
      %509 = vmatprep.subr.mxu0 0.0
      %510 = vmatpush2.msra.mxu0 0.0
      %511 = vmatprep.subr.mxu0 0.0
      %512 = vmatpush2.msra.mxu0 0.0
      %513 = vmatprep.subr.mxu0 0.0
      %514 = vmatpush2.msra.mxu0 0.0
      %515 = vmatprep.subr.mxu0 0.0
      %516 = vmatpush2.msra.mxu0 0.0
      %517 = vmatprep.subr.mxu0 0.0
      %518 = vmatpush2.msra.mxu0 0.0
      %519 = vmatprep.subr.mxu0 0.0
      %520 = vmatpush2.msra.mxu0 0.0
      %521 = vmatprep.subr.mxu0 0.0
      %522 = vmatpush2.msra.mxu0 0.0
      %523 = vmatprep.subr.mxu0 0.0
      %524 = vmatpush2.msra.mxu0 0.0
      %525 = vmatprep.subr.mxu0 0.0
      %526 = vmatpush2.msra.mxu0 0.0
      %527 = vmatprep.subr.mxu0 0.0
      %528 = vmatpush2.msra.mxu0 0.0
      %529 = vmatprep.subr.mxu0 0.0
      %530 = vmatpush2.msra.mxu0 0.0
      %531 = vmatprep.subr.mxu0 0.0
      %532 = vmatpush2.msra.mxu0 0.0
      %533 = vmatprep.subr.mxu0 0.0
      %534 = vmatpush2.msra.mxu0 0.0
      %535 = vmatprep.subr.mxu0 0.0
      %536 = vmatpush2.msra.mxu0 0.0
      %537 = vmatprep.subr.mxu0 0.0
      %538 = vmatpush2.msra.mxu0 0.0
      %539 = vmatprep.mubr.f32.mxu0 0.0
      %540 = vmatmul.mubr.f32.gmra.mxu0 %v470
      %v541 = vpop.f32.mrf.mxu0
      %v542 = vadd.f32 0.0, %v541
      %v543 = vpop.f32.mrf.mxu0
      %544 = vmatprep.mubr.f32.mxu0 0.0
      %545 = vmatmul.mubr.f32.gmra.mxu0 %v473
      %v546 = vpop.f32.mrf.mxu0
      %v547 = vadd.f32 0.0, %v546
      %v548 = vpop.f32.mrf.mxu0
      %549 = vdwg.mxu0
      %v550 = vmax.f32 %v542, 0.0
      %v551 = vmax.f32 %v547, 0.0
      %v552 = vld [vmem:[%s3] sm:$0xff]
      %v553 = vld [vmem:[%s3 + $0x8] sm:$0xff]
      %v554 = vld [vmem:[%s3 + $0x10] sm:$0xff]
      %v555 = vld [vmem:[%s3 + $0x18] sm:$0xff]
      %v556 = vld [vmem:[%s3 + $0x20] sm:$0xff]
      %v557 = vld [vmem:[%s3 + $0x28] sm:$0xff]
      %v558 = vld [vmem:[%s3 + $0x30] sm:$0xff]
      %v559 = vld [vmem:[%s3 + $0x38] sm:$0xff]
      %vm560 = vcmask 130048
      %v562 = vsel %vm560, %v552, 0
      %v565 = vsel %vm560, %v553, 0
      %v568 = vsel %vm560, %v554, 0
      %v571 = vsel %vm560, %v555, 0
      %v574 = vsel %vm560, %v556, 0
      %v577 = vsel %vm560, %v557, 0
      %v580 = vsel %vm560, %v558, 0
      %v583 = vsel %vm560, %v559, 0
      %585 = vmatprep.subr.mxu0 0.0
      %586 = vmatpush1.msra.mxu0 0.0
      %587 = vmatprep.subr.mxu0 0.0
      %588 = vmatpush1.msra.mxu0 0.0
      %589 = vmatprep.subr.mxu0 0.0
      %590 = vmatpush1.msra.mxu0 0.0
      %591 = vmatprep.subr.mxu0 0.0
      %592 = vmatpush1.msra.mxu0 0.0
      %593 = vmatprep.subr.mxu0 0.0
      %594 = vmatpush1.msra.mxu0 0.0
      %595 = vmatprep.subr.mxu0 0.0
      %596 = vmatpush1.msra.mxu0 0.0
      %597 = vmatprep.subr.mxu0 0.0
      %598 = vmatpush1.msra.mxu0 0.0
      %599 = vmatprep.subr.mxu0 0.0
      %600 = vmatpush1.msra.mxu0 0.0
      %601 = vmatprep.subr.mxu0 0.0
      %602 = vmatpush1.msra.mxu0 0.0
      %603 = vmatprep.subr.mxu0 0.0
      %604 = vmatpush1.msra.mxu0 0.0
      %605 = vmatprep.subr.mxu0 0.0
      %606 = vmatpush1.msra.mxu0 0.0
      %607 = vmatprep.subr.mxu0 0.0
      %608 = vmatpush1.msra.mxu0 0.0
      %609 = vmatprep.subr.mxu0 0.0
      %610 = vmatpush1.msra.mxu0 0.0
      %611 = vmatprep.subr.mxu0 0.0
      %612 = vmatpush1.msra.mxu0 0.0
      %613 = vmatprep.subr.mxu0 0.0
      %614 = vmatpush1.msra.mxu0 %v551
      %615 = vmatprep.subr.mxu0 0.0
      %616 = vmatpush1.msra.mxu0 %v550
      %617 = vmatprep.subr.mxu0 0.0
      %618 = vmatpush2.msra.mxu0 0.0
      %619 = vmatprep.subr.mxu0 0.0
      %620 = vmatpush2.msra.mxu0 0.0
      %621 = vmatprep.subr.mxu0 0.0
      %622 = vmatpush2.msra.mxu0 0.0
      %623 = vmatprep.subr.mxu0 0.0
      %624 = vmatpush2.msra.mxu0 0.0
      %625 = vmatprep.subr.mxu0 0.0
      %626 = vmatpush2.msra.mxu0 0.0
      %627 = vmatprep.subr.mxu0 0.0
      %628 = vmatpush2.msra.mxu0 0.0
      %629 = vmatprep.subr.mxu0 0.0
      %630 = vmatpush2.msra.mxu0 0.0
      %631 = vmatprep.subr.mxu0 0.0
      %632 = vmatpush2.msra.mxu0 0.0
      %633 = vmatprep.subr.mxu0 0.0
      %634 = vmatpush2.msra.mxu0 0.0
      %635 = vmatprep.subr.mxu0 0.0
      %636 = vmatpush2.msra.mxu0 0.0
      %637 = vmatprep.subr.mxu0 0.0
      %638 = vmatpush2.msra.mxu0 0.0
      %639 = vmatprep.subr.mxu0 0.0
      %640 = vmatpush2.msra.mxu0 0.0
      %641 = vmatprep.subr.mxu0 0.0
      %642 = vmatpush2.msra.mxu0 0.0
      %643 = vmatprep.subr.mxu0 0.0
      %644 = vmatpush2.msra.mxu0 0.0
      %645 = vmatprep.subr.mxu0 0.0
      %646 = vmatpush2.msra.mxu0 0.0
      %647 = vmatprep.subr.mxu0 0.0
      %648 = vmatpush2.msra.mxu0 0.0
      %649 = vmatprep.mubr.f32.mxu0 0.0
      %650 = vmatmul.mubr.f32.gmra.mxu0 %v562
      %v651 = vpop.f32.mrf.mxu0
      %v652 = vadd.f32 0.0, %v651
      %v653 = vpop.f32.mrf.mxu0
      %654 = vmatprep.mubr.f32.mxu0 0.0
      %655 = vmatmul.mubr.f32.gmra.mxu0 %v565
      %v656 = vpop.f32.mrf.mxu0
      %v657 = vadd.f32 0.0, %v656
      %v658 = vpop.f32.mrf.mxu0
      %659 = vmatprep.mubr.f32.mxu0 0.0
      %660 = vmatmul.mubr.f32.gmra.mxu0 %v568
      %v661 = vpop.f32.mrf.mxu0
      %v662 = vadd.f32 0.0, %v661
      %v663 = vpop.f32.mrf.mxu0
      %664 = vmatprep.mubr.f32.mxu0 0.0
      %665 = vmatmul.mubr.f32.gmra.mxu0 %v571
      %v666 = vpop.f32.mrf.mxu0
      %v667 = vadd.f32 0.0, %v666
      %v668 = vpop.f32.mrf.mxu0
      %669 = vmatprep.mubr.f32.mxu0 0.0
      %670 = vmatmul.mubr.f32.gmra.mxu0 %v574
      %v671 = vpop.f32.mrf.mxu0
      %v672 = vadd.f32 0.0, %v671
      %v673 = vpop.f32.mrf.mxu0
      %674 = vmatprep.mubr.f32.mxu0 0.0
      %675 = vmatmul.mubr.f32.gmra.mxu0 %v577
      %v676 = vpop.f32.mrf.mxu0
      %v677 = vadd.f32 0.0, %v676
      %v678 = vpop.f32.mrf.mxu0
      %679 = vmatprep.mubr.f32.mxu0 0.0
      %680 = vmatmul.mubr.f32.gmra.mxu0 %v580
      %v681 = vpop.f32.mrf.mxu0
      %v682 = vadd.f32 0.0, %v681
      %v683 = vpop.f32.mrf.mxu0
      %684 = vmatprep.mubr.f32.mxu0 0.0
      %685 = vmatmul.mubr.f32.gmra.mxu0 %v583
      %v686 = vpop.f32.mrf.mxu0
      %v687 = vadd.f32 0.0, %v686
      %v688 = vpop.f32.mrf.mxu0
      %689 = vdwg.mxu0
      %v690 = vsub.f32 0.0, %v652
      %v691 = vsub.f32 0.0, %v657
      %v692 = vsub.f32 0.0, %v662
      %v693 = vsub.f32 0.0, %v667
      %v694 = vsub.f32 0.0, %v672
      %v695 = vsub.f32 0.0, %v677
      %v696 = vsub.f32 0.0, %v682
      %v697 = vsub.f32 0.0, %v687
      %v698 = vmul.f32 %v690, 1.442695
      %v699 = vpow.pop %v698
      %v700 = vmul.f32 %v691, 1.442695
      %v701 = vpow.pop %v700
      %v702 = vmul.f32 %v692, 1.442695
      %v703 = vpow.pop %v702
      %v704 = vmul.f32 %v693, 1.442695
      %v705 = vpow.pop %v704
      %v706 = vmul.f32 %v694, 1.442695
      %v707 = vpow.pop %v706
      %v708 = vmul.f32 %v695, 1.442695
      %v709 = vpow.pop %v708
      %v710 = vmul.f32 %v696, 1.442695
      %v711 = vpow.pop %v710
      %v712 = vmul.f32 %v697, 1.442695
      %v713 = vpow.pop %v712
      %v714 = vadd.f32 %v699, 1.0
      %v715 = vadd.f32 %v701, 1.0
      %v716 = vadd.f32 %v703, 1.0
      %v717 = vadd.f32 %v705, 1.0
      %v718 = vadd.f32 %v707, 1.0
      %v719 = vadd.f32 %v709, 1.0
      %v720 = vadd.f32 %v711, 1.0
      %v721 = vadd.f32 %v713, 1.0
      %v722 = vrcp.pop %v714
      %v723 = vrcp.pop %v715
      %v724 = vrcp.pop %v716
      %v725 = vrcp.pop %v717
      %v726 = vrcp.pop %v718
      %v727 = vrcp.pop %v719
      %v728 = vrcp.pop %v720
      %v729 = vrcp.pop %v721
      %v730 = vmul.f32 %v714, %v722
      %v731 = vmul.f32 %v715, %v723
      %v732 = vmul.f32 %v716, %v724
      %v733 = vmul.f32 %v717, %v725
      %v734 = vmul.f32 %v718, %v726
      %v735 = vmul.f32 %v719, %v727
      %v736 = vmul.f32 %v720, %v728
      %v737 = vmul.f32 %v721, %v729
      %v738 = vsub.f32 2.0, %v730
      %v739 = vsub.f32 2.0, %v731
      %v740 = vsub.f32 2.0, %v732
      %v741 = vsub.f32 2.0, %v733
      %v742 = vsub.f32 2.0, %v734
      %v743 = vsub.f32 2.0, %v735
      %v744 = vsub.f32 2.0, %v736
      %v745 = vsub.f32 2.0, %v737
      %v746 = vmul.f32 %v722, %v738
      %v747 = vmul.f32 %v723, %v739
      %v748 = vmul.f32 %v724, %v740
      %v749 = vmul.f32 %v725, %v741
      %v750 = vmul.f32 %v726, %v742
      %v751 = vmul.f32 %v727, %v743
      %v752 = vmul.f32 %v728, %v744
      %v753 = vmul.f32 %v729, %v745
      %755 = vset.pattern.permute.xlu0 0
      %756 = vperm.xlu0 %755, %v746
      %v757 = vpop.permute.xlu0 %756
      %760 = vset.pattern.permute.xlu0 0
      %761 = vperm.xlu0 %760, %v747
      %v762 = vpop.permute.xlu0 %761
      %765 = vset.pattern.permute.xlu0 0
      %766 = vperm.xlu0 %765, %v748
      %v767 = vpop.permute.xlu0 %766
      %770 = vset.pattern.permute.xlu0 0
      %771 = vperm.xlu0 %770, %v749
      %v772 = vpop.permute.xlu0 %771
      %775 = vset.pattern.permute.xlu0 0
      %776 = vperm.xlu0 %775, %v750
      %v777 = vpop.permute.xlu0 %776
      %780 = vset.pattern.permute.xlu0 0
      %781 = vperm.xlu0 %780, %v751
      %v782 = vpop.permute.xlu0 %781
      %785 = vset.pattern.permute.xlu0 0
      %786 = vperm.xlu0 %785, %v752
      %v787 = vpop.permute.xlu0 %786
      %790 = vset.pattern.permute.xlu0 0
      %791 = vperm.xlu0 %790, %v753
      %v792 = vpop.permute.xlu0 %791
      %v794 = vmul.f32 %v389, %v757
      %v795 = vmul.f32 %v391, %v757
      %v796 = vmul.f32 %v395, %v762
      %v797 = vmul.f32 %v397, %v762
      %v798 = vmul.f32 %v401, %v767
      %v799 = vmul.f32 %v403, %v767
      %v800 = vmul.f32 %v407, %v772
      %v801 = vmul.f32 %v409, %v772
      %v802 = vmul.f32 %v413, %v777
      %v803 = vmul.f32 %v415, %v777
      %v804 = vmul.f32 %v419, %v782
      %v805 = vmul.f32 %v421, %v782
      %v806 = vmul.f32 %v425, %v787
      %v807 = vmul.f32 %v427, %v787
      %v808 = vmul.f32 %v431, %v792
      %v809 = vmul.f32 %v433, %v792
      %v810 = vadd.f32 %v794, %v796
      %v811 = vadd.f32 %v810, %v798
      %v812 = vadd.f32 %v811, %v800
      %v813 = vadd.f32 %v812, %v802
      %v814 = vadd.f32 %v813, %v804
      %v815 = vadd.f32 %v814, %v806
      %v816 = vadd.f32 %v815, %v808
      %v817 = vrot.slane %v816, 4
      %v818 = vadd.f32 %v816, %v817
      %v819 = vrot.slane %v818, 2
      %v820 = vadd.f32 %v818, %v819
      %v821 = vrot.slane %v820, 1
      %v822 = vadd.f32 %v820, %v821
      %v823 = vadd.f32 %v795, %v797
      %v824 = vadd.f32 %v823, %v799
      %v825 = vadd.f32 %v824, %v801
      %v826 = vadd.f32 %v825, %v803
      %v827 = vadd.f32 %v826, %v805
      %v828 = vadd.f32 %v827, %v807
      %v829 = vadd.f32 %v828, %v809
      %v830 = vrot.slane %v829, 4
      %v831 = vadd.f32 %v829, %v830
      %v832 = vrot.slane %v831, 2
      %v833 = vadd.f32 %v831, %v832
      %v834 = vrot.slane %v833, 1
      %v835 = vadd.f32 %v833, %v834
      %v836 = vrcp.pop 64.0
      %v837 = vmul.f32 %v822, %v836
      %v838 = vmul.f32 %v835, %v836
      %v839 = vmax.f32 %v794, %v798
      %v840 = vmax.f32 %v796, %v800
      %v841 = vmax.f32 %v839, %v802
      %v842 = vmax.f32 %v840, %v804
      %v843 = vmax.f32 %v841, %v806
      %v844 = vmax.f32 %v842, %v808
      %v845 = vmax.f32 %v843, %v844
      %v846 = vrot.slane %v845, 4
      %v847 = vmax.f32 %v845, %v846
      %v848 = vrot.slane %v847, 2
      %v849 = vmax.f32 %v847, %v848
      %v850 = vrot.slane %v849, 1
      %v851 = vmax.f32 %v849, %v850
      %v852 = vmax.f32 %v795, %v799
      %v853 = vmax.f32 %v797, %v801
      %v854 = vmax.f32 %v852, %v803
      %v855 = vmax.f32 %v853, %v805
      %v856 = vmax.f32 %v854, %v807
      %v857 = vmax.f32 %v855, %v809
      %v858 = vmax.f32 %v856, %v857
      %v859 = vrot.slane %v858, 4
      %v860 = vmax.f32 %v858, %v859
      %v861 = vrot.slane %v860, 2
      %v862 = vmax.f32 %v860, %v861
      %v863 = vrot.slane %v862, 1
      %v864 = vmax.f32 %v862, %v863
      %865 = vst [vmem:[%s264] sm:$0xff] %v794
      %866 = vst [vmem:[%s264 + $0x8] sm:$0xff] %v795
      %867 = vst [vmem:[%s264 + $0x10] sm:$0xff] %v796
      %868 = vst [vmem:[%s264 + $0x18] sm:$0xff] %v797
      %869 = vst [vmem:[%s264 + $0x20] sm:$0xff] %v798
      %870 = vst [vmem:[%s264 + $0x28] sm:$0xff] %v799
      %871 = vst [vmem:[%s264 + $0x30] sm:$0xff] %v800
      %872 = vst [vmem:[%s264 + $0x38] sm:$0xff] %v801
      %873 = vst [vmem:[%s264 + $0x40] sm:$0xff] %v802
      %874 = vst [vmem:[%s264 + $0x48] sm:$0xff] %v803
      %875 = vst [vmem:[%s264 + $0x50] sm:$0xff] %v804
      %876 = vst [vmem:[%s264 + $0x58] sm:$0xff] %v805
      %877 = vst [vmem:[%s264 + $0x60] sm:$0xff] %v806
      %878 = vst [vmem:[%s264 + $0x68] sm:$0xff] %v807
      %879 = vst [vmem:[%s264 + $0x70] sm:$0xff] %v808
      %880 = vst [vmem:[%s264 + $0x78] sm:$0xff] %v809
      %v883 = vcombine.low %v837, %v838
      %v885 = vunpack.c.l.s4 1966171168
      %v886 = vunpack.c.0.s8 %v885
      %v887 = vlaneseq
      %v888 = vshrl.u32 %v887, 7
      %v889 = vsub.s32 %v886, %v888
      %v890 = vrot.slane %v883, %v889
      %v892 = vunpack.c.l.s4 1966171168
      %v893 = vunpack.c.0.s8 %v892
      %v894 = vlaneseq
      %v895 = vshrl.u32 %v894, 7
      %v896 = vsub.s32 %v893, %v895
      %v897 = vrot.slane %v890, %v896
      %v899 = vlaneseq
      %vm900 = vcmp.ge.s32.totalorder %v899, 0
      %vm901 = vcmp.lt.s32.totalorder %v899, 256
      %vm902 = vmand %vm900, %vm901
      %903 = vst.msk [vmem:[%s268] sm:$0x3] %vm902, %v897
      %v906 = vcombine.low %v851, %v864
      %v908 = vunpack.c.l.s4 1966171168
      %v909 = vunpack.c.0.s8 %v908
      %v910 = vlaneseq
      %v911 = vshrl.u32 %v910, 7
      %v912 = vsub.s32 %v909, %v911
      %v913 = vrot.slane %v906, %v912
      %v915 = vunpack.c.l.s4 1966171168
      %v916 = vunpack.c.0.s8 %v915
      %v917 = vlaneseq
      %v918 = vshrl.u32 %v917, 7
      %v919 = vsub.s32 %v916, %v918
      %v920 = vrot.slane %v913, %v919
      %922 = vst.msk [vmem:[%s272] sm:$0x3] %vm902, %v920
      %p923 = scmp.lt.s32.totalorder %s18, 1
      %s924 = scalar_select %p923, %s18, 1
      %s925 = smul.addr %s924, 16
      %s926 = smul.addr %s925, 8
      %s927 = scalar_lea.vmem %s4, %s926
      %p928 = scmp.lt.s32.totalorder %s18, 1
      %s929 = scalar_select %p928, %s18, 1
      %s930 = smul.addr %s929, 2
      %s931 = scalar_lea.vmem %s5, %s930
      %p932 = scmp.lt.s32.totalorder %s18, 1
      %s933 = scalar_select %p932, %s18, 1
      %s934 = smul.addr %s933, 2
      %s935 = scalar_lea.vmem %s6, %s934
      // Predicated region
      $region37: #{forward_pallas.10} parent=35 // pred_check
        %p936 = pneg %p125
      $region38: #{forward_pallas.10} parent=35 // pred_check_branch
        %938 = sbr.rel (%p936) target = $region40
      $region39: #{forward_pallas.10} parent=35 // pred_region
        _
      $region40: #{forward_pallas.10} parent=35 // pred_fallthru
        _
      // Predicated region
      $region41: #{forward_pallas.10} parent=35 // pred_check
        %p939 = pneg %p151
      $region42: #{forward_pallas.10} parent=35 // pred_check_branch
        %941 = sbr.rel (%p939) target = $region44
      $region43: #{forward_pallas.10} parent=35 // pred_region
        _
      $region44: #{forward_pallas.10} parent=35 // pred_fallthru
        _
      // Predicated region
      $region45: #{forward_pallas.10} parent=35 // pred_check
        %p942 = pneg %p177
      $region46: #{forward_pallas.10} parent=35 // pred_check_branch
        %944 = sbr.rel (%p942) target = $region48
      $region47: #{forward_pallas.10} parent=35 // pred_region
        _
      $region48: #{forward_pallas.10} parent=35 // pred_fallthru
        _
    $region36: #{forward_pallas.10} parent=5 // pred_fallthru
      _
    %p945 = scmp.le.s32.totalorder 2, %s13
    // Predicated region
    $region49: #{forward_pallas.10} parent=5 // pred_check
      %p946 = pneg %p945
    $region50: #{forward_pallas.10} parent=5 // pred_check_branch
      %948 = sbr.rel (%p946) target = $region52
    $region51: #{forward_pallas.10} parent=5 // pred_region
      %s949 = ssub.s32 %s13, 2
      // Predicated region
      $region53: #{forward_pallas.10} parent=51 // pred_check
        %p950 = pneg %p131
      $region54: #{forward_pallas.10} parent=51 // pred_check_branch
        %952 = sbr.rel (%p950) target = $region56
      $region55: #{forward_pallas.10} parent=51 // pred_region
        %p953 = scmp.lt.s32.totalorder %s19, 1
        %s954 = scalar_select %p953, %s19, 1
        %s955 = smul.addr %s954, 16
        %s956 = smul.addr %s955, 8
        %s957 = scalar_lea.vmem %s4, %s956
      $region56: #{forward_pallas.10} parent=51 // pred_fallthru
        _
      // Predicated region
      $region57: #{forward_pallas.10} parent=51 // pred_check
        %p958 = pneg %p157
      $region58: #{forward_pallas.10} parent=51 // pred_check_branch
        %960 = sbr.rel (%p958) target = $region60
      $region59: #{forward_pallas.10} parent=51 // pred_region
        %p961 = scmp.lt.s32.totalorder %s19, 1
        %s962 = scalar_select %p961, %s19, 1
        %s963 = smul.addr %s962, 2
        %s964 = scalar_lea.vmem %s5, %s963
      $region60: #{forward_pallas.10} parent=51 // pred_fallthru
        _
      // Predicated region
      $region61: #{forward_pallas.10} parent=51 // pred_check
        %p965 = pneg %p183
      $region62: #{forward_pallas.10} parent=51 // pred_check_branch
        %967 = sbr.rel (%p965) target = $region64
      $region63: #{forward_pallas.10} parent=51 // pred_region
        %p968 = scmp.lt.s32.totalorder %s19, 1
        %s969 = scalar_select %p968, %s19, 1
        %s970 = smul.addr %s969, 2
        %s971 = scalar_lea.vmem %s6, %s970
      $region64: #{forward_pallas.10} parent=51 // pred_fallthru
        _
    $region52: #{forward_pallas.10} parent=5 // pred_fallthru
      _
  $region6: #{forward_pallas.10} parent=0 // loop_footer
    %s17 = sadd.s32 1, %s13
  $region7: #{forward_pallas.10} parent=0 // loop_footer_branch
    %12 = sbr.rel target = $region3
  $region8: #{forward_pallas.10} parent=0 // loop_exit
    _

// kernel: forward_pallas.11
$region0: #{forward_pallas.11}
  #allocation0 [shape = 'u32[]', space=smem, size = 0x4, offset = 0x4, fixed_abs, tag = 'smem constant byte address 0x4 - core index']
  #allocation1 [shape = 'u32[144,128]{1,0:T(1,128)}', space=vmem, size = 0x12000, scoped, tag = 'internal scratch']
  %s0 = inlined_call_operand.vmem [shape: f32[2,64,256], index: 0, kind: input, shape index: {}]
  %s1 = inlined_call_operand.vmem [shape: f32[2,1,256], index: 1, kind: input, shape index: {}]
  %s2 = inlined_call_operand.vmem [shape: f32[2,64,256], index: 2, kind: output, shape index: {}]
  %s3 = sld [smem:[#allocation0]]
  $region41: #{forward_pallas.11} parent=0
    _
  %s5 = ssub.s32 1, %s3
  %s6 = scalar_select 0, %s5, %s3
  loop: start=0, step=1, limit=4
  $region2: #{forward_pallas.11} parent=0 // loop_pre_header
    _
  $region3: #{forward_pallas.11} parent=0 // loop_header
    %s8 = sphi 0, %s12
    %p9 = scmp.ge.s32.totalorder %s8, 4
    %s18 = sphi 0, %s20
    %s21 = sphi 0, %s18
    %s22 = sphi 0, %s21
    %s38 = sphi 0, %s22
    %s44 = sphi 0, %s46
    %s47 = sphi 0, %s44
    %s48 = sphi 0, %s47
    %s64 = sphi 0, %s48
    %s70 = sphi 0, %s72
    %s73 = sphi 0, %s70
    %s74 = sphi 0, %s73
    %s90 = sphi 0, %s74
  $region4: #{forward_pallas.11} parent=0 // loop_header_branch
    %11 = sbr.rel (%p9) target = $region8
  $region5: #{forward_pallas.11} parent=0 // loop_body
    %s13 = ssub.s32 %s8, 1
    %s14 = ssub.s32 %s8, 2
    %s15 = sadd.s32 %s8, 1
    %s16 = ssub.s32 %s8, %s15
    %p17 = scmp.eq.s32.totalorder %s16, 0
    %s19 = sadd.s32 %s18, 1
    %s20 = scalar_select %p17, %s18, %s19
    %p23 = pneg %p17
    %p24 = scmp.eq.s32.totalorder %s8, 1
    %p25 = por %p23, %p24
    %p26 = scmp.ne.s32.totalorder %s18, %s21
    %p27 = scmp.eq.s32.totalorder %s8, 0
    %p28 = por %p26, %p27
    %p29 = scmp.ne.s32.totalorder %s18, %s21
    %p30 = scmp.eq.s32.totalorder %s13, 1
    %p31 = por %p29, %p30
    %p32 = scmp.ne.s32.totalorder %s21, %s22
    %p33 = scmp.eq.s32.totalorder %s13, 0
    %p34 = por %p32, %p33
    %p35 = scmp.ne.s32.totalorder %s21, %s22
    %p36 = scmp.eq.s32.totalorder %s14, 1
    %p37 = por %p35, %p36
    %p39 = scmp.ne.s32.totalorder %s22, %s38
    %p40 = scmp.eq.s32.totalorder %s14, 0
    %p41 = por %p39, %p40
    %s42 = ssub.s32 %s8, %s15
    %p43 = scmp.eq.s32.totalorder %s42, 0
    %s45 = sadd.s32 %s44, 1
    %s46 = scalar_select %p43, %s44, %s45
    %p49 = pneg %p43
    %p50 = scmp.eq.s32.totalorder %s8, 1
    %p51 = por %p49, %p50
    %p52 = scmp.ne.s32.totalorder %s44, %s47
    %p53 = scmp.eq.s32.totalorder %s8, 0
    %p54 = por %p52, %p53
    %p55 = scmp.ne.s32.totalorder %s44, %s47
    %p56 = scmp.eq.s32.totalorder %s13, 1
    %p57 = por %p55, %p56
    %p58 = scmp.ne.s32.totalorder %s47, %s48
    %p59 = scmp.eq.s32.totalorder %s13, 0
    %p60 = por %p58, %p59
    %p61 = scmp.ne.s32.totalorder %s47, %s48
    %p62 = scmp.eq.s32.totalorder %s14, 1
    %p63 = por %p61, %p62
    %p65 = scmp.ne.s32.totalorder %s48, %s64
    %p66 = scmp.eq.s32.totalorder %s14, 0
    %p67 = por %p65, %p66
    %s68 = ssub.s32 %s8, %s15
    %p69 = scmp.eq.s32.totalorder %s68, 0
    %s71 = sadd.s32 %s70, 1
    %s72 = scalar_select %p69, %s70, %s71
    %p75 = pneg %p69
    %p76 = scmp.eq.s32.totalorder %s8, 1
    %p77 = por %p75, %p76
    %p78 = scmp.ne.s32.totalorder %s70, %s73
    %p79 = scmp.eq.s32.totalorder %s8, 0
    %p80 = por %p78, %p79
    %p81 = scmp.ne.s32.totalorder %s70, %s73
    %p82 = scmp.eq.s32.totalorder %s13, 1
    %p83 = por %p81, %p82
    %p84 = scmp.ne.s32.totalorder %s73, %s74
    %p85 = scmp.eq.s32.totalorder %s13, 0
    %p86 = por %p84, %p85
    %p87 = scmp.ne.s32.totalorder %s73, %s74
    %p88 = scmp.eq.s32.totalorder %s14, 1
    %p89 = por %p87, %p88
    %p91 = scmp.ne.s32.totalorder %s74, %s90
    %p92 = scmp.eq.s32.totalorder %s14, 0
    %p93 = por %p91, %p92
    %p94 = scmp.le.s32.totalorder 1, %s8
    %p95 = scmp.lt.s32.totalorder %s8, 3
    %p96 = pnand %p94, %p95
    %p97 = pneg %p96
    // Predicated region
    $region9: #{forward_pallas.11} parent=5 // pred_check
      _
    $region10: #{forward_pallas.11} parent=5 // pred_check_branch
      %99 = sbr.rel (%p96) target = $region12
    $region11: #{forward_pallas.11} parent=5 // pred_region
      %s100 = ssub.s32 %s8, 1
    $region12: #{forward_pallas.11} parent=5 // pred_fallthru
      _
    %p101 = scmp.lt.s32.totalorder %s8, 2
    // Predicated region
    $region13: #{forward_pallas.11} parent=5 // pred_check
      %p102 = pneg %p101
    $region14: #{forward_pallas.11} parent=5 // pred_check_branch
      %104 = sbr.rel (%p102) target = $region16
    $region15: #{forward_pallas.11} parent=5 // pred_region
      // Predicated region
      $region17: #{forward_pallas.11} parent=15 // pred_check
        %p105 = pneg %p28
      $region18: #{forward_pallas.11} parent=15 // pred_check_branch
        %107 = sbr.rel (%p105) target = $region20
      $region19: #{forward_pallas.11} parent=15 // pred_region
        %p108 = scmp.lt.s32.totalorder %s8, 1
        %s109 = scalar_select %p108, %s8, 1
        %s110 = smul.addr %s109, 16
        %s111 = smul.addr %s110, 8
        %s112 = scalar_lea.vmem %s0, %s111
      $region20: #{forward_pallas.11} parent=15 // pred_fallthru
        _
      // Predicated region
      $region21: #{forward_pallas.11} parent=15 // pred_check
        %p113 = pneg %p54
      $region22: #{forward_pallas.11} parent=15 // pred_check_branch
        %115 = sbr.rel (%p113) target = $region24
      $region23: #{forward_pallas.11} parent=15 // pred_region
        %p116 = scmp.lt.s32.totalorder %s8, 1
        %s117 = scalar_select %p116, %s8, 1
        %s118 = smul.addr %s117, 2
        %s119 = scalar_lea.vmem %s1, %s118
      $region24: #{forward_pallas.11} parent=15 // pred_fallthru
        _
    $region16: #{forward_pallas.11} parent=5 // pred_fallthru
      _
    %p120 = scmp.le.s32.totalorder 1, %s8
    %p121 = scmp.lt.s32.totalorder %s8, 3
    %p122 = pnand %p120, %p121
    %p123 = pneg %p122
    // Predicated region
    $region25: #{forward_pallas.11} parent=5 // pred_check
      _
    $region26: #{forward_pallas.11} parent=5 // pred_check_branch
      %125 = sbr.rel (%p122) target = $region28
    $region27: #{forward_pallas.11} parent=5 // pred_region
      %s126 = ssub.s32 %s8, 1
      %p127 = scmp.lt.s32.totalorder %s13, 1
      %s128 = scalar_select %p127, %s13, 1
      %s129 = smul.addr %s128, 16
      %s130 = smul.addr %s129, 8
      %s131 = scalar_lea.vmem %s0, %s130
      %p132 = pneg %p34
      %p133 = pneg %p31
      %p134 = scmp.lt.s32.totalorder %s13, 1
      %s135 = scalar_select %p134, %s13, 1
      %s136 = smul.addr %s135, 2
      %s137 = scalar_lea.vmem %s1, %s136
      %p138 = pneg %p60
      %p139 = pneg %p57
      %p140 = pneg %p86
      %p141 = pneg %p83
      %p142 = scmp.lt.s32.totalorder %s13, 1
      %s143 = scalar_select %p142, %s13, 1
      %s144 = smul.addr %s143, 16
      %s145 = smul.addr %s144, 8
      %s146 = scalar_lea.vmem %s2, %s145
      %p147 = scmp.lt.s32.totalorder %s13, 1
      %s148 = scalar_select %p147, %s13, 1
      %s149 = smul.addr %s148, 16
      %s150 = smul.addr %s149, 8
      %s151 = scalar_lea.vmem %s0, %s150
      %p152 = scmp.lt.s32.totalorder %s13, 1
      %s153 = scalar_select %p152, %s13, 1
      %s154 = smul.addr %s153, 2
      %s155 = scalar_lea.vmem %s1, %s154
      %p156 = scmp.lt.s32.totalorder %s13, 1
      %s157 = scalar_select %p156, %s13, 1
      %s158 = smul.addr %s157, 16
      %s159 = smul.addr %s158, 8
      %s160 = scalar_lea.vmem %s2, %s159
      %v161 = vld [vmem:[%s151] sm:$0xff]
      %v162 = vld [vmem:[%s151 + $0x8] sm:$0xff]
      %v163 = vld [vmem:[%s151 + $0x10] sm:$0xff]
      %v164 = vld [vmem:[%s151 + $0x18] sm:$0xff]
      %v165 = vld [vmem:[%s151 + $0x20] sm:$0xff]
      %v166 = vld [vmem:[%s151 + $0x28] sm:$0xff]
      %v167 = vld [vmem:[%s151 + $0x30] sm:$0xff]
      %v168 = vld [vmem:[%s151 + $0x38] sm:$0xff]
      %v169 = vld [vmem:[%s151 + $0x40] sm:$0xff]
      %v170 = vld [vmem:[%s151 + $0x48] sm:$0xff]
      %v171 = vld [vmem:[%s151 + $0x50] sm:$0xff]
      %v172 = vld [vmem:[%s151 + $0x58] sm:$0xff]
      %v173 = vld [vmem:[%s151 + $0x60] sm:$0xff]
      %v174 = vld [vmem:[%s151 + $0x68] sm:$0xff]
      %v175 = vld [vmem:[%s151 + $0x70] sm:$0xff]
      %v176 = vld [vmem:[%s151 + $0x78] sm:$0xff]
      %v177 = vld [vmem:[%s155] sm:$0x3]
      %v178 = vsub.f32 0.0, %v177
      %v179 = vmul.f32 %v178, 1.442695
      %v180 = vpow.pop %v179
      %v181 = vadd.f32 %v180, 1.0
      %v182 = vrcp.pop %v181
      %v183 = vmul.f32 %v181, %v182
      %v184 = vsub.f32 2.0, %v183
      %v185 = vmul.f32 %v182, %v184
      %v187 = vlaneseq
      %v188 = vshrl.u32 %v187, 7
      %v189 = vsub.s32 0, %v188
      %v190 = vrot.slane %v185, %v189
      %v191 = vlaneseq
      %v192 = vshrl.u32 %v191, 7
      %v193 = vsub.s32 1, %v192
      %v194 = vrot.slane %v185, %v193
      %v197 = vmul.f32 %v161, %v190
      %v198 = vmul.f32 %v162, %v194
      %v199 = vmul.f32 %v163, %v190
      %v200 = vmul.f32 %v164, %v194
      %v201 = vmul.f32 %v165, %v190
      %v202 = vmul.f32 %v166, %v194
      %v203 = vmul.f32 %v167, %v190
      %v204 = vmul.f32 %v168, %v194
      %v205 = vmul.f32 %v169, %v190
      %v206 = vmul.f32 %v170, %v194
      %v207 = vmul.f32 %v171, %v190
      %v208 = vmul.f32 %v172, %v194
      %v209 = vmul.f32 %v173, %v190
      %v210 = vmul.f32 %v174, %v194
      %v211 = vmul.f32 %v175, %v190
      %v212 = vmul.f32 %v176, %v194
      %213 = vst [vmem:[%s160] sm:$0xff] %v197
      %214 = vst [vmem:[%s160 + $0x8] sm:$0xff] %v198
      %215 = vst [vmem:[%s160 + $0x10] sm:$0xff] %v199
      %216 = vst [vmem:[%s160 + $0x18] sm:$0xff] %v200
      %217 = vst [vmem:[%s160 + $0x20] sm:$0xff] %v201
      %218 = vst [vmem:[%s160 + $0x28] sm:$0xff] %v202
      %219 = vst [vmem:[%s160 + $0x30] sm:$0xff] %v203
      %220 = vst [vmem:[%s160 + $0x38] sm:$0xff] %v204
      %221 = vst [vmem:[%s160 + $0x40] sm:$0xff] %v205
      %222 = vst [vmem:[%s160 + $0x48] sm:$0xff] %v206
      %223 = vst [vmem:[%s160 + $0x50] sm:$0xff] %v207
      %224 = vst [vmem:[%s160 + $0x58] sm:$0xff] %v208
      %225 = vst [vmem:[%s160 + $0x60] sm:$0xff] %v209
      %226 = vst [vmem:[%s160 + $0x68] sm:$0xff] %v210
      %227 = vst [vmem:[%s160 + $0x70] sm:$0xff] %v211
      %228 = vst [vmem:[%s160 + $0x78] sm:$0xff] %v212
      %p229 = scmp.lt.s32.totalorder %s13, 1
      %s230 = scalar_select %p229, %s13, 1
      %s231 = smul.addr %s230, 16
      %s232 = smul.addr %s231, 8
      %s233 = scalar_lea.vmem %s2, %s232
      // Predicated region
      $region29: #{forward_pallas.11} parent=27 // pred_check
        %p234 = pneg %p83
      $region30: #{forward_pallas.11} parent=27 // pred_check_branch
        %236 = sbr.rel (%p234) target = $region32
      $region31: #{forward_pallas.11} parent=27 // pred_region
        _
      $region32: #{forward_pallas.11} parent=27 // pred_fallthru
        _
    $region28: #{forward_pallas.11} parent=5 // pred_fallthru
      _
    %p237 = scmp.le.s32.totalorder 2, %s8
    // Predicated region
    $region33: #{forward_pallas.11} parent=5 // pred_check
      %p238 = pneg %p237
    $region34: #{forward_pallas.11} parent=5 // pred_check_branch
      %240 = sbr.rel (%p238) target = $region36
    $region35: #{forward_pallas.11} parent=5 // pred_region
      %s241 = ssub.s32 %s8, 2
      // Predicated region
      $region37: #{forward_pallas.11} parent=35 // pred_check
        %p242 = pneg %p89
      $region38: #{forward_pallas.11} parent=35 // pred_check_branch
        %244 = sbr.rel (%p242) target = $region40
      $region39: #{forward_pallas.11} parent=35 // pred_region
        %p245 = scmp.lt.s32.totalorder %s14, 1
        %s246 = scalar_select %p245, %s14, 1
        %s247 = smul.addr %s246, 16
        %s248 = smul.addr %s247, 8
        %s249 = scalar_lea.vmem %s2, %s248
      $region40: #{forward_pallas.11} parent=35 // pred_fallthru
        _
    $region36: #{forward_pallas.11} parent=5 // pred_fallthru
      _
  $region6: #{forward_pallas.11} parent=0 // loop_footer
    %s12 = sadd.s32 1, %s8
  $region7: #{forward_pallas.11} parent=0 // loop_footer_branch
    %7 = sbr.rel target = $region3
  $region8: #{forward_pallas.11} parent=0 // loop_exit
    _

// kernel: forward_pallas.12
$region0: #{forward_pallas.12}
  #allocation0 [shape = 'u32[]', space=smem, size = 0x4, offset = 0x4, fixed_abs, tag = 'smem constant byte address 0x4 - core index']
  #allocation1 [shape = 'u32[144,128]{1,0:T(1,128)}', space=vmem, size = 0x12000, scoped, tag = 'internal scratch']
  %s0 = inlined_call_operand.vmem [shape: f32[2,64,32], index: 0, kind: input, shape index: {}]
  %s1 = inlined_call_operand.vmem [shape: f32[96,64], index: 1, kind: input, shape index: {}]
  %s2 = inlined_call_operand.vmem [shape: f32[24,96], index: 2, kind: input, shape index: {}]
  %s3 = inlined_call_operand.vmem [shape: f32[96,24], index: 3, kind: input, shape index: {}]
  %s4 = inlined_call_operand.vmem [shape: f32[2,96,32], index: 4, kind: output, shape index: {0}]
  %s5 = inlined_call_operand.vmem [shape: f32[2,1,32], index: 5, kind: output, shape index: {1}]
  %s6 = inlined_call_operand.vmem [shape: f32[2,1,32], index: 6, kind: output, shape index: {2}]
  %7 = xla_tuple %s4, %s5, %s6
  %s8 = sld [smem:[#allocation0]]
  $region65: #{forward_pallas.12} parent=0
    _
  %s10 = ssub.s32 1, %s8
  %s11 = scalar_select 0, %s10, %s8
  loop: start=0, step=1, limit=4
  $region2: #{forward_pallas.12} parent=0 // loop_pre_header
    _
  $region3: #{forward_pallas.12} parent=0 // loop_header
    %s13 = sphi 0, %s17
    %p14 = scmp.ge.s32.totalorder %s13, 4
    %s23 = sphi 0, %s25
    %s26 = sphi 0, %s23
    %s27 = sphi 0, %s26
    %s43 = sphi 0, %s27
    %s47 = sphi 0, %s47
    %s49 = sphi 0, %s47
    %s50 = sphi 0, %s49
    %s64 = sphi 0, %s50
    %s68 = sphi 0, %s68
    %s70 = sphi 0, %s68
    %s71 = sphi 0, %s70
    %s85 = sphi 0, %s71
    %s89 = sphi 0, %s89
    %s91 = sphi 0, %s89
    %s92 = sphi 0, %s91
    %s106 = sphi 0, %s92
    %s112 = sphi 0, %s114
    %s115 = sphi 0, %s112
    %s116 = sphi 0, %s115
    %s132 = sphi 0, %s116
    %s138 = sphi 0, %s140
    %s141 = sphi 0, %s138
    %s142 = sphi 0, %s141
    %s158 = sphi 0, %s142
    %s164 = sphi 0, %s166
    %s167 = sphi 0, %s164
    %s168 = sphi 0, %s167
    %s184 = sphi 0, %s168
  $region4: #{forward_pallas.12} parent=0 // loop_header_branch
    %16 = sbr.rel (%p14) target = $region8
  $region5: #{forward_pallas.12} parent=0 // loop_body
    %s18 = ssub.s32 %s13, 1
    %s19 = ssub.s32 %s13, 2
    %s20 = sadd.s32 %s13, 1
    %s21 = ssub.s32 %s13, %s20
    %p22 = scmp.eq.s32.totalorder %s21, 0
    %s24 = sadd.s32 %s23, 1
    %s25 = scalar_select %p22, %s23, %s24
    %p28 = pneg %p22
    %p29 = scmp.eq.s32.totalorder %s13, 1
    %p30 = por %p28, %p29
    %p31 = scmp.ne.s32.totalorder %s23, %s26
    %p32 = scmp.eq.s32.totalorder %s13, 0
    %p33 = por %p31, %p32
    %p34 = scmp.ne.s32.totalorder %s23, %s26
    %p35 = scmp.eq.s32.totalorder %s18, 1
    %p36 = por %p34, %p35
    %p37 = scmp.ne.s32.totalorder %s26, %s27
    %p38 = scmp.eq.s32.totalorder %s18, 0
    %p39 = por %p37, %p38
    %p40 = scmp.ne.s32.totalorder %s26, %s27
    %p41 = scmp.eq.s32.totalorder %s19, 1
    %p42 = por %p40, %p41
    %p44 = scmp.ne.s32.totalorder %s27, %s43
    %p45 = scmp.eq.s32.totalorder %s19, 0
    %p46 = por %p44, %p45
    %s48 = sadd.s32 %s47, 1
    %p51 = scmp.eq.s32.totalorder %s13, 1
    %p52 = scmp.ne.s32.totalorder %s47, %s49
    %p53 = scmp.eq.s32.totalorder %s13, 0
    %p54 = por %p52, %p53
    %p55 = scmp.ne.s32.totalorder %s47, %s49
    %p56 = scmp.eq.s32.totalorder %s18, 1
    %p57 = por %p55, %p56
    %p58 = scmp.ne.s32.totalorder %s49, %s50
    %p59 = scmp.eq.s32.totalorder %s18, 0
    %p60 = por %p58, %p59
    %p61 = scmp.ne.s32.totalorder %s49, %s50
    %p62 = scmp.eq.s32.totalorder %s19, 1
    %p63 = por %p61, %p62
    %p65 = scmp.ne.s32.totalorder %s50, %s64
    %p66 = scmp.eq.s32.totalorder %s19, 0
    %p67 = por %p65, %p66
    %s69 = sadd.s32 %s68, 1
    %p72 = scmp.eq.s32.totalorder %s13, 1
    %p73 = scmp.ne.s32.totalorder %s68, %s70
    %p74 = scmp.eq.s32.totalorder %s13, 0
    %p75 = por %p73, %p74
    %p76 = scmp.ne.s32.totalorder %s68, %s70
    %p77 = scmp.eq.s32.totalorder %s18, 1
    %p78 = por %p76, %p77
    %p79 = scmp.ne.s32.totalorder %s70, %s71
    %p80 = scmp.eq.s32.totalorder %s18, 0
    %p81 = por %p79, %p80
    %p82 = scmp.ne.s32.totalorder %s70, %s71
    %p83 = scmp.eq.s32.totalorder %s19, 1
    %p84 = por %p82, %p83
    %p86 = scmp.ne.s32.totalorder %s71, %s85
    %p87 = scmp.eq.s32.totalorder %s19, 0
    %p88 = por %p86, %p87
    %s90 = sadd.s32 %s89, 1
    %p93 = scmp.eq.s32.totalorder %s13, 1
    %p94 = scmp.ne.s32.totalorder %s89, %s91
    %p95 = scmp.eq.s32.totalorder %s13, 0
    %p96 = por %p94, %p95
    %p97 = scmp.ne.s32.totalorder %s89, %s91
    %p98 = scmp.eq.s32.totalorder %s18, 1
    %p99 = por %p97, %p98
    %p100 = scmp.ne.s32.totalorder %s91, %s92
    %p101 = scmp.eq.s32.totalorder %s18, 0
    %p102 = por %p100, %p101
    %p103 = scmp.ne.s32.totalorder %s91, %s92
    %p104 = scmp.eq.s32.totalorder %s19, 1
    %p105 = por %p103, %p104
    %p107 = scmp.ne.s32.totalorder %s92, %s106
    %p108 = scmp.eq.s32.totalorder %s19, 0
    %p109 = por %p107, %p108
    %s110 = ssub.s32 %s13, %s20
    %p111 = scmp.eq.s32.totalorder %s110, 0
    %s113 = sadd.s32 %s112, 1
    %s114 = scalar_select %p111, %s112, %s113
    %p117 = pneg %p111
    %p118 = scmp.eq.s32.totalorder %s13, 1
    %p119 = por %p117, %p118
    %p120 = scmp.ne.s32.totalorder %s112, %s115
    %p121 = scmp.eq.s32.totalorder %s13, 0
    %p122 = por %p120, %p121
    %p123 = scmp.ne.s32.totalorder %s112, %s115
    %p124 = scmp.eq.s32.totalorder %s18, 1
    %p125 = por %p123, %p124
    %p126 = scmp.ne.s32.totalorder %s115, %s116
    %p127 = scmp.eq.s32.totalorder %s18, 0
    %p128 = por %p126, %p127
    %p129 = scmp.ne.s32.totalorder %s115, %s116
    %p130 = scmp.eq.s32.totalorder %s19, 1
    %p131 = por %p129, %p130
    %p133 = scmp.ne.s32.totalorder %s116, %s132
    %p134 = scmp.eq.s32.totalorder %s19, 0
    %p135 = por %p133, %p134
    %s136 = ssub.s32 %s13, %s20
    %p137 = scmp.eq.s32.totalorder %s136, 0
    %s139 = sadd.s32 %s138, 1
    %s140 = scalar_select %p137, %s138, %s139
    %p143 = pneg %p137
    %p144 = scmp.eq.s32.totalorder %s13, 1
    %p145 = por %p143, %p144
    %p146 = scmp.ne.s32.totalorder %s138, %s141
    %p147 = scmp.eq.s32.totalorder %s13, 0
    %p148 = por %p146, %p147
    %p149 = scmp.ne.s32.totalorder %s138, %s141
    %p150 = scmp.eq.s32.totalorder %s18, 1
    %p151 = por %p149, %p150
    %p152 = scmp.ne.s32.totalorder %s141, %s142
    %p153 = scmp.eq.s32.totalorder %s18, 0
    %p154 = por %p152, %p153
    %p155 = scmp.ne.s32.totalorder %s141, %s142
    %p156 = scmp.eq.s32.totalorder %s19, 1
    %p157 = por %p155, %p156
    %p159 = scmp.ne.s32.totalorder %s142, %s158
    %p160 = scmp.eq.s32.totalorder %s19, 0
    %p161 = por %p159, %p160
    %s162 = ssub.s32 %s13, %s20
    %p163 = scmp.eq.s32.totalorder %s162, 0
    %s165 = sadd.s32 %s164, 1
    %s166 = scalar_select %p163, %s164, %s165
    %p169 = pneg %p163
    %p170 = scmp.eq.s32.totalorder %s13, 1
    %p171 = por %p169, %p170
    %p172 = scmp.ne.s32.totalorder %s164, %s167
    %p173 = scmp.eq.s32.totalorder %s13, 0
    %p174 = por %p172, %p173
    %p175 = scmp.ne.s32.totalorder %s164, %s167
    %p176 = scmp.eq.s32.totalorder %s18, 1
    %p177 = por %p175, %p176
    %p178 = scmp.ne.s32.totalorder %s167, %s168
    %p179 = scmp.eq.s32.totalorder %s18, 0
    %p180 = por %p178, %p179
    %p181 = scmp.ne.s32.totalorder %s167, %s168
    %p182 = scmp.eq.s32.totalorder %s19, 1
    %p183 = por %p181, %p182
    %p185 = scmp.ne.s32.totalorder %s168, %s184
    %p186 = scmp.eq.s32.totalorder %s19, 0
    %p187 = por %p185, %p186
    %p188 = scmp.le.s32.totalorder 1, %s13
    %p189 = scmp.lt.s32.totalorder %s13, 3
    %p190 = pnand %p188, %p189
    %p191 = pneg %p190
    // Predicated region
    $region9: #{forward_pallas.12} parent=5 // pred_check
      _
    $region10: #{forward_pallas.12} parent=5 // pred_check_branch
      %193 = sbr.rel (%p190) target = $region12
    $region11: #{forward_pallas.12} parent=5 // pred_region
      %s194 = ssub.s32 %s13, 1
      // Predicated region
      $region13: #{forward_pallas.12} parent=11 // pred_check
        %p195 = pneg %p60
      $region14: #{forward_pallas.12} parent=11 // pred_check_branch
        %197 = sbr.rel (%p195) target = $region16
      $region15: #{forward_pallas.12} parent=11 // pred_region
        _
      $region16: #{forward_pallas.12} parent=11 // pred_fallthru
        _
      // Predicated region
      $region17: #{forward_pallas.12} parent=11 // pred_check
        %p198 = pneg %p81
      $region18: #{forward_pallas.12} parent=11 // pred_check_branch
        %200 = sbr.rel (%p198) target = $region20
      $region19: #{forward_pallas.12} parent=11 // pred_region
        _
      $region20: #{forward_pallas.12} parent=11 // pred_fallthru
        _
      // Predicated region
      $region21: #{forward_pallas.12} parent=11 // pred_check
        %p201 = pneg %p102
      $region22: #{forward_pallas.12} parent=11 // pred_check_branch
        %203 = sbr.rel (%p201) target = $region24
      $region23: #{forward_pallas.12} parent=11 // pred_region
        _
      $region24: #{forward_pallas.12} parent=11 // pred_fallthru
        _
    $region12: #{forward_pallas.12} parent=5 // pred_fallthru
      _
    %p204 = scmp.lt.s32.totalorder %s13, 2
    // Predicated region
    $region25: #{forward_pallas.12} parent=5 // pred_check
      %p205 = pneg %p204
    $region26: #{forward_pallas.12} parent=5 // pred_check_branch
      %207 = sbr.rel (%p205) target = $region28
    $region27: #{forward_pallas.12} parent=5 // pred_region
      // Predicated region
      $region29: #{forward_pallas.12} parent=27 // pred_check
        %p208 = pneg %p33
      $region30: #{forward_pallas.12} parent=27 // pred_check_branch
        %210 = sbr.rel (%p208) target = $region32
      $region31: #{forward_pallas.12} parent=27 // pred_region
        %p211 = scmp.lt.s32.totalorder %s13, 1
        %s212 = scalar_select %p211, %s13, 1
        %s213 = smul.addr %s212, 8
        %s214 = smul.addr %s213, 8
        %s215 = scalar_lea.vmem %s0, %s214
      $region32: #{forward_pallas.12} parent=27 // pred_fallthru
        _
    $region28: #{forward_pallas.12} parent=5 // pred_fallthru
      _
    %p216 = scmp.le.s32.totalorder 1, %s13
    %p217 = scmp.lt.s32.totalorder %s13, 3
    %p218 = pnand %p216, %p217
    %p219 = pneg %p218
    // Predicated region
    $region33: #{forward_pallas.12} parent=5 // pred_check
      _
    $region34: #{forward_pallas.12} parent=5 // pred_check_branch
      %221 = sbr.rel (%p218) target = $region36
    $region35: #{forward_pallas.12} parent=5 // pred_region
      %s222 = ssub.s32 %s13, 1
      %p223 = scmp.lt.s32.totalorder %s18, 1
      %s224 = scalar_select %p223, %s18, 1
      %s225 = smul.addr %s224, 8
      %s226 = smul.addr %s225, 8
      %s227 = scalar_lea.vmem %s0, %s226
      %p228 = pneg %p39
      %p229 = pneg %p36
      %p230 = pneg %p60
      %p231 = pneg %p57
      %p232 = pneg %p81
      %p233 = pneg %p78
      %p234 = pneg %p102
      %p235 = pneg %p99
      %p236 = pneg %p128
      %p237 = pneg %p125
      %p238 = scmp.lt.s32.totalorder %s18, 1
      %s239 = scalar_select %p238, %s18, 1
      %s240 = smul.addr %s239, 12
      %s241 = smul.addr %s240, 8
      %s242 = scalar_lea.vmem %s4, %s241
      %p243 = pneg %p154
      %p244 = pneg %p151
      %p245 = scmp.lt.s32.totalorder %s18, 1
      %s246 = scalar_select %p245, %s18, 1
      %s247 = scalar_lea.vmem %s5, %s246
      %p248 = pneg %p180
      %p249 = pneg %p177
      %p250 = scmp.lt.s32.totalorder %s18, 1
      %s251 = scalar_select %p250, %s18, 1
      %s252 = scalar_lea.vmem %s6, %s251
      %p253 = scmp.lt.s32.totalorder %s18, 1
      %s254 = scalar_select %p253, %s18, 1
      %s255 = smul.addr %s254, 8
      %s256 = smul.addr %s255, 8
      %s257 = scalar_lea.vmem %s0, %s256
      %p258 = scmp.lt.s32.totalorder %s18, 1
      %s259 = scalar_select %p258, %s18, 1
      %s260 = smul.addr %s259, 12
      %s261 = smul.addr %s260, 8
      %s262 = scalar_lea.vmem %s4, %s261
      %p263 = scmp.lt.s32.totalorder %s18, 1
      %s264 = scalar_select %p263, %s18, 1
      %s265 = scalar_lea.vmem %s5, %s264
      %p266 = scmp.lt.s32.totalorder %s18, 1
      %s267 = scalar_select %p266, %s18, 1
      %s268 = scalar_lea.vmem %s6, %s267
      %v269 = vld [vmem:[%s257] sm:$0xff]
      %v270 = vld [vmem:[%s257 + $0x8] sm:$0xff]
      %v271 = vld [vmem:[%s257 + $0x10] sm:$0xff]
      %v272 = vld [vmem:[%s257 + $0x18] sm:$0xff]
      %v273 = vld [vmem:[%s257 + $0x20] sm:$0xff]
      %v274 = vld [vmem:[%s257 + $0x28] sm:$0xff]
      %v275 = vld [vmem:[%s257 + $0x30] sm:$0xff]
      %v276 = vld [vmem:[%s257 + $0x38] sm:$0xff]
      %v277 = vld [vmem:[%s1] sm:$0xff]
      %v278 = vld [vmem:[%s1 + $0x8] sm:$0xff]
      %v279 = vld [vmem:[%s1 + $0x10] sm:$0xff]
      %v280 = vld [vmem:[%s1 + $0x18] sm:$0xff]
      %v281 = vld [vmem:[%s1 + $0x20] sm:$0xff]
      %v282 = vld [vmem:[%s1 + $0x28] sm:$0xff]
      %v283 = vld [vmem:[%s1 + $0x30] sm:$0xff]
      %v284 = vld [vmem:[%s1 + $0x38] sm:$0xff]
      %v285 = vld [vmem:[%s1 + $0x40] sm:$0xff]
      %v286 = vld [vmem:[%s1 + $0x48] sm:$0xff]
      %v287 = vld [vmem:[%s1 + $0x50] sm:$0xff]
      %v288 = vld [vmem:[%s1 + $0x58] sm:$0xff]
      %vm289 = vcmask 523264
      %v291 = vsel %vm289, %v277, 0
      %v294 = vsel %vm289, %v278, 0
      %v297 = vsel %vm289, %v279, 0
      %v300 = vsel %vm289, %v280, 0
      %v303 = vsel %vm289, %v281, 0
      %v306 = vsel %vm289, %v282, 0
      %v309 = vsel %vm289, %v283, 0
      %v312 = vsel %vm289, %v284, 0
      %v315 = vsel %vm289, %v285, 0
      %v318 = vsel %vm289, %v286, 0
      %v321 = vsel %vm289, %v287, 0
      %v324 = vsel %vm289, %v288, 0
      %326 = vmatprep.subr.mxu0 0.0
      %327 = vmatpush1.msra.mxu0 0.0
      %328 = vmatprep.subr.mxu0 0.0
      %329 = vmatpush1.msra.mxu0 0.0
      %330 = vmatprep.subr.mxu0 0.0
      %331 = vmatpush1.msra.mxu0 0.0
      %332 = vmatprep.subr.mxu0 0.0
      %333 = vmatpush1.msra.mxu0 0.0
      %334 = vmatprep.subr.mxu0 0.0
      %335 = vmatpush1.msra.mxu0 0.0
      %336 = vmatprep.subr.mxu0 0.0
      %337 = vmatpush1.msra.mxu0 0.0
      %338 = vmatprep.subr.mxu0 0.0
      %339 = vmatpush1.msra.mxu0 0.0
      %340 = vmatprep.subr.mxu0 0.0
      %341 = vmatpush1.msra.mxu0 0.0
      %342 = vmatprep.subr.mxu0 0.0
      %343 = vmatpush1.msra.mxu0 %v276
      %344 = vmatprep.subr.mxu0 0.0
      %345 = vmatpush1.msra.mxu0 %v275
      %346 = vmatprep.subr.mxu0 0.0
      %347 = vmatpush1.msra.mxu0 %v274
      %348 = vmatprep.subr.mxu0 0.0
      %349 = vmatpush1.msra.mxu0 %v273
      %350 = vmatprep.subr.mxu0 0.0
      %351 = vmatpush1.msra.mxu0 %v272
      %352 = vmatprep.subr.mxu0 0.0
      %353 = vmatpush1.msra.mxu0 %v271
      %354 = vmatprep.subr.mxu0 0.0
      %355 = vmatpush1.msra.mxu0 %v270
      %356 = vmatprep.subr.mxu0 0.0
      %357 = vmatpush1.msra.mxu0 %v269
      %358 = vmatprep.subr.mxu0 0.0
      %359 = vmatpush2.msra.mxu0 0.0
      %360 = vmatprep.subr.mxu0 0.0
      %361 = vmatpush2.msra.mxu0 0.0
      %362 = vmatprep.subr.mxu0 0.0
      %363 = vmatpush2.msra.mxu0 0.0
      %364 = vmatprep.subr.mxu0 0.0
      %365 = vmatpush2.msra.mxu0 0.0
      %366 = vmatprep.subr.mxu0 0.0
      %367 = vmatpush2.msra.mxu0 0.0
      %368 = vmatprep.subr.mxu0 0.0
      %369 = vmatpush2.msra.mxu0 0.0
      %370 = vmatprep.subr.mxu0 0.0
      %371 = vmatpush2.msra.mxu0 0.0
      %372 = vmatprep.subr.mxu0 0.0
      %373 = vmatpush2.msra.mxu0 0.0
      %374 = vmatprep.subr.mxu0 0.0
      %375 = vmatpush2.msra.mxu0 0.0
      %376 = vmatprep.subr.mxu0 0.0
      %377 = vmatpush2.msra.mxu0 0.0
      %378 = vmatprep.subr.mxu0 0.0
      %379 = vmatpush2.msra.mxu0 0.0
      %380 = vmatprep.subr.mxu0 0.0
      %381 = vmatpush2.msra.mxu0 0.0
      %382 = vmatprep.subr.mxu0 0.0
      %383 = vmatpush2.msra.mxu0 0.0
      %384 = vmatprep.subr.mxu0 0.0
      %385 = vmatpush2.msra.mxu0 0.0
      %386 = vmatprep.subr.mxu0 0.0
      %387 = vmatpush2.msra.mxu0 0.0
      %388 = vmatprep.subr.mxu0 0.0
      %389 = vmatpush2.msra.mxu0 0.0
      %390 = vmatprep.mubr.f32.mxu0 0.0
      %391 = vmatmul.mubr.f32.gmra.mxu0 %v291
      %v392 = vpop.f32.mrf.mxu0
      %v393 = vadd.f32 0.0, %v392
      %v394 = vpop.f32.mrf.mxu0
      %395 = vmatprep.mubr.f32.mxu0 0.0
      %396 = vmatmul.mubr.f32.gmra.mxu0 %v294
      %v397 = vpop.f32.mrf.mxu0
      %v398 = vadd.f32 0.0, %v397
      %v399 = vpop.f32.mrf.mxu0
      %400 = vmatprep.mubr.f32.mxu0 0.0
      %401 = vmatmul.mubr.f32.gmra.mxu0 %v297
      %v402 = vpop.f32.mrf.mxu0
      %v403 = vadd.f32 0.0, %v402
      %v404 = vpop.f32.mrf.mxu0
      %405 = vmatprep.mubr.f32.mxu0 0.0
      %406 = vmatmul.mubr.f32.gmra.mxu0 %v300
      %v407 = vpop.f32.mrf.mxu0
      %v408 = vadd.f32 0.0, %v407
      %v409 = vpop.f32.mrf.mxu0
      %410 = vmatprep.mubr.f32.mxu0 0.0
      %411 = vmatmul.mubr.f32.gmra.mxu0 %v303
      %v412 = vpop.f32.mrf.mxu0
      %v413 = vadd.f32 0.0, %v412
      %v414 = vpop.f32.mrf.mxu0
      %415 = vmatprep.mubr.f32.mxu0 0.0
      %416 = vmatmul.mubr.f32.gmra.mxu0 %v306
      %v417 = vpop.f32.mrf.mxu0
      %v418 = vadd.f32 0.0, %v417
      %v419 = vpop.f32.mrf.mxu0
      %420 = vmatprep.mubr.f32.mxu0 0.0
      %421 = vmatmul.mubr.f32.gmra.mxu0 %v309
      %v422 = vpop.f32.mrf.mxu0
      %v423 = vadd.f32 0.0, %v422
      %v424 = vpop.f32.mrf.mxu0
      %425 = vmatprep.mubr.f32.mxu0 0.0
      %426 = vmatmul.mubr.f32.gmra.mxu0 %v312
      %v427 = vpop.f32.mrf.mxu0
      %v428 = vadd.f32 0.0, %v427
      %v429 = vpop.f32.mrf.mxu0
      %430 = vmatprep.mubr.f32.mxu0 0.0
      %431 = vmatmul.mubr.f32.gmra.mxu0 %v315
      %v432 = vpop.f32.mrf.mxu0
      %v433 = vadd.f32 0.0, %v432
      %v434 = vpop.f32.mrf.mxu0
      %435 = vmatprep.mubr.f32.mxu0 0.0
      %436 = vmatmul.mubr.f32.gmra.mxu0 %v318
      %v437 = vpop.f32.mrf.mxu0
      %v438 = vadd.f32 0.0, %v437
      %v439 = vpop.f32.mrf.mxu0
      %440 = vmatprep.mubr.f32.mxu0 0.0
      %441 = vmatmul.mubr.f32.gmra.mxu0 %v321
      %v442 = vpop.f32.mrf.mxu0
      %v443 = vadd.f32 0.0, %v442
      %v444 = vpop.f32.mrf.mxu0
      %445 = vmatprep.mubr.f32.mxu0 0.0
      %446 = vmatmul.mubr.f32.gmra.mxu0 %v324
      %v447 = vpop.f32.mrf.mxu0
      %v448 = vadd.f32 0.0, %v447
      %v449 = vpop.f32.mrf.mxu0
      %450 = vdwg.mxu0
      %vm451 = vcmask 261120
      %v452 = vsel %vm451, %v393, 0.0
      %453 = vadd.xlane.f32.xlu0 %v452
      %v454 = vpop.xlane.xlu0 %453
      %v455 = vsel %vm451, %v398, 0.0
      %456 = vadd.xlane.f32.xlu0 %v455
      %v457 = vpop.xlane.xlu0 %456
      %v458 = vsel %vm451, %v403, 0.0
      %459 = vadd.xlane.f32.xlu0 %v458
      %v460 = vpop.xlane.xlu0 %459
      %v461 = vsel %vm451, %v408, 0.0
      %462 = vadd.xlane.f32.xlu0 %v461
      %v463 = vpop.xlane.xlu0 %462
      %v464 = vsel %vm451, %v413, 0.0
      %465 = vadd.xlane.f32.xlu0 %v464
      %v466 = vpop.xlane.xlu0 %465
      %v467 = vsel %vm451, %v418, 0.0
      %468 = vadd.xlane.f32.xlu0 %v467
      %v469 = vpop.xlane.xlu0 %468
      %v470 = vsel %vm451, %v423, 0.0
      %471 = vadd.xlane.f32.xlu0 %v470
      %v472 = vpop.xlane.xlu0 %471
      %v473 = vsel %vm451, %v428, 0.0
      %474 = vadd.xlane.f32.xlu0 %v473
      %v475 = vpop.xlane.xlu0 %474
      %v476 = vsel %vm451, %v433, 0.0
      %477 = vadd.xlane.f32.xlu0 %v476
      %v478 = vpop.xlane.xlu0 %477
      %v479 = vsel %vm451, %v438, 0.0
      %480 = vadd.xlane.f32.xlu0 %v479
      %v481 = vpop.xlane.xlu0 %480
      %v482 = vsel %vm451, %v443, 0.0
      %483 = vadd.xlane.f32.xlu0 %v482
      %v484 = vpop.xlane.xlu0 %483
      %v485 = vsel %vm451, %v448, 0.0
      %486 = vadd.xlane.f32.xlu0 %v485
      %v487 = vpop.xlane.xlu0 %486
      %v488 = vmul.f32 %v454, 0.03125
      %v489 = vmul.f32 %v457, 0.03125
      %v490 = vmul.f32 %v460, 0.03125
      %v491 = vmul.f32 %v463, 0.03125
      %v492 = vmul.f32 %v466, 0.03125
      %v493 = vmul.f32 %v469, 0.03125
      %v494 = vmul.f32 %v472, 0.03125
      %v495 = vmul.f32 %v475, 0.03125
      %v496 = vmul.f32 %v478, 0.03125
      %v497 = vmul.f32 %v481, 0.03125
      %v498 = vmul.f32 %v484, 0.03125
      %v499 = vmul.f32 %v487, 0.03125
      %v500 = vld [vmem:[%s2] sm:$0xff]
      %v501 = vld [vmem:[%s2 + $0x8] sm:$0xff]
      %v502 = vld [vmem:[%s2 + $0x10] sm:$0xff]
      %vm503 = vcmask 785408
      %v505 = vsel %vm503, %v500, 0
      %v508 = vsel %vm503, %v501, 0
      %v511 = vsel %vm503, %v502, 0
      %513 = vmatprep.subr.mxu0 0.0
      %514 = vmatpush1.msra.mxu0 0.0
      %515 = vmatprep.subr.mxu0 0.0
      %516 = vmatpush1.msra.mxu0 0.0
      %517 = vmatprep.subr.mxu0 0.0
      %518 = vmatpush1.msra.mxu0 0.0
      %519 = vmatprep.subr.mxu0 0.0
      %520 = vmatpush1.msra.mxu0 0.0
      %521 = vmatprep.subr.mxu0 0.0
      %522 = vmatpush1.msra.mxu0 %v499
      %523 = vmatprep.subr.mxu0 0.0
      %524 = vmatpush1.msra.mxu0 %v498
      %525 = vmatprep.subr.mxu0 0.0
      %526 = vmatpush1.msra.mxu0 %v497
      %527 = vmatprep.subr.mxu0 0.0
      %528 = vmatpush1.msra.mxu0 %v496
      %529 = vmatprep.subr.mxu0 0.0
      %530 = vmatpush1.msra.mxu0 %v495
      %531 = vmatprep.subr.mxu0 0.0
      %532 = vmatpush1.msra.mxu0 %v494
      %533 = vmatprep.subr.mxu0 0.0
      %534 = vmatpush1.msra.mxu0 %v493
      %535 = vmatprep.subr.mxu0 0.0
      %536 = vmatpush1.msra.mxu0 %v492
      %537 = vmatprep.subr.mxu0 0.0
      %538 = vmatpush1.msra.mxu0 %v491
      %539 = vmatprep.subr.mxu0 0.0
      %540 = vmatpush1.msra.mxu0 %v490
      %541 = vmatprep.subr.mxu0 0.0
      %542 = vmatpush1.msra.mxu0 %v489
      %543 = vmatprep.subr.mxu0 0.0
      %544 = vmatpush1.msra.mxu0 %v488
      %545 = vmatprep.subr.mxu0 0.0
      %546 = vmatpush2.msra.mxu0 0.0
      %547 = vmatprep.subr.mxu0 0.0
      %548 = vmatpush2.msra.mxu0 0.0
      %549 = vmatprep.subr.mxu0 0.0
      %550 = vmatpush2.msra.mxu0 0.0
      %551 = vmatprep.subr.mxu0 0.0
      %552 = vmatpush2.msra.mxu0 0.0
      %553 = vmatprep.subr.mxu0 0.0
      %554 = vmatpush2.msra.mxu0 0.0
      %555 = vmatprep.subr.mxu0 0.0
      %556 = vmatpush2.msra.mxu0 0.0
      %557 = vmatprep.subr.mxu0 0.0
      %558 = vmatpush2.msra.mxu0 0.0
      %559 = vmatprep.subr.mxu0 0.0
      %560 = vmatpush2.msra.mxu0 0.0
      %561 = vmatprep.subr.mxu0 0.0
      %562 = vmatpush2.msra.mxu0 0.0
      %563 = vmatprep.subr.mxu0 0.0
      %564 = vmatpush2.msra.mxu0 0.0
      %565 = vmatprep.subr.mxu0 0.0
      %566 = vmatpush2.msra.mxu0 0.0
      %567 = vmatprep.subr.mxu0 0.0
      %568 = vmatpush2.msra.mxu0 0.0
      %569 = vmatprep.subr.mxu0 0.0
      %570 = vmatpush2.msra.mxu0 0.0
      %571 = vmatprep.subr.mxu0 0.0
      %572 = vmatpush2.msra.mxu0 0.0
      %573 = vmatprep.subr.mxu0 0.0
      %574 = vmatpush2.msra.mxu0 0.0
      %575 = vmatprep.subr.mxu0 0.0
      %576 = vmatpush2.msra.mxu0 0.0
      %577 = vmatprep.mubr.f32.mxu0 0.0
      %578 = vmatmul.mubr.f32.gmra.mxu0 %v505
      %v579 = vpop.f32.mrf.mxu0
      %v580 = vadd.f32 0.0, %v579
      %v581 = vpop.f32.mrf.mxu0
      %582 = vmatprep.mubr.f32.mxu0 0.0
      %583 = vmatmul.mubr.f32.gmra.mxu0 %v508
      %v584 = vpop.f32.mrf.mxu0
      %v585 = vadd.f32 0.0, %v584
      %v586 = vpop.f32.mrf.mxu0
      %587 = vmatprep.mubr.f32.mxu0 0.0
      %588 = vmatmul.mubr.f32.gmra.mxu0 %v511
      %v589 = vpop.f32.mrf.mxu0
      %v590 = vadd.f32 0.0, %v589
      %v591 = vpop.f32.mrf.mxu0
      %592 = vdwg.mxu0
      %v593 = vmax.f32 %v580, 0.0
      %v594 = vmax.f32 %v585, 0.0
      %v595 = vmax.f32 %v590, 0.0
      %v596 = vld [vmem:[%s3] sm:$0xff]
      %v597 = vld [vmem:[%s3 + $0x8] sm:$0xff]
      %v598 = vld [vmem:[%s3 + $0x10] sm:$0xff]
      %v599 = vld [vmem:[%s3 + $0x18] sm:$0xff]
      %v600 = vld [vmem:[%s3 + $0x20] sm:$0xff]
      %v601 = vld [vmem:[%s3 + $0x28] sm:$0xff]
      %v602 = vld [vmem:[%s3 + $0x30] sm:$0xff]
      %v603 = vld [vmem:[%s3 + $0x38] sm:$0xff]
      %v604 = vld [vmem:[%s3 + $0x40] sm:$0xff]
      %v605 = vld [vmem:[%s3 + $0x48] sm:$0xff]
      %v606 = vld [vmem:[%s3 + $0x50] sm:$0xff]
      %v607 = vld [vmem:[%s3 + $0x58] sm:$0xff]
      %vm608 = vcmask 195584
      %v610 = vsel %vm608, %v596, 0
      %v613 = vsel %vm608, %v597, 0
      %v616 = vsel %vm608, %v598, 0
      %v619 = vsel %vm608, %v599, 0
      %v622 = vsel %vm608, %v600, 0
      %v625 = vsel %vm608, %v601, 0
      %v628 = vsel %vm608, %v602, 0
      %v631 = vsel %vm608, %v603, 0
      %v634 = vsel %vm608, %v604, 0
      %v637 = vsel %vm608, %v605, 0
      %v640 = vsel %vm608, %v606, 0
      %v643 = vsel %vm608, %v607, 0
      %645 = vmatprep.subr.mxu0 0.0
      %646 = vmatpush1.msra.mxu0 0.0
      %647 = vmatprep.subr.mxu0 0.0
      %648 = vmatpush1.msra.mxu0 0.0
      %649 = vmatprep.subr.mxu0 0.0
      %650 = vmatpush1.msra.mxu0 0.0
      %651 = vmatprep.subr.mxu0 0.0
      %652 = vmatpush1.msra.mxu0 0.0
      %653 = vmatprep.subr.mxu0 0.0
      %654 = vmatpush1.msra.mxu0 0.0
      %655 = vmatprep.subr.mxu0 0.0
      %656 = vmatpush1.msra.mxu0 0.0
      %657 = vmatprep.subr.mxu0 0.0
      %658 = vmatpush1.msra.mxu0 0.0
      %659 = vmatprep.subr.mxu0 0.0
      %660 = vmatpush1.msra.mxu0 0.0
      %661 = vmatprep.subr.mxu0 0.0
      %662 = vmatpush1.msra.mxu0 0.0
      %663 = vmatprep.subr.mxu0 0.0
      %664 = vmatpush1.msra.mxu0 0.0
      %665 = vmatprep.subr.mxu0 0.0
      %666 = vmatpush1.msra.mxu0 0.0
      %667 = vmatprep.subr.mxu0 0.0
      %668 = vmatpush1.msra.mxu0 0.0
      %669 = vmatprep.subr.mxu0 0.0
      %670 = vmatpush1.msra.mxu0 0.0
      %671 = vmatprep.subr.mxu0 0.0
      %672 = vmatpush1.msra.mxu0 %v595
      %673 = vmatprep.subr.mxu0 0.0
      %674 = vmatpush1.msra.mxu0 %v594
      %675 = vmatprep.subr.mxu0 0.0
      %676 = vmatpush1.msra.mxu0 %v593
      %677 = vmatprep.subr.mxu0 0.0
      %678 = vmatpush2.msra.mxu0 0.0
      %679 = vmatprep.subr.mxu0 0.0
      %680 = vmatpush2.msra.mxu0 0.0
      %681 = vmatprep.subr.mxu0 0.0
      %682 = vmatpush2.msra.mxu0 0.0
      %683 = vmatprep.subr.mxu0 0.0
      %684 = vmatpush2.msra.mxu0 0.0
      %685 = vmatprep.subr.mxu0 0.0
      %686 = vmatpush2.msra.mxu0 0.0
      %687 = vmatprep.subr.mxu0 0.0
      %688 = vmatpush2.msra.mxu0 0.0
      %689 = vmatprep.subr.mxu0 0.0
      %690 = vmatpush2.msra.mxu0 0.0
      %691 = vmatprep.subr.mxu0 0.0
      %692 = vmatpush2.msra.mxu0 0.0
      %693 = vmatprep.subr.mxu0 0.0
      %694 = vmatpush2.msra.mxu0 0.0
      %695 = vmatprep.subr.mxu0 0.0
      %696 = vmatpush2.msra.mxu0 0.0
      %697 = vmatprep.subr.mxu0 0.0
      %698 = vmatpush2.msra.mxu0 0.0
      %699 = vmatprep.subr.mxu0 0.0
      %700 = vmatpush2.msra.mxu0 0.0
      %701 = vmatprep.subr.mxu0 0.0
      %702 = vmatpush2.msra.mxu0 0.0
      %703 = vmatprep.subr.mxu0 0.0
      %704 = vmatpush2.msra.mxu0 0.0
      %705 = vmatprep.subr.mxu0 0.0
      %706 = vmatpush2.msra.mxu0 0.0
      %707 = vmatprep.subr.mxu0 0.0
      %708 = vmatpush2.msra.mxu0 0.0
      %709 = vmatprep.mubr.f32.mxu0 0.0
      %710 = vmatmul.mubr.f32.gmra.mxu0 %v610
      %v711 = vpop.f32.mrf.mxu0
      %v712 = vadd.f32 0.0, %v711
      %v713 = vpop.f32.mrf.mxu0
      %714 = vmatprep.mubr.f32.mxu0 0.0
      %715 = vmatmul.mubr.f32.gmra.mxu0 %v613
      %v716 = vpop.f32.mrf.mxu0
      %v717 = vadd.f32 0.0, %v716
      %v718 = vpop.f32.mrf.mxu0
      %719 = vmatprep.mubr.f32.mxu0 0.0
      %720 = vmatmul.mubr.f32.gmra.mxu0 %v616
      %v721 = vpop.f32.mrf.mxu0
      %v722 = vadd.f32 0.0, %v721
      %v723 = vpop.f32.mrf.mxu0
      %724 = vmatprep.mubr.f32.mxu0 0.0
      %725 = vmatmul.mubr.f32.gmra.mxu0 %v619
      %v726 = vpop.f32.mrf.mxu0
      %v727 = vadd.f32 0.0, %v726
      %v728 = vpop.f32.mrf.mxu0
      %729 = vmatprep.mubr.f32.mxu0 0.0
      %730 = vmatmul.mubr.f32.gmra.mxu0 %v622
      %v731 = vpop.f32.mrf.mxu0
      %v732 = vadd.f32 0.0, %v731
      %v733 = vpop.f32.mrf.mxu0
      %734 = vmatprep.mubr.f32.mxu0 0.0
      %735 = vmatmul.mubr.f32.gmra.mxu0 %v625
      %v736 = vpop.f32.mrf.mxu0
      %v737 = vadd.f32 0.0, %v736
      %v738 = vpop.f32.mrf.mxu0
      %739 = vmatprep.mubr.f32.mxu0 0.0
      %740 = vmatmul.mubr.f32.gmra.mxu0 %v628
      %v741 = vpop.f32.mrf.mxu0
      %v742 = vadd.f32 0.0, %v741
      %v743 = vpop.f32.mrf.mxu0
      %744 = vmatprep.mubr.f32.mxu0 0.0
      %745 = vmatmul.mubr.f32.gmra.mxu0 %v631
      %v746 = vpop.f32.mrf.mxu0
      %v747 = vadd.f32 0.0, %v746
      %v748 = vpop.f32.mrf.mxu0
      %749 = vmatprep.mubr.f32.mxu0 0.0
      %750 = vmatmul.mubr.f32.gmra.mxu0 %v634
      %v751 = vpop.f32.mrf.mxu0
      %v752 = vadd.f32 0.0, %v751
      %v753 = vpop.f32.mrf.mxu0
      %754 = vmatprep.mubr.f32.mxu0 0.0
      %755 = vmatmul.mubr.f32.gmra.mxu0 %v637
      %v756 = vpop.f32.mrf.mxu0
      %v757 = vadd.f32 0.0, %v756
      %v758 = vpop.f32.mrf.mxu0
      %759 = vmatprep.mubr.f32.mxu0 0.0
      %760 = vmatmul.mubr.f32.gmra.mxu0 %v640
      %v761 = vpop.f32.mrf.mxu0
      %v762 = vadd.f32 0.0, %v761
      %v763 = vpop.f32.mrf.mxu0
      %764 = vmatprep.mubr.f32.mxu0 0.0
      %765 = vmatmul.mubr.f32.gmra.mxu0 %v643
      %v766 = vpop.f32.mrf.mxu0
      %v767 = vadd.f32 0.0, %v766
      %v768 = vpop.f32.mrf.mxu0
      %769 = vdwg.mxu0
      %v770 = vsub.f32 0.0, %v712
      %v771 = vsub.f32 0.0, %v717
      %v772 = vsub.f32 0.0, %v722
      %v773 = vsub.f32 0.0, %v727
      %v774 = vsub.f32 0.0, %v732
      %v775 = vsub.f32 0.0, %v737
      %v776 = vsub.f32 0.0, %v742
      %v777 = vsub.f32 0.0, %v747
      %v778 = vsub.f32 0.0, %v752
      %v779 = vsub.f32 0.0, %v757
      %v780 = vsub.f32 0.0, %v762
      %v781 = vsub.f32 0.0, %v767
      %v782 = vmul.f32 %v770, 1.442695
      %v783 = vpow.pop %v782
      %v784 = vmul.f32 %v771, 1.442695
      %v785 = vpow.pop %v784
      %v786 = vmul.f32 %v772, 1.442695
      %v787 = vpow.pop %v786
      %v788 = vmul.f32 %v773, 1.442695
      %v789 = vpow.pop %v788
      %v790 = vmul.f32 %v774, 1.442695
      %v791 = vpow.pop %v790
      %v792 = vmul.f32 %v775, 1.442695
      %v793 = vpow.pop %v792
      %v794 = vmul.f32 %v776, 1.442695
      %v795 = vpow.pop %v794
      %v796 = vmul.f32 %v777, 1.442695
      %v797 = vpow.pop %v796
      %v798 = vmul.f32 %v778, 1.442695
      %v799 = vpow.pop %v798
      %v800 = vmul.f32 %v779, 1.442695
      %v801 = vpow.pop %v800
      %v802 = vmul.f32 %v780, 1.442695
      %v803 = vpow.pop %v802
      %v804 = vmul.f32 %v781, 1.442695
      %v805 = vpow.pop %v804
      %v806 = vadd.f32 %v783, 1.0
      %v807 = vadd.f32 %v785, 1.0
      %v808 = vadd.f32 %v787, 1.0
      %v809 = vadd.f32 %v789, 1.0
      %v810 = vadd.f32 %v791, 1.0
      %v811 = vadd.f32 %v793, 1.0
      %v812 = vadd.f32 %v795, 1.0
      %v813 = vadd.f32 %v797, 1.0
      %v814 = vadd.f32 %v799, 1.0
      %v815 = vadd.f32 %v801, 1.0
      %v816 = vadd.f32 %v803, 1.0
      %v817 = vadd.f32 %v805, 1.0
      %v818 = vrcp.pop %v806
      %v819 = vrcp.pop %v807
      %v820 = vrcp.pop %v808
      %v821 = vrcp.pop %v809
      %v822 = vrcp.pop %v810
      %v823 = vrcp.pop %v811
      %v824 = vrcp.pop %v812
      %v825 = vrcp.pop %v813
      %v826 = vrcp.pop %v814
      %v827 = vrcp.pop %v815
      %v828 = vrcp.pop %v816
      %v829 = vrcp.pop %v817
      %v830 = vmul.f32 %v806, %v818
      %v831 = vmul.f32 %v807, %v819
      %v832 = vmul.f32 %v808, %v820
      %v833 = vmul.f32 %v809, %v821
      %v834 = vmul.f32 %v810, %v822
      %v835 = vmul.f32 %v811, %v823
      %v836 = vmul.f32 %v812, %v824
      %v837 = vmul.f32 %v813, %v825
      %v838 = vmul.f32 %v814, %v826
      %v839 = vmul.f32 %v815, %v827
      %v840 = vmul.f32 %v816, %v828
      %v841 = vmul.f32 %v817, %v829
      %v842 = vsub.f32 2.0, %v830
      %v843 = vsub.f32 2.0, %v831
      %v844 = vsub.f32 2.0, %v832
      %v845 = vsub.f32 2.0, %v833
      %v846 = vsub.f32 2.0, %v834
      %v847 = vsub.f32 2.0, %v835
      %v848 = vsub.f32 2.0, %v836
      %v849 = vsub.f32 2.0, %v837
      %v850 = vsub.f32 2.0, %v838
      %v851 = vsub.f32 2.0, %v839
      %v852 = vsub.f32 2.0, %v840
      %v853 = vsub.f32 2.0, %v841
      %v854 = vmul.f32 %v818, %v842
      %v855 = vmul.f32 %v819, %v843
      %v856 = vmul.f32 %v820, %v844
      %v857 = vmul.f32 %v821, %v845
      %v858 = vmul.f32 %v822, %v846
      %v859 = vmul.f32 %v823, %v847
      %v860 = vmul.f32 %v824, %v848
      %v861 = vmul.f32 %v825, %v849
      %v862 = vmul.f32 %v826, %v850
      %v863 = vmul.f32 %v827, %v851
      %v864 = vmul.f32 %v828, %v852
      %v865 = vmul.f32 %v829, %v853
      %867 = vset.pattern.permute.xlu0 0
      %868 = vperm.xlu0 %867, %v854
      %v869 = vpop.permute.xlu0 %868
      %872 = vset.pattern.permute.xlu0 0
      %873 = vperm.xlu0 %872, %v855
      %v874 = vpop.permute.xlu0 %873
      %877 = vset.pattern.permute.xlu0 0
      %878 = vperm.xlu0 %877, %v856
      %v879 = vpop.permute.xlu0 %878
      %882 = vset.pattern.permute.xlu0 0
      %883 = vperm.xlu0 %882, %v857
      %v884 = vpop.permute.xlu0 %883
      %887 = vset.pattern.permute.xlu0 0
      %888 = vperm.xlu0 %887, %v858
      %v889 = vpop.permute.xlu0 %888
      %892 = vset.pattern.permute.xlu0 0
      %893 = vperm.xlu0 %892, %v859
      %v894 = vpop.permute.xlu0 %893
      %897 = vset.pattern.permute.xlu0 0
      %898 = vperm.xlu0 %897, %v860
      %v899 = vpop.permute.xlu0 %898
      %902 = vset.pattern.permute.xlu0 0
      %903 = vperm.xlu0 %902, %v861
      %v904 = vpop.permute.xlu0 %903
      %907 = vset.pattern.permute.xlu0 0
      %908 = vperm.xlu0 %907, %v862
      %v909 = vpop.permute.xlu0 %908
      %912 = vset.pattern.permute.xlu0 0
      %913 = vperm.xlu0 %912, %v863
      %v914 = vpop.permute.xlu0 %913
      %917 = vset.pattern.permute.xlu0 0
      %918 = vperm.xlu0 %917, %v864
      %v919 = vpop.permute.xlu0 %918
      %922 = vset.pattern.permute.xlu0 0
      %923 = vperm.xlu0 %922, %v865
      %v924 = vpop.permute.xlu0 %923
      %v926 = vmul.f32 %v393, %v869
      %v927 = vmul.f32 %v398, %v874
      %v928 = vmul.f32 %v403, %v879
      %v929 = vmul.f32 %v408, %v884
      %v930 = vmul.f32 %v413, %v889
      %v931 = vmul.f32 %v418, %v894
      %v932 = vmul.f32 %v423, %v899
      %v933 = vmul.f32 %v428, %v904
      %v934 = vmul.f32 %v433, %v909
      %v935 = vmul.f32 %v438, %v914
      %v936 = vmul.f32 %v443, %v919
      %v937 = vmul.f32 %v448, %v924
      %v938 = vsel %vm451, %v926, 0.0
      %v939 = vsel %vm451, %v927, 0.0
      %v940 = vadd.f32 %v938, %v939
      %v941 = vsel %vm451, %v928, 0.0
      %v942 = vadd.f32 %v940, %v941
      %v943 = vsel %vm451, %v929, 0.0
      %v944 = vadd.f32 %v942, %v943
      %v945 = vsel %vm451, %v930, 0.0
      %v946 = vadd.f32 %v944, %v945
      %v947 = vsel %vm451, %v931, 0.0
      %v948 = vadd.f32 %v946, %v947
      %v949 = vsel %vm451, %v932, 0.0
      %v950 = vadd.f32 %v948, %v949
      %v951 = vsel %vm451, %v933, 0.0
      %v952 = vadd.f32 %v950, %v951
      %v953 = vsel %vm451, %v934, 0.0
      %v954 = vadd.f32 %v952, %v953
      %v955 = vsel %vm451, %v935, 0.0
      %v956 = vadd.f32 %v954, %v955
      %v957 = vsel %vm451, %v936, 0.0
      %v958 = vadd.f32 %v956, %v957
      %v959 = vsel %vm451, %v937, 0.0
      %v960 = vadd.f32 %v958, %v959
      %v961 = vrot.slane %v960, 4
      %v962 = vadd.f32 %v960, %v961
      %v963 = vrot.slane %v962, 2
      %v964 = vadd.f32 %v962, %v963
      %v965 = vrot.slane %v964, 1
      %v966 = vadd.f32 %v964, %v965
      %v967 = vrcp.pop 96.0
      %v968 = vmul.f32 %v966, %v967
      %v969 = vsel %vm451, %v926, -inf
      %v970 = vsel %vm451, %v927, -inf
      %v971 = vsel %vm451, %v928, -inf
      %v972 = vsel %vm451, %v929, -inf
      %v973 = vsel %vm451, %v930, -inf
      %v974 = vmax.f32 %v969, %v973
      %v975 = vsel %vm451, %v931, -inf
      %v976 = vmax.f32 %v970, %v975
      %v977 = vsel %vm451, %v932, -inf
      %v978 = vmax.f32 %v971, %v977
      %v979 = vsel %vm451, %v933, -inf
      %v980 = vmax.f32 %v972, %v979
      %v981 = vsel %vm451, %v934, -inf
      %v982 = vmax.f32 %v974, %v981
      %v983 = vsel %vm451, %v935, -inf
      %v984 = vmax.f32 %v976, %v983
      %v985 = vsel %vm451, %v936, -inf
      %v986 = vmax.f32 %v978, %v985
      %v987 = vsel %vm451, %v937, -inf
      %v988 = vmax.f32 %v980, %v987
      %v989 = vmax.f32 %v982, %v984
      %v990 = vmax.f32 %v986, %v988
      %v991 = vmax.f32 %v989, %v990
      %v992 = vrot.slane %v991, 4
      %v993 = vmax.f32 %v991, %v992
      %v994 = vrot.slane %v993, 2
      %v995 = vmax.f32 %v993, %v994
      %v996 = vrot.slane %v995, 1
      %v997 = vmax.f32 %v995, %v996
      %998 = vst.msk [vmem:[%s262] sm:$0xff] %vm451, %v926
      %999 = vst.msk [vmem:[%s262 + $0x8] sm:$0xff] %vm451, %v927
      %1000 = vst.msk [vmem:[%s262 + $0x10] sm:$0xff] %vm451, %v928
      %1001 = vst.msk [vmem:[%s262 + $0x18] sm:$0xff] %vm451, %v929
      %1002 = vst.msk [vmem:[%s262 + $0x20] sm:$0xff] %vm451, %v930
      %1003 = vst.msk [vmem:[%s262 + $0x28] sm:$0xff] %vm451, %v931
      %1004 = vst.msk [vmem:[%s262 + $0x30] sm:$0xff] %vm451, %v932
      %1005 = vst.msk [vmem:[%s262 + $0x38] sm:$0xff] %vm451, %v933
      %1006 = vst.msk [vmem:[%s262 + $0x40] sm:$0xff] %vm451, %v934
      %1007 = vst.msk [vmem:[%s262 + $0x48] sm:$0xff] %vm451, %v935
      %1008 = vst.msk [vmem:[%s262 + $0x50] sm:$0xff] %vm451, %v936
      %1009 = vst.msk [vmem:[%s262 + $0x58] sm:$0xff] %vm451, %v937
      %vm1010 = vcmask 253952
      %1011 = vst.msk [vmem:[%s265] sm:$0x1] %vm1010, %v968
      %1012 = vst.msk [vmem:[%s268] sm:$0x1] %vm1010, %v997
      %p1013 = scmp.lt.s32.totalorder %s18, 1
      %s1014 = scalar_select %p1013, %s18, 1
      %s1015 = smul.addr %s1014, 12
      %s1016 = smul.addr %s1015, 8
      %s1017 = scalar_lea.vmem %s4, %s1016
      %p1018 = scmp.lt.s32.totalorder %s18, 1
      %s1019 = scalar_select %p1018, %s18, 1
      %s1020 = scalar_lea.vmem %s5, %s1019
      %p1021 = scmp.lt.s32.totalorder %s18, 1
      %s1022 = scalar_select %p1021, %s18, 1
      %s1023 = scalar_lea.vmem %s6, %s1022
      // Predicated region
      $region37: #{forward_pallas.12} parent=35 // pred_check
        %p1024 = pneg %p125
      $region38: #{forward_pallas.12} parent=35 // pred_check_branch
        %1026 = sbr.rel (%p1024) target = $region40
      $region39: #{forward_pallas.12} parent=35 // pred_region
        _
      $region40: #{forward_pallas.12} parent=35 // pred_fallthru
        _
      // Predicated region
      $region41: #{forward_pallas.12} parent=35 // pred_check
        %p1027 = pneg %p151
      $region42: #{forward_pallas.12} parent=35 // pred_check_branch
        %1029 = sbr.rel (%p1027) target = $region44
      $region43: #{forward_pallas.12} parent=35 // pred_region
        _
      $region44: #{forward_pallas.12} parent=35 // pred_fallthru
        _
      // Predicated region
      $region45: #{forward_pallas.12} parent=35 // pred_check
        %p1030 = pneg %p177
      $region46: #{forward_pallas.12} parent=35 // pred_check_branch
        %1032 = sbr.rel (%p1030) target = $region48
      $region47: #{forward_pallas.12} parent=35 // pred_region
        _
      $region48: #{forward_pallas.12} parent=35 // pred_fallthru
        _
    $region36: #{forward_pallas.12} parent=5 // pred_fallthru
      _
    %p1033 = scmp.le.s32.totalorder 2, %s13
    // Predicated region
    $region49: #{forward_pallas.12} parent=5 // pred_check
      %p1034 = pneg %p1033
    $region50: #{forward_pallas.12} parent=5 // pred_check_branch
      %1036 = sbr.rel (%p1034) target = $region52
    $region51: #{forward_pallas.12} parent=5 // pred_region
      %s1037 = ssub.s32 %s13, 2
      // Predicated region
      $region53: #{forward_pallas.12} parent=51 // pred_check
        %p1038 = pneg %p131
      $region54: #{forward_pallas.12} parent=51 // pred_check_branch
        %1040 = sbr.rel (%p1038) target = $region56
      $region55: #{forward_pallas.12} parent=51 // pred_region
        %p1041 = scmp.lt.s32.totalorder %s19, 1
        %s1042 = scalar_select %p1041, %s19, 1
        %s1043 = smul.addr %s1042, 12
        %s1044 = smul.addr %s1043, 8
        %s1045 = scalar_lea.vmem %s4, %s1044
      $region56: #{forward_pallas.12} parent=51 // pred_fallthru
        _
      // Predicated region
      $region57: #{forward_pallas.12} parent=51 // pred_check
        %p1046 = pneg %p157
      $region58: #{forward_pallas.12} parent=51 // pred_check_branch
        %1048 = sbr.rel (%p1046) target = $region60
      $region59: #{forward_pallas.12} parent=51 // pred_region
        %p1049 = scmp.lt.s32.totalorder %s19, 1
        %s1050 = scalar_select %p1049, %s19, 1
        %s1051 = scalar_lea.vmem %s5, %s1050
      $region60: #{forward_pallas.12} parent=51 // pred_fallthru
        _
      // Predicated region
      $region61: #{forward_pallas.12} parent=51 // pred_check
        %p1052 = pneg %p183
      $region62: #{forward_pallas.12} parent=51 // pred_check_branch
        %1054 = sbr.rel (%p1052) target = $region64
      $region63: #{forward_pallas.12} parent=51 // pred_region
        %p1055 = scmp.lt.s32.totalorder %s19, 1
        %s1056 = scalar_select %p1055, %s19, 1
        %s1057 = scalar_lea.vmem %s6, %s1056
      $region64: #{forward_pallas.12} parent=51 // pred_fallthru
        _
    $region52: #{forward_pallas.12} parent=5 // pred_fallthru
      _
  $region6: #{forward_pallas.12} parent=0 // loop_footer
    %s17 = sadd.s32 1, %s13
  $region7: #{forward_pallas.12} parent=0 // loop_footer_branch
    %12 = sbr.rel target = $region3
  $region8: #{forward_pallas.12} parent=0 // loop_exit
    _

// kernel: reverse
$region0: #{reverse}
  %s0 = inlined_call_operand.vmem [shape: f32[1,2,7,7], index: 0, kind: input, shape index: {}]
  %s1 = inlined_call_operand.vmem [shape: bf16[1,2,7,7], index: 1, kind: output, shape index: {}]
  %v2 = vlaneseq
  %v3 = vsub.s32 6, %v2
  %4 = vset.pattern.permute.xlu0 %v3
  $region1: #{reverse} parent=0
    #allocation0 [shape = 'u8[28672]{0}', space=vmem, size = 0x7000, scoped, tag = 'operand span for operand 0']
    #allocation1 [shape = 'u8[7168]{0}', space=vmem, size = 0x1c00, scoped, tag = 'packed  for operand 0']
    #allocation2 [shape = 'u8[28672]{0}', space=vmem, size = 0x7000, scoped, tag = 'operand span for operand 1']
    #allocation3 [shape = 'u8[3584]{0}', space=vmem, size = 0x1000, scoped, tag = 'packed  for operand 1']
    // Predicated region
    $region2: #{reverse} parent=1 // pred_check
      _
    $region3: #{reverse} parent=1 // pred_check_branch
      %6 = sbr.rel (0) target = $region5
    $region4: #{reverse} parent=1 // pred_region
      // Predicated region
      $region6: #{reverse} parent=4 // pred_check
        _
      $region7: #{reverse} parent=4 // pred_check_branch
        %8 = sbr.rel target = $region9
      $region8: #{reverse} parent=4 // pred_region
        // Predicated region
        $region21: #{reverse} parent=8 // pred_check
          _
        $region22: #{reverse} parent=8 // pred_check_branch
          %36 = sbr.rel (0) target = $region24
        $region23: #{reverse} parent=8 // pred_region
          loop: start=0, step=1, limit=1
          $region25: #{reverse} parent=23 // loop_pre_header
            _
          $region26: #{reverse} parent=23 // loop_header
            %s38 = sphi 0, %s42
            %p39 = scmp.ge.s32.totalorder %s38, 1
            %s43 = sphi %s0, %s0
            %s44 = sphi [#allocation1], [#allocation1]
          $region27: #{reverse} parent=23 // loop_header_branch
            %41 = sbr.rel (%p39) target = $region31
          $region28: #{reverse} parent=23 // loop_body
            _
          $region29: #{reverse} parent=23 // loop_footer
            %s42 = sadd.s32 1, %s38
          $region30: #{reverse} parent=23 // loop_footer_branch
            %37 = sbr.rel target = $region26
          $region31: #{reverse} parent=23 // loop_exit
            _
          %s46 = ssub.s32 4, 1
          loop: start=0, step=1, limit=1
          $region32: #{reverse} parent=23 // loop_pre_header
            _
          $region33: #{reverse} parent=23 // loop_header
            %s48 = sphi 0, %s52
            %p49 = scmp.ge.s32.totalorder %s48, 1
            %s53 = sphi %s0, %s0
            %s54 = sphi [#allocation1], [#allocation1]
          $region34: #{reverse} parent=23 // loop_header_branch
            %51 = sbr.rel (%p49) target = $region38
          $region35: #{reverse} parent=23 // loop_body
            %v55 = vld [vmem:[%s53] sm:%s46]
            %56 = vst [vmem:[%s54] sm:%s46] %v55
            %v57 = vld [vmem:[%s53 + $0x2] sm:%s46]
            %58 = vst [vmem:[%s54 + $0x2] sm:%s46] %v57
            %v59 = vld [vmem:[%s53 + $0x4] sm:%s46]
            %60 = vst [vmem:[%s54 + $0x4] sm:%s46] %v59
            %v61 = vld [vmem:[%s53 + $0x6] sm:%s46]
            %62 = vst [vmem:[%s54 + $0x6] sm:%s46] %v61
            %v63 = vld [vmem:[%s53 + $0x8] sm:%s46]
            %64 = vst [vmem:[%s54 + $0x8] sm:%s46] %v63
            %v65 = vld [vmem:[%s53 + $0xa] sm:%s46]
            %66 = vst [vmem:[%s54 + $0xa] sm:%s46] %v65
            %v67 = vld [vmem:[%s53 + $0xc] sm:%s46]
            %68 = vst [vmem:[%s54 + $0xc] sm:%s46] %v67
          $region36: #{reverse} parent=23 // loop_footer
            %s52 = sadd.s32 1, %s48
          $region37: #{reverse} parent=23 // loop_footer_branch
            %47 = sbr.rel target = $region33
          $region38: #{reverse} parent=23 // loop_exit
            _
        $region24: #{reverse} parent=8 // pred_fallthru
          _
      $region9: #{reverse} parent=4 // pred_fallthru
        _
      // Predicated region
      $region10: #{reverse} parent=4 // pred_check
        _
      $region11: #{reverse} parent=4 // pred_check_branch
        %10 = sbr.rel (0) target = $region13
      $region12: #{reverse} parent=4 // pred_region
        %s12 = ssub.s32 4, 1
        loop: start=0, step=1, limit=1
        $region14: #{reverse} parent=12 // loop_pre_header
          _
        $region15: #{reverse} parent=12 // loop_header
          %s14 = sphi 0, %s18
          %p15 = scmp.ge.s32.totalorder %s14, 1
          %s19 = sphi %s0, %s0
          %s20 = sphi [#allocation1], [#allocation1]
        $region16: #{reverse} parent=12 // loop_header_branch
          %17 = sbr.rel (%p15) target = $region20
        $region17: #{reverse} parent=12 // loop_body
          %v21 = vld [vmem:[%s19] sm:%s12]
          %22 = vst [vmem:[%s20] sm:%s12] %v21
          %v23 = vld [vmem:[%s19 + $0x2] sm:%s12]
          %24 = vst [vmem:[%s20 + $0x2] sm:%s12] %v23
          %v25 = vld [vmem:[%s19 + $0x4] sm:%s12]
          %26 = vst [vmem:[%s20 + $0x4] sm:%s12] %v25
          %v27 = vld [vmem:[%s19 + $0x6] sm:%s12]
          %28 = vst [vmem:[%s20 + $0x6] sm:%s12] %v27
          %v29 = vld [vmem:[%s19 + $0x8] sm:%s12]
          %30 = vst [vmem:[%s20 + $0x8] sm:%s12] %v29
          %v31 = vld [vmem:[%s19 + $0xa] sm:%s12]
          %32 = vst [vmem:[%s20 + $0xa] sm:%s12] %v31
          %v33 = vld [vmem:[%s19 + $0xc] sm:%s12]
          %34 = vst [vmem:[%s20 + $0xc] sm:%s12] %v33
        $region18: #{reverse} parent=12 // loop_footer
          %s18 = sadd.s32 1, %s14
        $region19: #{reverse} parent=12 // loop_footer_branch
          %13 = sbr.rel target = $region15
        $region20: #{reverse} parent=12 // loop_exit
          _
      $region13: #{reverse} parent=4 // pred_fallthru
        _
    $region5: #{reverse} parent=1 // pred_fallthru
      _
    %69 = vnop
    %s71 = sshll.u32 1, 2
    %s72 = ssub.s32 %s71, 1
    %s73 = smul.addr 2, 6
    %s74 = scalar_lea.vmem [#allocation1], %s73
    %v75 = vld [vmem:[%s74] sm:%s72]
    %s76 = scalar_lea.vmem [#allocation0], 48
    %77 = vst [vmem:[%s76] sm:%s72] %v75
    %s78 = smul.addr 2, 5
    %s79 = scalar_lea.vmem [#allocation1], %s78
    %v80 = vld [vmem:[%s79] sm:%s72]
    %s81 = scalar_lea.vmem [#allocation0], 40
    %82 = vst [vmem:[%s81] sm:%s72] %v80
    %s83 = smul.addr 2, 4
    %s84 = scalar_lea.vmem [#allocation1], %s83
    %v85 = vld [vmem:[%s84] sm:%s72]
    %s86 = scalar_lea.vmem [#allocation0], 32
    %87 = vst [vmem:[%s86] sm:%s72] %v85
    %s88 = smul.addr 2, 3
    %s89 = scalar_lea.vmem [#allocation1], %s88
    %v90 = vld [vmem:[%s89] sm:%s72]
    %s91 = scalar_lea.vmem [#allocation0], 24
    %92 = vst [vmem:[%s91] sm:%s72] %v90
    %s93 = smul.addr 2, 2
    %s94 = scalar_lea.vmem [#allocation1], %s93
    %v95 = vld [vmem:[%s94] sm:%s72]
    %s96 = scalar_lea.vmem [#allocation0], 16
    %97 = vst [vmem:[%s96] sm:%s72] %v95
    %s98 = scalar_lea.vmem [#allocation1], 2
    %v99 = vld [vmem:[%s98] sm:%s72]
    %s100 = scalar_lea.vmem [#allocation0], 8
    %101 = vst [vmem:[%s100] sm:%s72] %v99
    %v102 = vld [vmem:[#allocation1] sm:%s72]
    %103 = vst [vmem:[#allocation0] sm:%s72] %v102
    %s104 = scalar_lea.vmem [#allocation0], 48
    %v105 = vld [vmem:[%s104] sm:$0xff]
    %106 = vperm.xlu0 %4, %v105
    %v107 = vpop.permute.xlu0 %106
    %108 = vst [vmem:[#allocation2] sm:$0xff] %v107
    %s109 = scalar_lea.vmem [#allocation2], 8
    %s110 = scalar_lea.vmem [#allocation0], 40
    %v111 = vld [vmem:[%s110] sm:$0xff]
    %112 = vperm.xlu0 %4, %v111
    %v113 = vpop.permute.xlu0 %112
    %114 = vst [vmem:[%s109] sm:$0xff] %v113
    %s115 = scalar_lea.vmem [#allocation2], 16
    %s116 = scalar_lea.vmem [#allocation0], 32
    %v117 = vld [vmem:[%s116] sm:$0xff]
    %118 = vperm.xlu0 %4, %v117
    %v119 = vpop.permute.xlu0 %118
    %120 = vst [vmem:[%s115] sm:$0xff] %v119
    %s121 = scalar_lea.vmem [#allocation2], 24
    %s122 = scalar_lea.vmem [#allocation0], 24
    %v123 = vld [vmem:[%s122] sm:$0xff]
    %124 = vperm.xlu0 %4, %v123
    %v125 = vpop.permute.xlu0 %124
    %126 = vst [vmem:[%s121] sm:$0xff] %v125
    %s127 = scalar_lea.vmem [#allocation2], 32
    %s128 = scalar_lea.vmem [#allocation0], 16
    %v129 = vld [vmem:[%s128] sm:$0xff]
    %130 = vperm.xlu0 %4, %v129
    %v131 = vpop.permute.xlu0 %130
    %132 = vst [vmem:[%s127] sm:$0xff] %v131
    %s133 = scalar_lea.vmem [#allocation2], 40
    %s134 = scalar_lea.vmem [#allocation0], 8
    %v135 = vld [vmem:[%s134] sm:$0xff]
    %136 = vperm.xlu0 %4, %v135
    %v137 = vpop.permute.xlu0 %136
    %138 = vst [vmem:[%s133] sm:$0xff] %v137
    %s139 = scalar_lea.vmem [#allocation2], 48
    %v140 = vld [vmem:[#allocation0] sm:$0xff]
    %141 = vperm.xlu0 %4, %v140
    %v142 = vpop.permute.xlu0 %141
    %143 = vst [vmem:[%s139] sm:$0xff] %v142
    %s145 = smul.u32 1, 2
    %s146 = sshll.u32 1, %s145
    %s147 = ssub.s32 %s146, 1
    %s148 = sshrl.u32 %s145, 1
    %v149 = vld [vmem:[#allocation2] sm:%s147]
    %v150 = vpack.c.bf16 0.0, %v149
    %s151 = sshll.u32 1, %s148
    %s152 = ssub.s32 %s151, 1
    %153 = vst [vmem:[#allocation3] sm:%s152] %v150
    %s154 = scalar_lea.vmem [#allocation2], 8
    %v155 = vld [vmem:[%s154] sm:%s147]
    %v156 = vpack.c.bf16 0.0, %v155
    %s157 = sshll.u32 1, %s148
    %s158 = ssub.s32 %s157, 1
    %s159 = scalar_lea.vmem [#allocation3], 1
    %160 = vst [vmem:[%s159] sm:%s158] %v156
    %s161 = scalar_lea.vmem [#allocation2], 16
    %v162 = vld [vmem:[%s161] sm:%s147]
    %v163 = vpack.c.bf16 0.0, %v162
    %s164 = sshll.u32 1, %s148
    %s165 = ssub.s32 %s164, 1
    %s166 = smul.addr 1, 2
    %s167 = scalar_lea.vmem [#allocation3], %s166
    %168 = vst [vmem:[%s167] sm:%s165] %v163
    %s169 = scalar_lea.vmem [#allocation2], 24
    %v170 = vld [vmem:[%s169] sm:%s147]
    %v171 = vpack.c.bf16 0.0, %v170
    %s172 = sshll.u32 1, %s148
    %s173 = ssub.s32 %s172, 1
    %s174 = smul.addr 1, 3
    %s175 = scalar_lea.vmem [#allocation3], %s174
    %176 = vst [vmem:[%s175] sm:%s173] %v171
    %s177 = scalar_lea.vmem [#allocation2], 32
    %v178 = vld [vmem:[%s177] sm:%s147]
    %v179 = vpack.c.bf16 0.0, %v178
    %s180 = sshll.u32 1, %s148
    %s181 = ssub.s32 %s180, 1
    %s182 = smul.addr 1, 4
    %s183 = scalar_lea.vmem [#allocation3], %s182
    %184 = vst [vmem:[%s183] sm:%s181] %v179
    %s185 = scalar_lea.vmem [#allocation2], 40
    %v186 = vld [vmem:[%s185] sm:%s147]
    %v187 = vpack.c.bf16 0.0, %v186
    %s188 = sshll.u32 1, %s148
    %s189 = ssub.s32 %s188, 1
    %s190 = smul.addr 1, 5
    %s191 = scalar_lea.vmem [#allocation3], %s190
    %192 = vst [vmem:[%s191] sm:%s189] %v187
    %s193 = scalar_lea.vmem [#allocation2], 48
    %v194 = vld [vmem:[%s193] sm:%s147]
    %v195 = vpack.c.bf16 0.0, %v194
    %s196 = sshll.u32 1, %s148
    %s197 = ssub.s32 %s196, 1
    %s198 = smul.addr 1, 6
    %s199 = scalar_lea.vmem [#allocation3], %s198
    %200 = vst [vmem:[%s199] sm:%s197] %v195
    // Predicated region
    $region39: #{reverse} parent=1 // pred_check
      _
    $region40: #{reverse} parent=1 // pred_check_branch
      %202 = sbr.rel (0) target = $region42
    $region41: #{reverse} parent=1 // pred_region
      // Predicated region
      $region43: #{reverse} parent=41 // pred_check
        _
      $region44: #{reverse} parent=41 // pred_check_branch
        %204 = sbr.rel target = $region46
      $region45: #{reverse} parent=41 // pred_region
        // Predicated region
        $region58: #{reverse} parent=45 // pred_check
          _
        $region59: #{reverse} parent=45 // pred_check_branch
          %220 = sbr.rel (0) target = $region61
        $region60: #{reverse} parent=45 // pred_region
          %s222 = ssub.s32 128, 1
          loop: start=0, step=1, limit=1
          $region62: #{reverse} parent=60 // loop_pre_header
            _
          $region63: #{reverse} parent=60 // loop_header
            %s224 = sphi 0, %s228
            %p225 = scmp.ge.s32.totalorder %s224, 1
            %s229 = sphi [#allocation3], [#allocation3]
            %s230 = sphi %s1, %s1
          $region64: #{reverse} parent=60 // loop_header_branch
            %227 = sbr.rel (%p225) target = $region68
          $region65: #{reverse} parent=60 // loop_body
            %v231 = vld [vmem:[%s229] sm:%s222]
            %232 = vst [vmem:[%s230] sm:%s222] %v231
          $region66: #{reverse} parent=60 // loop_footer
            %s228 = sadd.s32 1, %s224
          $region67: #{reverse} parent=60 // loop_footer_branch
            %223 = sbr.rel target = $region63
          $region68: #{reverse} parent=60 // loop_exit
            _
        $region61: #{reverse} parent=45 // pred_fallthru
          _
      $region46: #{reverse} parent=41 // pred_fallthru
        _
      // Predicated region
      $region47: #{reverse} parent=41 // pred_check
        _
      $region48: #{reverse} parent=41 // pred_check_branch
        %206 = sbr.rel (0) target = $region50
      $region49: #{reverse} parent=41 // pred_region
        %s208 = ssub.s32 128, 1
        loop: start=0, step=1, limit=1
        $region51: #{reverse} parent=49 // loop_pre_header
          _
        $region52: #{reverse} parent=49 // loop_header
          %s210 = sphi 0, %s214
          %p211 = scmp.ge.s32.totalorder %s210, 1
          %s215 = sphi [#allocation3], [#allocation3]
          %s216 = sphi %s1, %s1
        $region53: #{reverse} parent=49 // loop_header_branch
          %213 = sbr.rel (%p211) target = $region57
        $region54: #{reverse} parent=49 // loop_body
          %v217 = vld [vmem:[%s215] sm:%s208]
          %218 = vst [vmem:[%s216] sm:%s208] %v217
        $region55: #{reverse} parent=49 // loop_footer
          %s214 = sadd.s32 1, %s210
        $region56: #{reverse} parent=49 // loop_footer_branch
          %209 = sbr.rel target = $region52
        $region57: #{reverse} parent=49 // loop_exit
          _
      $region50: #{reverse} parent=41 // pred_fallthru
        _
    $region42: #{reverse} parent=1 // pred_fallthru
      _
    %233 = vnop

// kernel: forward_pallas.13
$region0: #{forward_pallas.13}
  #allocation0 [shape = 'u32[]', space=smem, size = 0x4, offset = 0x4, fixed_abs, tag = 'smem constant byte address 0x4 - core index']
  #allocation1 [shape = 'u32[144,128]{1,0:T(1,128)}', space=vmem, size = 0x12000, scoped, tag = 'internal scratch']
  %s0 = inlined_call_operand.vmem [shape: f32[2,96,32], index: 0, kind: input, shape index: {}]
  %s1 = inlined_call_operand.vmem [shape: f32[2,1,32], index: 1, kind: input, shape index: {}]
  %s2 = inlined_call_operand.vmem [shape: f32[2,96,32], index: 2, kind: output, shape index: {}]
  %s3 = sld [smem:[#allocation0]]
  $region41: #{forward_pallas.13} parent=0
    _
  %s5 = ssub.s32 1, %s3
  %s6 = scalar_select 0, %s5, %s3
  loop: start=0, step=1, limit=4
  $region2: #{forward_pallas.13} parent=0 // loop_pre_header
    _
  $region3: #{forward_pallas.13} parent=0 // loop_header
    %s8 = sphi 0, %s12
    %p9 = scmp.ge.s32.totalorder %s8, 4
    %s18 = sphi 0, %s20
    %s21 = sphi 0, %s18
    %s22 = sphi 0, %s21
    %s38 = sphi 0, %s22
    %s44 = sphi 0, %s46
    %s47 = sphi 0, %s44
    %s48 = sphi 0, %s47
    %s64 = sphi 0, %s48
    %s70 = sphi 0, %s72
    %s73 = sphi 0, %s70
    %s74 = sphi 0, %s73
    %s90 = sphi 0, %s74
  $region4: #{forward_pallas.13} parent=0 // loop_header_branch
    %11 = sbr.rel (%p9) target = $region8
  $region5: #{forward_pallas.13} parent=0 // loop_body
    %s13 = ssub.s32 %s8, 1
    %s14 = ssub.s32 %s8, 2
    %s15 = sadd.s32 %s8, 1
    %s16 = ssub.s32 %s8, %s15
    %p17 = scmp.eq.s32.totalorder %s16, 0
    %s19 = sadd.s32 %s18, 1
    %s20 = scalar_select %p17, %s18, %s19
    %p23 = pneg %p17
    %p24 = scmp.eq.s32.totalorder %s8, 1
    %p25 = por %p23, %p24
    %p26 = scmp.ne.s32.totalorder %s18, %s21
    %p27 = scmp.eq.s32.totalorder %s8, 0
    %p28 = por %p26, %p27
    %p29 = scmp.ne.s32.totalorder %s18, %s21
    %p30 = scmp.eq.s32.totalorder %s13, 1
    %p31 = por %p29, %p30
    %p32 = scmp.ne.s32.totalorder %s21, %s22
    %p33 = scmp.eq.s32.totalorder %s13, 0
    %p34 = por %p32, %p33
    %p35 = scmp.ne.s32.totalorder %s21, %s22
    %p36 = scmp.eq.s32.totalorder %s14, 1
    %p37 = por %p35, %p36
    %p39 = scmp.ne.s32.totalorder %s22, %s38
    %p40 = scmp.eq.s32.totalorder %s14, 0
    %p41 = por %p39, %p40
    %s42 = ssub.s32 %s8, %s15
    %p43 = scmp.eq.s32.totalorder %s42, 0
    %s45 = sadd.s32 %s44, 1
    %s46 = scalar_select %p43, %s44, %s45
    %p49 = pneg %p43
    %p50 = scmp.eq.s32.totalorder %s8, 1
    %p51 = por %p49, %p50
    %p52 = scmp.ne.s32.totalorder %s44, %s47
    %p53 = scmp.eq.s32.totalorder %s8, 0
    %p54 = por %p52, %p53
    %p55 = scmp.ne.s32.totalorder %s44, %s47
    %p56 = scmp.eq.s32.totalorder %s13, 1
    %p57 = por %p55, %p56
    %p58 = scmp.ne.s32.totalorder %s47, %s48
    %p59 = scmp.eq.s32.totalorder %s13, 0
    %p60 = por %p58, %p59
    %p61 = scmp.ne.s32.totalorder %s47, %s48
    %p62 = scmp.eq.s32.totalorder %s14, 1
    %p63 = por %p61, %p62
    %p65 = scmp.ne.s32.totalorder %s48, %s64
    %p66 = scmp.eq.s32.totalorder %s14, 0
    %p67 = por %p65, %p66
    %s68 = ssub.s32 %s8, %s15
    %p69 = scmp.eq.s32.totalorder %s68, 0
    %s71 = sadd.s32 %s70, 1
    %s72 = scalar_select %p69, %s70, %s71
    %p75 = pneg %p69
    %p76 = scmp.eq.s32.totalorder %s8, 1
    %p77 = por %p75, %p76
    %p78 = scmp.ne.s32.totalorder %s70, %s73
    %p79 = scmp.eq.s32.totalorder %s8, 0
    %p80 = por %p78, %p79
    %p81 = scmp.ne.s32.totalorder %s70, %s73
    %p82 = scmp.eq.s32.totalorder %s13, 1
    %p83 = por %p81, %p82
    %p84 = scmp.ne.s32.totalorder %s73, %s74
    %p85 = scmp.eq.s32.totalorder %s13, 0
    %p86 = por %p84, %p85
    %p87 = scmp.ne.s32.totalorder %s73, %s74
    %p88 = scmp.eq.s32.totalorder %s14, 1
    %p89 = por %p87, %p88
    %p91 = scmp.ne.s32.totalorder %s74, %s90
    %p92 = scmp.eq.s32.totalorder %s14, 0
    %p93 = por %p91, %p92
    %p94 = scmp.le.s32.totalorder 1, %s8
    %p95 = scmp.lt.s32.totalorder %s8, 3
    %p96 = pnand %p94, %p95
    %p97 = pneg %p96
    // Predicated region
    $region9: #{forward_pallas.13} parent=5 // pred_check
      _
    $region10: #{forward_pallas.13} parent=5 // pred_check_branch
      %99 = sbr.rel (%p96) target = $region12
    $region11: #{forward_pallas.13} parent=5 // pred_region
      %s100 = ssub.s32 %s8, 1
    $region12: #{forward_pallas.13} parent=5 // pred_fallthru
      _
    %p101 = scmp.lt.s32.totalorder %s8, 2
    // Predicated region
    $region13: #{forward_pallas.13} parent=5 // pred_check
      %p102 = pneg %p101
    $region14: #{forward_pallas.13} parent=5 // pred_check_branch
      %104 = sbr.rel (%p102) target = $region16
    $region15: #{forward_pallas.13} parent=5 // pred_region
      // Predicated region
      $region17: #{forward_pallas.13} parent=15 // pred_check
        %p105 = pneg %p28
      $region18: #{forward_pallas.13} parent=15 // pred_check_branch
        %107 = sbr.rel (%p105) target = $region20
      $region19: #{forward_pallas.13} parent=15 // pred_region
        %p108 = scmp.lt.s32.totalorder %s8, 1
        %s109 = scalar_select %p108, %s8, 1
        %s110 = smul.addr %s109, 12
        %s111 = smul.addr %s110, 8
        %s112 = scalar_lea.vmem %s0, %s111
      $region20: #{forward_pallas.13} parent=15 // pred_fallthru
        _
      // Predicated region
      $region21: #{forward_pallas.13} parent=15 // pred_check
        %p113 = pneg %p54
      $region22: #{forward_pallas.13} parent=15 // pred_check_branch
        %115 = sbr.rel (%p113) target = $region24
      $region23: #{forward_pallas.13} parent=15 // pred_region
        %p116 = scmp.lt.s32.totalorder %s8, 1
        %s117 = scalar_select %p116, %s8, 1
        %s118 = scalar_lea.vmem %s1, %s117
      $region24: #{forward_pallas.13} parent=15 // pred_fallthru
        _
    $region16: #{forward_pallas.13} parent=5 // pred_fallthru
      _
    %p119 = scmp.le.s32.totalorder 1, %s8
    %p120 = scmp.lt.s32.totalorder %s8, 3
    %p121 = pnand %p119, %p120
    %p122 = pneg %p121
    // Predicated region
    $region25: #{forward_pallas.13} parent=5 // pred_check
      _
    $region26: #{forward_pallas.13} parent=5 // pred_check_branch
      %124 = sbr.rel (%p121) target = $region28
    $region27: #{forward_pallas.13} parent=5 // pred_region
      %s125 = ssub.s32 %s8, 1
      %p126 = scmp.lt.s32.totalorder %s13, 1
      %s127 = scalar_select %p126, %s13, 1
      %s128 = smul.addr %s127, 12
      %s129 = smul.addr %s128, 8
      %s130 = scalar_lea.vmem %s0, %s129
      %p131 = pneg %p34
      %p132 = pneg %p31
      %p133 = scmp.lt.s32.totalorder %s13, 1
      %s134 = scalar_select %p133, %s13, 1
      %s135 = scalar_lea.vmem %s1, %s134
      %p136 = pneg %p60
      %p137 = pneg %p57
      %p138 = pneg %p86
      %p139 = pneg %p83
      %p140 = scmp.lt.s32.totalorder %s13, 1
      %s141 = scalar_select %p140, %s13, 1
      %s142 = smul.addr %s141, 12
      %s143 = smul.addr %s142, 8
      %s144 = scalar_lea.vmem %s2, %s143
      %p145 = scmp.lt.s32.totalorder %s13, 1
      %s146 = scalar_select %p145, %s13, 1
      %s147 = smul.addr %s146, 12
      %s148 = smul.addr %s147, 8
      %s149 = scalar_lea.vmem %s0, %s148
      %p150 = scmp.lt.s32.totalorder %s13, 1
      %s151 = scalar_select %p150, %s13, 1
      %s152 = scalar_lea.vmem %s1, %s151
      %p153 = scmp.lt.s32.totalorder %s13, 1
      %s154 = scalar_select %p153, %s13, 1
      %s155 = smul.addr %s154, 12
      %s156 = smul.addr %s155, 8
      %s157 = scalar_lea.vmem %s2, %s156
      %v158 = vld [vmem:[%s149] sm:$0xff]
      %v159 = vld [vmem:[%s149 + $0x8] sm:$0xff]
      %v160 = vld [vmem:[%s149 + $0x10] sm:$0xff]
      %v161 = vld [vmem:[%s149 + $0x18] sm:$0xff]
      %v162 = vld [vmem:[%s149 + $0x20] sm:$0xff]
      %v163 = vld [vmem:[%s149 + $0x28] sm:$0xff]
      %v164 = vld [vmem:[%s149 + $0x30] sm:$0xff]
      %v165 = vld [vmem:[%s149 + $0x38] sm:$0xff]
      %v166 = vld [vmem:[%s149 + $0x40] sm:$0xff]
      %v167 = vld [vmem:[%s149 + $0x48] sm:$0xff]
      %v168 = vld [vmem:[%s149 + $0x50] sm:$0xff]
      %v169 = vld [vmem:[%s149 + $0x58] sm:$0xff]
      %v170 = vld [vmem:[%s152] sm:$0x1]
      %v171 = vsub.f32 0.0, %v170
      %v172 = vmul.f32 %v171, 1.442695
      %v173 = vpow.pop %v172
      %v174 = vadd.f32 %v173, 1.0
      %v175 = vrcp.pop %v174
      %v176 = vmul.f32 %v174, %v175
      %v177 = vsub.f32 2.0, %v176
      %v178 = vmul.f32 %v175, %v177
      %v180 = vlaneseq
      %v181 = vshrl.u32 %v180, 7
      %v182 = vsub.s32 0, %v181
      %v183 = vrot.slane %v178, %v182
      %v185 = vmul.f32 %v158, %v183
      %v186 = vmul.f32 %v159, %v183
      %v187 = vmul.f32 %v160, %v183
      %v188 = vmul.f32 %v161, %v183
      %v189 = vmul.f32 %v162, %v183
      %v190 = vmul.f32 %v163, %v183
      %v191 = vmul.f32 %v164, %v183
      %v192 = vmul.f32 %v165, %v183
      %v193 = vmul.f32 %v166, %v183
      %v194 = vmul.f32 %v167, %v183
      %v195 = vmul.f32 %v168, %v183
      %v196 = vmul.f32 %v169, %v183
      %vm197 = vcmask 261120
      %198 = vst.msk [vmem:[%s157] sm:$0xff] %vm197, %v185
      %199 = vst.msk [vmem:[%s157 + $0x8] sm:$0xff] %vm197, %v186
      %200 = vst.msk [vmem:[%s157 + $0x10] sm:$0xff] %vm197, %v187
      %201 = vst.msk [vmem:[%s157 + $0x18] sm:$0xff] %vm197, %v188
      %202 = vst.msk [vmem:[%s157 + $0x20] sm:$0xff] %vm197, %v189
      %203 = vst.msk [vmem:[%s157 + $0x28] sm:$0xff] %vm197, %v190
      %204 = vst.msk [vmem:[%s157 + $0x30] sm:$0xff] %vm197, %v191
      %205 = vst.msk [vmem:[%s157 + $0x38] sm:$0xff] %vm197, %v192
      %206 = vst.msk [vmem:[%s157 + $0x40] sm:$0xff] %vm197, %v193
      %207 = vst.msk [vmem:[%s157 + $0x48] sm:$0xff] %vm197, %v194
      %208 = vst.msk [vmem:[%s157 + $0x50] sm:$0xff] %vm197, %v195
      %209 = vst.msk [vmem:[%s157 + $0x58] sm:$0xff] %vm197, %v196
      %p210 = scmp.lt.s32.totalorder %s13, 1
      %s211 = scalar_select %p210, %s13, 1
      %s212 = smul.addr %s211, 12
      %s213 = smul.addr %s212, 8
      %s214 = scalar_lea.vmem %s2, %s213
      // Predicated region
      $region29: #{forward_pallas.13} parent=27 // pred_check
        %p215 = pneg %p83
      $region30: #{forward_pallas.13} parent=27 // pred_check_branch
        %217 = sbr.rel (%p215) target = $region32
      $region31: #{forward_pallas.13} parent=27 // pred_region
        _
      $region32: #{forward_pallas.13} parent=27 // pred_fallthru
        _
    $region28: #{forward_pallas.13} parent=5 // pred_fallthru
      _
    %p218 = scmp.le.s32.totalorder 2, %s8
    // Predicated region
    $region33: #{forward_pallas.13} parent=5 // pred_check
      %p219 = pneg %p218
    $region34: #{forward_pallas.13} parent=5 // pred_check_branch
      %221 = sbr.rel (%p219) target = $region36
    $region35: #{forward_pallas.13} parent=5 // pred_region
      %s222 = ssub.s32 %s8, 2
      // Predicated region
      $region37: #{forward_pallas.13} parent=35 // pred_check
        %p223 = pneg %p89
      $region38: #{forward_pallas.13} parent=35 // pred_check_branch
        %225 = sbr.rel (%p223) target = $region40
      $region39: #{forward_pallas.13} parent=35 // pred_region
        %p226 = scmp.lt.s32.totalorder %s14, 1
        %s227 = scalar_select %p226, %s14, 1
        %s228 = smul.addr %s227, 12
        %s229 = smul.addr %s228, 8
        %s230 = scalar_lea.vmem %s2, %s229
      $region40: #{forward_pallas.13} parent=35 // pred_fallthru
        _
    $region36: #{forward_pallas.13} parent=5 // pred_fallthru
      _
  $region6: #{forward_pallas.13} parent=0 // loop_footer
    %s12 = sadd.s32 1, %s8
  $region7: #{forward_pallas.13} parent=0 // loop_footer_branch
    %7 = sbr.rel target = $region3
  $region8: #{forward_pallas.13} parent=0 // loop_exit
    _

// kernel: forward_pallas.14
$region0: #{forward_pallas.14}
  #allocation0 [shape = 'u32[]', space=smem, size = 0x4, offset = 0x4, fixed_abs, tag = 'smem constant byte address 0x4 - core index']
  #allocation1 [shape = 'u32[144,128]{1,0:T(1,128)}', space=vmem, size = 0x12000, scoped, tag = 'internal scratch']
  %s0 = inlined_call_operand.vmem [shape: f32[2,96,4], index: 0, kind: input, shape index: {}]
  %s1 = inlined_call_operand.vmem [shape: f32[192,96], index: 1, kind: input, shape index: {}]
  %s2 = inlined_call_operand.vmem [shape: f32[48,192], index: 2, kind: input, shape index: {}]
  %s3 = inlined_call_operand.vmem [shape: f32[192,48], index: 3, kind: input, shape index: {}]
  %s4 = inlined_call_operand.vmem [shape: f32[2,192,4], index: 4, kind: output, shape index: {0}]
  %s5 = inlined_call_operand.vmem [shape: f32[2,1,4], index: 5, kind: output, shape index: {1}]
  %s6 = inlined_call_operand.vmem [shape: f32[2,1,4], index: 6, kind: output, shape index: {2}]
  %7 = xla_tuple %s4, %s5, %s6
  %s8 = sld [smem:[#allocation0]]
  $region65: #{forward_pallas.14} parent=0
    _
  %s10 = ssub.s32 1, %s8
  %s11 = scalar_select 0, %s10, %s8
  loop: start=0, step=1, limit=4
  $region2: #{forward_pallas.14} parent=0 // loop_pre_header
    _
  $region3: #{forward_pallas.14} parent=0 // loop_header
    %s13 = sphi 0, %s17
    %p14 = scmp.ge.s32.totalorder %s13, 4
    %s23 = sphi 0, %s25
    %s26 = sphi 0, %s23
    %s27 = sphi 0, %s26
    %s43 = sphi 0, %s27
    %s47 = sphi 0, %s47
    %s49 = sphi 0, %s47
    %s50 = sphi 0, %s49
    %s64 = sphi 0, %s50
    %s68 = sphi 0, %s68
    %s70 = sphi 0, %s68
    %s71 = sphi 0, %s70
    %s85 = sphi 0, %s71
    %s89 = sphi 0, %s89
    %s91 = sphi 0, %s89
    %s92 = sphi 0, %s91
    %s106 = sphi 0, %s92
    %s112 = sphi 0, %s114
    %s115 = sphi 0, %s112
    %s116 = sphi 0, %s115
    %s132 = sphi 0, %s116
    %s138 = sphi 0, %s140
    %s141 = sphi 0, %s138
    %s142 = sphi 0, %s141
    %s158 = sphi 0, %s142
    %s164 = sphi 0, %s166
    %s167 = sphi 0, %s164
    %s168 = sphi 0, %s167
    %s184 = sphi 0, %s168
  $region4: #{forward_pallas.14} parent=0 // loop_header_branch
    %16 = sbr.rel (%p14) target = $region8
  $region5: #{forward_pallas.14} parent=0 // loop_body
    %s18 = ssub.s32 %s13, 1
    %s19 = ssub.s32 %s13, 2
    %s20 = sadd.s32 %s13, 1
    %s21 = ssub.s32 %s13, %s20
    %p22 = scmp.eq.s32.totalorder %s21, 0
    %s24 = sadd.s32 %s23, 1
    %s25 = scalar_select %p22, %s23, %s24
    %p28 = pneg %p22
    %p29 = scmp.eq.s32.totalorder %s13, 1
    %p30 = por %p28, %p29
    %p31 = scmp.ne.s32.totalorder %s23, %s26
    %p32 = scmp.eq.s32.totalorder %s13, 0
    %p33 = por %p31, %p32
    %p34 = scmp.ne.s32.totalorder %s23, %s26
    %p35 = scmp.eq.s32.totalorder %s18, 1
    %p36 = por %p34, %p35
    %p37 = scmp.ne.s32.totalorder %s26, %s27
    %p38 = scmp.eq.s32.totalorder %s18, 0
    %p39 = por %p37, %p38
    %p40 = scmp.ne.s32.totalorder %s26, %s27
    %p41 = scmp.eq.s32.totalorder %s19, 1
    %p42 = por %p40, %p41
    %p44 = scmp.ne.s32.totalorder %s27, %s43
    %p45 = scmp.eq.s32.totalorder %s19, 0
    %p46 = por %p44, %p45
    %s48 = sadd.s32 %s47, 1
    %p51 = scmp.eq.s32.totalorder %s13, 1
    %p52 = scmp.ne.s32.totalorder %s47, %s49
    %p53 = scmp.eq.s32.totalorder %s13, 0
    %p54 = por %p52, %p53
    %p55 = scmp.ne.s32.totalorder %s47, %s49
    %p56 = scmp.eq.s32.totalorder %s18, 1
    %p57 = por %p55, %p56
    %p58 = scmp.ne.s32.totalorder %s49, %s50
    %p59 = scmp.eq.s32.totalorder %s18, 0
    %p60 = por %p58, %p59
    %p61 = scmp.ne.s32.totalorder %s49, %s50
    %p62 = scmp.eq.s32.totalorder %s19, 1
    %p63 = por %p61, %p62
    %p65 = scmp.ne.s32.totalorder %s50, %s64
    %p66 = scmp.eq.s32.totalorder %s19, 0
    %p67 = por %p65, %p66
    %s69 = sadd.s32 %s68, 1
    %p72 = scmp.eq.s32.totalorder %s13, 1
    %p73 = scmp.ne.s32.totalorder %s68, %s70
    %p74 = scmp.eq.s32.totalorder %s13, 0
    %p75 = por %p73, %p74
    %p76 = scmp.ne.s32.totalorder %s68, %s70
    %p77 = scmp.eq.s32.totalorder %s18, 1
    %p78 = por %p76, %p77
    %p79 = scmp.ne.s32.totalorder %s70, %s71
    %p80 = scmp.eq.s32.totalorder %s18, 0
    %p81 = por %p79, %p80
    %p82 = scmp.ne.s32.totalorder %s70, %s71
    %p83 = scmp.eq.s32.totalorder %s19, 1
    %p84 = por %p82, %p83
    %p86 = scmp.ne.s32.totalorder %s71, %s85
    %p87 = scmp.eq.s32.totalorder %s19, 0
    %p88 = por %p86, %p87
    %s90 = sadd.s32 %s89, 1
    %p93 = scmp.eq.s32.totalorder %s13, 1
    %p94 = scmp.ne.s32.totalorder %s89, %s91
    %p95 = scmp.eq.s32.totalorder %s13, 0
    %p96 = por %p94, %p95
    %p97 = scmp.ne.s32.totalorder %s89, %s91
    %p98 = scmp.eq.s32.totalorder %s18, 1
    %p99 = por %p97, %p98
    %p100 = scmp.ne.s32.totalorder %s91, %s92
    %p101 = scmp.eq.s32.totalorder %s18, 0
    %p102 = por %p100, %p101
    %p103 = scmp.ne.s32.totalorder %s91, %s92
    %p104 = scmp.eq.s32.totalorder %s19, 1
    %p105 = por %p103, %p104
    %p107 = scmp.ne.s32.totalorder %s92, %s106
    %p108 = scmp.eq.s32.totalorder %s19, 0
    %p109 = por %p107, %p108
    %s110 = ssub.s32 %s13, %s20
    %p111 = scmp.eq.s32.totalorder %s110, 0
    %s113 = sadd.s32 %s112, 1
    %s114 = scalar_select %p111, %s112, %s113
    %p117 = pneg %p111
    %p118 = scmp.eq.s32.totalorder %s13, 1
    %p119 = por %p117, %p118
    %p120 = scmp.ne.s32.totalorder %s112, %s115
    %p121 = scmp.eq.s32.totalorder %s13, 0
    %p122 = por %p120, %p121
    %p123 = scmp.ne.s32.totalorder %s112, %s115
    %p124 = scmp.eq.s32.totalorder %s18, 1
    %p125 = por %p123, %p124
    %p126 = scmp.ne.s32.totalorder %s115, %s116
    %p127 = scmp.eq.s32.totalorder %s18, 0
    %p128 = por %p126, %p127
    %p129 = scmp.ne.s32.totalorder %s115, %s116
    %p130 = scmp.eq.s32.totalorder %s19, 1
    %p131 = por %p129, %p130
    %p133 = scmp.ne.s32.totalorder %s116, %s132
    %p134 = scmp.eq.s32.totalorder %s19, 0
    %p135 = por %p133, %p134
    %s136 = ssub.s32 %s13, %s20
    %p137 = scmp.eq.s32.totalorder %s136, 0
    %s139 = sadd.s32 %s138, 1
    %s140 = scalar_select %p137, %s138, %s139
    %p143 = pneg %p137
    %p144 = scmp.eq.s32.totalorder %s13, 1
    %p145 = por %p143, %p144
    %p146 = scmp.ne.s32.totalorder %s138, %s141
    %p147 = scmp.eq.s32.totalorder %s13, 0
    %p148 = por %p146, %p147
    %p149 = scmp.ne.s32.totalorder %s138, %s141
    %p150 = scmp.eq.s32.totalorder %s18, 1
    %p151 = por %p149, %p150
    %p152 = scmp.ne.s32.totalorder %s141, %s142
    %p153 = scmp.eq.s32.totalorder %s18, 0
    %p154 = por %p152, %p153
    %p155 = scmp.ne.s32.totalorder %s141, %s142
    %p156 = scmp.eq.s32.totalorder %s19, 1
    %p157 = por %p155, %p156
    %p159 = scmp.ne.s32.totalorder %s142, %s158
    %p160 = scmp.eq.s32.totalorder %s19, 0
    %p161 = por %p159, %p160
    %s162 = ssub.s32 %s13, %s20
    %p163 = scmp.eq.s32.totalorder %s162, 0
    %s165 = sadd.s32 %s164, 1
    %s166 = scalar_select %p163, %s164, %s165
    %p169 = pneg %p163
    %p170 = scmp.eq.s32.totalorder %s13, 1
    %p171 = por %p169, %p170
    %p172 = scmp.ne.s32.totalorder %s164, %s167
    %p173 = scmp.eq.s32.totalorder %s13, 0
    %p174 = por %p172, %p173
    %p175 = scmp.ne.s32.totalorder %s164, %s167
    %p176 = scmp.eq.s32.totalorder %s18, 1
    %p177 = por %p175, %p176
    %p178 = scmp.ne.s32.totalorder %s167, %s168
    %p179 = scmp.eq.s32.totalorder %s18, 0
    %p180 = por %p178, %p179
    %p181 = scmp.ne.s32.totalorder %s167, %s168
    %p182 = scmp.eq.s32.totalorder %s19, 1
    %p183 = por %p181, %p182
    %p185 = scmp.ne.s32.totalorder %s168, %s184
    %p186 = scmp.eq.s32.totalorder %s19, 0
    %p187 = por %p185, %p186
    %p188 = scmp.le.s32.totalorder 1, %s13
    %p189 = scmp.lt.s32.totalorder %s13, 3
    %p190 = pnand %p188, %p189
    %p191 = pneg %p190
    // Predicated region
    $region9: #{forward_pallas.14} parent=5 // pred_check
      _
    $region10: #{forward_pallas.14} parent=5 // pred_check_branch
      %193 = sbr.rel (%p190) target = $region12
    $region11: #{forward_pallas.14} parent=5 // pred_region
      %s194 = ssub.s32 %s13, 1
      // Predicated region
      $region13: #{forward_pallas.14} parent=11 // pred_check
        %p195 = pneg %p60
      $region14: #{forward_pallas.14} parent=11 // pred_check_branch
        %197 = sbr.rel (%p195) target = $region16
      $region15: #{forward_pallas.14} parent=11 // pred_region
        _
      $region16: #{forward_pallas.14} parent=11 // pred_fallthru
        _
      // Predicated region
      $region17: #{forward_pallas.14} parent=11 // pred_check
        %p198 = pneg %p81
      $region18: #{forward_pallas.14} parent=11 // pred_check_branch
        %200 = sbr.rel (%p198) target = $region20
      $region19: #{forward_pallas.14} parent=11 // pred_region
        _
      $region20: #{forward_pallas.14} parent=11 // pred_fallthru
        _
      // Predicated region
      $region21: #{forward_pallas.14} parent=11 // pred_check
        %p201 = pneg %p102
      $region22: #{forward_pallas.14} parent=11 // pred_check_branch
        %203 = sbr.rel (%p201) target = $region24
      $region23: #{forward_pallas.14} parent=11 // pred_region
        _
      $region24: #{forward_pallas.14} parent=11 // pred_fallthru
        _
    $region12: #{forward_pallas.14} parent=5 // pred_fallthru
      _
    %p204 = scmp.lt.s32.totalorder %s13, 2
    // Predicated region
    $region25: #{forward_pallas.14} parent=5 // pred_check
      %p205 = pneg %p204
    $region26: #{forward_pallas.14} parent=5 // pred_check_branch
      %207 = sbr.rel (%p205) target = $region28
    $region27: #{forward_pallas.14} parent=5 // pred_region
      // Predicated region
      $region29: #{forward_pallas.14} parent=27 // pred_check
        %p208 = pneg %p33
      $region30: #{forward_pallas.14} parent=27 // pred_check_branch
        %210 = sbr.rel (%p208) target = $region32
      $region31: #{forward_pallas.14} parent=27 // pred_region
        %p211 = scmp.lt.s32.totalorder %s13, 1
        %s212 = scalar_select %p211, %s13, 1
        %s213 = smul.addr %s212, 12
        %s214 = smul.addr %s213, 8
        %s215 = scalar_lea.vmem %s0, %s214
      $region32: #{forward_pallas.14} parent=27 // pred_fallthru
        _
    $region28: #{forward_pallas.14} parent=5 // pred_fallthru
      _
    %p216 = scmp.le.s32.totalorder 1, %s13
    %p217 = scmp.lt.s32.totalorder %s13, 3
    %p218 = pnand %p216, %p217
    %p219 = pneg %p218
    // Predicated region
    $region33: #{forward_pallas.14} parent=5 // pred_check
      _
    $region34: #{forward_pallas.14} parent=5 // pred_check_branch
      %221 = sbr.rel (%p218) target = $region36
    $region35: #{forward_pallas.14} parent=5 // pred_region
      %s222 = ssub.s32 %s13, 1
      %p223 = scmp.lt.s32.totalorder %s18, 1
      %s224 = scalar_select %p223, %s18, 1
      %s225 = smul.addr %s224, 12
      %s226 = smul.addr %s225, 8
      %s227 = scalar_lea.vmem %s0, %s226
      %p228 = pneg %p39
      %p229 = pneg %p36
      %p230 = pneg %p60
      %p231 = pneg %p57
      %p232 = pneg %p81
      %p233 = pneg %p78
      %p234 = pneg %p102
      %p235 = pneg %p99
      %p236 = pneg %p128
      %p237 = pneg %p125
      %p238 = scmp.lt.s32.totalorder %s18, 1
      %s239 = scalar_select %p238, %s18, 1
      %s240 = smul.addr %s239, 24
      %s241 = smul.addr %s240, 8
      %s242 = scalar_lea.vmem %s4, %s241
      %p243 = pneg %p154
      %p244 = pneg %p151
      %p245 = scmp.lt.s32.totalorder %s18, 1
      %s246 = scalar_select %p245, %s18, 1
      %s247 = scalar_lea.vmem %s5, %s246
      %p248 = pneg %p180
      %p249 = pneg %p177
      %p250 = scmp.lt.s32.totalorder %s18, 1
      %s251 = scalar_select %p250, %s18, 1
      %s252 = scalar_lea.vmem %s6, %s251
      %p253 = scmp.lt.s32.totalorder %s18, 1
      %s254 = scalar_select %p253, %s18, 1
      %s255 = smul.addr %s254, 12
      %s256 = smul.addr %s255, 8
      %s257 = scalar_lea.vmem %s0, %s256
      %p258 = scmp.lt.s32.totalorder %s18, 1
      %s259 = scalar_select %p258, %s18, 1
      %s260 = smul.addr %s259, 24
      %s261 = smul.addr %s260, 8
      %s262 = scalar_lea.vmem %s4, %s261
      %p263 = scmp.lt.s32.totalorder %s18, 1
      %s264 = scalar_select %p263, %s18, 1
      %s265 = scalar_lea.vmem %s5, %s264
      %p266 = scmp.lt.s32.totalorder %s18, 1
      %s267 = scalar_select %p266, %s18, 1
      %s268 = scalar_lea.vmem %s6, %s267
      %v269 = vld [vmem:[%s257] sm:$0xff]
      %v270 = vld [vmem:[%s257 + $0x8] sm:$0xff]
      %v271 = vld [vmem:[%s257 + $0x10] sm:$0xff]
      %v272 = vld [vmem:[%s257 + $0x18] sm:$0xff]
      %v273 = vld [vmem:[%s257 + $0x20] sm:$0xff]
      %v274 = vld [vmem:[%s257 + $0x28] sm:$0xff]
      %v275 = vld [vmem:[%s257 + $0x30] sm:$0xff]
      %v276 = vld [vmem:[%s257 + $0x38] sm:$0xff]
      %v277 = vld [vmem:[%s257 + $0x40] sm:$0xff]
      %v278 = vld [vmem:[%s257 + $0x48] sm:$0xff]
      %v279 = vld [vmem:[%s257 + $0x50] sm:$0xff]
      %v280 = vld [vmem:[%s257 + $0x58] sm:$0xff]
      %v281 = vld [vmem:[%s1] sm:$0xff]
      %v282 = vld [vmem:[%s1 + $0x8] sm:$0xff]
      %v283 = vld [vmem:[%s1 + $0x10] sm:$0xff]
      %v284 = vld [vmem:[%s1 + $0x18] sm:$0xff]
      %v285 = vld [vmem:[%s1 + $0x20] sm:$0xff]
      %v286 = vld [vmem:[%s1 + $0x28] sm:$0xff]
      %v287 = vld [vmem:[%s1 + $0x30] sm:$0xff]
      %v288 = vld [vmem:[%s1 + $0x38] sm:$0xff]
      %v289 = vld [vmem:[%s1 + $0x40] sm:$0xff]
      %v290 = vld [vmem:[%s1 + $0x48] sm:$0xff]
      %v291 = vld [vmem:[%s1 + $0x50] sm:$0xff]
      %v292 = vld [vmem:[%s1 + $0x58] sm:$0xff]
      %v293 = vld [vmem:[%s1 + $0x60] sm:$0xff]
      %v294 = vld [vmem:[%s1 + $0x68] sm:$0xff]
      %v295 = vld [vmem:[%s1 + $0x70] sm:$0xff]
      %v296 = vld [vmem:[%s1 + $0x78] sm:$0xff]
      %v297 = vld [vmem:[%s1 + $0x80] sm:$0xff]
      %v298 = vld [vmem:[%s1 + $0x88] sm:$0xff]
      %v299 = vld [vmem:[%s1 + $0x90] sm:$0xff]
      %v300 = vld [vmem:[%s1 + $0x98] sm:$0xff]
      %v301 = vld [vmem:[%s1 + $0xa0] sm:$0xff]
      %v302 = vld [vmem:[%s1 + $0xa8] sm:$0xff]
      %v303 = vld [vmem:[%s1 + $0xb0] sm:$0xff]
      %v304 = vld [vmem:[%s1 + $0xb8] sm:$0xff]
      %vm305 = vcmask 785408
      %v307 = vsel %vm305, %v281, 0
      %v310 = vsel %vm305, %v282, 0
      %v313 = vsel %vm305, %v283, 0
      %v316 = vsel %vm305, %v284, 0
      %v319 = vsel %vm305, %v285, 0
      %v322 = vsel %vm305, %v286, 0
      %v325 = vsel %vm305, %v287, 0
      %v328 = vsel %vm305, %v288, 0
      %v331 = vsel %vm305, %v289, 0
      %v334 = vsel %vm305, %v290, 0
      %v337 = vsel %vm305, %v291, 0
      %v340 = vsel %vm305, %v292, 0
      %v343 = vsel %vm305, %v293, 0
      %v346 = vsel %vm305, %v294, 0
      %v349 = vsel %vm305, %v295, 0
      %v352 = vsel %vm305, %v296, 0
      %v355 = vsel %vm305, %v297, 0
      %v358 = vsel %vm305, %v298, 0
      %v361 = vsel %vm305, %v299, 0
      %v364 = vsel %vm305, %v300, 0
      %v367 = vsel %vm305, %v301, 0
      %v370 = vsel %vm305, %v302, 0
      %v373 = vsel %vm305, %v303, 0
      %v376 = vsel %vm305, %v304, 0
      %378 = vmatprep.subr.mxu0 0.0
      %379 = vmatpush1.msra.mxu0 0.0
      %380 = vmatprep.subr.mxu0 0.0
      %381 = vmatpush1.msra.mxu0 0.0
      %382 = vmatprep.subr.mxu0 0.0
      %383 = vmatpush1.msra.mxu0 0.0
      %384 = vmatprep.subr.mxu0 0.0
      %385 = vmatpush1.msra.mxu0 0.0
      %386 = vmatprep.subr.mxu0 0.0
      %387 = vmatpush1.msra.mxu0 %v280
      %388 = vmatprep.subr.mxu0 0.0
      %389 = vmatpush1.msra.mxu0 %v279
      %390 = vmatprep.subr.mxu0 0.0
      %391 = vmatpush1.msra.mxu0 %v278
      %392 = vmatprep.subr.mxu0 0.0
      %393 = vmatpush1.msra.mxu0 %v277
      %394 = vmatprep.subr.mxu0 0.0
      %395 = vmatpush1.msra.mxu0 %v276
      %396 = vmatprep.subr.mxu0 0.0
      %397 = vmatpush1.msra.mxu0 %v275
      %398 = vmatprep.subr.mxu0 0.0
      %399 = vmatpush1.msra.mxu0 %v274
      %400 = vmatprep.subr.mxu0 0.0
      %401 = vmatpush1.msra.mxu0 %v273
      %402 = vmatprep.subr.mxu0 0.0
      %403 = vmatpush1.msra.mxu0 %v272
      %404 = vmatprep.subr.mxu0 0.0
      %405 = vmatpush1.msra.mxu0 %v271
      %406 = vmatprep.subr.mxu0 0.0
      %407 = vmatpush1.msra.mxu0 %v270
      %408 = vmatprep.subr.mxu0 0.0
      %409 = vmatpush1.msra.mxu0 %v269
      %410 = vmatprep.subr.mxu0 0.0
      %411 = vmatpush2.msra.mxu0 0.0
      %412 = vmatprep.subr.mxu0 0.0
      %413 = vmatpush2.msra.mxu0 0.0
      %414 = vmatprep.subr.mxu0 0.0
      %415 = vmatpush2.msra.mxu0 0.0
      %416 = vmatprep.subr.mxu0 0.0
      %417 = vmatpush2.msra.mxu0 0.0
      %418 = vmatprep.subr.mxu0 0.0
      %419 = vmatpush2.msra.mxu0 0.0
      %420 = vmatprep.subr.mxu0 0.0
      %421 = vmatpush2.msra.mxu0 0.0
      %422 = vmatprep.subr.mxu0 0.0
      %423 = vmatpush2.msra.mxu0 0.0
      %424 = vmatprep.subr.mxu0 0.0
      %425 = vmatpush2.msra.mxu0 0.0
      %426 = vmatprep.subr.mxu0 0.0
      %427 = vmatpush2.msra.mxu0 0.0
      %428 = vmatprep.subr.mxu0 0.0
      %429 = vmatpush2.msra.mxu0 0.0
      %430 = vmatprep.subr.mxu0 0.0
      %431 = vmatpush2.msra.mxu0 0.0
      %432 = vmatprep.subr.mxu0 0.0
      %433 = vmatpush2.msra.mxu0 0.0
      %434 = vmatprep.subr.mxu0 0.0
      %435 = vmatpush2.msra.mxu0 0.0
      %436 = vmatprep.subr.mxu0 0.0
      %437 = vmatpush2.msra.mxu0 0.0
      %438 = vmatprep.subr.mxu0 0.0
      %439 = vmatpush2.msra.mxu0 0.0
      %440 = vmatprep.subr.mxu0 0.0
      %441 = vmatpush2.msra.mxu0 0.0
      %442 = vmatprep.mubr.f32.mxu0 0.0
      %443 = vmatmul.mubr.f32.gmra.mxu0 %v307
      %v444 = vpop.f32.mrf.mxu0
      %v445 = vadd.f32 0.0, %v444
      %v446 = vpop.f32.mrf.mxu0
      %447 = vmatprep.mubr.f32.mxu0 0.0
      %448 = vmatmul.mubr.f32.gmra.mxu0 %v310
      %v449 = vpop.f32.mrf.mxu0
      %v450 = vadd.f32 0.0, %v449
      %v451 = vpop.f32.mrf.mxu0
      %452 = vmatprep.mubr.f32.mxu0 0.0
      %453 = vmatmul.mubr.f32.gmra.mxu0 %v313
      %v454 = vpop.f32.mrf.mxu0
      %v455 = vadd.f32 0.0, %v454
      %v456 = vpop.f32.mrf.mxu0
      %457 = vmatprep.mubr.f32.mxu0 0.0
      %458 = vmatmul.mubr.f32.gmra.mxu0 %v316
      %v459 = vpop.f32.mrf.mxu0
      %v460 = vadd.f32 0.0, %v459
      %v461 = vpop.f32.mrf.mxu0
      %462 = vmatprep.mubr.f32.mxu0 0.0
      %463 = vmatmul.mubr.f32.gmra.mxu0 %v319
      %v464 = vpop.f32.mrf.mxu0
      %v465 = vadd.f32 0.0, %v464
      %v466 = vpop.f32.mrf.mxu0
      %467 = vmatprep.mubr.f32.mxu0 0.0
      %468 = vmatmul.mubr.f32.gmra.mxu0 %v322
      %v469 = vpop.f32.mrf.mxu0
      %v470 = vadd.f32 0.0, %v469
      %v471 = vpop.f32.mrf.mxu0
      %472 = vmatprep.mubr.f32.mxu0 0.0
      %473 = vmatmul.mubr.f32.gmra.mxu0 %v325
      %v474 = vpop.f32.mrf.mxu0
      %v475 = vadd.f32 0.0, %v474
      %v476 = vpop.f32.mrf.mxu0
      %477 = vmatprep.mubr.f32.mxu0 0.0
      %478 = vmatmul.mubr.f32.gmra.mxu0 %v328
      %v479 = vpop.f32.mrf.mxu0
      %v480 = vadd.f32 0.0, %v479
      %v481 = vpop.f32.mrf.mxu0
      %482 = vmatprep.mubr.f32.mxu0 0.0
      %483 = vmatmul.mubr.f32.gmra.mxu0 %v331
      %v484 = vpop.f32.mrf.mxu0
      %v485 = vadd.f32 0.0, %v484
      %v486 = vpop.f32.mrf.mxu0
      %487 = vmatprep.mubr.f32.mxu0 0.0
      %488 = vmatmul.mubr.f32.gmra.mxu0 %v334
      %v489 = vpop.f32.mrf.mxu0
      %v490 = vadd.f32 0.0, %v489
      %v491 = vpop.f32.mrf.mxu0
      %492 = vmatprep.mubr.f32.mxu0 0.0
      %493 = vmatmul.mubr.f32.gmra.mxu0 %v337
      %v494 = vpop.f32.mrf.mxu0
      %v495 = vadd.f32 0.0, %v494
      %v496 = vpop.f32.mrf.mxu0
      %497 = vmatprep.mubr.f32.mxu0 0.0
      %498 = vmatmul.mubr.f32.gmra.mxu0 %v340
      %v499 = vpop.f32.mrf.mxu0
      %v500 = vadd.f32 0.0, %v499
      %v501 = vpop.f32.mrf.mxu0
      %502 = vmatprep.mubr.f32.mxu0 0.0
      %503 = vmatmul.mubr.f32.gmra.mxu0 %v343
      %v504 = vpop.f32.mrf.mxu0
      %v505 = vadd.f32 0.0, %v504
      %v506 = vpop.f32.mrf.mxu0
      %507 = vmatprep.mubr.f32.mxu0 0.0
      %508 = vmatmul.mubr.f32.gmra.mxu0 %v346
      %v509 = vpop.f32.mrf.mxu0
      %v510 = vadd.f32 0.0, %v509
      %v511 = vpop.f32.mrf.mxu0
      %512 = vmatprep.mubr.f32.mxu0 0.0
      %513 = vmatmul.mubr.f32.gmra.mxu0 %v349
      %v514 = vpop.f32.mrf.mxu0
      %v515 = vadd.f32 0.0, %v514
      %v516 = vpop.f32.mrf.mxu0
      %517 = vmatprep.mubr.f32.mxu0 0.0
      %518 = vmatmul.mubr.f32.gmra.mxu0 %v352
      %v519 = vpop.f32.mrf.mxu0
      %v520 = vadd.f32 0.0, %v519
      %v521 = vpop.f32.mrf.mxu0
      %522 = vmatprep.mubr.f32.mxu0 0.0
      %523 = vmatmul.mubr.f32.gmra.mxu0 %v355
      %v524 = vpop.f32.mrf.mxu0
      %v525 = vadd.f32 0.0, %v524
      %v526 = vpop.f32.mrf.mxu0
      %527 = vmatprep.mubr.f32.mxu0 0.0
      %528 = vmatmul.mubr.f32.gmra.mxu0 %v358
      %v529 = vpop.f32.mrf.mxu0
      %v530 = vadd.f32 0.0, %v529
      %v531 = vpop.f32.mrf.mxu0
      %532 = vmatprep.mubr.f32.mxu0 0.0
      %533 = vmatmul.mubr.f32.gmra.mxu0 %v361
      %v534 = vpop.f32.mrf.mxu0
      %v535 = vadd.f32 0.0, %v534
      %v536 = vpop.f32.mrf.mxu0
      %537 = vmatprep.mubr.f32.mxu0 0.0
      %538 = vmatmul.mubr.f32.gmra.mxu0 %v364
      %v539 = vpop.f32.mrf.mxu0
      %v540 = vadd.f32 0.0, %v539
      %v541 = vpop.f32.mrf.mxu0
      %542 = vmatprep.mubr.f32.mxu0 0.0
      %543 = vmatmul.mubr.f32.gmra.mxu0 %v367
      %v544 = vpop.f32.mrf.mxu0
      %v545 = vadd.f32 0.0, %v544
      %v546 = vpop.f32.mrf.mxu0
      %547 = vmatprep.mubr.f32.mxu0 0.0
      %548 = vmatmul.mubr.f32.gmra.mxu0 %v370
      %v549 = vpop.f32.mrf.mxu0
      %v550 = vadd.f32 0.0, %v549
      %v551 = vpop.f32.mrf.mxu0
      %552 = vmatprep.mubr.f32.mxu0 0.0
      %553 = vmatmul.mubr.f32.gmra.mxu0 %v373
      %v554 = vpop.f32.mrf.mxu0
      %v555 = vadd.f32 0.0, %v554
      %v556 = vpop.f32.mrf.mxu0
      %557 = vmatprep.mubr.f32.mxu0 0.0
      %558 = vmatmul.mubr.f32.gmra.mxu0 %v376
      %v559 = vpop.f32.mrf.mxu0
      %v560 = vadd.f32 0.0, %v559
      %v561 = vpop.f32.mrf.mxu0
      %562 = vdwg.mxu0
      %vm563 = vcmask 31744
      %v564 = vsel %vm563, %v445, 0.0
      %565 = vadd.xlane.f32.xlu0 %v564
      %v566 = vpop.xlane.xlu0 %565
      %v567 = vsel %vm563, %v450, 0.0
      %568 = vadd.xlane.f32.xlu0 %v567
      %v569 = vpop.xlane.xlu0 %568
      %v570 = vsel %vm563, %v455, 0.0
      %571 = vadd.xlane.f32.xlu0 %v570
      %v572 = vpop.xlane.xlu0 %571
      %v573 = vsel %vm563, %v460, 0.0
      %574 = vadd.xlane.f32.xlu0 %v573
      %v575 = vpop.xlane.xlu0 %574
      %v576 = vsel %vm563, %v465, 0.0
      %577 = vadd.xlane.f32.xlu0 %v576
      %v578 = vpop.xlane.xlu0 %577
      %v579 = vsel %vm563, %v470, 0.0
      %580 = vadd.xlane.f32.xlu0 %v579
      %v581 = vpop.xlane.xlu0 %580
      %v582 = vsel %vm563, %v475, 0.0
      %583 = vadd.xlane.f32.xlu0 %v582
      %v584 = vpop.xlane.xlu0 %583
      %v585 = vsel %vm563, %v480, 0.0
      %586 = vadd.xlane.f32.xlu0 %v585
      %v587 = vpop.xlane.xlu0 %586
      %v588 = vsel %vm563, %v485, 0.0
      %589 = vadd.xlane.f32.xlu0 %v588
      %v590 = vpop.xlane.xlu0 %589
      %v591 = vsel %vm563, %v490, 0.0
      %592 = vadd.xlane.f32.xlu0 %v591
      %v593 = vpop.xlane.xlu0 %592
      %v594 = vsel %vm563, %v495, 0.0
      %595 = vadd.xlane.f32.xlu0 %v594
      %v596 = vpop.xlane.xlu0 %595
      %v597 = vsel %vm563, %v500, 0.0
      %598 = vadd.xlane.f32.xlu0 %v597
      %v599 = vpop.xlane.xlu0 %598
      %v600 = vsel %vm563, %v505, 0.0
      %601 = vadd.xlane.f32.xlu0 %v600
      %v602 = vpop.xlane.xlu0 %601
      %v603 = vsel %vm563, %v510, 0.0
      %604 = vadd.xlane.f32.xlu0 %v603
      %v605 = vpop.xlane.xlu0 %604
      %v606 = vsel %vm563, %v515, 0.0
      %607 = vadd.xlane.f32.xlu0 %v606
      %v608 = vpop.xlane.xlu0 %607
      %v609 = vsel %vm563, %v520, 0.0
      %610 = vadd.xlane.f32.xlu0 %v609
      %v611 = vpop.xlane.xlu0 %610
      %v612 = vsel %vm563, %v525, 0.0
      %613 = vadd.xlane.f32.xlu0 %v612
      %v614 = vpop.xlane.xlu0 %613
      %v615 = vsel %vm563, %v530, 0.0
      %616 = vadd.xlane.f32.xlu0 %v615
      %v617 = vpop.xlane.xlu0 %616
      %v618 = vsel %vm563, %v535, 0.0
      %619 = vadd.xlane.f32.xlu0 %v618
      %v620 = vpop.xlane.xlu0 %619
      %v621 = vsel %vm563, %v540, 0.0
      %622 = vadd.xlane.f32.xlu0 %v621
      %v623 = vpop.xlane.xlu0 %622
      %v624 = vsel %vm563, %v545, 0.0
      %625 = vadd.xlane.f32.xlu0 %v624
      %v626 = vpop.xlane.xlu0 %625
      %v627 = vsel %vm563, %v550, 0.0
      %628 = vadd.xlane.f32.xlu0 %v627
      %v629 = vpop.xlane.xlu0 %628
      %v630 = vsel %vm563, %v555, 0.0
      %631 = vadd.xlane.f32.xlu0 %v630
      %v632 = vpop.xlane.xlu0 %631
      %v633 = vsel %vm563, %v560, 0.0
      %634 = vadd.xlane.f32.xlu0 %v633
      %v635 = vpop.xlane.xlu0 %634
      %v636 = vmul.f32 %v566, 0.25
      %v637 = vmul.f32 %v569, 0.25
      %v638 = vmul.f32 %v572, 0.25
      %v639 = vmul.f32 %v575, 0.25
      %v640 = vmul.f32 %v578, 0.25
      %v641 = vmul.f32 %v581, 0.25
      %v642 = vmul.f32 %v584, 0.25
      %v643 = vmul.f32 %v587, 0.25
      %v644 = vmul.f32 %v590, 0.25
      %v645 = vmul.f32 %v593, 0.25
      %v646 = vmul.f32 %v596, 0.25
      %v647 = vmul.f32 %v599, 0.25
      %v648 = vmul.f32 %v602, 0.25
      %v649 = vmul.f32 %v605, 0.25
      %v650 = vmul.f32 %v608, 0.25
      %v651 = vmul.f32 %v611, 0.25
      %v652 = vmul.f32 %v614, 0.25
      %v653 = vmul.f32 %v617, 0.25
      %v654 = vmul.f32 %v620, 0.25
      %v655 = vmul.f32 %v623, 0.25
      %v656 = vmul.f32 %v626, 0.25
      %v657 = vmul.f32 %v629, 0.25
      %v658 = vmul.f32 %v632, 0.25
      %v659 = vmul.f32 %v635, 0.25
      %v660 = vld [vmem:[%s2] sm:$0xff]
      %v661 = vld [vmem:[%s2 + $0x8] sm:$0xff]
      %v662 = vld [vmem:[%s2 + $0x10] sm:$0xff]
      %v663 = vld [vmem:[%s2 + $0x18] sm:$0xff]
      %v664 = vld [vmem:[%s2 + $0x20] sm:$0xff]
      %v665 = vld [vmem:[%s2 + $0x28] sm:$0xff]
      %v666 = vld [vmem:[%s2 + $0x30] sm:$0xff]
      %v667 = vld [vmem:[%s2 + $0x38] sm:$0xff]
      %v668 = vld [vmem:[%s2 + $0x40] sm:$0xff]
      %v669 = vld [vmem:[%s2 + $0x48] sm:$0xff]
      %v670 = vld [vmem:[%s2 + $0x50] sm:$0xff]
      %v671 = vld [vmem:[%s2 + $0x58] sm:$0xff]
      %vm672 = vcmask 523264
      %v674 = vsel %vm672, %v661, 0
      %v677 = vsel %vm672, %v663, 0
      %v680 = vsel %vm672, %v665, 0
      %v683 = vsel %vm672, %v667, 0
      %v686 = vsel %vm672, %v669, 0
      %v689 = vsel %vm672, %v671, 0
      %691 = vmatprep.subr.mxu0 0.0
      %692 = vmatpush1.msra.mxu0 %v651
      %693 = vmatprep.subr.mxu0 0.0
      %694 = vmatpush1.msra.mxu0 %v650
      %695 = vmatprep.subr.mxu0 0.0
      %696 = vmatpush1.msra.mxu0 %v649
      %697 = vmatprep.subr.mxu0 0.0
      %698 = vmatpush1.msra.mxu0 %v648
      %699 = vmatprep.subr.mxu0 0.0
      %700 = vmatpush1.msra.mxu0 %v647
      %701 = vmatprep.subr.mxu0 0.0
      %702 = vmatpush1.msra.mxu0 %v646
      %703 = vmatprep.subr.mxu0 0.0
      %704 = vmatpush1.msra.mxu0 %v645
      %705 = vmatprep.subr.mxu0 0.0
      %706 = vmatpush1.msra.mxu0 %v644
      %707 = vmatprep.subr.mxu0 0.0
      %708 = vmatpush1.msra.mxu0 %v643
      %709 = vmatprep.subr.mxu0 0.0
      %710 = vmatpush1.msra.mxu0 %v642
      %711 = vmatprep.subr.mxu0 0.0
      %712 = vmatpush1.msra.mxu0 %v641
      %713 = vmatprep.subr.mxu0 0.0
      %714 = vmatpush1.msra.mxu0 %v640
      %715 = vmatprep.subr.mxu0 0.0
      %716 = vmatpush1.msra.mxu0 %v639
      %717 = vmatprep.subr.mxu0 0.0
      %718 = vmatpush1.msra.mxu0 %v638
      %719 = vmatprep.subr.mxu0 0.0
      %720 = vmatpush1.msra.mxu0 %v637
      %721 = vmatprep.subr.mxu0 0.0
      %722 = vmatpush1.msra.mxu0 %v636
      %723 = vmatprep.subr.mxu0 0.0
      %724 = vmatpush2.msra.mxu0 0.0
      %725 = vmatprep.subr.mxu0 0.0
      %726 = vmatpush2.msra.mxu0 0.0
      %727 = vmatprep.subr.mxu0 0.0
      %728 = vmatpush2.msra.mxu0 0.0
      %729 = vmatprep.subr.mxu0 0.0
      %730 = vmatpush2.msra.mxu0 0.0
      %731 = vmatprep.subr.mxu0 0.0
      %732 = vmatpush2.msra.mxu0 0.0
      %733 = vmatprep.subr.mxu0 0.0
      %734 = vmatpush2.msra.mxu0 0.0
      %735 = vmatprep.subr.mxu0 0.0
      %736 = vmatpush2.msra.mxu0 0.0
      %737 = vmatprep.subr.mxu0 0.0
      %738 = vmatpush2.msra.mxu0 0.0
      %739 = vmatprep.subr.mxu0 0.0
      %740 = vmatpush2.msra.mxu0 %v659
      %741 = vmatprep.subr.mxu0 0.0
      %742 = vmatpush2.msra.mxu0 %v658
      %743 = vmatprep.subr.mxu0 0.0
      %744 = vmatpush2.msra.mxu0 %v657
      %745 = vmatprep.subr.mxu0 0.0
      %746 = vmatpush2.msra.mxu0 %v656
      %747 = vmatprep.subr.mxu0 0.0
      %748 = vmatpush2.msra.mxu0 %v655
      %749 = vmatprep.subr.mxu0 0.0
      %750 = vmatpush2.msra.mxu0 %v654
      %751 = vmatprep.subr.mxu0 0.0
      %752 = vmatpush2.msra.mxu0 %v653
      %753 = vmatprep.subr.mxu0 0.0
      %754 = vmatpush2.msra.mxu0 %v652
      %755 = vmatprep.mubr.f32.mxu0 %v674
      %756 = vmatmul.mubr.f32.gmra.mxu0 %v660
      %v757 = vpop.f32.mrf.mxu0
      %v758 = vadd.f32 0.0, %v757
      %v759 = vpop.f32.mrf.mxu0
      %760 = vmatprep.mubr.f32.mxu0 %v677
      %761 = vmatmul.mubr.f32.gmra.mxu0 %v662
      %v762 = vpop.f32.mrf.mxu0
      %v763 = vadd.f32 0.0, %v762
      %v764 = vpop.f32.mrf.mxu0
      %765 = vmatprep.mubr.f32.mxu0 %v680
      %766 = vmatmul.mubr.f32.gmra.mxu0 %v664
      %v767 = vpop.f32.mrf.mxu0
      %v768 = vadd.f32 0.0, %v767
      %v769 = vpop.f32.mrf.mxu0
      %770 = vmatprep.mubr.f32.mxu0 %v683
      %771 = vmatmul.mubr.f32.gmra.mxu0 %v666
      %v772 = vpop.f32.mrf.mxu0
      %v773 = vadd.f32 0.0, %v772
      %v774 = vpop.f32.mrf.mxu0
      %775 = vmatprep.mubr.f32.mxu0 %v686
      %776 = vmatmul.mubr.f32.gmra.mxu0 %v668
      %v777 = vpop.f32.mrf.mxu0
      %v778 = vadd.f32 0.0, %v777
      %v779 = vpop.f32.mrf.mxu0
      %780 = vmatprep.mubr.f32.mxu0 %v689
      %781 = vmatmul.mubr.f32.gmra.mxu0 %v670
      %v782 = vpop.f32.mrf.mxu0
      %v783 = vadd.f32 0.0, %v782
      %v784 = vpop.f32.mrf.mxu0
      %785 = vdwg.mxu0
      %v786 = vmax.f32 %v758, 0.0
      %v787 = vmax.f32 %v763, 0.0
      %v788 = vmax.f32 %v768, 0.0
      %v789 = vmax.f32 %v773, 0.0
      %v790 = vmax.f32 %v778, 0.0
      %v791 = vmax.f32 %v783, 0.0
      %v792 = vld [vmem:[%s3] sm:$0xff]
      %v793 = vld [vmem:[%s3 + $0x8] sm:$0xff]
      %v794 = vld [vmem:[%s3 + $0x10] sm:$0xff]
      %v795 = vld [vmem:[%s3 + $0x18] sm:$0xff]
      %v796 = vld [vmem:[%s3 + $0x20] sm:$0xff]
      %v797 = vld [vmem:[%s3 + $0x28] sm:$0xff]
      %v798 = vld [vmem:[%s3 + $0x30] sm:$0xff]
      %v799 = vld [vmem:[%s3 + $0x38] sm:$0xff]
      %v800 = vld [vmem:[%s3 + $0x40] sm:$0xff]
      %v801 = vld [vmem:[%s3 + $0x48] sm:$0xff]
      %v802 = vld [vmem:[%s3 + $0x50] sm:$0xff]
      %v803 = vld [vmem:[%s3 + $0x58] sm:$0xff]
      %v804 = vld [vmem:[%s3 + $0x60] sm:$0xff]
      %v805 = vld [vmem:[%s3 + $0x68] sm:$0xff]
      %v806 = vld [vmem:[%s3 + $0x70] sm:$0xff]
      %v807 = vld [vmem:[%s3 + $0x78] sm:$0xff]
      %v808 = vld [vmem:[%s3 + $0x80] sm:$0xff]
      %v809 = vld [vmem:[%s3 + $0x88] sm:$0xff]
      %v810 = vld [vmem:[%s3 + $0x90] sm:$0xff]
      %v811 = vld [vmem:[%s3 + $0x98] sm:$0xff]
      %v812 = vld [vmem:[%s3 + $0xa0] sm:$0xff]
      %v813 = vld [vmem:[%s3 + $0xa8] sm:$0xff]
      %v814 = vld [vmem:[%s3 + $0xb0] sm:$0xff]
      %v815 = vld [vmem:[%s3 + $0xb8] sm:$0xff]
      %vm816 = vcmask 392192
      %v818 = vsel %vm816, %v792, 0
      %v821 = vsel %vm816, %v793, 0
      %v824 = vsel %vm816, %v794, 0
      %v827 = vsel %vm816, %v795, 0
      %v830 = vsel %vm816, %v796, 0
      %v833 = vsel %vm816, %v797, 0
      %v836 = vsel %vm816, %v798, 0
      %v839 = vsel %vm816, %v799, 0
      %v842 = vsel %vm816, %v800, 0
      %v845 = vsel %vm816, %v801, 0
      %v848 = vsel %vm816, %v802, 0
      %v851 = vsel %vm816, %v803, 0
      %v854 = vsel %vm816, %v804, 0
      %v857 = vsel %vm816, %v805, 0
      %v860 = vsel %vm816, %v806, 0
      %v863 = vsel %vm816, %v807, 0
      %v866 = vsel %vm816, %v808, 0
      %v869 = vsel %vm816, %v809, 0
      %v872 = vsel %vm816, %v810, 0
      %v875 = vsel %vm816, %v811, 0
      %v878 = vsel %vm816, %v812, 0
      %v881 = vsel %vm816, %v813, 0
      %v884 = vsel %vm816, %v814, 0
      %v887 = vsel %vm816, %v815, 0
      %889 = vmatprep.subr.mxu0 0.0
      %890 = vmatpush1.msra.mxu0 0.0
      %891 = vmatprep.subr.mxu0 0.0
      %892 = vmatpush1.msra.mxu0 0.0
      %893 = vmatprep.subr.mxu0 0.0
      %894 = vmatpush1.msra.mxu0 0.0
      %895 = vmatprep.subr.mxu0 0.0
      %896 = vmatpush1.msra.mxu0 0.0
      %897 = vmatprep.subr.mxu0 0.0
      %898 = vmatpush1.msra.mxu0 0.0
      %899 = vmatprep.subr.mxu0 0.0
      %900 = vmatpush1.msra.mxu0 0.0
      %901 = vmatprep.subr.mxu0 0.0
      %902 = vmatpush1.msra.mxu0 0.0
      %903 = vmatprep.subr.mxu0 0.0
      %904 = vmatpush1.msra.mxu0 0.0
      %905 = vmatprep.subr.mxu0 0.0
      %906 = vmatpush1.msra.mxu0 0.0
      %907 = vmatprep.subr.mxu0 0.0
      %908 = vmatpush1.msra.mxu0 0.0
      %909 = vmatprep.subr.mxu0 0.0
      %910 = vmatpush1.msra.mxu0 %v791
      %911 = vmatprep.subr.mxu0 0.0
      %912 = vmatpush1.msra.mxu0 %v790
      %913 = vmatprep.subr.mxu0 0.0
      %914 = vmatpush1.msra.mxu0 %v789
      %915 = vmatprep.subr.mxu0 0.0
      %916 = vmatpush1.msra.mxu0 %v788
      %917 = vmatprep.subr.mxu0 0.0
      %918 = vmatpush1.msra.mxu0 %v787
      %919 = vmatprep.subr.mxu0 0.0
      %920 = vmatpush1.msra.mxu0 %v786
      %921 = vmatprep.subr.mxu0 0.0
      %922 = vmatpush2.msra.mxu0 0.0
      %923 = vmatprep.subr.mxu0 0.0
      %924 = vmatpush2.msra.mxu0 0.0
      %925 = vmatprep.subr.mxu0 0.0
      %926 = vmatpush2.msra.mxu0 0.0
      %927 = vmatprep.subr.mxu0 0.0
      %928 = vmatpush2.msra.mxu0 0.0
      %929 = vmatprep.subr.mxu0 0.0
      %930 = vmatpush2.msra.mxu0 0.0
      %931 = vmatprep.subr.mxu0 0.0
      %932 = vmatpush2.msra.mxu0 0.0
      %933 = vmatprep.subr.mxu0 0.0
      %934 = vmatpush2.msra.mxu0 0.0
      %935 = vmatprep.subr.mxu0 0.0
      %936 = vmatpush2.msra.mxu0 0.0
      %937 = vmatprep.subr.mxu0 0.0
      %938 = vmatpush2.msra.mxu0 0.0
      %939 = vmatprep.subr.mxu0 0.0
      %940 = vmatpush2.msra.mxu0 0.0
      %941 = vmatprep.subr.mxu0 0.0
      %942 = vmatpush2.msra.mxu0 0.0
      %943 = vmatprep.subr.mxu0 0.0
      %944 = vmatpush2.msra.mxu0 0.0
      %945 = vmatprep.subr.mxu0 0.0
      %946 = vmatpush2.msra.mxu0 0.0
      %947 = vmatprep.subr.mxu0 0.0
      %948 = vmatpush2.msra.mxu0 0.0
      %949 = vmatprep.subr.mxu0 0.0
      %950 = vmatpush2.msra.mxu0 0.0
      %951 = vmatprep.subr.mxu0 0.0
      %952 = vmatpush2.msra.mxu0 0.0
      %953 = vmatprep.mubr.f32.mxu0 0.0
      %954 = vmatmul.mubr.f32.gmra.mxu0 %v818
      %v955 = vpop.f32.mrf.mxu0
      %v956 = vadd.f32 0.0, %v955
      %v957 = vpop.f32.mrf.mxu0
      %958 = vmatprep.mubr.f32.mxu0 0.0
      %959 = vmatmul.mubr.f32.gmra.mxu0 %v821
      %v960 = vpop.f32.mrf.mxu0
      %v961 = vadd.f32 0.0, %v960
      %v962 = vpop.f32.mrf.mxu0
      %963 = vmatprep.mubr.f32.mxu0 0.0
      %964 = vmatmul.mubr.f32.gmra.mxu0 %v824
      %v965 = vpop.f32.mrf.mxu0
      %v966 = vadd.f32 0.0, %v965
      %v967 = vpop.f32.mrf.mxu0
      %968 = vmatprep.mubr.f32.mxu0 0.0
      %969 = vmatmul.mubr.f32.gmra.mxu0 %v827
      %v970 = vpop.f32.mrf.mxu0
      %v971 = vadd.f32 0.0, %v970
      %v972 = vpop.f32.mrf.mxu0
      %973 = vmatprep.mubr.f32.mxu0 0.0
      %974 = vmatmul.mubr.f32.gmra.mxu0 %v830
      %v975 = vpop.f32.mrf.mxu0
      %v976 = vadd.f32 0.0, %v975
      %v977 = vpop.f32.mrf.mxu0
      %978 = vmatprep.mubr.f32.mxu0 0.0
      %979 = vmatmul.mubr.f32.gmra.mxu0 %v833
      %v980 = vpop.f32.mrf.mxu0
      %v981 = vadd.f32 0.0, %v980
      %v982 = vpop.f32.mrf.mxu0
      %983 = vmatprep.mubr.f32.mxu0 0.0
      %984 = vmatmul.mubr.f32.gmra.mxu0 %v836
      %v985 = vpop.f32.mrf.mxu0
      %v986 = vadd.f32 0.0, %v985
      %v987 = vpop.f32.mrf.mxu0
      %988 = vmatprep.mubr.f32.mxu0 0.0
      %989 = vmatmul.mubr.f32.gmra.mxu0 %v839
      %v990 = vpop.f32.mrf.mxu0
      %v991 = vadd.f32 0.0, %v990
      %v992 = vpop.f32.mrf.mxu0
      %993 = vmatprep.mubr.f32.mxu0 0.0
      %994 = vmatmul.mubr.f32.gmra.mxu0 %v842
      %v995 = vpop.f32.mrf.mxu0
      %v996 = vadd.f32 0.0, %v995
      %v997 = vpop.f32.mrf.mxu0
      %998 = vmatprep.mubr.f32.mxu0 0.0
      %999 = vmatmul.mubr.f32.gmra.mxu0 %v845
      %v1000 = vpop.f32.mrf.mxu0
      %v1001 = vadd.f32 0.0, %v1000
      %v1002 = vpop.f32.mrf.mxu0
      %1003 = vmatprep.mubr.f32.mxu0 0.0
      %1004 = vmatmul.mubr.f32.gmra.mxu0 %v848
      %v1005 = vpop.f32.mrf.mxu0
      %v1006 = vadd.f32 0.0, %v1005
      %v1007 = vpop.f32.mrf.mxu0
      %1008 = vmatprep.mubr.f32.mxu0 0.0
      %1009 = vmatmul.mubr.f32.gmra.mxu0 %v851
      %v1010 = vpop.f32.mrf.mxu0
      %v1011 = vadd.f32 0.0, %v1010
      %v1012 = vpop.f32.mrf.mxu0
      %1013 = vmatprep.mubr.f32.mxu0 0.0
      %1014 = vmatmul.mubr.f32.gmra.mxu0 %v854
      %v1015 = vpop.f32.mrf.mxu0
      %v1016 = vadd.f32 0.0, %v1015
      %v1017 = vpop.f32.mrf.mxu0
      %1018 = vmatprep.mubr.f32.mxu0 0.0
      %1019 = vmatmul.mubr.f32.gmra.mxu0 %v857
      %v1020 = vpop.f32.mrf.mxu0
      %v1021 = vadd.f32 0.0, %v1020
      %v1022 = vpop.f32.mrf.mxu0
      %1023 = vmatprep.mubr.f32.mxu0 0.0
      %1024 = vmatmul.mubr.f32.gmra.mxu0 %v860
      %v1025 = vpop.f32.mrf.mxu0
      %v1026 = vadd.f32 0.0, %v1025
      %v1027 = vpop.f32.mrf.mxu0
      %1028 = vmatprep.mubr.f32.mxu0 0.0
      %1029 = vmatmul.mubr.f32.gmra.mxu0 %v863
      %v1030 = vpop.f32.mrf.mxu0
      %v1031 = vadd.f32 0.0, %v1030
      %v1032 = vpop.f32.mrf.mxu0
      %1033 = vmatprep.mubr.f32.mxu0 0.0
      %1034 = vmatmul.mubr.f32.gmra.mxu0 %v866
      %v1035 = vpop.f32.mrf.mxu0
      %v1036 = vadd.f32 0.0, %v1035
      %v1037 = vpop.f32.mrf.mxu0
      %1038 = vmatprep.mubr.f32.mxu0 0.0
      %1039 = vmatmul.mubr.f32.gmra.mxu0 %v869
      %v1040 = vpop.f32.mrf.mxu0
      %v1041 = vadd.f32 0.0, %v1040
      %v1042 = vpop.f32.mrf.mxu0
      %1043 = vmatprep.mubr.f32.mxu0 0.0
      %1044 = vmatmul.mubr.f32.gmra.mxu0 %v872
      %v1045 = vpop.f32.mrf.mxu0
      %v1046 = vadd.f32 0.0, %v1045
      %v1047 = vpop.f32.mrf.mxu0
      %1048 = vmatprep.mubr.f32.mxu0 0.0
      %1049 = vmatmul.mubr.f32.gmra.mxu0 %v875
      %v1050 = vpop.f32.mrf.mxu0
      %v1051 = vadd.f32 0.0, %v1050
      %v1052 = vpop.f32.mrf.mxu0
      %1053 = vmatprep.mubr.f32.mxu0 0.0
      %1054 = vmatmul.mubr.f32.gmra.mxu0 %v878
      %v1055 = vpop.f32.mrf.mxu0
      %v1056 = vadd.f32 0.0, %v1055
      %v1057 = vpop.f32.mrf.mxu0
      %1058 = vmatprep.mubr.f32.mxu0 0.0
      %1059 = vmatmul.mubr.f32.gmra.mxu0 %v881
      %v1060 = vpop.f32.mrf.mxu0
      %v1061 = vadd.f32 0.0, %v1060
      %v1062 = vpop.f32.mrf.mxu0
      %1063 = vmatprep.mubr.f32.mxu0 0.0
      %1064 = vmatmul.mubr.f32.gmra.mxu0 %v884
      %v1065 = vpop.f32.mrf.mxu0
      %v1066 = vadd.f32 0.0, %v1065
      %v1067 = vpop.f32.mrf.mxu0
      %1068 = vmatprep.mubr.f32.mxu0 0.0
      %1069 = vmatmul.mubr.f32.gmra.mxu0 %v887
      %v1070 = vpop.f32.mrf.mxu0
      %v1071 = vadd.f32 0.0, %v1070
      %v1072 = vpop.f32.mrf.mxu0
      %1073 = vdwg.mxu0
      %v1074 = vsub.f32 0.0, %v956
      %v1075 = vsub.f32 0.0, %v961
      %v1076 = vsub.f32 0.0, %v966
      %v1077 = vsub.f32 0.0, %v971
      %v1078 = vsub.f32 0.0, %v976
      %v1079 = vsub.f32 0.0, %v981
      %v1080 = vsub.f32 0.0, %v986
      %v1081 = vsub.f32 0.0, %v991
      %v1082 = vsub.f32 0.0, %v996
      %v1083 = vsub.f32 0.0, %v1001
      %v1084 = vsub.f32 0.0, %v1006
      %v1085 = vsub.f32 0.0, %v1011
      %v1086 = vsub.f32 0.0, %v1016
      %v1087 = vsub.f32 0.0, %v1021
      %v1088 = vsub.f32 0.0, %v1026
      %v1089 = vsub.f32 0.0, %v1031
      %v1090 = vsub.f32 0.0, %v1036
      %v1091 = vsub.f32 0.0, %v1041
      %v1092 = vsub.f32 0.0, %v1046
      %v1093 = vsub.f32 0.0, %v1051
      %v1094 = vsub.f32 0.0, %v1056
      %v1095 = vsub.f32 0.0, %v1061
      %v1096 = vsub.f32 0.0, %v1066
      %v1097 = vsub.f32 0.0, %v1071
      %v1098 = vmul.f32 %v1074, 1.442695
      %v1099 = vpow.pop %v1098
      %v1100 = vmul.f32 %v1075, 1.442695
      %v1101 = vpow.pop %v1100
      %v1102 = vmul.f32 %v1076, 1.442695
      %v1103 = vpow.pop %v1102
      %v1104 = vmul.f32 %v1077, 1.442695
      %v1105 = vpow.pop %v1104
      %v1106 = vmul.f32 %v1078, 1.442695
      %v1107 = vpow.pop %v1106
      %v1108 = vmul.f32 %v1079, 1.442695
      %v1109 = vpow.pop %v1108
      %v1110 = vmul.f32 %v1080, 1.442695
      %v1111 = vpow.pop %v1110
      %v1112 = vmul.f32 %v1081, 1.442695
      %v1113 = vpow.pop %v1112
      %v1114 = vmul.f32 %v1082, 1.442695
      %v1115 = vpow.pop %v1114
      %v1116 = vmul.f32 %v1083, 1.442695
      %v1117 = vpow.pop %v1116
      %v1118 = vmul.f32 %v1084, 1.442695
      %v1119 = vpow.pop %v1118
      %v1120 = vmul.f32 %v1085, 1.442695
      %v1121 = vpow.pop %v1120
      %v1122 = vmul.f32 %v1086, 1.442695
      %v1123 = vpow.pop %v1122
      %v1124 = vmul.f32 %v1087, 1.442695
      %v1125 = vpow.pop %v1124
      %v1126 = vmul.f32 %v1088, 1.442695
      %v1127 = vpow.pop %v1126
      %v1128 = vmul.f32 %v1089, 1.442695
      %v1129 = vpow.pop %v1128
      %v1130 = vmul.f32 %v1090, 1.442695
      %v1131 = vpow.pop %v1130
      %v1132 = vmul.f32 %v1091, 1.442695
      %v1133 = vpow.pop %v1132
      %v1134 = vmul.f32 %v1092, 1.442695
      %v1135 = vpow.pop %v1134
      %v1136 = vmul.f32 %v1093, 1.442695
      %v1137 = vpow.pop %v1136
      %v1138 = vmul.f32 %v1094, 1.442695
      %v1139 = vpow.pop %v1138
      %v1140 = vmul.f32 %v1095, 1.442695
      %v1141 = vpow.pop %v1140
      %v1142 = vmul.f32 %v1096, 1.442695
      %v1143 = vpow.pop %v1142
      %v1144 = vmul.f32 %v1097, 1.442695
      %v1145 = vpow.pop %v1144
      %v1146 = vadd.f32 %v1099, 1.0
      %v1147 = vadd.f32 %v1101, 1.0
      %v1148 = vadd.f32 %v1103, 1.0
      %v1149 = vadd.f32 %v1105, 1.0
      %v1150 = vadd.f32 %v1107, 1.0
      %v1151 = vadd.f32 %v1109, 1.0
      %v1152 = vadd.f32 %v1111, 1.0
      %v1153 = vadd.f32 %v1113, 1.0
      %v1154 = vadd.f32 %v1115, 1.0
      %v1155 = vadd.f32 %v1117, 1.0
      %v1156 = vadd.f32 %v1119, 1.0
      %v1157 = vadd.f32 %v1121, 1.0
      %v1158 = vadd.f32 %v1123, 1.0
      %v1159 = vadd.f32 %v1125, 1.0
      %v1160 = vadd.f32 %v1127, 1.0
      %v1161 = vadd.f32 %v1129, 1.0
      %v1162 = vadd.f32 %v1131, 1.0
      %v1163 = vadd.f32 %v1133, 1.0
      %v1164 = vadd.f32 %v1135, 1.0
      %v1165 = vadd.f32 %v1137, 1.0
      %v1166 = vadd.f32 %v1139, 1.0
      %v1167 = vadd.f32 %v1141, 1.0
      %v1168 = vadd.f32 %v1143, 1.0
      %v1169 = vadd.f32 %v1145, 1.0
      %v1170 = vrcp.pop %v1146
      %v1171 = vrcp.pop %v1147
      %v1172 = vrcp.pop %v1148
      %v1173 = vrcp.pop %v1149
      %v1174 = vrcp.pop %v1150
      %v1175 = vrcp.pop %v1151
      %v1176 = vrcp.pop %v1152
      %v1177 = vrcp.pop %v1153
      %v1178 = vrcp.pop %v1154
      %v1179 = vrcp.pop %v1155
      %v1180 = vrcp.pop %v1156
      %v1181 = vrcp.pop %v1157
      %v1182 = vrcp.pop %v1158
      %v1183 = vrcp.pop %v1159
      %v1184 = vrcp.pop %v1160
      %v1185 = vrcp.pop %v1161
      %v1186 = vrcp.pop %v1162
      %v1187 = vrcp.pop %v1163
      %v1188 = vrcp.pop %v1164
      %v1189 = vrcp.pop %v1165
      %v1190 = vrcp.pop %v1166
      %v1191 = vrcp.pop %v1167
      %v1192 = vrcp.pop %v1168
      %v1193 = vrcp.pop %v1169
      %v1194 = vmul.f32 %v1146, %v1170
      %v1195 = vmul.f32 %v1147, %v1171
      %v1196 = vmul.f32 %v1148, %v1172
      %v1197 = vmul.f32 %v1149, %v1173
      %v1198 = vmul.f32 %v1150, %v1174
      %v1199 = vmul.f32 %v1151, %v1175
      %v1200 = vmul.f32 %v1152, %v1176
      %v1201 = vmul.f32 %v1153, %v1177
      %v1202 = vmul.f32 %v1154, %v1178
      %v1203 = vmul.f32 %v1155, %v1179
      %v1204 = vmul.f32 %v1156, %v1180
      %v1205 = vmul.f32 %v1157, %v1181
      %v1206 = vmul.f32 %v1158, %v1182
      %v1207 = vmul.f32 %v1159, %v1183
      %v1208 = vmul.f32 %v1160, %v1184
      %v1209 = vmul.f32 %v1161, %v1185
      %v1210 = vmul.f32 %v1162, %v1186
      %v1211 = vmul.f32 %v1163, %v1187
      %v1212 = vmul.f32 %v1164, %v1188
      %v1213 = vmul.f32 %v1165, %v1189
      %v1214 = vmul.f32 %v1166, %v1190
      %v1215 = vmul.f32 %v1167, %v1191
      %v1216 = vmul.f32 %v1168, %v1192
      %v1217 = vmul.f32 %v1169, %v1193
      %v1218 = vsub.f32 2.0, %v1194
      %v1219 = vsub.f32 2.0, %v1195
      %v1220 = vsub.f32 2.0, %v1196
      %v1221 = vsub.f32 2.0, %v1197
      %v1222 = vsub.f32 2.0, %v1198
      %v1223 = vsub.f32 2.0, %v1199
      %v1224 = vsub.f32 2.0, %v1200
      %v1225 = vsub.f32 2.0, %v1201
      %v1226 = vsub.f32 2.0, %v1202
      %v1227 = vsub.f32 2.0, %v1203
      %v1228 = vsub.f32 2.0, %v1204
      %v1229 = vsub.f32 2.0, %v1205
      %v1230 = vsub.f32 2.0, %v1206
      %v1231 = vsub.f32 2.0, %v1207
      %v1232 = vsub.f32 2.0, %v1208
      %v1233 = vsub.f32 2.0, %v1209
      %v1234 = vsub.f32 2.0, %v1210
      %v1235 = vsub.f32 2.0, %v1211
      %v1236 = vsub.f32 2.0, %v1212
      %v1237 = vsub.f32 2.0, %v1213
      %v1238 = vsub.f32 2.0, %v1214
      %v1239 = vsub.f32 2.0, %v1215
      %v1240 = vsub.f32 2.0, %v1216
      %v1241 = vsub.f32 2.0, %v1217
      %v1242 = vmul.f32 %v1170, %v1218
      %v1243 = vmul.f32 %v1171, %v1219
      %v1244 = vmul.f32 %v1172, %v1220
      %v1245 = vmul.f32 %v1173, %v1221
      %v1246 = vmul.f32 %v1174, %v1222
      %v1247 = vmul.f32 %v1175, %v1223
      %v1248 = vmul.f32 %v1176, %v1224
      %v1249 = vmul.f32 %v1177, %v1225
      %v1250 = vmul.f32 %v1178, %v1226
      %v1251 = vmul.f32 %v1179, %v1227
      %v1252 = vmul.f32 %v1180, %v1228
      %v1253 = vmul.f32 %v1181, %v1229
      %v1254 = vmul.f32 %v1182, %v1230
      %v1255 = vmul.f32 %v1183, %v1231
      %v1256 = vmul.f32 %v1184, %v1232
      %v1257 = vmul.f32 %v1185, %v1233
      %v1258 = vmul.f32 %v1186, %v1234
      %v1259 = vmul.f32 %v1187, %v1235
      %v1260 = vmul.f32 %v1188, %v1236
      %v1261 = vmul.f32 %v1189, %v1237
      %v1262 = vmul.f32 %v1190, %v1238
      %v1263 = vmul.f32 %v1191, %v1239
      %v1264 = vmul.f32 %v1192, %v1240
      %v1265 = vmul.f32 %v1193, %v1241
      %1267 = vset.pattern.permute.xlu0 0
      %1268 = vperm.xlu0 %1267, %v1242
      %v1269 = vpop.permute.xlu0 %1268
      %1272 = vset.pattern.permute.xlu0 0
      %1273 = vperm.xlu0 %1272, %v1243
      %v1274 = vpop.permute.xlu0 %1273
      %1277 = vset.pattern.permute.xlu0 0
      %1278 = vperm.xlu0 %1277, %v1244
      %v1279 = vpop.permute.xlu0 %1278
      %1282 = vset.pattern.permute.xlu0 0
      %1283 = vperm.xlu0 %1282, %v1245
      %v1284 = vpop.permute.xlu0 %1283
      %1287 = vset.pattern.permute.xlu0 0
      %1288 = vperm.xlu0 %1287, %v1246
      %v1289 = vpop.permute.xlu0 %1288
      %1292 = vset.pattern.permute.xlu0 0
      %1293 = vperm.xlu0 %1292, %v1247
      %v1294 = vpop.permute.xlu0 %1293
      %1297 = vset.pattern.permute.xlu0 0
      %1298 = vperm.xlu0 %1297, %v1248
      %v1299 = vpop.permute.xlu0 %1298
      %1302 = vset.pattern.permute.xlu0 0
      %1303 = vperm.xlu0 %1302, %v1249
      %v1304 = vpop.permute.xlu0 %1303
      %1307 = vset.pattern.permute.xlu0 0
      %1308 = vperm.xlu0 %1307, %v1250
      %v1309 = vpop.permute.xlu0 %1308
      %1312 = vset.pattern.permute.xlu0 0
      %1313 = vperm.xlu0 %1312, %v1251
      %v1314 = vpop.permute.xlu0 %1313
      %1317 = vset.pattern.permute.xlu0 0
      %1318 = vperm.xlu0 %1317, %v1252
      %v1319 = vpop.permute.xlu0 %1318
      %1322 = vset.pattern.permute.xlu0 0
      %1323 = vperm.xlu0 %1322, %v1253
      %v1324 = vpop.permute.xlu0 %1323
      %1327 = vset.pattern.permute.xlu0 0
      %1328 = vperm.xlu0 %1327, %v1254
      %v1329 = vpop.permute.xlu0 %1328
      %1332 = vset.pattern.permute.xlu0 0
      %1333 = vperm.xlu0 %1332, %v1255
      %v1334 = vpop.permute.xlu0 %1333
      %1337 = vset.pattern.permute.xlu0 0
      %1338 = vperm.xlu0 %1337, %v1256
      %v1339 = vpop.permute.xlu0 %1338
      %1342 = vset.pattern.permute.xlu0 0
      %1343 = vperm.xlu0 %1342, %v1257
      %v1344 = vpop.permute.xlu0 %1343
      %1347 = vset.pattern.permute.xlu0 0
      %1348 = vperm.xlu0 %1347, %v1258
      %v1349 = vpop.permute.xlu0 %1348
      %1352 = vset.pattern.permute.xlu0 0
      %1353 = vperm.xlu0 %1352, %v1259
      %v1354 = vpop.permute.xlu0 %1353
      %1357 = vset.pattern.permute.xlu0 0
      %1358 = vperm.xlu0 %1357, %v1260
      %v1359 = vpop.permute.xlu0 %1358
      %1362 = vset.pattern.permute.xlu0 0
      %1363 = vperm.xlu0 %1362, %v1261
      %v1364 = vpop.permute.xlu0 %1363
      %1367 = vset.pattern.permute.xlu0 0
      %1368 = vperm.xlu0 %1367, %v1262
      %v1369 = vpop.permute.xlu0 %1368
      %1372 = vset.pattern.permute.xlu0 0
      %1373 = vperm.xlu0 %1372, %v1263
      %v1374 = vpop.permute.xlu0 %1373
      %1377 = vset.pattern.permute.xlu0 0
      %1378 = vperm.xlu0 %1377, %v1264
      %v1379 = vpop.permute.xlu0 %1378
      %1382 = vset.pattern.permute.xlu0 0
      %1383 = vperm.xlu0 %1382, %v1265
      %v1384 = vpop.permute.xlu0 %1383
      %v1386 = vmul.f32 %v445, %v1269
      %v1387 = vmul.f32 %v450, %v1274
      %v1388 = vmul.f32 %v455, %v1279
      %v1389 = vmul.f32 %v460, %v1284
      %v1390 = vmul.f32 %v465, %v1289
      %v1391 = vmul.f32 %v470, %v1294
      %v1392 = vmul.f32 %v475, %v1299
      %v1393 = vmul.f32 %v480, %v1304
      %v1394 = vmul.f32 %v485, %v1309
      %v1395 = vmul.f32 %v490, %v1314
      %v1396 = vmul.f32 %v495, %v1319
      %v1397 = vmul.f32 %v500, %v1324
      %v1398 = vmul.f32 %v505, %v1329
      %v1399 = vmul.f32 %v510, %v1334
      %v1400 = vmul.f32 %v515, %v1339
      %v1401 = vmul.f32 %v520, %v1344
      %v1402 = vmul.f32 %v525, %v1349
      %v1403 = vmul.f32 %v530, %v1354
      %v1404 = vmul.f32 %v535, %v1359
      %v1405 = vmul.f32 %v540, %v1364
      %v1406 = vmul.f32 %v545, %v1369
      %v1407 = vmul.f32 %v550, %v1374
      %v1408 = vmul.f32 %v555, %v1379
      %v1409 = vmul.f32 %v560, %v1384
      %v1410 = vsel %vm563, %v1386, 0.0
      %v1411 = vsel %vm563, %v1387, 0.0
      %v1412 = vadd.f32 %v1410, %v1411
      %v1413 = vsel %vm563, %v1388, 0.0
      %v1414 = vadd.f32 %v1412, %v1413
      %v1415 = vsel %vm563, %v1389, 0.0
      %v1416 = vadd.f32 %v1414, %v1415
      %v1417 = vsel %vm563, %v1390, 0.0
      %v1418 = vadd.f32 %v1416, %v1417
      %v1419 = vsel %vm563, %v1391, 0.0
      %v1420 = vadd.f32 %v1418, %v1419
      %v1421 = vsel %vm563, %v1392, 0.0
      %v1422 = vadd.f32 %v1420, %v1421
      %v1423 = vsel %vm563, %v1393, 0.0
      %v1424 = vadd.f32 %v1422, %v1423
      %v1425 = vsel %vm563, %v1394, 0.0
      %v1426 = vadd.f32 %v1424, %v1425
      %v1427 = vsel %vm563, %v1395, 0.0
      %v1428 = vadd.f32 %v1426, %v1427
      %v1429 = vsel %vm563, %v1396, 0.0
      %v1430 = vadd.f32 %v1428, %v1429
      %v1431 = vsel %vm563, %v1397, 0.0
      %v1432 = vadd.f32 %v1430, %v1431
      %v1433 = vsel %vm563, %v1398, 0.0
      %v1434 = vadd.f32 %v1432, %v1433
      %v1435 = vsel %vm563, %v1399, 0.0
      %v1436 = vadd.f32 %v1434, %v1435
      %v1437 = vsel %vm563, %v1400, 0.0
      %v1438 = vadd.f32 %v1436, %v1437
      %v1439 = vsel %vm563, %v1401, 0.0
      %v1440 = vadd.f32 %v1438, %v1439
      %v1441 = vsel %vm563, %v1402, 0.0
      %v1442 = vadd.f32 %v1440, %v1441
      %v1443 = vsel %vm563, %v1403, 0.0
      %v1444 = vadd.f32 %v1442, %v1443
      %v1445 = vsel %vm563, %v1404, 0.0
      %v1446 = vadd.f32 %v1444, %v1445
      %v1447 = vsel %vm563, %v1405, 0.0
      %v1448 = vadd.f32 %v1446, %v1447
      %v1449 = vsel %vm563, %v1406, 0.0
      %v1450 = vadd.f32 %v1448, %v1449
      %v1451 = vsel %vm563, %v1407, 0.0
      %v1452 = vadd.f32 %v1450, %v1451
      %v1453 = vsel %vm563, %v1408, 0.0
      %v1454 = vadd.f32 %v1452, %v1453
      %v1455 = vsel %vm563, %v1409, 0.0
      %v1456 = vadd.f32 %v1454, %v1455
      %v1457 = vrot.slane %v1456, 4
      %v1458 = vadd.f32 %v1456, %v1457
      %v1459 = vrot.slane %v1458, 2
      %v1460 = vadd.f32 %v1458, %v1459
      %v1461 = vrot.slane %v1460, 1
      %v1462 = vadd.f32 %v1460, %v1461
      %v1463 = vrcp.pop 192.0
      %v1464 = vmul.f32 %v1462, %v1463
      %v1465 = vsel %vm563, %v1386, -inf
      %v1466 = vsel %vm563, %v1387, -inf
      %v1467 = vsel %vm563, %v1388, -inf
      %v1468 = vsel %vm563, %v1389, -inf
      %v1469 = vsel %vm563, %v1390, -inf
      %v1470 = vmax.f32 %v1465, %v1469
      %v1471 = vsel %vm563, %v1391, -inf
      %v1472 = vmax.f32 %v1466, %v1471
      %v1473 = vsel %vm563, %v1392, -inf
      %v1474 = vmax.f32 %v1467, %v1473
      %v1475 = vsel %vm563, %v1393, -inf
      %v1476 = vmax.f32 %v1468, %v1475
      %v1477 = vsel %vm563, %v1394, -inf
      %v1478 = vmax.f32 %v1470, %v1477
      %v1479 = vsel %vm563, %v1395, -inf
      %v1480 = vmax.f32 %v1472, %v1479
      %v1481 = vsel %vm563, %v1396, -inf
      %v1482 = vmax.f32 %v1474, %v1481
      %v1483 = vsel %vm563, %v1397, -inf
      %v1484 = vmax.f32 %v1476, %v1483
      %v1485 = vsel %vm563, %v1398, -inf
      %v1486 = vmax.f32 %v1478, %v1485
      %v1487 = vsel %vm563, %v1399, -inf
      %v1488 = vmax.f32 %v1480, %v1487
      %v1489 = vsel %vm563, %v1400, -inf
      %v1490 = vmax.f32 %v1482, %v1489
      %v1491 = vsel %vm563, %v1401, -inf
      %v1492 = vmax.f32 %v1484, %v1491
      %v1493 = vsel %vm563, %v1402, -inf
      %v1494 = vmax.f32 %v1486, %v1493
      %v1495 = vsel %vm563, %v1403, -inf
      %v1496 = vmax.f32 %v1488, %v1495
      %v1497 = vsel %vm563, %v1404, -inf
      %v1498 = vmax.f32 %v1490, %v1497
      %v1499 = vsel %vm563, %v1405, -inf
      %v1500 = vmax.f32 %v1492, %v1499
      %v1501 = vsel %vm563, %v1406, -inf
      %v1502 = vmax.f32 %v1494, %v1501
      %v1503 = vsel %vm563, %v1407, -inf
      %v1504 = vmax.f32 %v1496, %v1503
      %v1505 = vsel %vm563, %v1408, -inf
      %v1506 = vmax.f32 %v1498, %v1505
      %v1507 = vsel %vm563, %v1409, -inf
      %v1508 = vmax.f32 %v1500, %v1507
      %v1509 = vmax.f32 %v1502, %v1504
      %v1510 = vmax.f32 %v1506, %v1508
      %v1511 = vmax.f32 %v1509, %v1510
      %v1512 = vrot.slane %v1511, 4
      %v1513 = vmax.f32 %v1511, %v1512
      %v1514 = vrot.slane %v1513, 2
      %v1515 = vmax.f32 %v1513, %v1514
      %v1516 = vrot.slane %v1515, 1
      %v1517 = vmax.f32 %v1515, %v1516
      %1518 = vst.msk [vmem:[%s262] sm:$0xff] %vm563, %v1386
      %1519 = vst.msk [vmem:[%s262 + $0x8] sm:$0xff] %vm563, %v1387
      %1520 = vst.msk [vmem:[%s262 + $0x10] sm:$0xff] %vm563, %v1388
      %1521 = vst.msk [vmem:[%s262 + $0x18] sm:$0xff] %vm563, %v1389
      %1522 = vst.msk [vmem:[%s262 + $0x20] sm:$0xff] %vm563, %v1390
      %1523 = vst.msk [vmem:[%s262 + $0x28] sm:$0xff] %vm563, %v1391
      %1524 = vst.msk [vmem:[%s262 + $0x30] sm:$0xff] %vm563, %v1392
      %1525 = vst.msk [vmem:[%s262 + $0x38] sm:$0xff] %vm563, %v1393
      %1526 = vst.msk [vmem:[%s262 + $0x40] sm:$0xff] %vm563, %v1394
      %1527 = vst.msk [vmem:[%s262 + $0x48] sm:$0xff] %vm563, %v1395
      %1528 = vst.msk [vmem:[%s262 + $0x50] sm:$0xff] %vm563, %v1396
      %1529 = vst.msk [vmem:[%s262 + $0x58] sm:$0xff] %vm563, %v1397
      %1530 = vst.msk [vmem:[%s262 + $0x60] sm:$0xff] %vm563, %v1398
      %1531 = vst.msk [vmem:[%s262 + $0x68] sm:$0xff] %vm563, %v1399
      %1532 = vst.msk [vmem:[%s262 + $0x70] sm:$0xff] %vm563, %v1400
      %1533 = vst.msk [vmem:[%s262 + $0x78] sm:$0xff] %vm563, %v1401
      %1534 = vst.msk [vmem:[%s262 + $0x80] sm:$0xff] %vm563, %v1402
      %1535 = vst.msk [vmem:[%s262 + $0x88] sm:$0xff] %vm563, %v1403
      %1536 = vst.msk [vmem:[%s262 + $0x90] sm:$0xff] %vm563, %v1404
      %1537 = vst.msk [vmem:[%s262 + $0x98] sm:$0xff] %vm563, %v1405
      %1538 = vst.msk [vmem:[%s262 + $0xa0] sm:$0xff] %vm563, %v1406
      %1539 = vst.msk [vmem:[%s262 + $0xa8] sm:$0xff] %vm563, %v1407
      %1540 = vst.msk [vmem:[%s262 + $0xb0] sm:$0xff] %vm563, %v1408
      %1541 = vst.msk [vmem:[%s262 + $0xb8] sm:$0xff] %vm563, %v1409
      %vm1542 = vcmask 24576
      %1543 = vst.msk [vmem:[%s265] sm:$0x1] %vm1542, %v1464
      %1544 = vst.msk [vmem:[%s268] sm:$0x1] %vm1542, %v1517
      %p1545 = scmp.lt.s32.totalorder %s18, 1
      %s1546 = scalar_select %p1545, %s18, 1
      %s1547 = smul.addr %s1546, 24
      %s1548 = smul.addr %s1547, 8
      %s1549 = scalar_lea.vmem %s4, %s1548
      %p1550 = scmp.lt.s32.totalorder %s18, 1
      %s1551 = scalar_select %p1550, %s18, 1
      %s1552 = scalar_lea.vmem %s5, %s1551
      %p1553 = scmp.lt.s32.totalorder %s18, 1
      %s1554 = scalar_select %p1553, %s18, 1
      %s1555 = scalar_lea.vmem %s6, %s1554
      // Predicated region
      $region37: #{forward_pallas.14} parent=35 // pred_check
        %p1556 = pneg %p125
      $region38: #{forward_pallas.14} parent=35 // pred_check_branch
        %1558 = sbr.rel (%p1556) target = $region40
      $region39: #{forward_pallas.14} parent=35 // pred_region
        _
      $region40: #{forward_pallas.14} parent=35 // pred_fallthru
        _
      // Predicated region
      $region41: #{forward_pallas.14} parent=35 // pred_check
        %p1559 = pneg %p151
      $region42: #{forward_pallas.14} parent=35 // pred_check_branch
        %1561 = sbr.rel (%p1559) target = $region44
      $region43: #{forward_pallas.14} parent=35 // pred_region
        _
      $region44: #{forward_pallas.14} parent=35 // pred_fallthru
        _
      // Predicated region
      $region45: #{forward_pallas.14} parent=35 // pred_check
        %p1562 = pneg %p177
      $region46: #{forward_pallas.14} parent=35 // pred_check_branch
        %1564 = sbr.rel (%p1562) target = $region48
      $region47: #{forward_pallas.14} parent=35 // pred_region
        _
      $region48: #{forward_pallas.14} parent=35 // pred_fallthru
        _
    $region36: #{forward_pallas.14} parent=5 // pred_fallthru
      _
    %p1565 = scmp.le.s32.totalorder 2, %s13
    // Predicated region
    $region49: #{forward_pallas.14} parent=5 // pred_check
      %p1566 = pneg %p1565
    $region50: #{forward_pallas.14} parent=5 // pred_check_branch
      %1568 = sbr.rel (%p1566) target = $region52
    $region51: #{forward_pallas.14} parent=5 // pred_region
      %s1569 = ssub.s32 %s13, 2
      // Predicated region
      $region53: #{forward_pallas.14} parent=51 // pred_check
        %p1570 = pneg %p131
      $region54: #{forward_pallas.14} parent=51 // pred_check_branch
        %1572 = sbr.rel (%p1570) target = $region56
      $region55: #{forward_pallas.14} parent=51 // pred_region
        %p1573 = scmp.lt.s32.totalorder %s19, 1
        %s1574 = scalar_select %p1573, %s19, 1
        %s1575 = smul.addr %s1574, 24
        %s1576 = smul.addr %s1575, 8
        %s1577 = scalar_lea.vmem %s4, %s1576
      $region56: #{forward_pallas.14} parent=51 // pred_fallthru
        _
      // Predicated region
      $region57: #{forward_pallas.14} parent=51 // pred_check
        %p1578 = pneg %p157
      $region58: #{forward_pallas.14} parent=51 // pred_check_branch
        %1580 = sbr.rel (%p1578) target = $region60
      $region59: #{forward_pallas.14} parent=51 // pred_region
        %p1581 = scmp.lt.s32.totalorder %s19, 1
        %s1582 = scalar_select %p1581, %s19, 1
        %s1583 = scalar_lea.vmem %s5, %s1582
      $region60: #{forward_pallas.14} parent=51 // pred_fallthru
        _
      // Predicated region
      $region61: #{forward_pallas.14} parent=51 // pred_check
        %p1584 = pneg %p183
      $region62: #{forward_pallas.14} parent=51 // pred_check_branch
        %1586 = sbr.rel (%p1584) target = $region64
      $region63: #{forward_pallas.14} parent=51 // pred_region
        %p1587 = scmp.lt.s32.totalorder %s19, 1
        %s1588 = scalar_select %p1587, %s19, 1
        %s1589 = scalar_lea.vmem %s6, %s1588
      $region64: #{forward_pallas.14} parent=51 // pred_fallthru
        _
    $region52: #{forward_pallas.14} parent=5 // pred_fallthru
      _
  $region6: #{forward_pallas.14} parent=0 // loop_footer
    %s17 = sadd.s32 1, %s13
  $region7: #{forward_pallas.14} parent=0 // loop_footer_branch
    %12 = sbr.rel target = $region3
  $region8: #{forward_pallas.14} parent=0 // loop_exit
    _

// kernel: forward_pallas.15
$region0: #{forward_pallas.15}
  #allocation0 [shape = 'u32[]', space=smem, size = 0x4, offset = 0x4, fixed_abs, tag = 'smem constant byte address 0x4 - core index']
  #allocation1 [shape = 'u32[144,128]{1,0:T(1,128)}', space=vmem, size = 0x12000, scoped, tag = 'internal scratch']
  %s0 = inlined_call_operand.vmem [shape: f32[2,192,4], index: 0, kind: input, shape index: {}]
  %s1 = inlined_call_operand.vmem [shape: f32[2,1,4], index: 1, kind: input, shape index: {}]
  %s2 = inlined_call_operand.vmem [shape: f32[2,192,1], index: 2, kind: output, shape index: {}]
  %s3 = sld [smem:[#allocation0]]
  $region41: #{forward_pallas.15} parent=0
    _
  %s5 = ssub.s32 1, %s3
  %s6 = scalar_select 0, %s5, %s3
  loop: start=0, step=1, limit=4
  $region2: #{forward_pallas.15} parent=0 // loop_pre_header
    _
  $region3: #{forward_pallas.15} parent=0 // loop_header
    %s8 = sphi 0, %s12
    %p9 = scmp.ge.s32.totalorder %s8, 4
    %s18 = sphi 0, %s20
    %s21 = sphi 0, %s18
    %s22 = sphi 0, %s21
    %s38 = sphi 0, %s22
    %s44 = sphi 0, %s46
    %s47 = sphi 0, %s44
    %s48 = sphi 0, %s47
    %s64 = sphi 0, %s48
    %s70 = sphi 0, %s72
    %s73 = sphi 0, %s70
    %s74 = sphi 0, %s73
    %s90 = sphi 0, %s74
  $region4: #{forward_pallas.15} parent=0 // loop_header_branch
    %11 = sbr.rel (%p9) target = $region8
  $region5: #{forward_pallas.15} parent=0 // loop_body
    %s13 = ssub.s32 %s8, 1
    %s14 = ssub.s32 %s8, 2
    %s15 = sadd.s32 %s8, 1
    %s16 = ssub.s32 %s8, %s15
    %p17 = scmp.eq.s32.totalorder %s16, 0
    %s19 = sadd.s32 %s18, 1
    %s20 = scalar_select %p17, %s18, %s19
    %p23 = pneg %p17
    %p24 = scmp.eq.s32.totalorder %s8, 1
    %p25 = por %p23, %p24
    %p26 = scmp.ne.s32.totalorder %s18, %s21
    %p27 = scmp.eq.s32.totalorder %s8, 0
    %p28 = por %p26, %p27
    %p29 = scmp.ne.s32.totalorder %s18, %s21
    %p30 = scmp.eq.s32.totalorder %s13, 1
    %p31 = por %p29, %p30
    %p32 = scmp.ne.s32.totalorder %s21, %s22
    %p33 = scmp.eq.s32.totalorder %s13, 0
    %p34 = por %p32, %p33
    %p35 = scmp.ne.s32.totalorder %s21, %s22
    %p36 = scmp.eq.s32.totalorder %s14, 1
    %p37 = por %p35, %p36
    %p39 = scmp.ne.s32.totalorder %s22, %s38
    %p40 = scmp.eq.s32.totalorder %s14, 0
    %p41 = por %p39, %p40
    %s42 = ssub.s32 %s8, %s15
    %p43 = scmp.eq.s32.totalorder %s42, 0
    %s45 = sadd.s32 %s44, 1
    %s46 = scalar_select %p43, %s44, %s45
    %p49 = pneg %p43
    %p50 = scmp.eq.s32.totalorder %s8, 1
    %p51 = por %p49, %p50
    %p52 = scmp.ne.s32.totalorder %s44, %s47
    %p53 = scmp.eq.s32.totalorder %s8, 0
    %p54 = por %p52, %p53
    %p55 = scmp.ne.s32.totalorder %s44, %s47
    %p56 = scmp.eq.s32.totalorder %s13, 1
    %p57 = por %p55, %p56
    %p58 = scmp.ne.s32.totalorder %s47, %s48
    %p59 = scmp.eq.s32.totalorder %s13, 0
    %p60 = por %p58, %p59
    %p61 = scmp.ne.s32.totalorder %s47, %s48
    %p62 = scmp.eq.s32.totalorder %s14, 1
    %p63 = por %p61, %p62
    %p65 = scmp.ne.s32.totalorder %s48, %s64
    %p66 = scmp.eq.s32.totalorder %s14, 0
    %p67 = por %p65, %p66
    %s68 = ssub.s32 %s8, %s15
    %p69 = scmp.eq.s32.totalorder %s68, 0
    %s71 = sadd.s32 %s70, 1
    %s72 = scalar_select %p69, %s70, %s71
    %p75 = pneg %p69
    %p76 = scmp.eq.s32.totalorder %s8, 1
    %p77 = por %p75, %p76
    %p78 = scmp.ne.s32.totalorder %s70, %s73
    %p79 = scmp.eq.s32.totalorder %s8, 0
    %p80 = por %p78, %p79
    %p81 = scmp.ne.s32.totalorder %s70, %s73
    %p82 = scmp.eq.s32.totalorder %s13, 1
    %p83 = por %p81, %p82
    %p84 = scmp.ne.s32.totalorder %s73, %s74
    %p85 = scmp.eq.s32.totalorder %s13, 0
    %p86 = por %p84, %p85
    %p87 = scmp.ne.s32.totalorder %s73, %s74
    %p88 = scmp.eq.s32.totalorder %s14, 1
    %p89 = por %p87, %p88
    %p91 = scmp.ne.s32.totalorder %s74, %s90
    %p92 = scmp.eq.s32.totalorder %s14, 0
    %p93 = por %p91, %p92
    %p94 = scmp.le.s32.totalorder 1, %s8
    %p95 = scmp.lt.s32.totalorder %s8, 3
    %p96 = pnand %p94, %p95
    %p97 = pneg %p96
    // Predicated region
    $region9: #{forward_pallas.15} parent=5 // pred_check
      _
    $region10: #{forward_pallas.15} parent=5 // pred_check_branch
      %99 = sbr.rel (%p96) target = $region12
    $region11: #{forward_pallas.15} parent=5 // pred_region
      %s100 = ssub.s32 %s8, 1
    $region12: #{forward_pallas.15} parent=5 // pred_fallthru
      _
    %p101 = scmp.lt.s32.totalorder %s8, 2
    // Predicated region
    $region13: #{forward_pallas.15} parent=5 // pred_check
      %p102 = pneg %p101
    $region14: #{forward_pallas.15} parent=5 // pred_check_branch
      %104 = sbr.rel (%p102) target = $region16
    $region15: #{forward_pallas.15} parent=5 // pred_region
      // Predicated region
      $region17: #{forward_pallas.15} parent=15 // pred_check
        %p105 = pneg %p28
      $region18: #{forward_pallas.15} parent=15 // pred_check_branch
        %107 = sbr.rel (%p105) target = $region20
      $region19: #{forward_pallas.15} parent=15 // pred_region
        %p108 = scmp.lt.s32.totalorder %s8, 1
        %s109 = scalar_select %p108, %s8, 1
        %s110 = smul.addr %s109, 24
        %s111 = smul.addr %s110, 8
        %s112 = scalar_lea.vmem %s0, %s111
      $region20: #{forward_pallas.15} parent=15 // pred_fallthru
        _
      // Predicated region
      $region21: #{forward_pallas.15} parent=15 // pred_check
        %p113 = pneg %p54
      $region22: #{forward_pallas.15} parent=15 // pred_check_branch
        %115 = sbr.rel (%p113) target = $region24
      $region23: #{forward_pallas.15} parent=15 // pred_region
        %p116 = scmp.lt.s32.totalorder %s8, 1
        %s117 = scalar_select %p116, %s8, 1
        %s118 = scalar_lea.vmem %s1, %s117
      $region24: #{forward_pallas.15} parent=15 // pred_fallthru
        _
    $region16: #{forward_pallas.15} parent=5 // pred_fallthru
      _
    %p119 = scmp.le.s32.totalorder 1, %s8
    %p120 = scmp.lt.s32.totalorder %s8, 3
    %p121 = pnand %p119, %p120
    %p122 = pneg %p121
    // Predicated region
    $region25: #{forward_pallas.15} parent=5 // pred_check
      _
    $region26: #{forward_pallas.15} parent=5 // pred_check_branch
      %124 = sbr.rel (%p121) target = $region28
    $region27: #{forward_pallas.15} parent=5 // pred_region
      %s125 = ssub.s32 %s8, 1
      %p126 = scmp.lt.s32.totalorder %s13, 1
      %s127 = scalar_select %p126, %s13, 1
      %s128 = smul.addr %s127, 24
      %s129 = smul.addr %s128, 8
      %s130 = scalar_lea.vmem %s0, %s129
      %p131 = pneg %p34
      %p132 = pneg %p31
      %p133 = scmp.lt.s32.totalorder %s13, 1
      %s134 = scalar_select %p133, %s13, 1
      %s135 = scalar_lea.vmem %s1, %s134
      %p136 = pneg %p60
      %p137 = pneg %p57
      %p138 = pneg %p86
      %p139 = pneg %p83
      %p140 = scmp.lt.s32.totalorder %s13, 1
      %s141 = scalar_select %p140, %s13, 1
      %s142 = smul.addr %s141, 24
      %s143 = smul.addr %s142, 8
      %s144 = scalar_lea.vmem %s2, %s143
      %p145 = scmp.lt.s32.totalorder %s13, 1
      %s146 = scalar_select %p145, %s13, 1
      %s147 = smul.addr %s146, 24
      %s148 = smul.addr %s147, 8
      %s149 = scalar_lea.vmem %s0, %s148
      %p150 = scmp.lt.s32.totalorder %s13, 1
      %s151 = scalar_select %p150, %s13, 1
      %s152 = scalar_lea.vmem %s1, %s151
      %p153 = scmp.lt.s32.totalorder %s13, 1
      %s154 = scalar_select %p153, %s13, 1
      %s155 = smul.addr %s154, 24
      %s156 = smul.addr %s155, 8
      %s157 = scalar_lea.vmem %s2, %s156
      %v158 = vld [vmem:[%s149] sm:$0xff]
      %v159 = vld [vmem:[%s149 + $0x8] sm:$0xff]
      %v160 = vld [vmem:[%s149 + $0x10] sm:$0xff]
      %v161 = vld [vmem:[%s149 + $0x18] sm:$0xff]
      %v162 = vld [vmem:[%s149 + $0x20] sm:$0xff]
      %v163 = vld [vmem:[%s149 + $0x28] sm:$0xff]
      %v164 = vld [vmem:[%s149 + $0x30] sm:$0xff]
      %v165 = vld [vmem:[%s149 + $0x38] sm:$0xff]
      %v166 = vld [vmem:[%s149 + $0x40] sm:$0xff]
      %v167 = vld [vmem:[%s149 + $0x48] sm:$0xff]
      %v168 = vld [vmem:[%s149 + $0x50] sm:$0xff]
      %v169 = vld [vmem:[%s149 + $0x58] sm:$0xff]
      %v170 = vld [vmem:[%s149 + $0x60] sm:$0xff]
      %v171 = vld [vmem:[%s149 + $0x68] sm:$0xff]
      %v172 = vld [vmem:[%s149 + $0x70] sm:$0xff]
      %v173 = vld [vmem:[%s149 + $0x78] sm:$0xff]
      %v174 = vld [vmem:[%s149 + $0x80] sm:$0xff]
      %v175 = vld [vmem:[%s149 + $0x88] sm:$0xff]
      %v176 = vld [vmem:[%s149 + $0x90] sm:$0xff]
      %v177 = vld [vmem:[%s149 + $0x98] sm:$0xff]
      %v178 = vld [vmem:[%s149 + $0xa0] sm:$0xff]
      %v179 = vld [vmem:[%s149 + $0xa8] sm:$0xff]
      %v180 = vld [vmem:[%s149 + $0xb0] sm:$0xff]
      %v181 = vld [vmem:[%s149 + $0xb8] sm:$0xff]
      %v182 = vld [vmem:[%s152] sm:$0x1]
      %v183 = vsub.f32 0.0, %v182
      %v184 = vmul.f32 %v183, 1.442695
      %v185 = vpow.pop %v184
      %v186 = vadd.f32 %v185, 1.0
      %v187 = vrcp.pop %v186
      %v188 = vmul.f32 %v186, %v187
      %v189 = vsub.f32 2.0, %v188
      %v190 = vmul.f32 %v187, %v189
      %v192 = vlaneseq
      %v193 = vshrl.u32 %v192, 7
      %v194 = vsub.s32 0, %v193
      %v195 = vrot.slane %v190, %v194
      %v197 = vmul.f32 %v158, %v195
      %v198 = vmul.f32 %v159, %v195
      %v199 = vmul.f32 %v160, %v195
      %v200 = vmul.f32 %v161, %v195
      %v201 = vmul.f32 %v162, %v195
      %v202 = vmul.f32 %v163, %v195
      %v203 = vmul.f32 %v164, %v195
      %v204 = vmul.f32 %v165, %v195
      %v205 = vmul.f32 %v166, %v195
      %v206 = vmul.f32 %v167, %v195
      %v207 = vmul.f32 %v168, %v195
      %v208 = vmul.f32 %v169, %v195
      %v209 = vmul.f32 %v170, %v195
      %v210 = vmul.f32 %v171, %v195
      %v211 = vmul.f32 %v172, %v195
      %v212 = vmul.f32 %v173, %v195
      %v213 = vmul.f32 %v174, %v195
      %v214 = vmul.f32 %v175, %v195
      %v215 = vmul.f32 %v176, %v195
      %v216 = vmul.f32 %v177, %v195
      %v217 = vmul.f32 %v178, %v195
      %v218 = vmul.f32 %v179, %v195
      %v219 = vmul.f32 %v180, %v195
      %v220 = vmul.f32 %v181, %v195
      %vm221 = vcmask 31744
      %v222 = vsel %vm221, %v197, 0.0
      %223 = vadd.xlane.f32.xlu0 %v222
      %v224 = vpop.xlane.xlu0 %223
      %v225 = vsel %vm221, %v198, 0.0
      %226 = vadd.xlane.f32.xlu0 %v225
      %v227 = vpop.xlane.xlu0 %226
      %v228 = vsel %vm221, %v199, 0.0
      %229 = vadd.xlane.f32.xlu0 %v228
      %v230 = vpop.xlane.xlu0 %229
      %v231 = vsel %vm221, %v200, 0.0
      %232 = vadd.xlane.f32.xlu0 %v231
      %v233 = vpop.xlane.xlu0 %232
      %v234 = vsel %vm221, %v201, 0.0
      %235 = vadd.xlane.f32.xlu0 %v234
      %v236 = vpop.xlane.xlu0 %235
      %v237 = vsel %vm221, %v202, 0.0
      %238 = vadd.xlane.f32.xlu0 %v237
      %v239 = vpop.xlane.xlu0 %238
      %v240 = vsel %vm221, %v203, 0.0
      %241 = vadd.xlane.f32.xlu0 %v240
      %v242 = vpop.xlane.xlu0 %241
      %v243 = vsel %vm221, %v204, 0.0
      %244 = vadd.xlane.f32.xlu0 %v243
      %v245 = vpop.xlane.xlu0 %244
      %v246 = vsel %vm221, %v205, 0.0
      %247 = vadd.xlane.f32.xlu0 %v246
      %v248 = vpop.xlane.xlu0 %247
      %v249 = vsel %vm221, %v206, 0.0
      %250 = vadd.xlane.f32.xlu0 %v249
      %v251 = vpop.xlane.xlu0 %250
      %v252 = vsel %vm221, %v207, 0.0
      %253 = vadd.xlane.f32.xlu0 %v252
      %v254 = vpop.xlane.xlu0 %253
      %v255 = vsel %vm221, %v208, 0.0
      %256 = vadd.xlane.f32.xlu0 %v255
      %v257 = vpop.xlane.xlu0 %256
      %v258 = vsel %vm221, %v209, 0.0
      %259 = vadd.xlane.f32.xlu0 %v258
      %v260 = vpop.xlane.xlu0 %259
      %v261 = vsel %vm221, %v210, 0.0
      %262 = vadd.xlane.f32.xlu0 %v261
      %v263 = vpop.xlane.xlu0 %262
      %v264 = vsel %vm221, %v211, 0.0
      %265 = vadd.xlane.f32.xlu0 %v264
      %v266 = vpop.xlane.xlu0 %265
      %v267 = vsel %vm221, %v212, 0.0
      %268 = vadd.xlane.f32.xlu0 %v267
      %v269 = vpop.xlane.xlu0 %268
      %v270 = vsel %vm221, %v213, 0.0
      %271 = vadd.xlane.f32.xlu0 %v270
      %v272 = vpop.xlane.xlu0 %271
      %v273 = vsel %vm221, %v214, 0.0
      %274 = vadd.xlane.f32.xlu0 %v273
      %v275 = vpop.xlane.xlu0 %274
      %v276 = vsel %vm221, %v215, 0.0
      %277 = vadd.xlane.f32.xlu0 %v276
      %v278 = vpop.xlane.xlu0 %277
      %v279 = vsel %vm221, %v216, 0.0
      %280 = vadd.xlane.f32.xlu0 %v279
      %v281 = vpop.xlane.xlu0 %280
      %v282 = vsel %vm221, %v217, 0.0
      %283 = vadd.xlane.f32.xlu0 %v282
      %v284 = vpop.xlane.xlu0 %283
      %v285 = vsel %vm221, %v218, 0.0
      %286 = vadd.xlane.f32.xlu0 %v285
      %v287 = vpop.xlane.xlu0 %286
      %v288 = vsel %vm221, %v219, 0.0
      %289 = vadd.xlane.f32.xlu0 %v288
      %v290 = vpop.xlane.xlu0 %289
      %v291 = vsel %vm221, %v220, 0.0
      %292 = vadd.xlane.f32.xlu0 %v291
      %v293 = vpop.xlane.xlu0 %292
      %v294 = vmul.f32 %v224, 0.25
      %v295 = vmul.f32 %v227, 0.25
      %v296 = vmul.f32 %v230, 0.25
      %v297 = vmul.f32 %v233, 0.25
      %v298 = vmul.f32 %v236, 0.25
      %v299 = vmul.f32 %v239, 0.25
      %v300 = vmul.f32 %v242, 0.25
      %v301 = vmul.f32 %v245, 0.25
      %v302 = vmul.f32 %v248, 0.25
      %v303 = vmul.f32 %v251, 0.25
      %v304 = vmul.f32 %v254, 0.25
      %v305 = vmul.f32 %v257, 0.25
      %v306 = vmul.f32 %v260, 0.25
      %v307 = vmul.f32 %v263, 0.25
      %v308 = vmul.f32 %v266, 0.25
      %v309 = vmul.f32 %v269, 0.25
      %v310 = vmul.f32 %v272, 0.25
      %v311 = vmul.f32 %v275, 0.25
      %v312 = vmul.f32 %v278, 0.25
      %v313 = vmul.f32 %v281, 0.25
      %v314 = vmul.f32 %v284, 0.25
      %v315 = vmul.f32 %v287, 0.25
      %v316 = vmul.f32 %v290, 0.25
      %v317 = vmul.f32 %v293, 0.25
      %vm318 = vcmask 7168
      %319 = vst.msk [vmem:[%s157] sm:$0xff] %vm318, %v294
      %320 = vst.msk [vmem:[%s157 + $0x8] sm:$0xff] %vm318, %v295
      %321 = vst.msk [vmem:[%s157 + $0x10] sm:$0xff] %vm318, %v296
      %322 = vst.msk [vmem:[%s157 + $0x18] sm:$0xff] %vm318, %v297
      %323 = vst.msk [vmem:[%s157 + $0x20] sm:$0xff] %vm318, %v298
      %324 = vst.msk [vmem:[%s157 + $0x28] sm:$0xff] %vm318, %v299
      %325 = vst.msk [vmem:[%s157 + $0x30] sm:$0xff] %vm318, %v300
      %326 = vst.msk [vmem:[%s157 + $0x38] sm:$0xff] %vm318, %v301
      %327 = vst.msk [vmem:[%s157 + $0x40] sm:$0xff] %vm318, %v302
      %328 = vst.msk [vmem:[%s157 + $0x48] sm:$0xff] %vm318, %v303
      %329 = vst.msk [vmem:[%s157 + $0x50] sm:$0xff] %vm318, %v304
      %330 = vst.msk [vmem:[%s157 + $0x58] sm:$0xff] %vm318, %v305
      %331 = vst.msk [vmem:[%s157 + $0x60] sm:$0xff] %vm318, %v306
      %332 = vst.msk [vmem:[%s157 + $0x68] sm:$0xff] %vm318, %v307
      %333 = vst.msk [vmem:[%s157 + $0x70] sm:$0xff] %vm318, %v308
      %334 = vst.msk [vmem:[%s157 + $0x78] sm:$0xff] %vm318, %v309
      %335 = vst.msk [vmem:[%s157 + $0x80] sm:$0xff] %vm318, %v310
      %336 = vst.msk [vmem:[%s157 + $0x88] sm:$0xff] %vm318, %v311
      %337 = vst.msk [vmem:[%s157 + $0x90] sm:$0xff] %vm318, %v312
      %338 = vst.msk [vmem:[%s157 + $0x98] sm:$0xff] %vm318, %v313
      %339 = vst.msk [vmem:[%s157 + $0xa0] sm:$0xff] %vm318, %v314
      %340 = vst.msk [vmem:[%s157 + $0xa8] sm:$0xff] %vm318, %v315
      %341 = vst.msk [vmem:[%s157 + $0xb0] sm:$0xff] %vm318, %v316
      %342 = vst.msk [vmem:[%s157 + $0xb8] sm:$0xff] %vm318, %v317
      %p343 = scmp.lt.s32.totalorder %s13, 1
      %s344 = scalar_select %p343, %s13, 1
      %s345 = smul.addr %s344, 24
      %s346 = smul.addr %s345, 8
      %s347 = scalar_lea.vmem %s2, %s346
      // Predicated region
      $region29: #{forward_pallas.15} parent=27 // pred_check
        %p348 = pneg %p83
      $region30: #{forward_pallas.15} parent=27 // pred_check_branch
        %350 = sbr.rel (%p348) target = $region32
      $region31: #{forward_pallas.15} parent=27 // pred_region
        _
      $region32: #{forward_pallas.15} parent=27 // pred_fallthru
        _
    $region28: #{forward_pallas.15} parent=5 // pred_fallthru
      _
    %p351 = scmp.le.s32.totalorder 2, %s8
    // Predicated region
    $region33: #{forward_pallas.15} parent=5 // pred_check
      %p352 = pneg %p351
    $region34: #{forward_pallas.15} parent=5 // pred_check_branch
      %354 = sbr.rel (%p352) target = $region36
    $region35: #{forward_pallas.15} parent=5 // pred_region
      %s355 = ssub.s32 %s8, 2
      // Predicated region
      $region37: #{forward_pallas.15} parent=35 // pred_check
        %p356 = pneg %p89
      $region38: #{forward_pallas.15} parent=35 // pred_check_branch
        %358 = sbr.rel (%p356) target = $region40
      $region39: #{forward_pallas.15} parent=35 // pred_region
        %p359 = scmp.lt.s32.totalorder %s14, 1
        %s360 = scalar_select %p359, %s14, 1
        %s361 = smul.addr %s360, 24
        %s362 = smul.addr %s361, 8
        %s363 = scalar_lea.vmem %s2, %s362
      $region40: #{forward_pallas.15} parent=35 // pred_fallthru
        _
    $region36: #{forward_pallas.15} parent=5 // pred_fallthru
      _
  $region6: #{forward_pallas.15} parent=0 // loop_footer
    %s12 = sadd.s32 1, %s8
  $region7: #{forward_pallas.15} parent=0 // loop_footer_branch
    %7 = sbr.rel target = $region3
  $region8: #{forward_pallas.15} parent=0 // loop_exit
    _

</llo_original>
